<compile_context>
chip_gen: v7x
topology: tpu7x:2x2x1
jax: 0.10.0
libtpu: 0.0.40
codegen_flags: <defaults>
</compile_context>

<pallas_src>
import functools
import math

import jax
import jax.numpy as jnp
from jax.experimental import pallas as pl
from jax.experimental.pallas import tpu as pltpu

HP = dict(
    n_symbols=32,
    symbols_embedding_dim=32,
    encoder_embedding_dim=32,
    encoder_n_convolutions=3,
    encoder_kernel_size=5,
    attention_rnn_dim=32,
    decoder_rnn_dim=32,
    prenet_dim=16,
    attention_dim=16,
    attention_location_n_filters=4,
    attention_location_kernel_size=5,
    num_mels=8,
    n_frames_per_step=1,
    postnet_embedding_dim=16,
    postnet_kernel_size=5,
    postnet_n_convolutions=5,
)

NEG_BIG = -1.0e9          # finite "-inf" for the attention mask (exp underflows to 0)
DECODER_CHUNK = 8         # decoder timesteps per grid iteration

# Probe once whether this JAX version supports single-buffered BlockSpecs.
try:
    pl.BlockSpec((8, 128), lambda i: (0, 0), pipeline_mode=pl.Buffered(1))
    _HAS_SINGLE_BUFFER = True
except Exception:          # pragma: no cover - older JAX fallback
    _HAS_SINGLE_BUFFER = False


def _const_spec(shape):
    """BlockSpec for a grid-invariant (resident) operand, single-buffered if possible."""
    imap = (lambda g: (0, 0)) if len(shape) == 2 else (lambda g: (0, 0, 0))
    if _HAS_SINGLE_BUFFER:
        return pl.BlockSpec(shape, imap, pipeline_mode=pl.Buffered(1))
    return pl.BlockSpec(shape, imap)


# ----------------------------------------------------------------------------
# Generic fused linear (matmul + bias + activation), M-tiled "parallel" grid
# ----------------------------------------------------------------------------
def _mm_bias_act_kernel(x_ref, w_ref, b_ref, o_ref, *, act):
    y = jnp.dot(x_ref[...], w_ref[...], preferred_element_type=jnp.float32) + b_ref[...]
    if act == "relu":
        y = jnp.maximum(y, 0.0)
    elif act == "tanh":
        y = jnp.tanh(y)
    o_ref[...] = y


def pallas_linear(x, w, b=None, act="none", tile_m=512):
    """x:(M,K) @ w:(K,N) + b with optional activation.  Rows tiled for pipelining."""
    M, K = x.shape
    N = w.shape[1]
    if b is None:
        b = jnp.zeros((N,), jnp.float32)
    tm = M if M <= tile_m else tile_m          # tile_m is a multiple of 8
    return pl.pallas_call(
        functools.partial(_mm_bias_act_kernel, act=act),
        grid=(pl.cdiv(M, tm),),
        in_specs=[
            pl.BlockSpec((tm, K), lambda i: (i, 0)),
            pl.BlockSpec((K, N), lambda i: (0, 0)),
            pl.BlockSpec((1, N), lambda i: (0, 0)),
        ],
        out_specs=pl.BlockSpec((tm, N), lambda i: (i, 0)),
        out_shape=jax.ShapeDtypeStruct((M, N), jnp.float32),
        compiler_params=pltpu.CompilerParams(dimension_semantics=("parallel",)),
    )(x.astype(jnp.float32), w.astype(jnp.float32),
      b.reshape(1, N).astype(jnp.float32))


# ----------------------------------------------------------------------------
# Prenet: two bias-free linears + ReLU fused in one kernel
# ----------------------------------------------------------------------------
def _prenet_kernel(x_ref, w1_ref, w2_ref, o_ref):
    h = jnp.maximum(
        jnp.dot(x_ref[...], w1_ref[...], preferred_element_type=jnp.float32), 0.0)
    o_ref[...] = jnp.maximum(
        jnp.dot(h, w2_ref[...], preferred_element_type=jnp.float32), 0.0)


def pallas_prenet(x, w1, w2):
    M, K = x.shape
    H1, H2 = w1.shape[1], w2.shape[1]
    return pl.pallas_call(
        _prenet_kernel,
        grid=(1,),
        in_specs=[
            pl.BlockSpec((M, K), lambda i: (0, 0)),
            pl.BlockSpec((K, H1), lambda i: (0, 0)),
            pl.BlockSpec((H1, H2), lambda i: (0, 0)),
        ],
        out_specs=pl.BlockSpec((M, H2), lambda i: (0, 0)),
        out_shape=jax.ShapeDtypeStruct((M, H2), jnp.float32),
    )(x.astype(jnp.float32), w1.astype(jnp.float32), w2.astype(jnp.float32))


# ----------------------------------------------------------------------------
# Channel-last 1-D conv as K shifted matmul accumulations (BN folded on host)
# ----------------------------------------------------------------------------
def _conv1d_kernel(x_ref, w_ref, b_ref, o_ref, *, act, k_size):
    B, Tp, Cin = x_ref.shape
    _, T, Cout = o_ref.shape
    x = x_ref[...]
    bias = b_ref[...]
    for b in range(B):                                  # B is small & static
        acc = jnp.zeros((T, Cout), jnp.float32)
        for k in range(k_size):
            acc = acc + jnp.dot(x[b, k:k + T, :], w_ref[k],
                                preferred_element_type=jnp.float32)
        y = acc + bias
        if act == "relu":
            y = jnp.maximum(y, 0.0)
        elif act == "tanh":
            y = jnp.tanh(y)
        o_ref[b] = y


def conv1d_cl(x_btc, w, b, act="none"):
    """x:(B,T,Cin) channel-last, w:(Cout,Cin,K) (PyTorch layout), 'same' padding."""
    B, T, Cin = x_btc.shape
    Cout, _, K = w.shape
    pad = (K - 1) // 2
    xp = jnp.pad(x_btc.astype(jnp.float32), ((0, 0), (pad, pad), (0, 0)))
    wk = jnp.transpose(w, (2, 1, 0)).astype(jnp.float32)          # (K, Cin, Cout)
    return pl.pallas_call(
        functools.partial(_conv1d_kernel, act=act, k_size=K),
        grid=(1,),
        in_specs=[
            pl.BlockSpec((B, T + 2 * pad, Cin), lambda i: (0, 0, 0)),
            pl.BlockSpec((K, Cin, Cout), lambda i: (0, 0, 0)),
            pl.BlockSpec((1, Cout), lambda i: (0, 0)),
        ],
        out_specs=pl.BlockSpec((B, T, Cout), lambda i: (0, 0, 0)),
        out_shape=jax.ShapeDtypeStruct((B, T, Cout), jnp.float32),
    )(xp, wk, b.reshape(1, Cout).astype(jnp.float32))


# ----------------------------------------------------------------------------
# Bidirectional encoder LSTM: one kernel, fused [x,h] gate matmul per direction
# ----------------------------------------------------------------------------
def _bilstm_kernel(x_ref, valid_ref, wf_ref, bf_ref, wb_ref, bb_ref, out_ref,
                   hf_ref, cf_ref, hb_ref, cb_ref):
    T, B, E = x_ref.shape
    H = hf_ref.shape[1]

    wf = wf_ref[...]
    bf = bf_ref[...]
    wb = wb_ref[...]
    bb = bb_ref[...]

    hf_ref[...] = jnp.zeros_like(hf_ref)
    cf_ref[...] = jnp.zeros_like(cf_ref)
    hb_ref[...] = jnp.zeros_like(hb_ref)
    cb_ref[...] = jnp.zeros_like(cb_ref)

    def cell(g, c):
        i = jax.nn.sigmoid(g[:, 0 * H:1 * H])
        f = jax.nn.sigmoid(g[:, 1 * H:2 * H])
        gg = jnp.tanh(g[:, 2 * H:3 * H])
        o = jax.nn.sigmoid(g[:, 3 * H:4 * H])
        c_new = f * c + i * gg
        return o * jnp.tanh(c_new), c_new

    @pl.loop(0, T)
    def _(i):
        tf_ = i
        tb_ = T - 1 - i
        vf = valid_ref[tf_]                          # (B, 1)
        vb = valid_ref[tb_]
        h_f = hf_ref[...]
        c_f = cf_ref[...]
        h_b = hb_ref[...]
        c_b = cb_ref[...]
        gf = jnp.dot(jnp.concatenate([x_ref[tf_], h_f], axis=1), wf,
                     preferred_element_type=jnp.float32) + bf
        gb = jnp.dot(jnp.concatenate([x_ref[tb_], h_b], axis=1), wb,
                     preferred_element_type=jnp.float32) + bb
        hf_n, cf_n = cell(gf, c_f)
        hb_n, cb_n = cell(gb, c_b)
        # packed-sequence semantics: freeze state / zero outputs at padded steps
        h_f = vf * hf_n + (1.0 - vf) * h_f
        c_f = vf * cf_n + (1.0 - vf) * c_f
        h_b = vb * hb_n + (1.0 - vb) * h_b
        c_b = vb * cb_n + (1.0 - vb) * c_b
        hf_ref[...] = h_f
        cf_ref[...] = c_f
        hb_ref[...] = h_b
        cb_ref[...] = c_b
        out_ref[tf_, :, 0:H] = vf * h_f
        out_ref[tb_, :, H:2 * H] = vb * h_b


def pallas_bilstm(x_tbe, valid, p_fwd, p_bwd):
    T, B, E = x_tbe.shape
    H = p_fwd["whh"].shape[0]
    G = 4 * H
    wf = jnp.concatenate([p_fwd["wih"], p_fwd["whh"]], axis=0)    # (E+H, 4H)
    wb = jnp.concatenate([p_bwd["wih"], p_bwd["whh"]], axis=0)
    return pl.pallas_call(
        _bilstm_kernel,
        grid=(1,),
        in_specs=[
            pl.BlockSpec((T, B, E), lambda i: (0, 0, 0)),
            pl.BlockSpec((T, B, 1), lambda i: (0, 0, 0)),
            pl.BlockSpec((E + H, G), lambda i: (0, 0)),
            pl.BlockSpec((1, G), lambda i: (0, 0)),
            pl.BlockSpec((E + H, G), lambda i: (0, 0)),
            pl.BlockSpec((1, G), lambda i: (0, 0)),
        ],
        out_specs=pl.BlockSpec((T, B, 2 * H), lambda i: (0, 0, 0)),
        out_shape=jax.ShapeDtypeStruct((T, B, 2 * H), jnp.float32),
        scratch_shapes=[pltpu.VMEM((B, H), jnp.float32) for _ in range(4)],
    )(x_tbe.astype(jnp.float32), valid.astype(jnp.float32),
      wf, p_fwd["b"].reshape(1, G), wb, p_bwd["b"].reshape(1, G))


# ----------------------------------------------------------------------------
# Fused autoregressive decoder (chunked grid, state in VMEM scratch)
# ----------------------------------------------------------------------------
def _decoder_kernel(prenet_ref, memory_ref, pmem_ref, negmask_ref,
                    awcat_ref, ab_ref, qw_ref, wloc_ref, v_ref,
                    dwcat_ref, db_ref, pw_ref, pb_ref,
                    proj_out_ref, align_out_ref,
                    ah_ref, ac_ref, dh_ref, dc_ref, att_ref, attc_ref, ctx_ref,
                    *, chunk, k_size):
    @pl.when(pl.program_id(0) == 0)
    def _init():
        ah_ref[...] = jnp.zeros_like(ah_ref)
        ac_ref[...] = jnp.zeros_like(ac_ref)
        dh_ref[...] = jnp.zeros_like(dh_ref)
        dc_ref[...] = jnp.zeros_like(dc_ref)
        att_ref[...] = jnp.zeros_like(att_ref)
        attc_ref[...] = jnp.zeros_like(attc_ref)
        ctx_ref[...] = jnp.zeros_like(ctx_ref)

    B, T_in, E = memory_ref.shape
    A = pmem_ref.shape[2]
    arnn = ah_ref.shape[1]
    drnn = dh_ref.shape[1]
    pad = (k_size - 1) // 2

    # Resident operands, loaded once per grid step (single-buffered in VMEM).
    memory = memory_ref[...]
    pmem = pmem_ref[...]
    negmask = negmask_ref[...]
    awcat = awcat_ref[...]
    ab = ab_ref[...]
    qw = qw_ref[...]
    wloc = wloc_ref[...]                     # (2, K, A) folded loc-conv + loc-dense
    v = v_ref[...]                           # (1, A)
    dwcat = dwcat_ref[...]
    db = db_ref[...]
    pw = pw_ref[...]
    pb = pb_ref[...]
    zpad = jnp.zeros((B, pad), jnp.float32)

    def lstm_gates(g, c, H):
        i = jax.nn.sigmoid(g[:, 0 * H:1 * H])
        f = jax.nn.sigmoid(g[:, 1 * H:2 * H])
        gg = jnp.tanh(g[:, 2 * H:3 * H])
        o = jax.nn.sigmoid(g[:, 3 * H:4 * H])
        c_new = f * c + i * gg
        return o * jnp.tanh(c_new), c_new

    @pl.loop(0, chunk)
    def _(c):
        ah = ah_ref[...]
        ac = ac_ref[...]
        dh = dh_ref[...]
        dc = dc_ref[...]
        att = att_ref[...]
        attc = attc_ref[...]
        ctx = ctx_ref[...]
        prenet = prenet_ref[c]                                    # (B, prenet_dim)

        # ---- attention LSTM: one fused gate matmul on [prenet, ctx, ah] ----
        g = jnp.dot(jnp.concatenate([prenet, ctx, ah], axis=1), awcat,
                    preferred_element_type=jnp.float32) + ab
        ah, ac = lstm_gates(g, ac, arnn)

        # ---- location-sensitive attention ----
        pq = jnp.dot(ah, qw, preferred_element_type=jnp.float32)  # (B, A)
        a_pad = jnp.concatenate([zpad, att, zpad], axis=1)        # (B, T_in + 2*pad)
        c_pad = jnp.concatenate([zpad, attc, zpad], axis=1)
        loc = jnp.zeros((B, T_in, A), jnp.float32)
        for k in range(k_size):                                   # K shifted rank-1 accums
            loc = loc + (a_pad[:, k:k + T_in, None] * wloc[0, k][None, None, :]
                         + c_pad[:, k:k + T_in, None] * wloc[1, k][None, None, :])
        s = jnp.tanh(pq[:, None, :] + loc + pmem)                 # (B, T_in, A)
        e = jnp.sum(s * v[None, :, :], axis=-1) + negmask         # (B, T_in)
        m = jnp.max(e, axis=1, keepdims=True)
        p = jnp.exp(e - m)
        att = p / jnp.sum(p, axis=1, keepdims=True)               # softmax
        attc = attc + att
        ctx = jnp.einsum('bqt,bte->bqe', att[:, None, :], memory,
                         preferred_element_type=jnp.float32)[:, 0, :]   # MXU context

        # ---- decoder LSTM: one fused gate matmul on [ah, ctx, dh] ----
        g2 = jnp.dot(jnp.concatenate([ah, ctx, dh], axis=1), dwcat,
                     preferred_element_type=jnp.float32) + db
        dh, dc = lstm_gates(g2, dc, drnn)

        # ---- fused mel + gate projection on [dh, ctx] ----
        proj = jnp.dot(jnp.concatenate([dh, ctx], axis=1), pw,
                       preferred_element_type=jnp.float32) + pb

        ah_ref[...] = ah
        ac_ref[...] = ac
        dh_ref[...] = dh
        dc_ref[...] = dc
        att_ref[...] = att
        attc_ref[...] = attc
        ctx_ref[...] = ctx
        proj_out_ref[c] = proj
        align_out_ref[c] = att


def pallas_decoder(prenet_seq, memory, pmem, negmask, dp, chunk):
    T_pad, B, pd = prenet_seq.shape
    _, T_in, E = memory.shape
    A = pmem.shape[2]
    arnn = HP["attention_rnn_dim"]
    drnn = HP["decoder_rnn_dim"]
    K = HP["attention_location_kernel_size"]
    nproj = HP["num_mels"] * HP["n_frames_per_step"] + 1
    n_chunks = T_pad // chunk

    proj_out, align_out = pl.pallas_call(
        functools.partial(_decoder_kernel, chunk=chunk, k_size=K),
        grid=(n_chunks,),
        in_specs=[
            pl.BlockSpec((chunk, B, pd), lambda g: (g, 0, 0)),    # prenet frames (chunked)
            _const_spec((B, T_in, E)),                            # memory
            _const_spec((B, T_in, A)),                            # processed memory
            _const_spec((B, T_in)),                               # additive attention mask
            _const_spec((pd + E + arnn, 4 * arnn)),               # fused attn-LSTM weights
            _const_spec((1, 4 * arnn)),
            _const_spec((arnn, A)),                               # query projection
            _const_spec((2, K, A)),                               # folded loc conv+dense
            _const_spec((1, A)),                                  # energy vector v
            _const_spec((arnn + E + drnn, 4 * drnn)),             # fused dec-LSTM weights
            _const_spec((1, 4 * drnn)),
            _const_spec((drnn + E, nproj)),                       # fused mel+gate proj
            _const_spec((1, nproj)),
        ],
        out_specs=(pl.BlockSpec((chunk, B, nproj), lambda g: (g, 0, 0)),
                   pl.BlockSpec((chunk, B, T_in), lambda g: (g, 0, 0))),
        out_shape=(jax.ShapeDtypeStruct((T_pad, B, nproj), jnp.float32),
                   jax.ShapeDtypeStruct((T_pad, B, T_in), jnp.float32)),
        scratch_shapes=[
            pltpu.VMEM((B, arnn), jnp.float32),   # attention rnn h
            pltpu.VMEM((B, arnn), jnp.float32),   # attention rnn c
            pltpu.VMEM((B, drnn), jnp.float32),   # decoder rnn h
            pltpu.VMEM((B, drnn), jnp.float32),   # decoder rnn c
            pltpu.VMEM((B, T_in), jnp.float32),   # attention weights
            pltpu.VMEM((B, T_in), jnp.float32),   # cumulative attention weights
            pltpu.VMEM((B, E), jnp.float32),      # attention context
        ],
        compiler_params=pltpu.CompilerParams(
            dimension_semantics=("arbitrary",),
            vmem_limit_bytes=64 * 1024 * 1024),
    )(prenet_seq, memory, pmem, negmask,
      dp["aw_cat"], dp["ab"], dp["qw"], dp["wloc"], dp["v"],
      dp["dw_cat"], dp["db"], dp["pw"], dp["pb"])
    return proj_out, align_out


# ----------------------------------------------------------------------------
# Host-side weight folding / glue
# ----------------------------------------------------------------------------
def fold_bn(cv, eps=1e-5):
    """Fold eval-mode BatchNorm1d (running stats) into the conv weight/bias."""
    scale = cv["gamma"] / jnp.sqrt(cv["running_var"] + eps)
    w = cv["w"] * scale[:, None, None]
    b = (cv["b"] - cv["running_mean"]) * scale + cv["beta"]
    return w, b


def _build_decoder_weights(params):
    arnn = HP["attention_rnn_dim"]
    drnn = HP["decoder_rnn_dim"]
    A = HP["attention_dim"]
    nproj = HP["num_mels"] * HP["n_frames_per_step"] + 1

    aw_cat = jnp.concatenate([params["attn_rnn"]["wih"], params["attn_rnn"]["whh"]], axis=0)
    dw_cat = jnp.concatenate([params["dec_rnn"]["wih"], params["dec_rnn"]["whh"]], axis=0)
    # Fold location conv (2->F, K, no bias) and location dense (F->A, no bias).
    wloc = jnp.einsum("fck,fa->cka",
                      params["att_loc_conv_w"], params["att_loc_dense_w"])   # (2, K, A)
    pw = jnp.concatenate([params["proj_w"], params["gate_w"]], axis=1)       # (drnn+E, nproj)
    pb = jnp.concatenate([params["proj_b"], params["gate_b"]], axis=0)

    return dict(
        aw_cat=aw_cat, ab=params["attn_rnn"]["b"].reshape(1, 4 * arnn),
        qw=params["att_query_w"], wloc=wloc, v=params["att_v"].reshape(1, A),
        dw_cat=dw_cat, db=params["dec_rnn"]["b"].reshape(1, 4 * drnn),
        pw=pw, pb=pb.reshape(1, nproj),
    )


# ----------------------------------------------------------------------------
# Model components
# ----------------------------------------------------------------------------
def encoder_forward(params, embedded_btc, text_lengths):
    # embedded: (B, T_in, E) channel-last (no NCW transposes between layers)
    x = embedded_btc
    for cv in params["enc_convs"]:
        w_f, b_f = fold_bn(cv)
        x = conv1d_cl(x, w_f, b_f, act="relu")
        # TODO(synk): encoder dropout(0.5) only applies in training; eval semantics used.
    B, T, E = x.shape
    x_tbe = x.transpose(1, 0, 2)                                   # (T, B, E)
    valid = (jnp.arange(T)[:, None] < text_lengths[None, :]).astype(jnp.float32)[:, :, None]
    enc = pallas_bilstm(x_tbe, valid, params["lstm_fwd"], params["lstm_bwd"])  # (T, B, 2H=E)
    return enc.transpose(1, 0, 2)                                  # (B, T, E)


def decoder_forward(params, memory, mels, memory_lengths):
    B, T_in, E = memory.shape
    n_mels = HP["num_mels"]
    pd = HP["prenet_dim"]
    A = HP["attention_dim"]
    T_out = mels.shape[2]
    chunk = DECODER_CHUNK
    T_pad = ((T_out + chunk - 1) // chunk) * chunk

    # Teacher-forced frames: [go_frame, mels[:-1]], zero-padded to a chunk multiple.
    mels_tbn = mels.transpose(2, 0, 1).astype(jnp.float32)         # (T_out, B, n_mels)
    frames = jnp.concatenate([
        jnp.zeros((1, B, n_mels), jnp.float32),
        mels_tbn[:T_out - 1],
        jnp.zeros((T_pad - T_out, B, n_mels), jnp.float32),
    ], axis=0)

    # TODO(synk): prenet dropout (p=0.5, applied even at inference in Tacotron2)
    #             is skipped for determinism.
    prenet_seq = pallas_prenet(frames.reshape(T_pad * B, n_mels),
                               params["prenet_w1"], params["prenet_w2"])
    prenet_seq = prenet_seq.reshape(T_pad, B, pd)

    # memory_layer (bias-free) applied once; kept as (B, T_in, A).
    pmem = pallas_linear(memory.reshape(B * T_in, E), params["att_memory_w"])
    pmem = pmem.reshape(B, T_in, A)

    negmask = jnp.where(jnp.arange(T_in)[None, :] >= memory_lengths[:, None],
                        NEG_BIG, 0.0).astype(jnp.float32)

    dp = _build_decoder_weights(params)
    proj_out, align_out = pallas_decoder(prenet_seq, memory, pmem, negmask, dp, chunk)

    mel_btc = proj_out[:T_out, :, :n_mels].transpose(1, 0, 2)      # (B, T_out, n_mels)
    gate_outputs = proj_out[:T_out, :, n_mels].T                   # (B, T_out)
    alignments = align_out[:T_out].transpose(1, 0, 2)              # (B, T_out, T_in)
    return mel_btc, gate_outputs, alignments


def postnet_forward(params, mel_btc):
    y = mel_btc
    n = len(params["postnet"])
    for i, cv in enumerate(params["postnet"]):
        w_f, b_f = fold_bn(cv)
        act = "tanh" if i < n - 1 else "none"
        y = conv1d_cl(y, w_f, b_f, act=act)
        # TODO(synk): postnet dropout(0.5) only applies in training; eval semantics used.
    return y


@jax.jit
def tacotron2_forward(params, text_inputs, text_lengths, mels, output_lengths):
    # embedding lookup (host-side gather); computation stays channel-last.
    embedded = params["embedding"][text_inputs]                    # (B, T_in, E)
    encoder_outputs = encoder_forward(params, embedded, text_lengths)
    mel_btc, gate_outputs, alignments = decoder_forward(
        params, encoder_outputs, mels, text_lengths)
    post_btc = postnet_forward(params, mel_btc)

    mel_outputs = mel_btc.transpose(0, 2, 1)                       # (B, n_mels, T_out)
    mel_outputs_postnet = (mel_btc + post_btc).transpose(0, 2, 1)

    # parse_output: mask padded output frames
    T_out = mel_outputs.shape[2]
    pad_mask = jnp.arange(T_out)[None, :] >= output_lengths[:, None]
    mel_outputs = jnp.where(pad_mask[:, None, :], 0.0, mel_outputs)
    mel_outputs_postnet = jnp.where(pad_mask[:, None, :], 0.0, mel_outputs_postnet)
    gate_outputs = jnp.where(pad_mask, 1000.0, gate_outputs)
    return [mel_outputs, mel_outputs_postnet, gate_outputs, alignments]


# ----------------------------------------------------------------------------
# Deterministic parameter initialization
# ----------------------------------------------------------------------------
def init_params(key):
    E = HP["symbols_embedding_dim"]
    keys = iter(jax.random.split(key, 128))

    def nrm(shape, scale=0.1):
        return jax.random.normal(next(keys), shape, jnp.float32) * scale

    p = {}
    std = math.sqrt(2.0 / (HP["n_symbols"] + E))
    val = math.sqrt(3.0) * std
    p["embedding"] = jax.random.uniform(
        next(keys), (HP["n_symbols"], E), jnp.float32, -val, val)

    def bn_conv(cin, cout, k):
        return dict(
            w=nrm((cout, cin, k)),
            b=jnp.zeros((cout,), jnp.float32),
            gamma=jnp.ones((cout,), jnp.float32),
            beta=jnp.zeros((cout,), jnp.float32),
            running_mean=jnp.zeros((cout,), jnp.float32),
            running_var=jnp.ones((cout,), jnp.float32))

    p["enc_convs"] = [bn_conv(E, E, HP["encoder_kernel_size"])
                      for _ in range(HP["encoder_n_convolutions"])]

    H = E // 2
    for name in ("lstm_fwd", "lstm_bwd"):
        p[name] = dict(wih=nrm((E, 4 * H)), whh=nrm((H, 4 * H)),
                       b=jnp.zeros((4 * H,), jnp.float32))

    n_mels = HP["num_mels"]
    pd, A, F = HP["prenet_dim"], HP["attention_dim"], HP["attention_location_n_filters"]
    arnn, drnn = HP["attention_rnn_dim"], HP["decoder_rnn_dim"]
    enc = HP["encoder_embedding_dim"]

    p["prenet_w1"] = nrm((n_mels, pd))
    p["prenet_w2"] = nrm((pd, pd))

    p["attn_rnn"] = dict(wih=nrm((pd + enc, 4 * arnn)), whh=nrm((arnn, 4 * arnn)),
                         b=jnp.zeros((4 * arnn,), jnp.float32))
    p["att_query_w"] = nrm((arnn, A))
    p["att_memory_w"] = nrm((enc, A))
    p["att_v"] = nrm((A, 1))
    p["att_loc_conv_w"] = nrm((F, 2, HP["attention_location_kernel_size"]))
    p["att_loc_dense_w"] = nrm((F, A))

    p["dec_rnn"] = dict(wih=nrm((arnn + enc, 4 * drnn)), whh=nrm((drnn, 4 * drnn)),
                        b=jnp.zeros((4 * drnn,), jnp.float32))
    p["proj_w"] = nrm((drnn + enc, n_mels * HP["n_frames_per_step"]))
    p["proj_b"] = jnp.zeros((n_mels * HP["n_frames_per_step"],), jnp.float32)
    p["gate_w"] = nrm((drnn + enc, 1))
    p["gate_b"] = jnp.zeros((1,), jnp.float32)

    pe, pk = HP["postnet_embedding_dim"], HP["postnet_kernel_size"]
    chans = [(n_mels, pe)] + [(pe, pe)] * (HP["postnet_n_convolutions"] - 2) + [(pe, n_mels)]
    p["postnet"] = [bn_conv(cin, cout, pk) for cin, cout in chans]
    return p


# ----------------------------------------------------------------------------
if __name__ == "__main__":
    B, T_in, T_out = 2, 8, 6
    params = init_params(jax.random.PRNGKey(0))

    k1, k2 = jax.random.split(jax.random.PRNGKey(0))
    text_inputs = jax.random.randint(k1, (B, T_in), 0, HP["n_symbols"], dtype=jnp.int32)
    text_lengths = jnp.array([8, 6], dtype=jnp.int32)          # sorted descending
    mels = jax.random.normal(k2, (B, HP["num_mels"], T_out), jnp.float32)
    output_lengths = jnp.array([6, 5], dtype=jnp.int32)

    outs = tacotron2_forward(params, text_inputs, text_lengths, mels, output_lengths)
    outs = jax.block_until_ready(outs)

    mel_outputs, mel_outputs_postnet, gate_outputs, alignments = outs
    assert mel_outputs.shape == (B, HP["num_mels"], T_out)
    assert mel_outputs_postnet.shape == (B, HP["num_mels"], T_out)
    assert gate_outputs.shape == (B, T_out)
    assert alignments.shape == (B, T_out, T_in)
    assert bool(jnp.all(jnp.isfinite(mel_outputs_postnet)))
    assert bool(jnp.all(jnp.isfinite(alignments)))
    # attention weights over valid positions should sum to ~1
    attn_sums = jnp.sum(alignments, axis=-1)
    assert bool(jnp.all(jnp.abs(attn_sums - 1.0) < 1e-3))
    print("KERNEL_OK")
</pallas_src>

<mosaic_0001>
module attributes {stable_mosaic.version = 11 : i64} {
  func.func @_conv1d_kernel(%arg0: i32, %arg1: memref<2x12x32xf32, #tpu.memory_space<vmem>>, %arg2: memref<5x32x32xf32, #tpu.memory_space<vmem>>, %arg3: memref<1x32xf32, #tpu.memory_space<vmem>>, %arg4: memref<2x8x32xf32, #tpu.memory_space<vmem>>) attributes {dimension_semantics = [#tpu.dimension_semantics<arbitrary>], iteration_bounds = array<i64: 1>, scalar_prefetch = 0 : i64, scratch_operands = 0 : i64, tpu.core_type = #tpu.core_type<tc>, window_params = [{pipeline_mode = #tpu.pipeline_mode<synchronous>, transform_indices = @transform_0, window_bounds = array<i64: 2, 12, 32>}, {pipeline_mode = #tpu.pipeline_mode<synchronous>, transform_indices = @transform_1, window_bounds = array<i64: 5, 32, 32>}, {pipeline_mode = #tpu.pipeline_mode<synchronous>, transform_indices = @transform_2, window_bounds = array<i64: 1, 32>}, {pipeline_mode = #tpu.pipeline_mode<synchronous>, transform_indices = @transform_3, window_bounds = array<i64: 2, 8, 32>}]} {
    %c0 = arith.constant 0 : index
    %c0_0 = arith.constant 0 : index
    %c0_1 = arith.constant 0 : index
    %0 = vector.load %arg1[%c0, %c0_0, %c0_1] : memref<2x12x32xf32, #tpu.memory_space<vmem>>, vector<2x12x32xf32>
    %c0_2 = arith.constant 0 : index
    %c0_3 = arith.constant 0 : index
    %1 = vector.load %arg3[%c0_2, %c0_3] : memref<1x32xf32, #tpu.memory_space<vmem>>, vector<1x32xf32>
    %cst = arith.constant 0.000000e+00 : f32
    %2 = vector.broadcast %cst : f32 to vector<8x32xf32>
    %3 = vector.extract_strided_slice %0 {offsets = [0, 0, 0], sizes = [1, 8, 32], strides = [1, 1, 1]} : vector<2x12x32xf32> to vector<1x8x32xf32>
    %4 = vector.shape_cast %3 : vector<1x8x32xf32> to vector<8x32xf32>
    %c0_4 = arith.constant 0 : index
    %c0_5 = arith.constant 0 : index
    %c0_6 = arith.constant 0 : index
    %5 = vector.load %arg2[%c0_4, %c0_5, %c0_6] : memref<5x32x32xf32, #tpu.memory_space<vmem>>, vector<1x32x32xf32>
    %6 = vector.shape_cast %5 : vector<1x32x32xf32> to vector<32x32xf32>
    %cst_7 = arith.constant dense<0.000000e+00> : vector<8x32xf32>
    %7 = tpu.matmul %4, %6, %cst_7 {dimension_numbers = #tpu.dot_dimension_numbers<[1], [0], [0], [1], [0, 0, 1, 1], [], []>} : vector<8x32xf32>, vector<32x32xf32>, vector<8x32xf32> -> vector<8x32xf32>
    %8 = arith.addf %2, %7 : vector<8x32xf32>
    %9 = vector.extract_strided_slice %0 {offsets = [0, 1, 0], sizes = [1, 8, 32], strides = [1, 1, 1]} : vector<2x12x32xf32> to vector<1x8x32xf32>
    %10 = vector.shape_cast %9 : vector<1x8x32xf32> to vector<8x32xf32>
    %c1 = arith.constant 1 : index
    %c0_8 = arith.constant 0 : index
    %c0_9 = arith.constant 0 : index
    %11 = vector.load %arg2[%c1, %c0_8, %c0_9] : memref<5x32x32xf32, #tpu.memory_space<vmem>>, vector<1x32x32xf32>
    %12 = vector.shape_cast %11 : vector<1x32x32xf32> to vector<32x32xf32>
    %cst_10 = arith.constant dense<0.000000e+00> : vector<8x32xf32>
    %13 = tpu.matmul %10, %12, %cst_10 {dimension_numbers = #tpu.dot_dimension_numbers<[1], [0], [0], [1], [0, 0, 1, 1], [], []>} : vector<8x32xf32>, vector<32x32xf32>, vector<8x32xf32> -> vector<8x32xf32>
    %14 = arith.addf %8, %13 : vector<8x32xf32>
    %15 = vector.extract_strided_slice %0 {offsets = [0, 2, 0], sizes = [1, 8, 32], strides = [1, 1, 1]} : vector<2x12x32xf32> to vector<1x8x32xf32>
    %16 = vector.shape_cast %15 : vector<1x8x32xf32> to vector<8x32xf32>
    %c2 = arith.constant 2 : index
    %c0_11 = arith.constant 0 : index
    %c0_12 = arith.constant 0 : index
    %17 = vector.load %arg2[%c2, %c0_11, %c0_12] : memref<5x32x32xf32, #tpu.memory_space<vmem>>, vector<1x32x32xf32>
    %18 = vector.shape_cast %17 : vector<1x32x32xf32> to vector<32x32xf32>
    %cst_13 = arith.constant dense<0.000000e+00> : vector<8x32xf32>
    %19 = tpu.matmul %16, %18, %cst_13 {dimension_numbers = #tpu.dot_dimension_numbers<[1], [0], [0], [1], [0, 0, 1, 1], [], []>} : vector<8x32xf32>, vector<32x32xf32>, vector<8x32xf32> -> vector<8x32xf32>
    %20 = arith.addf %14, %19 : vector<8x32xf32>
    %21 = vector.extract_strided_slice %0 {offsets = [0, 3, 0], sizes = [1, 8, 32], strides = [1, 1, 1]} : vector<2x12x32xf32> to vector<1x8x32xf32>
    %22 = vector.shape_cast %21 : vector<1x8x32xf32> to vector<8x32xf32>
    %c3 = arith.constant 3 : index
    %c0_14 = arith.constant 0 : index
    %c0_15 = arith.constant 0 : index
    %23 = vector.load %arg2[%c3, %c0_14, %c0_15] : memref<5x32x32xf32, #tpu.memory_space<vmem>>, vector<1x32x32xf32>
    %24 = vector.shape_cast %23 : vector<1x32x32xf32> to vector<32x32xf32>
    %cst_16 = arith.constant dense<0.000000e+00> : vector<8x32xf32>
    %25 = tpu.matmul %22, %24, %cst_16 {dimension_numbers = #tpu.dot_dimension_numbers<[1], [0], [0], [1], [0, 0, 1, 1], [], []>} : vector<8x32xf32>, vector<32x32xf32>, vector<8x32xf32> -> vector<8x32xf32>
    %26 = arith.addf %20, %25 : vector<8x32xf32>
    %27 = vector.extract_strided_slice %0 {offsets = [0, 4, 0], sizes = [1, 8, 32], strides = [1, 1, 1]} : vector<2x12x32xf32> to vector<1x8x32xf32>
    %28 = vector.shape_cast %27 : vector<1x8x32xf32> to vector<8x32xf32>
    %c4 = arith.constant 4 : index
    %c0_17 = arith.constant 0 : index
    %c0_18 = arith.constant 0 : index
    %29 = vector.load %arg2[%c4, %c0_17, %c0_18] : memref<5x32x32xf32, #tpu.memory_space<vmem>>, vector<1x32x32xf32>
    %30 = vector.shape_cast %29 : vector<1x32x32xf32> to vector<32x32xf32>
    %cst_19 = arith.constant dense<0.000000e+00> : vector<8x32xf32>
    %31 = tpu.matmul %28, %30, %cst_19 {dimension_numbers = #tpu.dot_dimension_numbers<[1], [0], [0], [1], [0, 0, 1, 1], [], []>} : vector<8x32xf32>, vector<32x32xf32>, vector<8x32xf32> -> vector<8x32xf32>
    %32 = arith.addf %26, %31 : vector<8x32xf32>
    %33 = vector.broadcast %1 : vector<1x32xf32> to vector<8x32xf32>
    %34 = arith.addf %32, %33 : vector<8x32xf32>
    %cst_20 = arith.constant 0.000000e+00 : f32
    %35 = vector.broadcast %cst_20 : f32 to vector<8x32xf32>
    %36 = arith.maximumf %34, %35 : vector<8x32xf32>
    %c0_21 = arith.constant 0 : index
    %c0_22 = arith.constant 0 : index
    %c0_23 = arith.constant 0 : index
    %37 = vector.load %arg4[%c0_21, %c0_22, %c0_23] : memref<2x8x32xf32, #tpu.memory_space<vmem>>, vector<1x8x32xf32>
    %38 = vector.shape_cast %37 : vector<1x8x32xf32> to vector<8x32xf32>
    %39 = vector.shape_cast %36 : vector<8x32xf32> to vector<1x8x32xf32>
    tpu.vector_store %arg4[%c0_21, %c0_22, %c0_23], %39 {strides = array<i32>} : memref<2x8x32xf32, #tpu.memory_space<vmem>>, vector<1x8x32xf32>,
    %cst_24 = arith.constant 0.000000e+00 : f32
    %40 = vector.broadcast %cst_24 : f32 to vector<8x32xf32>
    %41 = vector.extract_strided_slice %0 {offsets = [1, 0, 0], sizes = [1, 8, 32], strides = [1, 1, 1]} : vector<2x12x32xf32> to vector<1x8x32xf32>
    %42 = vector.shape_cast %41 : vector<1x8x32xf32> to vector<8x32xf32>
    %c0_25 = arith.constant 0 : index
    %c0_26 = arith.constant 0 : index
    %c0_27 = arith.constant 0 : index
    %43 = vector.load %arg2[%c0_25, %c0_26, %c0_27] : memref<5x32x32xf32, #tpu.memory_space<vmem>>, vector<1x32x32xf32>
    %44 = vector.shape_cast %43 : vector<1x32x32xf32> to vector<32x32xf32>
    %cst_28 = arith.constant dense<0.000000e+00> : vector<8x32xf32>
    %45 = tpu.matmul %42, %44, %cst_28 {dimension_numbers = #tpu.dot_dimension_numbers<[1], [0], [0], [1], [0, 0, 1, 1], [], []>} : vector<8x32xf32>, vector<32x32xf32>, vector<8x32xf32> -> vector<8x32xf32>
    %46 = arith.addf %40, %45 : vector<8x32xf32>
    %47 = vector.extract_strided_slice %0 {offsets = [1, 1, 0], sizes = [1, 8, 32], strides = [1, 1, 1]} : vector<2x12x32xf32> to vector<1x8x32xf32>
    %48 = vector.shape_cast %47 : vector<1x8x32xf32> to vector<8x32xf32>
    %c1_29 = arith.constant 1 : index
    %c0_30 = arith.constant 0 : index
    %c0_31 = arith.constant 0 : index
    %49 = vector.load %arg2[%c1_29, %c0_30, %c0_31] : memref<5x32x32xf32, #tpu.memory_space<vmem>>, vector<1x32x32xf32>
    %50 = vector.shape_cast %49 : vector<1x32x32xf32> to vector<32x32xf32>
    %cst_32 = arith.constant dense<0.000000e+00> : vector<8x32xf32>
    %51 = tpu.matmul %48, %50, %cst_32 {dimension_numbers = #tpu.dot_dimension_numbers<[1], [0], [0], [1], [0, 0, 1, 1], [], []>} : vector<8x32xf32>, vector<32x32xf32>, vector<8x32xf32> -> vector<8x32xf32>
    %52 = arith.addf %46, %51 : vector<8x32xf32>
    %53 = vector.extract_strided_slice %0 {offsets = [1, 2, 0], sizes = [1, 8, 32], strides = [1, 1, 1]} : vector<2x12x32xf32> to vector<1x8x32xf32>
    %54 = vector.shape_cast %53 : vector<1x8x32xf32> to vector<8x32xf32>
    %c2_33 = arith.constant 2 : index
    %c0_34 = arith.constant 0 : index
    %c0_35 = arith.constant 0 : index
    %55 = vector.load %arg2[%c2_33, %c0_34, %c0_35] : memref<5x32x32xf32, #tpu.memory_space<vmem>>, vector<1x32x32xf32>
    %56 = vector.shape_cast %55 : vector<1x32x32xf32> to vector<32x32xf32>
    %cst_36 = arith.constant dense<0.000000e+00> : vector<8x32xf32>
    %57 = tpu.matmul %54, %56, %cst_36 {dimension_numbers = #tpu.dot_dimension_numbers<[1], [0], [0], [1], [0, 0, 1, 1], [], []>} : vector<8x32xf32>, vector<32x32xf32>, vector<8x32xf32> -> vector<8x32xf32>
    %58 = arith.addf %52, %57 : vector<8x32xf32>
    %59 = vector.extract_strided_slice %0 {offsets = [1, 3, 0], sizes = [1, 8, 32], strides = [1, 1, 1]} : vector<2x12x32xf32> to vector<1x8x32xf32>
    %60 = vector.shape_cast %59 : vector<1x8x32xf32> to vector<8x32xf32>
    %c3_37 = arith.constant 3 : index
    %c0_38 = arith.constant 0 : index
    %c0_39 = arith.constant 0 : index
    %61 = vector.load %arg2[%c3_37, %c0_38, %c0_39] : memref<5x32x32xf32, #tpu.memory_space<vmem>>, vector<1x32x32xf32>
    %62 = vector.shape_cast %61 : vector<1x32x32xf32> to vector<32x32xf32>
    %cst_40 = arith.constant dense<0.000000e+00> : vector<8x32xf32>
    %63 = tpu.matmul %60, %62, %cst_40 {dimension_numbers = #tpu.dot_dimension_numbers<[1], [0], [0], [1], [0, 0, 1, 1], [], []>} : vector<8x32xf32>, vector<32x32xf32>, vector<8x32xf32> -> vector<8x32xf32>
    %64 = arith.addf %58, %63 : vector<8x32xf32>
    %65 = vector.extract_strided_slice %0 {offsets = [1, 4, 0], sizes = [1, 8, 32], strides = [1, 1, 1]} : vector<2x12x32xf32> to vector<1x8x32xf32>
    %66 = vector.shape_cast %65 : vector<1x8x32xf32> to vector<8x32xf32>
    %c4_41 = arith.constant 4 : index
    %c0_42 = arith.constant 0 : index
    %c0_43 = arith.constant 0 : index
    %67 = vector.load %arg2[%c4_41, %c0_42, %c0_43] : memref<5x32x32xf32, #tpu.memory_space<vmem>>, vector<1x32x32xf32>
    %68 = vector.shape_cast %67 : vector<1x32x32xf32> to vector<32x32xf32>
    %cst_44 = arith.constant dense<0.000000e+00> : vector<8x32xf32>
    %69 = tpu.matmul %66, %68, %cst_44 {dimension_numbers = #tpu.dot_dimension_numbers<[1], [0], [0], [1], [0, 0, 1, 1], [], []>} : vector<8x32xf32>, vector<32x32xf32>, vector<8x32xf32> -> vector<8x32xf32>
    %70 = arith.addf %64, %69 : vector<8x32xf32>
    %71 = vector.broadcast %1 : vector<1x32xf32> to vector<8x32xf32>
    %72 = arith.addf %70, %71 : vector<8x32xf32>
    %cst_45 = arith.constant 0.000000e+00 : f32
    %73 = vector.broadcast %cst_45 : f32 to vector<8x32xf32>
    %74 = arith.maximumf %72, %73 : vector<8x32xf32>
    %c1_46 = arith.constant 1 : index
    %c0_47 = arith.constant 0 : index
    %c0_48 = arith.constant 0 : index
    %75 = vector.load %arg4[%c1_46, %c0_47, %c0_48] : memref<2x8x32xf32, #tpu.memory_space<vmem>>, vector<1x8x32xf32>
    %76 = vector.shape_cast %75 : vector<1x8x32xf32> to vector<8x32xf32>
    %77 = vector.shape_cast %74 : vector<8x32xf32> to vector<1x8x32xf32>
    tpu.vector_store %arg4[%c1_46, %c0_47, %c0_48], %77 {strides = array<i32>} : memref<2x8x32xf32, #tpu.memory_space<vmem>>, vector<1x8x32xf32>,
    return
  }
  func.func @transform_0(%arg0: i32) -> (i32, i32, i32) {
    %c0_i32 = arith.constant 0 : i32
    %c0_i32_0 = arith.constant 0 : i32
    %c0_i32_1 = arith.constant 0 : i32
    %c0_i32_2 = arith.constant 0 : i32
    return %c0_i32, %c0_i32_0, %c0_i32_1 : i32, i32, i32
  }
  func.func @transform_1(%arg0: i32) -> (i32, i32, i32) {
    %c0_i32 = arith.constant 0 : i32
    %c0_i32_0 = arith.constant 0 : i32
    %c0_i32_1 = arith.constant 0 : i32
    %c0_i32_2 = arith.constant 0 : i32
    return %c0_i32, %c0_i32_0, %c0_i32_1 : i32, i32, i32
  }
  func.func @transform_2(%arg0: i32) -> (i32, i32) {
    %c0_i32 = arith.constant 0 : i32
    %c0_i32_0 = arith.constant 0 : i32
    %c0_i32_1 = arith.constant 0 : i32
    return %c0_i32, %c0_i32_0 : i32, i32
  }
  func.func @transform_3(%arg0: i32) -> (i32, i32, i32) {
    %c0_i32 = arith.constant 0 : i32
    %c0_i32_0 = arith.constant 0 : i32
    %c0_i32_1 = arith.constant 0 : i32
    %c0_i32_2 = arith.constant 0 : i32
    return %c0_i32, %c0_i32_0, %c0_i32_1 : i32, i32, i32
  }
}

module attributes {stable_mosaic.version = 11 : i64} {
  func.func @_bilstm_kernel(%arg0: i32, %arg1: memref<8x2x32xf32, #tpu.memory_space<vmem>>, %arg2: memref<8x2x1xf32, #tpu.memory_space<vmem>>, %arg3: memref<48x64xf32, #tpu.memory_space<vmem>>, %arg4: memref<1x64xf32, #tpu.memory_space<vmem>>, %arg5: memref<48x64xf32, #tpu.memory_space<vmem>>, %arg6: memref<1x64xf32, #tpu.memory_space<vmem>>, %arg7: memref<8x2x32xf32, #tpu.memory_space<vmem>>, %arg8: memref<2x16xf32, #tpu.memory_space<vmem>>, %arg9: memref<2x16xf32, #tpu.memory_space<vmem>>, %arg10: memref<2x16xf32, #tpu.memory_space<vmem>>, %arg11: memref<2x16xf32, #tpu.memory_space<vmem>>) attributes {dimension_semantics = [#tpu.dimension_semantics<arbitrary>], iteration_bounds = array<i64: 1>, scalar_prefetch = 0 : i64, scratch_operands = 4 : i64, tpu.core_type = #tpu.core_type<tc>, window_params = [{pipeline_mode = #tpu.pipeline_mode<synchronous>, transform_indices = @transform_0, window_bounds = array<i64: 8, 2, 32>}, {pipeline_mode = #tpu.pipeline_mode<synchronous>, transform_indices = @transform_1, window_bounds = array<i64: 8, 2, 1>}, {pipeline_mode = #tpu.pipeline_mode<synchronous>, transform_indices = @transform_2, window_bounds = array<i64: 48, 64>}, {pipeline_mode = #tpu.pipeline_mode<synchronous>, transform_indices = @transform_3, window_bounds = array<i64: 1, 64>}, {pipeline_mode = #tpu.pipeline_mode<synchronous>, transform_indices = @transform_4, window_bounds = array<i64: 48, 64>}, {pipeline_mode = #tpu.pipeline_mode<synchronous>, transform_indices = @transform_5, window_bounds = array<i64: 1, 64>}, {pipeline_mode = #tpu.pipeline_mode<synchronous>, transform_indices = @transform_6, window_bounds = array<i64: 8, 2, 32>}]} {
    %c0 = arith.constant 0 : index
    %c0_0 = arith.constant 0 : index
    %0 = vector.load %arg3[%c0, %c0_0] : memref<48x64xf32, #tpu.memory_space<vmem>>, vector<48x64xf32>
    %c0_1 = arith.constant 0 : index
    %c0_2 = arith.constant 0 : index
    %1 = vector.load %arg4[%c0_1, %c0_2] : memref<1x64xf32, #tpu.memory_space<vmem>>, vector<1x64xf32>
    %c0_3 = arith.constant 0 : index
    %c0_4 = arith.constant 0 : index
    %2 = vector.load %arg5[%c0_3, %c0_4] : memref<48x64xf32, #tpu.memory_space<vmem>>, vector<48x64xf32>
    %c0_5 = arith.constant 0 : index
    %c0_6 = arith.constant 0 : index
    %3 = vector.load %arg6[%c0_5, %c0_6] : memref<1x64xf32, #tpu.memory_space<vmem>>, vector<1x64xf32>
    %cst = arith.constant 0.000000e+00 : f32
    %4 = vector.broadcast %cst : f32 to vector<2x16xf32>
    %c0_7 = arith.constant 0 : index
    %c0_8 = arith.constant 0 : index
    %5 = vector.load %arg8[%c0_7, %c0_8] : memref<2x16xf32, #tpu.memory_space<vmem>>, vector<2x16xf32>
    tpu.vector_store %arg8[%c0_7, %c0_8], %4 {strides = array<i32>} : memref<2x16xf32, #tpu.memory_space<vmem>>, vector<2x16xf32>,
    %cst_9 = arith.constant 0.000000e+00 : f32
    %6 = vector.broadcast %cst_9 : f32 to vector<2x16xf32>
    %c0_10 = arith.constant 0 : index
    %c0_11 = arith.constant 0 : index
    %7 = vector.load %arg9[%c0_10, %c0_11] : memref<2x16xf32, #tpu.memory_space<vmem>>, vector<2x16xf32>
    tpu.vector_store %arg9[%c0_10, %c0_11], %6 {strides = array<i32>} : memref<2x16xf32, #tpu.memory_space<vmem>>, vector<2x16xf32>,
    %cst_12 = arith.constant 0.000000e+00 : f32
    %8 = vector.broadcast %cst_12 : f32 to vector<2x16xf32>
    %c0_13 = arith.constant 0 : index
    %c0_14 = arith.constant 0 : index
    %9 = vector.load %arg10[%c0_13, %c0_14] : memref<2x16xf32, #tpu.memory_space<vmem>>, vector<2x16xf32>
    tpu.vector_store %arg10[%c0_13, %c0_14], %8 {strides = array<i32>} : memref<2x16xf32, #tpu.memory_space<vmem>>, vector<2x16xf32>,
    %cst_15 = arith.constant 0.000000e+00 : f32
    %10 = vector.broadcast %cst_15 : f32 to vector<2x16xf32>
    %c0_16 = arith.constant 0 : index
    %c0_17 = arith.constant 0 : index
    %11 = vector.load %arg11[%c0_16, %c0_17] : memref<2x16xf32, #tpu.memory_space<vmem>>, vector<2x16xf32>
    tpu.vector_store %arg11[%c0_16, %c0_17], %10 {strides = array<i32>} : memref<2x16xf32, #tpu.memory_space<vmem>>, vector<2x16xf32>,
    %c0_i32 = arith.constant 0 : i32
    %c8_i32 = arith.constant 8 : i32
    %12 = arith.addi %c0_i32, %c8_i32 : i32
    %c1_i32 = arith.constant 1 : i32
    scf.for %arg12 = %c0_i32 to %12 step %c1_i32  : i32 {
      %c1_i32_19 = arith.constant 1 : i32
      %13 = arith.muli %arg12, %c1_i32_19 : i32
      %c0_i32_20 = arith.constant 0 : i32
      %14 = arith.addi %c0_i32_20, %13 : i32
      %c7_i32 = arith.constant 7 : i32
      %15 = arith.subi %c7_i32, %14 : i32
      %16 = arith.index_cast %14 : i32 to index
      %c0_21 = arith.constant 0 : index
      %c0_22 = arith.constant 0 : index
      %17 = vector.load %arg2[%16, %c0_21, %c0_22] : memref<8x2x1xf32, #tpu.memory_space<vmem>>, vector<1x2x1xf32>
      %18 = vector.shape_cast %17 : vector<1x2x1xf32> to vector<2x1xf32>
      %19 = arith.index_cast %15 : i32 to index
      %c0_23 = arith.constant 0 : index
      %c0_24 = arith.constant 0 : index
      %20 = vector.load %arg2[%19, %c0_23, %c0_24] : memref<8x2x1xf32, #tpu.memory_space<vmem>>, vector<1x2x1xf32>
      %21 = vector.shape_cast %20 : vector<1x2x1xf32> to vector<2x1xf32>
      %c0_25 = arith.constant 0 : index
      %c0_26 = arith.constant 0 : index
      %22 = vector.load %arg8[%c0_25, %c0_26] : memref<2x16xf32, #tpu.memory_space<vmem>>, vector<2x16xf32>
      %c0_27 = arith.constant 0 : index
      %c0_28 = arith.constant 0 : index
      %23 = vector.load %arg9[%c0_27, %c0_28] : memref<2x16xf32, #tpu.memory_space<vmem>>, vector<2x16xf32>
      %c0_29 = arith.constant 0 : index
      %c0_30 = arith.constant 0 : index
      %24 = vector.load %arg10[%c0_29, %c0_30] : memref<2x16xf32, #tpu.memory_space<vmem>>, vector<2x16xf32>
      %c0_31 = arith.constant 0 : index
      %c0_32 = arith.constant 0 : index
      %25 = vector.load %arg11[%c0_31, %c0_32] : memref<2x16xf32, #tpu.memory_space<vmem>>, vector<2x16xf32>
      %26 = arith.index_cast %14 : i32 to index
      %c0_33 = arith.constant 0 : index
      %c0_34 = arith.constant 0 : index
      %27 = vector.load %arg1[%26, %c0_33, %c0_34] : memref<8x2x32xf32, #tpu.memory_space<vmem>>, vector<1x2x32xf32>
      %28 = vector.shape_cast %27 : vector<1x2x32xf32> to vector<2x32xf32>
      %29 = tpu.concatenate %28, %22 in 1 : vector<2x32xf32>, vector<2x16xf32> -> vector<2x48xf32>
      %cst_35 = arith.constant dense<0.000000e+00> : vector<2x64xf32>
      %30 = tpu.matmul %29, %0, %cst_35 {dimension_numbers = #tpu.dot_dimension_numbers<[1], [0], [0], [1], [0, 0, 1, 1], [], []>} : vector<2x48xf32>, vector<48x64xf32>, vector<2x64xf32> -> vector<2x64xf32>
      %31 = vector.broadcast %1 : vector<1x64xf32> to vector<2x64xf32>
      %32 = arith.addf %30, %31 : vector<2x64xf32>
      %33 = arith.index_cast %15 : i32 to index
      %c0_36 = arith.constant 0 : index
      %c0_37 = arith.constant 0 : index
      %34 = vector.load %arg1[%33, %c0_36, %c0_37] : memref<8x2x32xf32, #tpu.memory_space<vmem>>, vector<1x2x32xf32>
      %35 = vector.shape_cast %34 : vector<1x2x32xf32> to vector<2x32xf32>
      %36 = tpu.concatenate %35, %24 in 1 : vector<2x32xf32>, vector<2x16xf32> -> vector<2x48xf32>
      %cst_38 = arith.constant dense<0.000000e+00> : vector<2x64xf32>
      %37 = tpu.matmul %36, %2, %cst_38 {dimension_numbers = #tpu.dot_dimension_numbers<[1], [0], [0], [1], [0, 0, 1, 1], [], []>} : vector<2x48xf32>, vector<48x64xf32>, vector<2x64xf32> -> vector<2x64xf32>
      %38 = vector.broadcast %3 : vector<1x64xf32> to vector<2x64xf32>
      %39 = arith.addf %37, %38 : vector<2x64xf32>
      %40 = vector.extract_strided_slice %32 {offsets = [0, 0], sizes = [2, 16], strides = [1, 1]} : vector<2x64xf32> to vector<2x16xf32>
      %41 = arith.negf %40 : vector<2x16xf32>
      %42 = math.exp %41 : vector<2x16xf32>
      %cst_39 = arith.constant 1.000000e+00 : f32
      %43 = vector.broadcast %cst_39 : f32 to vector<2x16xf32>
      %44 = arith.addf %43, %42 : vector<2x16xf32>
      %45 = arith.divf %43, %44 : vector<2x16xf32>
      %46 = vector.extract_strided_slice %32 {offsets = [0, 16], sizes = [2, 16], strides = [1, 1]} : vector<2x64xf32> to vector<2x16xf32>
      %47 = arith.negf %46 : vector<2x16xf32>
      %48 = math.exp %47 : vector<2x16xf32>
      %cst_40 = arith.constant 1.000000e+00 : f32
      %49 = vector.broadcast %cst_40 : f32 to vector<2x16xf32>
      %50 = arith.addf %49, %48 : vector<2x16xf32>
      %51 = arith.divf %49, %50 : vector<2x16xf32>
      %52 = vector.extract_strided_slice %32 {offsets = [0, 32], sizes = [2, 16], strides = [1, 1]} : vector<2x64xf32> to vector<2x16xf32>
      %53 = math.tanh %52 : vector<2x16xf32>
      %54 = vector.extract_strided_slice %32 {offsets = [0, 48], sizes = [2, 16], strides = [1, 1]} : vector<2x64xf32> to vector<2x16xf32>
      %55 = arith.negf %54 : vector<2x16xf32>
      %56 = math.exp %55 : vector<2x16xf32>
      %cst_41 = arith.constant 1.000000e+00 : f32
      %57 = vector.broadcast %cst_41 : f32 to vector<2x16xf32>
      %58 = arith.addf %57, %56 : vector<2x16xf32>
      %59 = arith.divf %57, %58 : vector<2x16xf32>
      %60 = arith.mulf %51, %23 : vector<2x16xf32>
      %61 = arith.mulf %45, %53 : vector<2x16xf32>
      %62 = arith.addf %60, %61 : vector<2x16xf32>
      %63 = math.tanh %62 : vector<2x16xf32>
      %64 = arith.mulf %59, %63 : vector<2x16xf32>
      %65 = vector.extract_strided_slice %39 {offsets = [0, 0], sizes = [2, 16], strides = [1, 1]} : vector<2x64xf32> to vector<2x16xf32>
      %66 = arith.negf %65 : vector<2x16xf32>
      %67 = math.exp %66 : vector<2x16xf32>
      %cst_42 = arith.constant 1.000000e+00 : f32
      %68 = vector.broadcast %cst_42 : f32 to vector<2x16xf32>
      %69 = arith.addf %68, %67 : vector<2x16xf32>
      %70 = arith.divf %68, %69 : vector<2x16xf32>
      %71 = vector.extract_strided_slice %39 {offsets = [0, 16], sizes = [2, 16], strides = [1, 1]} : vector<2x64xf32> to vector<2x16xf32>
      %72 = arith.negf %71 : vector<2x16xf32>
      %73 = math.exp %72 : vector<2x16xf32>
      %cst_43 = arith.constant 1.000000e+00 : f32
      %74 = vector.broadcast %cst_43 : f32 to vector<2x16xf32>
      %75 = arith.addf %74, %73 : vector<2x16xf32>
      %76 = arith.divf %74, %75 : vector<2x16xf32>
      %77 = vector.extract_strided_slice %39 {offsets = [0, 32], sizes = [2, 16], strides = [1, 1]} : vector<2x64xf32> to vector<2x16xf32>
      %78 = math.tanh %77 : vector<2x16xf32>
      %79 = vector.extract_strided_slice %39 {offsets = [0, 48], sizes = [2, 16], strides = [1, 1]} : vector<2x64xf32> to vector<2x16xf32>
      %80 = arith.negf %79 : vector<2x16xf32>
      %81 = math.exp %80 : vector<2x16xf32>
      %cst_44 = arith.constant 1.000000e+00 : f32
      %82 = vector.broadcast %cst_44 : f32 to vector<2x16xf32>
      %83 = arith.addf %82, %81 : vector<2x16xf32>
      %84 = arith.divf %82, %83 : vector<2x16xf32>
      %85 = arith.mulf %76, %25 : vector<2x16xf32>
      %86 = arith.mulf %70, %78 : vector<2x16xf32>
      %87 = arith.addf %85, %86 : vector<2x16xf32>
      %88 = math.tanh %87 : vector<2x16xf32>
      %89 = arith.mulf %84, %88 : vector<2x16xf32>
      %90 = vector.broadcast %18 : vector<2x1xf32> to vector<2x16xf32>
      %91 = arith.mulf %90, %64 : vector<2x16xf32>
      %cst_45 = arith.constant 1.000000e+00 : f32
      %92 = vector.broadcast %cst_45 : f32 to vector<2x1xf32>
      %93 = arith.subf %92, %18 : vector<2x1xf32>
      %94 = vector.broadcast %93 : vector<2x1xf32> to vector<2x16xf32>
      %95 = arith.mulf %94, %22 : vector<2x16xf32>
      %96 = arith.addf %91, %95 : vector<2x16xf32>
      %97 = vector.broadcast %18 : vector<2x1xf32> to vector<2x16xf32>
      %98 = arith.mulf %97, %62 : vector<2x16xf32>
      %cst_46 = arith.constant 1.000000e+00 : f32
      %99 = vector.broadcast %cst_46 : f32 to vector<2x1xf32>
      %100 = arith.subf %99, %18 : vector<2x1xf32>
      %101 = vector.broadcast %100 : vector<2x1xf32> to vector<2x16xf32>
      %102 = arith.mulf %101, %23 : vector<2x16xf32>
      %103 = arith.addf %98, %102 : vector<2x16xf32>
      %104 = vector.broadcast %21 : vector<2x1xf32> to vector<2x16xf32>
      %105 = arith.mulf %104, %89 : vector<2x16xf32>
      %cst_47 = arith.constant 1.000000e+00 : f32
      %106 = vector.broadcast %cst_47 : f32 to vector<2x1xf32>
      %107 = arith.subf %106, %21 : vector<2x1xf32>
      %108 = vector.broadcast %107 : vector<2x1xf32> to vector<2x16xf32>
      %109 = arith.mulf %108, %24 : vector<2x16xf32>
      %110 = arith.addf %105, %109 : vector<2x16xf32>
      %111 = vector.broadcast %21 : vector<2x1xf32> to vector<2x16xf32>
      %112 = arith.mulf %111, %87 : vector<2x16xf32>
      %cst_48 = arith.constant 1.000000e+00 : f32
      %113 = vector.broadcast %cst_48 : f32 to vector<2x1xf32>
      %114 = arith.subf %113, %21 : vector<2x1xf32>
      %115 = vector.broadcast %114 : vector<2x1xf32> to vector<2x16xf32>
      %116 = arith.mulf %115, %25 : vector<2x16xf32>
      %117 = arith.addf %112, %116 : vector<2x16xf32>
      %c0_49 = arith.constant 0 : index
      %c0_50 = arith.constant 0 : index
      %118 = vector.load %arg8[%c0_49, %c0_50] : memref<2x16xf32, #tpu.memory_space<vmem>>, vector<2x16xf32>
      tpu.vector_store %arg8[%c0_49, %c0_50], %96 {strides = array<i32>} : memref<2x16xf32, #tpu.memory_space<vmem>>, vector<2x16xf32>,
      %c0_51 = arith.constant 0 : index
      %c0_52 = arith.constant 0 : index
      %119 = vector.load %arg9[%c0_51, %c0_52] : memref<2x16xf32, #tpu.memory_space<vmem>>, vector<2x16xf32>
      tpu.vector_store %arg9[%c0_51, %c0_52], %103 {strides = array<i32>} : memref<2x16xf32, #tpu.memory_space<vmem>>, vector<2x16xf32>,
      %c0_53 = arith.constant 0 : index
      %c0_54 = arith.constant 0 : index
      %120 = vector.load %arg10[%c0_53, %c0_54] : memref<2x16xf32, #tpu.memory_space<vmem>>, vector<2x16xf32>
      tpu.vector_store %arg10[%c0_53, %c0_54], %110 {strides = array<i32>} : memref<2x16xf32, #tpu.memory_space<vmem>>, vector<2x16xf32>,
      %c0_55 = arith.constant 0 : index
      %c0_56 = arith.constant 0 : index
      %121 = vector.load %arg11[%c0_55, %c0_56] : memref<2x16xf32, #tpu.memory_space<vmem>>, vector<2x16xf32>
      tpu.vector_store %arg11[%c0_55, %c0_56], %117 {strides = array<i32>} : memref<2x16xf32, #tpu.memory_space<vmem>>, vector<2x16xf32>,
      %122 = vector.broadcast %18 : vector<2x1xf32> to vector<2x16xf32>
      %123 = arith.mulf %122, %96 : vector<2x16xf32>
      %124 = arith.index_cast %14 : i32 to index
      %c0_57 = arith.constant 0 : index
      %c0_58 = arith.constant 0 : index
      %125 = vector.load %arg7[%124, %c0_57, %c0_58] : memref<8x2x32xf32, #tpu.memory_space<vmem>>, vector<1x2x16xf32>
      %126 = vector.shape_cast %125 : vector<1x2x16xf32> to vector<2x16xf32>
      %127 = vector.shape_cast %123 : vector<2x16xf32> to vector<1x2x16xf32>
      tpu.vector_store %arg7[%124, %c0_57, %c0_58], %127 {strides = array<i32>} : memref<8x2x32xf32, #tpu.memory_space<vmem>>, vector<1x2x16xf32>,
      %128 = vector.broadcast %21 : vector<2x1xf32> to vector<2x16xf32>
      %129 = arith.mulf %128, %110 : vector<2x16xf32>
      %130 = arith.index_cast %15 : i32 to index
      %c0_59 = arith.constant 0 : index
      %c16 = arith.constant 16 : index
      %131 = vector.load %arg7[%130, %c0_59, %c16] : memref<8x2x32xf32, #tpu.memory_space<vmem>>, vector<1x2x16xf32>
      %132 = vector.shape_cast %131 : vector<1x2x16xf32> to vector<2x16xf32>
      %133 = vector.shape_cast %129 : vector<2x16xf32> to vector<1x2x16xf32>
      tpu.vector_store %arg7[%130, %c0_59, %c16], %133 {strides = array<i32>} : memref<8x2x32xf32, #tpu.memory_space<vmem>>, vector<1x2x16xf32>,
    }
    %c8_i32_18 = arith.constant 8 : i32
    return
  }
  func.func @transform_0(%arg0: i32) -> (i32, i32, i32) {
    %c0_i32 = arith.constant 0 : i32
    %c0_i32_0 = arith.constant 0 : i32
    %c0_i32_1 = arith.constant 0 : i32
    %c0_i32_2 = arith.constant 0 : i32
    return %c0_i32, %c0_i32_0, %c0_i32_1 : i32, i32, i32
  }
  func.func @transform_1(%arg0: i32) -> (i32, i32, i32) {
    %c0_i32 = arith.constant 0 : i32
    %c0_i32_0 = arith.constant 0 : i32
    %c0_i32_1 = arith.constant 0 : i32
    %c0_i32_2 = arith.constant 0 : i32
    return %c0_i32, %c0_i32_0, %c0_i32_1 : i32, i32, i32
  }
  func.func @transform_2(%arg0: i32) -> (i32, i32) {
    %c0_i32 = arith.constant 0 : i32
    %c0_i32_0 = arith.constant 0 : i32
    %c0_i32_1 = arith.constant 0 : i32
    return %c0_i32, %c0_i32_0 : i32, i32
  }
  func.func @transform_3(%arg0: i32) -> (i32, i32) {
    %c0_i32 = arith.constant 0 : i32
    %c0_i32_0 = arith.constant 0 : i32
    %c0_i32_1 = arith.constant 0 : i32
    return %c0_i32, %c0_i32_0 : i32, i32
  }
  func.func @transform_4(%arg0: i32) -> (i32, i32) {
    %c0_i32 = arith.constant 0 : i32
    %c0_i32_0 = arith.constant 0 : i32
    %c0_i32_1 = arith.constant 0 : i32
    return %c0_i32, %c0_i32_0 : i32, i32
  }
  func.func @transform_5(%arg0: i32) -> (i32, i32) {
    %c0_i32 = arith.constant 0 : i32
    %c0_i32_0 = arith.constant 0 : i32
    %c0_i32_1 = arith.constant 0 : i32
    return %c0_i32, %c0_i32_0 : i32, i32
  }
  func.func @transform_6(%arg0: i32) -> (i32, i32, i32) {
    %c0_i32 = arith.constant 0 : i32
    %c0_i32_0 = arith.constant 0 : i32
    %c0_i32_1 = arith.constant 0 : i32
    %c0_i32_2 = arith.constant 0 : i32
    return %c0_i32, %c0_i32_0, %c0_i32_1 : i32, i32, i32
  }
}

module attributes {stable_mosaic.version = 11 : i64} {
  func.func @_mm_bias_act_kernel(%arg0: i32, %arg1: memref<16x32xf32, #tpu.memory_space<vmem>>, %arg2: memref<32x16xf32, #tpu.memory_space<vmem>>, %arg3: memref<1x16xf32, #tpu.memory_space<vmem>>, %arg4: memref<16x16xf32, #tpu.memory_space<vmem>>) attributes {dimension_semantics = [#tpu.dimension_semantics<parallel>], iteration_bounds = array<i64: 1>, scalar_prefetch = 0 : i64, scratch_operands = 0 : i64, tpu.core_type = #tpu.core_type<tc>, window_params = [{transform_indices = @transform_0, window_bounds = array<i64: 16, 32>}, {pipeline_mode = #tpu.pipeline_mode<synchronous>, transform_indices = @transform_1, window_bounds = array<i64: 32, 16>}, {pipeline_mode = #tpu.pipeline_mode<synchronous>, transform_indices = @transform_2, window_bounds = array<i64: 1, 16>}, {transform_indices = @transform_3, window_bounds = array<i64: 16, 16>}]} {
    %c0 = arith.constant 0 : index
    %c0_0 = arith.constant 0 : index
    %0 = vector.load %arg1[%c0, %c0_0] : memref<16x32xf32, #tpu.memory_space<vmem>>, vector<16x32xf32>
    %c0_1 = arith.constant 0 : index
    %c0_2 = arith.constant 0 : index
    %1 = vector.load %arg2[%c0_1, %c0_2] : memref<32x16xf32, #tpu.memory_space<vmem>>, vector<32x16xf32>
    %cst = arith.constant dense<0.000000e+00> : vector<16x16xf32>
    %2 = tpu.matmul %0, %1, %cst {dimension_numbers = #tpu.dot_dimension_numbers<[1], [0], [0], [1], [0, 0, 1, 1], [], []>} : vector<16x32xf32>, vector<32x16xf32>, vector<16x16xf32> -> vector<16x16xf32>
    %c0_3 = arith.constant 0 : index
    %c0_4 = arith.constant 0 : index
    %3 = vector.load %arg3[%c0_3, %c0_4] : memref<1x16xf32, #tpu.memory_space<vmem>>, vector<1x16xf32>
    %4 = vector.broadcast %3 : vector<1x16xf32> to vector<16x16xf32>
    %5 = arith.addf %2, %4 : vector<16x16xf32>
    %c0_5 = arith.constant 0 : index
    %c0_6 = arith.constant 0 : index
    %6 = vector.load %arg4[%c0_5, %c0_6] : memref<16x16xf32, #tpu.memory_space<vmem>>, vector<16x16xf32>
    tpu.vector_store %arg4[%c0_5, %c0_6], %5 {strides = array<i32>} : memref<16x16xf32, #tpu.memory_space<vmem>>, vector<16x16xf32>,
    return
  }
  func.func @transform_0(%arg0: i32) -> (i32, i32) {
    %c0_i32 = arith.constant 0 : i32
    %c0_i32_0 = arith.constant 0 : i32
    return %arg0, %c0_i32 : i32, i32
  }
  func.func @transform_1(%arg0: i32) -> (i32, i32) {
    %c0_i32 = arith.constant 0 : i32
    %c0_i32_0 = arith.constant 0 : i32
    %c0_i32_1 = arith.constant 0 : i32
    return %c0_i32, %c0_i32_0 : i32, i32
  }
  func.func @transform_2(%arg0: i32) -> (i32, i32) {
    %c0_i32 = arith.constant 0 : i32
    %c0_i32_0 = arith.constant 0 : i32
    %c0_i32_1 = arith.constant 0 : i32
    return %c0_i32, %c0_i32_0 : i32, i32
  }
  func.func @transform_3(%arg0: i32) -> (i32, i32) {
    %c0_i32 = arith.constant 0 : i32
    %c0_i32_0 = arith.constant 0 : i32
    return %arg0, %c0_i32 : i32, i32
  }
}

module attributes {stable_mosaic.version = 11 : i64} {
  func.func @_prenet_kernel(%arg0: i32, %arg1: memref<16x8xf32, #tpu.memory_space<vmem>>, %arg2: memref<8x16xf32, #tpu.memory_space<vmem>>, %arg3: memref<16x16xf32, #tpu.memory_space<vmem>>, %arg4: memref<16x16xf32, #tpu.memory_space<vmem>>) attributes {dimension_semantics = [#tpu.dimension_semantics<arbitrary>], iteration_bounds = array<i64: 1>, scalar_prefetch = 0 : i64, scratch_operands = 0 : i64, tpu.core_type = #tpu.core_type<tc>, window_params = [{pipeline_mode = #tpu.pipeline_mode<synchronous>, transform_indices = @transform_0, window_bounds = array<i64: 16, 8>}, {pipeline_mode = #tpu.pipeline_mode<synchronous>, transform_indices = @transform_1, window_bounds = array<i64: 8, 16>}, {pipeline_mode = #tpu.pipeline_mode<synchronous>, transform_indices = @transform_2, window_bounds = array<i64: 16, 16>}, {pipeline_mode = #tpu.pipeline_mode<synchronous>, transform_indices = @transform_3, window_bounds = array<i64: 16, 16>}]} {
    %c0 = arith.constant 0 : index
    %c0_0 = arith.constant 0 : index
    %0 = vector.load %arg1[%c0, %c0_0] : memref<16x8xf32, #tpu.memory_space<vmem>>, vector<16x8xf32>
    %c0_1 = arith.constant 0 : index
    %c0_2 = arith.constant 0 : index
    %1 = vector.load %arg2[%c0_1, %c0_2] : memref<8x16xf32, #tpu.memory_space<vmem>>, vector<8x16xf32>
    %cst = arith.constant dense<0.000000e+00> : vector<16x16xf32>
    %2 = tpu.matmul %0, %1, %cst {dimension_numbers = #tpu.dot_dimension_numbers<[1], [0], [0], [1], [0, 0, 1, 1], [], []>} : vector<16x8xf32>, vector<8x16xf32>, vector<16x16xf32> -> vector<16x16xf32>
    %cst_3 = arith.constant 0.000000e+00 : f32
    %3 = vector.broadcast %cst_3 : f32 to vector<16x16xf32>
    %4 = arith.maximumf %2, %3 : vector<16x16xf32>
    %c0_4 = arith.constant 0 : index
    %c0_5 = arith.constant 0 : index
    %5 = vector.load %arg3[%c0_4, %c0_5] : memref<16x16xf32, #tpu.memory_space<vmem>>, vector<16x16xf32>
    %cst_6 = arith.constant dense<0.000000e+00> : vector<16x16xf32>
    %6 = tpu.matmul %4, %5, %cst_6 {dimension_numbers = #tpu.dot_dimension_numbers<[1], [0], [0], [1], [0, 0, 1, 1], [], []>} : vector<16x16xf32>, vector<16x16xf32>, vector<16x16xf32> -> vector<16x16xf32>
    %cst_7 = arith.constant 0.000000e+00 : f32
    %7 = vector.broadcast %cst_7 : f32 to vector<16x16xf32>
    %8 = arith.maximumf %6, %7 : vector<16x16xf32>
    %c0_8 = arith.constant 0 : index
    %c0_9 = arith.constant 0 : index
    %9 = vector.load %arg4[%c0_8, %c0_9] : memref<16x16xf32, #tpu.memory_space<vmem>>, vector<16x16xf32>
    tpu.vector_store %arg4[%c0_8, %c0_9], %8 {strides = array<i32>} : memref<16x16xf32, #tpu.memory_space<vmem>>, vector<16x16xf32>,
    return
  }
  func.func @transform_0(%arg0: i32) -> (i32, i32) {
    %c0_i32 = arith.constant 0 : i32
    %c0_i32_0 = arith.constant 0 : i32
    %c0_i32_1 = arith.constant 0 : i32
    return %c0_i32, %c0_i32_0 : i32, i32
  }
  func.func @transform_1(%arg0: i32) -> (i32, i32) {
    %c0_i32 = arith.constant 0 : i32
    %c0_i32_0 = arith.constant 0 : i32
    %c0_i32_1 = arith.constant 0 : i32
    return %c0_i32, %c0_i32_0 : i32, i32
  }
  func.func @transform_2(%arg0: i32) -> (i32, i32) {
    %c0_i32 = arith.constant 0 : i32
    %c0_i32_0 = arith.constant 0 : i32
    %c0_i32_1 = arith.constant 0 : i32
    return %c0_i32, %c0_i32_0 : i32, i32
  }
  func.func @transform_3(%arg0: i32) -> (i32, i32) {
    %c0_i32 = arith.constant 0 : i32
    %c0_i32_0 = arith.constant 0 : i32
    %c0_i32_1 = arith.constant 0 : i32
    return %c0_i32, %c0_i32_0 : i32, i32
  }
}

module attributes {stable_mosaic.version = 11 : i64} {
  func.func @_decoder_kernel(%arg0: i32, %arg1: memref<8x2x16xf32, #tpu.memory_space<vmem>>, %arg2: memref<2x8x32xf32, #tpu.memory_space<vmem>>, %arg3: memref<2x8x16xf32, #tpu.memory_space<vmem>>, %arg4: memref<2x8xf32, #tpu.memory_space<vmem>>, %arg5: memref<80x128xf32, #tpu.memory_space<vmem>>, %arg6: memref<1x128xf32, #tpu.memory_space<vmem>>, %arg7: memref<32x16xf32, #tpu.memory_space<vmem>>, %arg8: memref<2x5x16xf32, #tpu.memory_space<vmem>>, %arg9: memref<1x16xf32, #tpu.memory_space<vmem>>, %arg10: memref<96x128xf32, #tpu.memory_space<vmem>>, %arg11: memref<1x128xf32, #tpu.memory_space<vmem>>, %arg12: memref<64x9xf32, #tpu.memory_space<vmem>>, %arg13: memref<1x9xf32, #tpu.memory_space<vmem>>, %arg14: memref<8x2x9xf32, #tpu.memory_space<vmem>>, %arg15: memref<8x2x8xf32, #tpu.memory_space<vmem>>, %arg16: memref<2x32xf32, #tpu.memory_space<vmem>>, %arg17: memref<2x32xf32, #tpu.memory_space<vmem>>, %arg18: memref<2x32xf32, #tpu.memory_space<vmem>>, %arg19: memref<2x32xf32, #tpu.memory_space<vmem>>, %arg20: memref<2x8xf32, #tpu.memory_space<vmem>>, %arg21: memref<2x8xf32, #tpu.memory_space<vmem>>, %arg22: memref<2x32xf32, #tpu.memory_space<vmem>>) attributes {dimension_semantics = [#tpu.dimension_semantics<arbitrary>], iteration_bounds = array<i64: 1>, scalar_prefetch = 0 : i64, scratch_operands = 7 : i64, tpu.core_type = #tpu.core_type<tc>, window_params = [{transform_indices = @transform_0, window_bounds = array<i64: 8, 2, 16>}, {pipeline_mode = #tpu.pipeline_mode<synchronous>, transform_indices = @transform_1, window_bounds = array<i64: 2, 8, 32>}, {pipeline_mode = #tpu.pipeline_mode<synchronous>, transform_indices = @transform_2, window_bounds = array<i64: 2, 8, 16>}, {pipeline_mode = #tpu.pipeline_mode<synchronous>, transform_indices = @transform_3, window_bounds = array<i64: 2, 8>}, {pipeline_mode = #tpu.pipeline_mode<synchronous>, transform_indices = @transform_4, window_bounds = array<i64: 80, 128>}, {pipeline_mode = #tpu.pipeline_mode<synchronous>, transform_indices = @transform_5, window_bounds = array<i64: 1, 128>}, {pipeline_mode = #tpu.pipeline_mode<synchronous>, transform_indices = @transform_6, window_bounds = array<i64: 32, 16>}, {pipeline_mode = #tpu.pipeline_mode<synchronous>, transform_indices = @transform_7, window_bounds = array<i64: 2, 5, 16>}, {pipeline_mode = #tpu.pipeline_mode<synchronous>, transform_indices = @transform_8, window_bounds = array<i64: 1, 16>}, {pipeline_mode = #tpu.pipeline_mode<synchronous>, transform_indices = @transform_9, window_bounds = array<i64: 96, 128>}, {pipeline_mode = #tpu.pipeline_mode<synchronous>, transform_indices = @transform_10, window_bounds = array<i64: 1, 128>}, {pipeline_mode = #tpu.pipeline_mode<synchronous>, transform_indices = @transform_11, window_bounds = array<i64: 64, 9>}, {pipeline_mode = #tpu.pipeline_mode<synchronous>, transform_indices = @transform_12, window_bounds = array<i64: 1, 9>}, {transform_indices = @transform_13, window_bounds = array<i64: 8, 2, 9>}, {transform_indices = @transform_14, window_bounds = array<i64: 8, 2, 8>}]} {
    %c0_i32 = arith.constant 0 : i32
    %0 = arith.cmpi eq, %arg0, %c0_i32 : i32
    %1 = arith.extui %0 : i1 to i32
    %c0_i32_0 = arith.constant 0 : i32
    %2 = arith.cmpi ne, %1, %c0_i32_0 : i32
    scf.if %2 {
      %cst_29 = arith.constant 0.000000e+00 : f32
      %17 = vector.broadcast %cst_29 : f32 to vector<2x32xf32>
      %c0_30 = arith.constant 0 : index
      %c0_31 = arith.constant 0 : index
      %18 = vector.load %arg16[%c0_30, %c0_31] : memref<2x32xf32, #tpu.memory_space<vmem>>, vector<2x32xf32>
      tpu.vector_store %arg16[%c0_30, %c0_31], %17 {strides = array<i32>} : memref<2x32xf32, #tpu.memory_space<vmem>>, vector<2x32xf32>,
      %cst_32 = arith.constant 0.000000e+00 : f32
      %19 = vector.broadcast %cst_32 : f32 to vector<2x32xf32>
      %c0_33 = arith.constant 0 : index
      %c0_34 = arith.constant 0 : index
      %20 = vector.load %arg17[%c0_33, %c0_34] : memref<2x32xf32, #tpu.memory_space<vmem>>, vector<2x32xf32>
      tpu.vector_store %arg17[%c0_33, %c0_34], %19 {strides = array<i32>} : memref<2x32xf32, #tpu.memory_space<vmem>>, vector<2x32xf32>,
      %cst_35 = arith.constant 0.000000e+00 : f32
      %21 = vector.broadcast %cst_35 : f32 to vector<2x32xf32>
      %c0_36 = arith.constant 0 : index
      %c0_37 = arith.constant 0 : index
      %22 = vector.load %arg18[%c0_36, %c0_37] : memref<2x32xf32, #tpu.memory_space<vmem>>, vector<2x32xf32>
      tpu.vector_store %arg18[%c0_36, %c0_37], %21 {strides = array<i32>} : memref<2x32xf32, #tpu.memory_space<vmem>>, vector<2x32xf32>,
      %cst_38 = arith.constant 0.000000e+00 : f32
      %23 = vector.broadcast %cst_38 : f32 to vector<2x32xf32>
      %c0_39 = arith.constant 0 : index
      %c0_40 = arith.constant 0 : index
      %24 = vector.load %arg19[%c0_39, %c0_40] : memref<2x32xf32, #tpu.memory_space<vmem>>, vector<2x32xf32>
      tpu.vector_store %arg19[%c0_39, %c0_40], %23 {strides = array<i32>} : memref<2x32xf32, #tpu.memory_space<vmem>>, vector<2x32xf32>,
      %cst_41 = arith.constant 0.000000e+00 : f32
      %25 = vector.broadcast %cst_41 : f32 to vector<2x8xf32>
      %c0_42 = arith.constant 0 : index
      %c0_43 = arith.constant 0 : index
      %26 = vector.load %arg20[%c0_42, %c0_43] : memref<2x8xf32, #tpu.memory_space<vmem>>, vector<2x8xf32>
      tpu.vector_store %arg20[%c0_42, %c0_43], %25 {strides = array<i32>} : memref<2x8xf32, #tpu.memory_space<vmem>>, vector<2x8xf32>,
      %cst_44 = arith.constant 0.000000e+00 : f32
      %27 = vector.broadcast %cst_44 : f32 to vector<2x8xf32>
      %c0_45 = arith.constant 0 : index
      %c0_46 = arith.constant 0 : index
      %28 = vector.load %arg21[%c0_45, %c0_46] : memref<2x8xf32, #tpu.memory_space<vmem>>, vector<2x8xf32>
      tpu.vector_store %arg21[%c0_45, %c0_46], %27 {strides = array<i32>} : memref<2x8xf32, #tpu.memory_space<vmem>>, vector<2x8xf32>,
      %cst_47 = arith.constant 0.000000e+00 : f32
      %29 = vector.broadcast %cst_47 : f32 to vector<2x32xf32>
      %c0_48 = arith.constant 0 : index
      %c0_49 = arith.constant 0 : index
      %30 = vector.load %arg22[%c0_48, %c0_49] : memref<2x32xf32, #tpu.memory_space<vmem>>, vector<2x32xf32>
      tpu.vector_store %arg22[%c0_48, %c0_49], %29 {strides = array<i32>} : memref<2x32xf32, #tpu.memory_space<vmem>>, vector<2x32xf32>,
    } else {
    }
    %c0 = arith.constant 0 : index
    %c0_1 = arith.constant 0 : index
    %c0_2 = arith.constant 0 : index
    %3 = vector.load %arg2[%c0, %c0_1, %c0_2] : memref<2x8x32xf32, #tpu.memory_space<vmem>>, vector<2x8x32xf32>
    %c0_3 = arith.constant 0 : index
    %c0_4 = arith.constant 0 : index
    %c0_5 = arith.constant 0 : index
    %4 = vector.load %arg3[%c0_3, %c0_4, %c0_5] : memref<2x8x16xf32, #tpu.memory_space<vmem>>, vector<2x8x16xf32>
    %c0_6 = arith.constant 0 : index
    %c0_7 = arith.constant 0 : index
    %5 = vector.load %arg4[%c0_6, %c0_7] : memref<2x8xf32, #tpu.memory_space<vmem>>, vector<2x8xf32>
    %c0_8 = arith.constant 0 : index
    %c0_9 = arith.constant 0 : index
    %6 = vector.load %arg5[%c0_8, %c0_9] : memref<80x128xf32, #tpu.memory_space<vmem>>, vector<80x128xf32>
    %c0_10 = arith.constant 0 : index
    %c0_11 = arith.constant 0 : index
    %7 = vector.load %arg6[%c0_10, %c0_11] : memref<1x128xf32, #tpu.memory_space<vmem>>, vector<1x128xf32>
    %c0_12 = arith.constant 0 : index
    %c0_13 = arith.constant 0 : index
    %8 = vector.load %arg7[%c0_12, %c0_13] : memref<32x16xf32, #tpu.memory_space<vmem>>, vector<32x16xf32>
    %c0_14 = arith.constant 0 : index
    %c0_15 = arith.constant 0 : index
    %c0_16 = arith.constant 0 : index
    %9 = vector.load %arg8[%c0_14, %c0_15, %c0_16] : memref<2x5x16xf32, #tpu.memory_space<vmem>>, vector<2x5x16xf32>
    %c0_17 = arith.constant 0 : index
    %c0_18 = arith.constant 0 : index
    %10 = vector.load %arg9[%c0_17, %c0_18] : memref<1x16xf32, #tpu.memory_space<vmem>>, vector<1x16xf32>
    %c0_19 = arith.constant 0 : index
    %c0_20 = arith.constant 0 : index
    %11 = vector.load %arg10[%c0_19, %c0_20] : memref<96x128xf32, #tpu.memory_space<vmem>>, vector<96x128xf32>
    %c0_21 = arith.constant 0 : index
    %c0_22 = arith.constant 0 : index
    %12 = vector.load %arg11[%c0_21, %c0_22] : memref<1x128xf32, #tpu.memory_space<vmem>>, vector<1x128xf32>
    %c0_23 = arith.constant 0 : index
    %c0_24 = arith.constant 0 : index
    %13 = vector.load %arg12[%c0_23, %c0_24] : memref<64x9xf32, #tpu.memory_space<vmem>>, vector<64x9xf32>
    %c0_25 = arith.constant 0 : index
    %c0_26 = arith.constant 0 : index
    %14 = vector.load %arg13[%c0_25, %c0_26] : memref<1x9xf32, #tpu.memory_space<vmem>>, vector<1x9xf32>
    %cst = arith.constant 0.000000e+00 : f32
    %15 = vector.broadcast %cst : f32 to vector<2x2xf32>
    %c0_i32_27 = arith.constant 0 : i32
    %c8_i32 = arith.constant 8 : i32
    %16 = arith.addi %c0_i32_27, %c8_i32 : i32
    %c1_i32 = arith.constant 1 : i32
    scf.for %arg23 = %c0_i32_27 to %16 step %c1_i32  : i32 {
      %c1_i32_29 = arith.constant 1 : i32
      %17 = arith.muli %arg23, %c1_i32_29 : i32
      %c0_i32_30 = arith.constant 0 : i32
      %18 = arith.addi %c0_i32_30, %17 : i32
      %c0_31 = arith.constant 0 : index
      %c0_32 = arith.constant 0 : index
      %19 = vector.load %arg16[%c0_31, %c0_32] : memref<2x32xf32, #tpu.memory_space<vmem>>, vector<2x32xf32>
      %c0_33 = arith.constant 0 : index
      %c0_34 = arith.constant 0 : index
      %20 = vector.load %arg17[%c0_33, %c0_34] : memref<2x32xf32, #tpu.memory_space<vmem>>, vector<2x32xf32>
      %c0_35 = arith.constant 0 : index
      %c0_36 = arith.constant 0 : index
      %21 = vector.load %arg18[%c0_35, %c0_36] : memref<2x32xf32, #tpu.memory_space<vmem>>, vector<2x32xf32>
      %c0_37 = arith.constant 0 : index
      %c0_38 = arith.constant 0 : index
      %22 = vector.load %arg19[%c0_37, %c0_38] : memref<2x32xf32, #tpu.memory_space<vmem>>, vector<2x32xf32>
      %c0_39 = arith.constant 0 : index
      %c0_40 = arith.constant 0 : index
      %23 = vector.load %arg20[%c0_39, %c0_40] : memref<2x8xf32, #tpu.memory_space<vmem>>, vector<2x8xf32>
      %c0_41 = arith.constant 0 : index
      %c0_42 = arith.constant 0 : index
      %24 = vector.load %arg21[%c0_41, %c0_42] : memref<2x8xf32, #tpu.memory_space<vmem>>, vector<2x8xf32>
      %c0_43 = arith.constant 0 : index
      %c0_44 = arith.constant 0 : index
      %25 = vector.load %arg22[%c0_43, %c0_44] : memref<2x32xf32, #tpu.memory_space<vmem>>, vector<2x32xf32>
      %26 = arith.index_cast %18 : i32 to index
      %c0_45 = arith.constant 0 : index
      %c0_46 = arith.constant 0 : index
      %27 = vector.load %arg1[%26, %c0_45, %c0_46] : memref<8x2x16xf32, #tpu.memory_space<vmem>>, vector<1x2x16xf32>
      %28 = vector.shape_cast %27 : vector<1x2x16xf32> to vector<2x16xf32>
      %29 = tpu.concatenate %28, %25, %19 in 1 : vector<2x16xf32>, vector<2x32xf32>, vector<2x32xf32> -> vector<2x80xf32>
      %cst_47 = arith.constant dense<0.000000e+00> : vector<2x128xf32>
      %30 = tpu.matmul %29, %6, %cst_47 {dimension_numbers = #tpu.dot_dimension_numbers<[1], [0], [0], [1], [0, 0, 1, 1], [], []>} : vector<2x80xf32>, vector<80x128xf32>, vector<2x128xf32> -> vector<2x128xf32>
      %31 = vector.broadcast %7 : vector<1x128xf32> to vector<2x128xf32>
      %32 = arith.addf %30, %31 : vector<2x128xf32>
      %33 = vector.extract_strided_slice %32 {offsets = [0, 0], sizes = [2, 32], strides = [1, 1]} : vector<2x128xf32> to vector<2x32xf32>
      %34 = arith.negf %33 : vector<2x32xf32>
      %35 = math.exp %34 : vector<2x32xf32>
      %cst_48 = arith.constant 1.000000e+00 : f32
      %36 = vector.broadcast %cst_48 : f32 to vector<2x32xf32>
      %37 = arith.addf %36, %35 : vector<2x32xf32>
      %38 = arith.divf %36, %37 : vector<2x32xf32>
      %39 = vector.extract_strided_slice %32 {offsets = [0, 32], sizes = [2, 32], strides = [1, 1]} : vector<2x128xf32> to vector<2x32xf32>
      %40 = arith.negf %39 : vector<2x32xf32>
      %41 = math.exp %40 : vector<2x32xf32>
      %cst_49 = arith.constant 1.000000e+00 : f32
      %42 = vector.broadcast %cst_49 : f32 to vector<2x32xf32>
      %43 = arith.addf %42, %41 : vector<2x32xf32>
      %44 = arith.divf %42, %43 : vector<2x32xf32>
      %45 = vector.extract_strided_slice %32 {offsets = [0, 64], sizes = [2, 32], strides = [1, 1]} : vector<2x128xf32> to vector<2x32xf32>
      %46 = math.tanh %45 : vector<2x32xf32>
      %47 = vector.extract_strided_slice %32 {offsets = [0, 96], sizes = [2, 32], strides = [1, 1]} : vector<2x128xf32> to vector<2x32xf32>
      %48 = arith.negf %47 : vector<2x32xf32>
      %49 = math.exp %48 : vector<2x32xf32>
      %cst_50 = arith.constant 1.000000e+00 : f32
      %50 = vector.broadcast %cst_50 : f32 to vector<2x32xf32>
      %51 = arith.addf %50, %49 : vector<2x32xf32>
      %52 = arith.divf %50, %51 : vector<2x32xf32>
      %53 = arith.mulf %44, %20 : vector<2x32xf32>
      %54 = arith.mulf %38, %46 : vector<2x32xf32>
      %55 = arith.addf %53, %54 : vector<2x32xf32>
      %56 = math.tanh %55 : vector<2x32xf32>
      %57 = arith.mulf %52, %56 : vector<2x32xf32>
      %cst_51 = arith.constant dense<0.000000e+00> : vector<2x16xf32>
      %58 = tpu.matmul %57, %8, %cst_51 {dimension_numbers = #tpu.dot_dimension_numbers<[1], [0], [0], [1], [0, 0, 1, 1], [], []>} : vector<2x32xf32>, vector<32x16xf32>, vector<2x16xf32> -> vector<2x16xf32>
      %59 = tpu.concatenate %15, %23, %15 in 1 : vector<2x2xf32>, vector<2x8xf32>, vector<2x2xf32> -> vector<2x12xf32>
      %60 = tpu.concatenate %15, %24, %15 in 1 : vector<2x2xf32>, vector<2x8xf32>, vector<2x2xf32> -> vector<2x12xf32>
      %cst_52 = arith.constant 0.000000e+00 : f32
      %61 = vector.broadcast %cst_52 : f32 to vector<2x8x16xf32>
      %62 = vector.extract_strided_slice %59 {offsets = [0, 0], sizes = [2, 8], strides = [1, 1]} : vector<2x12xf32> to vector<2x8xf32>
      %63 = vector.shape_cast %62 : vector<2x8xf32> to vector<2x8x1xf32>
      %64 = vector.extract_strided_slice %9 {offsets = [0, 0, 0], sizes = [1, 1, 16], strides = [1, 1, 1]} : vector<2x5x16xf32> to vector<1x1x16xf32>
      %65 = vector.shape_cast %64 : vector<1x1x16xf32> to vector<16xf32>
      %66 = vector.shape_cast %65 : vector<16xf32> to vector<1x1x16xf32>
      %67 = vector.broadcast %63 : vector<2x8x1xf32> to vector<2x8x16xf32>
      %68 = vector.broadcast %66 : vector<1x1x16xf32> to vector<2x8x16xf32>
      %69 = arith.mulf %67, %68 : vector<2x8x16xf32>
      %70 = vector.extract_strided_slice %60 {offsets = [0, 0], sizes = [2, 8], strides = [1, 1]} : vector<2x12xf32> to vector<2x8xf32>
      %71 = vector.shape_cast %70 : vector<2x8xf32> to vector<2x8x1xf32>
      %72 = vector.extract_strided_slice %9 {offsets = [1, 0, 0], sizes = [1, 1, 16], strides = [1, 1, 1]} : vector<2x5x16xf32> to vector<1x1x16xf32>
      %73 = vector.shape_cast %72 : vector<1x1x16xf32> to vector<16xf32>
      %74 = vector.shape_cast %73 : vector<16xf32> to vector<1x1x16xf32>
      %75 = vector.broadcast %71 : vector<2x8x1xf32> to vector<2x8x16xf32>
      %76 = vector.broadcast %74 : vector<1x1x16xf32> to vector<2x8x16xf32>
      %77 = arith.mulf %75, %76 : vector<2x8x16xf32>
      %78 = arith.addf %69, %77 : vector<2x8x16xf32>
      %79 = arith.addf %61, %78 : vector<2x8x16xf32>
      %80 = vector.extract_strided_slice %59 {offsets = [0, 1], sizes = [2, 8], strides = [1, 1]} : vector<2x12xf32> to vector<2x8xf32>
      %81 = vector.shape_cast %80 : vector<2x8xf32> to vector<2x8x1xf32>
      %82 = vector.extract_strided_slice %9 {offsets = [0, 1, 0], sizes = [1, 1, 16], strides = [1, 1, 1]} : vector<2x5x16xf32> to vector<1x1x16xf32>
      %83 = vector.shape_cast %82 : vector<1x1x16xf32> to vector<16xf32>
      %84 = vector.shape_cast %83 : vector<16xf32> to vector<1x1x16xf32>
      %85 = vector.broadcast %81 : vector<2x8x1xf32> to vector<2x8x16xf32>
      %86 = vector.broadcast %84 : vector<1x1x16xf32> to vector<2x8x16xf32>
      %87 = arith.mulf %85, %86 : vector<2x8x16xf32>
      %88 = vector.extract_strided_slice %60 {offsets = [0, 1], sizes = [2, 8], strides = [1, 1]} : vector<2x12xf32> to vector<2x8xf32>
      %89 = vector.shape_cast %88 : vector<2x8xf32> to vector<2x8x1xf32>
      %90 = vector.extract_strided_slice %9 {offsets = [1, 1, 0], sizes = [1, 1, 16], strides = [1, 1, 1]} : vector<2x5x16xf32> to vector<1x1x16xf32>
      %91 = vector.shape_cast %90 : vector<1x1x16xf32> to vector<16xf32>
      %92 = vector.shape_cast %91 : vector<16xf32> to vector<1x1x16xf32>
      %93 = vector.broadcast %89 : vector<2x8x1xf32> to vector<2x8x16xf32>
      %94 = vector.broadcast %92 : vector<1x1x16xf32> to vector<2x8x16xf32>
      %95 = arith.mulf %93, %94 : vector<2x8x16xf32>
      %96 = arith.addf %87, %95 : vector<2x8x16xf32>
      %97 = arith.addf %79, %96 : vector<2x8x16xf32>
      %98 = vector.extract_strided_slice %59 {offsets = [0, 2], sizes = [2, 8], strides = [1, 1]} : vector<2x12xf32> to vector<2x8xf32>
      %99 = vector.shape_cast %98 : vector<2x8xf32> to vector<2x8x1xf32>
      %100 = vector.extract_strided_slice %9 {offsets = [0, 2, 0], sizes = [1, 1, 16], strides = [1, 1, 1]} : vector<2x5x16xf32> to vector<1x1x16xf32>
      %101 = vector.shape_cast %100 : vector<1x1x16xf32> to vector<16xf32>
      %102 = vector.shape_cast %101 : vector<16xf32> to vector<1x1x16xf32>
      %103 = vector.broadcast %99 : vector<2x8x1xf32> to vector<2x8x16xf32>
      %104 = vector.broadcast %102 : vector<1x1x16xf32> to vector<2x8x16xf32>
      %105 = arith.mulf %103, %104 : vector<2x8x16xf32>
      %106 = vector.extract_strided_slice %60 {offsets = [0, 2], sizes = [2, 8], strides = [1, 1]} : vector<2x12xf32> to vector<2x8xf32>
      %107 = vector.shape_cast %106 : vector<2x8xf32> to vector<2x8x1xf32>
      %108 = vector.extract_strided_slice %9 {offsets = [1, 2, 0], sizes = [1, 1, 16], strides = [1, 1, 1]} : vector<2x5x16xf32> to vector<1x1x16xf32>
      %109 = vector.shape_cast %108 : vector<1x1x16xf32> to vector<16xf32>
      %110 = vector.shape_cast %109 : vector<16xf32> to vector<1x1x16xf32>
      %111 = vector.broadcast %107 : vector<2x8x1xf32> to vector<2x8x16xf32>
      %112 = vector.broadcast %110 : vector<1x1x16xf32> to vector<2x8x16xf32>
      %113 = arith.mulf %111, %112 : vector<2x8x16xf32>
      %114 = arith.addf %105, %113 : vector<2x8x16xf32>
      %115 = arith.addf %97, %114 : vector<2x8x16xf32>
      %116 = vector.extract_strided_slice %59 {offsets = [0, 3], sizes = [2, 8], strides = [1, 1]} : vector<2x12xf32> to vector<2x8xf32>
      %117 = vector.shape_cast %116 : vector<2x8xf32> to vector<2x8x1xf32>
      %118 = vector.extract_strided_slice %9 {offsets = [0, 3, 0], sizes = [1, 1, 16], strides = [1, 1, 1]} : vector<2x5x16xf32> to vector<1x1x16xf32>
      %119 = vector.shape_cast %118 : vector<1x1x16xf32> to vector<16xf32>
      %120 = vector.shape_cast %119 : vector<16xf32> to vector<1x1x16xf32>
      %121 = vector.broadcast %117 : vector<2x8x1xf32> to vector<2x8x16xf32>
      %122 = vector.broadcast %120 : vector<1x1x16xf32> to vector<2x8x16xf32>
      %123 = arith.mulf %121, %122 : vector<2x8x16xf32>
      %124 = vector.extract_strided_slice %60 {offsets = [0, 3], sizes = [2, 8], strides = [1, 1]} : vector<2x12xf32> to vector<2x8xf32>
      %125 = vector.shape_cast %124 : vector<2x8xf32> to vector<2x8x1xf32>
      %126 = vector.extract_strided_slice %9 {offsets = [1, 3, 0], sizes = [1, 1, 16], strides = [1, 1, 1]} : vector<2x5x16xf32> to vector<1x1x16xf32>
      %127 = vector.shape_cast %126 : vector<1x1x16xf32> to vector<16xf32>
      %128 = vector.shape_cast %127 : vector<16xf32> to vector<1x1x16xf32>
      %129 = vector.broadcast %125 : vector<2x8x1xf32> to vector<2x8x16xf32>
      %130 = vector.broadcast %128 : vector<1x1x16xf32> to vector<2x8x16xf32>
      %131 = arith.mulf %129, %130 : vector<2x8x16xf32>
      %132 = arith.addf %123, %131 : vector<2x8x16xf32>
      %133 = arith.addf %115, %132 : vector<2x8x16xf32>
      %134 = vector.extract_strided_slice %59 {offsets = [0, 4], sizes = [2, 8], strides = [1, 1]} : vector<2x12xf32> to vector<2x8xf32>
      %135 = vector.shape_cast %134 : vector<2x8xf32> to vector<2x8x1xf32>
      %136 = vector.extract_strided_slice %9 {offsets = [0, 4, 0], sizes = [1, 1, 16], strides = [1, 1, 1]} : vector<2x5x16xf32> to vector<1x1x16xf32>
      %137 = vector.shape_cast %136 : vector<1x1x16xf32> to vector<16xf32>
      %138 = vector.shape_cast %137 : vector<16xf32> to vector<1x1x16xf32>
      %139 = vector.broadcast %135 : vector<2x8x1xf32> to vector<2x8x16xf32>
      %140 = vector.broadcast %138 : vector<1x1x16xf32> to vector<2x8x16xf32>
      %141 = arith.mulf %139, %140 : vector<2x8x16xf32>
      %142 = vector.extract_strided_slice %60 {offsets = [0, 4], sizes = [2, 8], strides = [1, 1]} : vector<2x12xf32> to vector<2x8xf32>
      %143 = vector.shape_cast %142 : vector<2x8xf32> to vector<2x8x1xf32>
      %144 = vector.extract_strided_slice %9 {offsets = [1, 4, 0], sizes = [1, 1, 16], strides = [1, 1, 1]} : vector<2x5x16xf32> to vector<1x1x16xf32>
      %145 = vector.shape_cast %144 : vector<1x1x16xf32> to vector<16xf32>
      %146 = vector.shape_cast %145 : vector<16xf32> to vector<1x1x16xf32>
      %147 = vector.broadcast %143 : vector<2x8x1xf32> to vector<2x8x16xf32>
      %148 = vector.broadcast %146 : vector<1x1x16xf32> to vector<2x8x16xf32>
      %149 = arith.mulf %147, %148 : vector<2x8x16xf32>
      %150 = arith.addf %141, %149 : vector<2x8x16xf32>
      %151 = arith.addf %133, %150 : vector<2x8x16xf32>
      %152 = vector.shape_cast %58 : vector<2x16xf32> to vector<2x1x16xf32>
      %153 = vector.broadcast %152 : vector<2x1x16xf32> to vector<2x8x16xf32>
      %154 = arith.addf %153, %151 : vector<2x8x16xf32>
      %155 = arith.addf %154, %4 : vector<2x8x16xf32>
      %156 = math.tanh %155 : vector<2x8x16xf32>
      %157 = vector.shape_cast %10 : vector<1x16xf32> to vector<1x1x16xf32>
      %158 = vector.broadcast %157 : vector<1x1x16xf32> to vector<2x8x16xf32>
      %159 = arith.mulf %156, %158 : vector<2x8x16xf32>
      %cst_53 = arith.constant dense<0.000000e+00> : vector<2x8xf32>
      %160 = vector.multi_reduction <add>, %159, %cst_53 [2] : vector<2x8x16xf32> to vector<2x8xf32>
      %161 = arith.addf %160, %5 : vector<2x8xf32>
      %cst_54 = arith.constant dense<0xFF800000> : vector<2xf32>
      %162 = vector.multi_reduction <maximumf>, %161, %cst_54 [1] : vector<2x8xf32> to vector<2xf32>
      %163 = vector.shape_cast %162 : vector<2xf32> to vector<2x1xf32>
      %164 = vector.broadcast %163 : vector<2x1xf32> to vector<2x8xf32>
      %165 = arith.subf %161, %164 : vector<2x8xf32>
      %166 = math.exp %165 : vector<2x8xf32>
      %cst_55 = arith.constant dense<0.000000e+00> : vector<2xf32>
      %167 = vector.multi_reduction <add>, %166, %cst_55 [1] : vector<2x8xf32> to vector<2xf32>
      %168 = vector.shape_cast %167 : vector<2xf32> to vector<2x1xf32>
      %169 = vector.broadcast %168 : vector<2x1xf32> to vector<2x8xf32>
      %170 = arith.divf %166, %169 : vector<2x8xf32>
      %171 = arith.addf %24, %170 : vector<2x8xf32>
      %172 = vector.shape_cast %170 : vector<2x8xf32> to vector<2x1x8xf32>
      "tpu.trace_start"() <{level = 10 : i32, message = "bqt,bte->bqe"}> : () -> ()
      %cst_56 = arith.constant dense<0.000000e+00> : vector<2x1x32xf32>
      %173 = tpu.matmul %172, %3, %cst_56 {dimension_numbers = #tpu.dot_dimension_numbers<[2], [1], [1], [2], [0, 0, 0, 1, 1, 2], [0], [0]>} : vector<2x1x8xf32>, vector<2x8x32xf32>, vector<2x1x32xf32> -> vector<2x1x32xf32>
      "tpu.trace_stop"() : () -> ()
      %174 = vector.shape_cast %173 : vector<2x1x32xf32> to vector<2x32xf32>
      %175 = tpu.concatenate %57, %174, %21 in 1 : vector<2x32xf32>, vector<2x32xf32>, vector<2x32xf32> -> vector<2x96xf32>
      %cst_57 = arith.constant dense<0.000000e+00> : vector<2x128xf32>
      %176 = tpu.matmul %175, %11, %cst_57 {dimension_numbers = #tpu.dot_dimension_numbers<[1], [0], [0], [1], [0, 0, 1, 1], [], []>} : vector<2x96xf32>, vector<96x128xf32>, vector<2x128xf32> -> vector<2x128xf32>
      %177 = vector.broadcast %12 : vector<1x128xf32> to vector<2x128xf32>
      %178 = arith.addf %176, %177 : vector<2x128xf32>
      %179 = vector.extract_strided_slice %178 {offsets = [0, 0], sizes = [2, 32], strides = [1, 1]} : vector<2x128xf32> to vector<2x32xf32>
      %180 = arith.negf %179 : vector<2x32xf32>
      %181 = math.exp %180 : vector<2x32xf32>
      %cst_58 = arith.constant 1.000000e+00 : f32
      %182 = vector.broadcast %cst_58 : f32 to vector<2x32xf32>
      %183 = arith.addf %182, %181 : vector<2x32xf32>
      %184 = arith.divf %182, %183 : vector<2x32xf32>
      %185 = vector.extract_strided_slice %178 {offsets = [0, 32], sizes = [2, 32], strides = [1, 1]} : vector<2x128xf32> to vector<2x32xf32>
      %186 = arith.negf %185 : vector<2x32xf32>
      %187 = math.exp %186 : vector<2x32xf32>
      %cst_59 = arith.constant 1.000000e+00 : f32
      %188 = vector.broadcast %cst_59 : f32 to vector<2x32xf32>
      %189 = arith.addf %188, %187 : vector<2x32xf32>
      %190 = arith.divf %188, %189 : vector<2x32xf32>
      %191 = vector.extract_strided_slice %178 {offsets = [0, 64], sizes = [2, 32], strides = [1, 1]} : vector<2x128xf32> to vector<2x32xf32>
      %192 = math.tanh %191 : vector<2x32xf32>
      %193 = vector.extract_strided_slice %178 {offsets = [0, 96], sizes = [2, 32], strides = [1, 1]} : vector<2x128xf32> to vector<2x32xf32>
      %194 = arith.negf %193 : vector<2x32xf32>
      %195 = math.exp %194 : vector<2x32xf32>
      %cst_60 = arith.constant 1.000000e+00 : f32
      %196 = vector.broadcast %cst_60 : f32 to vector<2x32xf32>
      %197 = arith.addf %196, %195 : vector<2x32xf32>
      %198 = arith.divf %196, %197 : vector<2x32xf32>
      %199 = arith.mulf %190, %22 : vector<2x32xf32>
      %200 = arith.mulf %184, %192 : vector<2x32xf32>
      %201 = arith.addf %199, %200 : vector<2x32xf32>
      %202 = math.tanh %201 : vector<2x32xf32>
      %203 = arith.mulf %198, %202 : vector<2x32xf32>
      %204 = tpu.concatenate %203, %174 in 1 : vector<2x32xf32>, vector<2x32xf32> -> vector<2x64xf32>
      %cst_61 = arith.constant dense<0.000000e+00> : vector<2x9xf32>
      %205 = tpu.matmul %204, %13, %cst_61 {dimension_numbers = #tpu.dot_dimension_numbers<[1], [0], [0], [1], [0, 0, 1, 1], [], []>} : vector<2x64xf32>, vector<64x9xf32>, vector<2x9xf32> -> vector<2x9xf32>
      %206 = vector.broadcast %14 : vector<1x9xf32> to vector<2x9xf32>
      %207 = arith.addf %205, %206 : vector<2x9xf32>
      %c0_62 = arith.constant 0 : index
      %c0_63 = arith.constant 0 : index
      %208 = vector.load %arg16[%c0_62, %c0_63] : memref<2x32xf32, #tpu.memory_space<vmem>>, vector<2x32xf32>
      tpu.vector_store %arg16[%c0_62, %c0_63], %57 {strides = array<i32>} : memref<2x32xf32, #tpu.memory_space<vmem>>, vector<2x32xf32>,
      %c0_64 = arith.constant 0 : index
      %c0_65 = arith.constant 0 : index
      %209 = vector.load %arg17[%c0_64, %c0_65] : memref<2x32xf32, #tpu.memory_space<vmem>>, vector<2x32xf32>
      tpu.vector_store %arg17[%c0_64, %c0_65], %55 {strides = array<i32>} : memref<2x32xf32, #tpu.memory_space<vmem>>, vector<2x32xf32>,
      %c0_66 = arith.constant 0 : index
      %c0_67 = arith.constant 0 : index
      %210 = vector.load %arg18[%c0_66, %c0_67] : memref<2x32xf32, #tpu.memory_space<vmem>>, vector<2x32xf32>
      tpu.vector_store %arg18[%c0_66, %c0_67], %203 {strides = array<i32>} : memref<2x32xf32, #tpu.memory_space<vmem>>, vector<2x32xf32>,
      %c0_68 = arith.constant 0 : index
      %c0_69 = arith.constant 0 : index
      %211 = vector.load %arg19[%c0_68, %c0_69] : memref<2x32xf32, #tpu.memory_space<vmem>>, vector<2x32xf32>
      tpu.vector_store %arg19[%c0_68, %c0_69], %201 {strides = array<i32>} : memref<2x32xf32, #tpu.memory_space<vmem>>, vector<2x32xf32>,
      %c0_70 = arith.constant 0 : index
      %c0_71 = arith.constant 0 : index
      %212 = vector.load %arg20[%c0_70, %c0_71] : memref<2x8xf32, #tpu.memory_space<vmem>>, vector<2x8xf32>
      tpu.vector_store %arg20[%c0_70, %c0_71], %170 {strides = array<i32>} : memref<2x8xf32, #tpu.memory_space<vmem>>, vector<2x8xf32>,
      %c0_72 = arith.constant 0 : index
      %c0_73 = arith.constant 0 : index
      %213 = vector.load %arg21[%c0_72, %c0_73] : memref<2x8xf32, #tpu.memory_space<vmem>>, vector<2x8xf32>
      tpu.vector_store %arg21[%c0_72, %c0_73], %171 {strides = array<i32>} : memref<2x8xf32, #tpu.memory_space<vmem>>, vector<2x8xf32>,
      %c0_74 = arith.constant 0 : index
      %c0_75 = arith.constant 0 : index
      %214 = vector.load %arg22[%c0_74, %c0_75] : memref<2x32xf32, #tpu.memory_space<vmem>>, vector<2x32xf32>
      tpu.vector_store %arg22[%c0_74, %c0_75], %174 {strides = array<i32>} : memref<2x32xf32, #tpu.memory_space<vmem>>, vector<2x32xf32>,
      %215 = arith.index_cast %18 : i32 to index
      %c0_76 = arith.constant 0 : index
      %c0_77 = arith.constant 0 : index
      %216 = vector.load %arg14[%215, %c0_76, %c0_77] : memref<8x2x9xf32, #tpu.memory_space<vmem>>, vector<1x2x9xf32>
      %217 = vector.shape_cast %216 : vector<1x2x9xf32> to vector<2x9xf32>
      %218 = vector.shape_cast %207 : vector<2x9xf32> to vector<1x2x9xf32>
      tpu.vector_store %arg14[%215, %c0_76, %c0_77], %218 {strides = array<i32>} : memref<8x2x9xf32, #tpu.memory_space<vmem>>, vector<1x2x9xf32>,
      %219 = arith.index_cast %18 : i32 to index
      %c0_78 = arith.constant 0 : index
      %c0_79 = arith.constant 0 : index
      %220 = vector.load %arg15[%219, %c0_78, %c0_79] : memref<8x2x8xf32, #tpu.memory_space<vmem>>, vector<1x2x8xf32>
      %221 = vector.shape_cast %220 : vector<1x2x8xf32> to vector<2x8xf32>
      %222 = vector.shape_cast %170 : vector<2x8xf32> to vector<1x2x8xf32>
      tpu.vector_store %arg15[%219, %c0_78, %c0_79], %222 {strides = array<i32>} : memref<8x2x8xf32, #tpu.memory_space<vmem>>, vector<1x2x8xf32>,
    }
    %c8_i32_28 = arith.constant 8 : i32
    return
  }
  func.func @transform_0(%arg0: i32) -> (i32, i32, i32) {
    %c0_i32 = arith.constant 0 : i32
    %c0_i32_0 = arith.constant 0 : i32
    %c0_i32_1 = arith.constant 0 : i32
    return %arg0, %c0_i32, %c0_i32_0 : i32, i32, i32
  }
  func.func @transform_1(%arg0: i32) -> (i32, i32, i32) {
    %c0_i32 = arith.constant 0 : i32
    %c0_i32_0 = arith.constant 0 : i32
    %c0_i32_1 = arith.constant 0 : i32
    %c0_i32_2 = arith.constant 0 : i32
    return %c0_i32, %c0_i32_0, %c0_i32_1 : i32, i32, i32
  }
  func.func @transform_2(%arg0: i32) -> (i32, i32, i32) {
    %c0_i32 = arith.constant 0 : i32
    %c0_i32_0 = arith.constant 0 : i32
    %c0_i32_1 = arith.constant 0 : i32
    %c0_i32_2 = arith.constant 0 : i32
    return %c0_i32, %c0_i32_0, %c0_i32_1 : i32, i32, i32
  }
  func.func @transform_3(%arg0: i32) -> (i32, i32) {
    %c0_i32 = arith.constant 0 : i32
    %c0_i32_0 = arith.constant 0 : i32
    %c0_i32_1 = arith.constant 0 : i32
    return %c0_i32, %c0_i32_0 : i32, i32
  }
  func.func @transform_4(%arg0: i32) -> (i32, i32) {
    %c0_i32 = arith.constant 0 : i32
    %c0_i32_0 = arith.constant 0 : i32
    %c0_i32_1 = arith.constant 0 : i32
    return %c0_i32, %c0_i32_0 : i32, i32
  }
  func.func @transform_5(%arg0: i32) -> (i32, i32) {
    %c0_i32 = arith.constant 0 : i32
    %c0_i32_0 = arith.constant 0 : i32
    %c0_i32_1 = arith.constant 0 : i32
    return %c0_i32, %c0_i32_0 : i32, i32
  }
  func.func @transform_6(%arg0: i32) -> (i32, i32) {
    %c0_i32 = arith.constant 0 : i32
    %c0_i32_0 = arith.constant 0 : i32
    %c0_i32_1 = arith.constant 0 : i32
    return %c0_i32, %c0_i32_0 : i32, i32
  }
  func.func @transform_7(%arg0: i32) -> (i32, i32, i32) {
    %c0_i32 = arith.constant 0 : i32
    %c0_i32_0 = arith.constant 0 : i32
    %c0_i32_1 = arith.constant 0 : i32
    %c0_i32_2 = arith.constant 0 : i32
    return %c0_i32, %c0_i32_0, %c0_i32_1 : i32, i32, i32
  }
  func.func @transform_8(%arg0: i32) -> (i32, i32) {
    %c0_i32 = arith.constant 0 : i32
    %c0_i32_0 = arith.constant 0 : i32
    %c0_i32_1 = arith.constant 0 : i32
    return %c0_i32, %c0_i32_0 : i32, i32
  }
  func.func @transform_9(%arg0: i32) -> (i32, i32) {
    %c0_i32 = arith.constant 0 : i32
    %c0_i32_0 = arith.constant 0 : i32
    %c0_i32_1 = arith.constant 0 : i32
    return %c0_i32, %c0_i32_0 : i32, i32
  }
  func.func @transform_10(%arg0: i32) -> (i32, i32) {
    %c0_i32 = arith.constant 0 : i32
    %c0_i32_0 = arith.constant 0 : i32
    %c0_i32_1 = arith.constant 0 : i32
    return %c0_i32, %c0_i32_0 : i32, i32
  }
  func.func @transform_11(%arg0: i32) -> (i32, i32) {
    %c0_i32 = arith.constant 0 : i32
    %c0_i32_0 = arith.constant 0 : i32
    %c0_i32_1 = arith.constant 0 : i32
    return %c0_i32, %c0_i32_0 : i32, i32
  }
  func.func @transform_12(%arg0: i32) -> (i32, i32) {
    %c0_i32 = arith.constant 0 : i32
    %c0_i32_0 = arith.constant 0 : i32
    %c0_i32_1 = arith.constant 0 : i32
    return %c0_i32, %c0_i32_0 : i32, i32
  }
  func.func @transform_13(%arg0: i32) -> (i32, i32, i32) {
    %c0_i32 = arith.constant 0 : i32
    %c0_i32_0 = arith.constant 0 : i32
    %c0_i32_1 = arith.constant 0 : i32
    return %arg0, %c0_i32, %c0_i32_0 : i32, i32, i32
  }
  func.func @transform_14(%arg0: i32) -> (i32, i32, i32) {
    %c0_i32 = arith.constant 0 : i32
    %c0_i32_0 = arith.constant 0 : i32
    %c0_i32_1 = arith.constant 0 : i32
    return %arg0, %c0_i32, %c0_i32_0 : i32, i32, i32
  }
}

module attributes {stable_mosaic.version = 11 : i64} {
  func.func @_conv1d_kernel(%arg0: i32, %arg1: memref<2x10x8xf32, #tpu.memory_space<vmem>>, %arg2: memref<5x8x16xf32, #tpu.memory_space<vmem>>, %arg3: memref<1x16xf32, #tpu.memory_space<vmem>>, %arg4: memref<2x6x16xf32, #tpu.memory_space<vmem>>) attributes {dimension_semantics = [#tpu.dimension_semantics<arbitrary>], iteration_bounds = array<i64: 1>, scalar_prefetch = 0 : i64, scratch_operands = 0 : i64, tpu.core_type = #tpu.core_type<tc>, window_params = [{pipeline_mode = #tpu.pipeline_mode<synchronous>, transform_indices = @transform_0, window_bounds = array<i64: 2, 10, 8>}, {pipeline_mode = #tpu.pipeline_mode<synchronous>, transform_indices = @transform_1, window_bounds = array<i64: 5, 8, 16>}, {pipeline_mode = #tpu.pipeline_mode<synchronous>, transform_indices = @transform_2, window_bounds = array<i64: 1, 16>}, {pipeline_mode = #tpu.pipeline_mode<synchronous>, transform_indices = @transform_3, window_bounds = array<i64: 2, 6, 16>}]} {
    %c0 = arith.constant 0 : index
    %c0_0 = arith.constant 0 : index
    %c0_1 = arith.constant 0 : index
    %0 = vector.load %arg1[%c0, %c0_0, %c0_1] : memref<2x10x8xf32, #tpu.memory_space<vmem>>, vector<2x10x8xf32>
    %c0_2 = arith.constant 0 : index
    %c0_3 = arith.constant 0 : index
    %1 = vector.load %arg3[%c0_2, %c0_3] : memref<1x16xf32, #tpu.memory_space<vmem>>, vector<1x16xf32>
    %cst = arith.constant 0.000000e+00 : f32
    %2 = vector.broadcast %cst : f32 to vector<6x16xf32>
    %3 = vector.extract_strided_slice %0 {offsets = [0, 0, 0], sizes = [1, 6, 8], strides = [1, 1, 1]} : vector<2x10x8xf32> to vector<1x6x8xf32>
    %4 = vector.shape_cast %3 : vector<1x6x8xf32> to vector<6x8xf32>
    %c0_4 = arith.constant 0 : index
    %c0_5 = arith.constant 0 : index
    %c0_6 = arith.constant 0 : index
    %5 = vector.load %arg2[%c0_4, %c0_5, %c0_6] : memref<5x8x16xf32, #tpu.memory_space<vmem>>, vector<1x8x16xf32>
    %6 = vector.shape_cast %5 : vector<1x8x16xf32> to vector<8x16xf32>
    %cst_7 = arith.constant dense<0.000000e+00> : vector<6x16xf32>
    %7 = tpu.matmul %4, %6, %cst_7 {dimension_numbers = #tpu.dot_dimension_numbers<[1], [0], [0], [1], [0, 0, 1, 1], [], []>} : vector<6x8xf32>, vector<8x16xf32>, vector<6x16xf32> -> vector<6x16xf32>
    %8 = arith.addf %2, %7 : vector<6x16xf32>
    %9 = vector.extract_strided_slice %0 {offsets = [0, 1, 0], sizes = [1, 6, 8], strides = [1, 1, 1]} : vector<2x10x8xf32> to vector<1x6x8xf32>
    %10 = vector.shape_cast %9 : vector<1x6x8xf32> to vector<6x8xf32>
    %c1 = arith.constant 1 : index
    %c0_8 = arith.constant 0 : index
    %c0_9 = arith.constant 0 : index
    %11 = vector.load %arg2[%c1, %c0_8, %c0_9] : memref<5x8x16xf32, #tpu.memory_space<vmem>>, vector<1x8x16xf32>
    %12 = vector.shape_cast %11 : vector<1x8x16xf32> to vector<8x16xf32>
    %cst_10 = arith.constant dense<0.000000e+00> : vector<6x16xf32>
    %13 = tpu.matmul %10, %12, %cst_10 {dimension_numbers = #tpu.dot_dimension_numbers<[1], [0], [0], [1], [0, 0, 1, 1], [], []>} : vector<6x8xf32>, vector<8x16xf32>, vector<6x16xf32> -> vector<6x16xf32>
    %14 = arith.addf %8, %13 : vector<6x16xf32>
    %15 = vector.extract_strided_slice %0 {offsets = [0, 2, 0], sizes = [1, 6, 8], strides = [1, 1, 1]} : vector<2x10x8xf32> to vector<1x6x8xf32>
    %16 = vector.shape_cast %15 : vector<1x6x8xf32> to vector<6x8xf32>
    %c2 = arith.constant 2 : index
    %c0_11 = arith.constant 0 : index
    %c0_12 = arith.constant 0 : index
    %17 = vector.load %arg2[%c2, %c0_11, %c0_12] : memref<5x8x16xf32, #tpu.memory_space<vmem>>, vector<1x8x16xf32>
    %18 = vector.shape_cast %17 : vector<1x8x16xf32> to vector<8x16xf32>
    %cst_13 = arith.constant dense<0.000000e+00> : vector<6x16xf32>
    %19 = tpu.matmul %16, %18, %cst_13 {dimension_numbers = #tpu.dot_dimension_numbers<[1], [0], [0], [1], [0, 0, 1, 1], [], []>} : vector<6x8xf32>, vector<8x16xf32>, vector<6x16xf32> -> vector<6x16xf32>
    %20 = arith.addf %14, %19 : vector<6x16xf32>
    %21 = vector.extract_strided_slice %0 {offsets = [0, 3, 0], sizes = [1, 6, 8], strides = [1, 1, 1]} : vector<2x10x8xf32> to vector<1x6x8xf32>
    %22 = vector.shape_cast %21 : vector<1x6x8xf32> to vector<6x8xf32>
    %c3 = arith.constant 3 : index
    %c0_14 = arith.constant 0 : index
    %c0_15 = arith.constant 0 : index
    %23 = vector.load %arg2[%c3, %c0_14, %c0_15] : memref<5x8x16xf32, #tpu.memory_space<vmem>>, vector<1x8x16xf32>
    %24 = vector.shape_cast %23 : vector<1x8x16xf32> to vector<8x16xf32>
    %cst_16 = arith.constant dense<0.000000e+00> : vector<6x16xf32>
    %25 = tpu.matmul %22, %24, %cst_16 {dimension_numbers = #tpu.dot_dimension_numbers<[1], [0], [0], [1], [0, 0, 1, 1], [], []>} : vector<6x8xf32>, vector<8x16xf32>, vector<6x16xf32> -> vector<6x16xf32>
    %26 = arith.addf %20, %25 : vector<6x16xf32>
    %27 = vector.extract_strided_slice %0 {offsets = [0, 4, 0], sizes = [1, 6, 8], strides = [1, 1, 1]} : vector<2x10x8xf32> to vector<1x6x8xf32>
    %28 = vector.shape_cast %27 : vector<1x6x8xf32> to vector<6x8xf32>
    %c4 = arith.constant 4 : index
    %c0_17 = arith.constant 0 : index
    %c0_18 = arith.constant 0 : index
    %29 = vector.load %arg2[%c4, %c0_17, %c0_18] : memref<5x8x16xf32, #tpu.memory_space<vmem>>, vector<1x8x16xf32>
    %30 = vector.shape_cast %29 : vector<1x8x16xf32> to vector<8x16xf32>
    %cst_19 = arith.constant dense<0.000000e+00> : vector<6x16xf32>
    %31 = tpu.matmul %28, %30, %cst_19 {dimension_numbers = #tpu.dot_dimension_numbers<[1], [0], [0], [1], [0, 0, 1, 1], [], []>} : vector<6x8xf32>, vector<8x16xf32>, vector<6x16xf32> -> vector<6x16xf32>
    %32 = arith.addf %26, %31 : vector<6x16xf32>
    %33 = vector.broadcast %1 : vector<1x16xf32> to vector<6x16xf32>
    %34 = arith.addf %32, %33 : vector<6x16xf32>
    %35 = math.tanh %34 : vector<6x16xf32>
    %c0_20 = arith.constant 0 : index
    %c0_21 = arith.constant 0 : index
    %c0_22 = arith.constant 0 : index
    %36 = vector.load %arg4[%c0_20, %c0_21, %c0_22] : memref<2x6x16xf32, #tpu.memory_space<vmem>>, vector<1x6x16xf32>
    %37 = vector.shape_cast %36 : vector<1x6x16xf32> to vector<6x16xf32>
    %38 = vector.shape_cast %35 : vector<6x16xf32> to vector<1x6x16xf32>
    tpu.vector_store %arg4[%c0_20, %c0_21, %c0_22], %38 {strides = array<i32>} : memref<2x6x16xf32, #tpu.memory_space<vmem>>, vector<1x6x16xf32>,
    %cst_23 = arith.constant 0.000000e+00 : f32
    %39 = vector.broadcast %cst_23 : f32 to vector<6x16xf32>
    %40 = vector.extract_strided_slice %0 {offsets = [1, 0, 0], sizes = [1, 6, 8], strides = [1, 1, 1]} : vector<2x10x8xf32> to vector<1x6x8xf32>
    %41 = vector.shape_cast %40 : vector<1x6x8xf32> to vector<6x8xf32>
    %c0_24 = arith.constant 0 : index
    %c0_25 = arith.constant 0 : index
    %c0_26 = arith.constant 0 : index
    %42 = vector.load %arg2[%c0_24, %c0_25, %c0_26] : memref<5x8x16xf32, #tpu.memory_space<vmem>>, vector<1x8x16xf32>
    %43 = vector.shape_cast %42 : vector<1x8x16xf32> to vector<8x16xf32>
    %cst_27 = arith.constant dense<0.000000e+00> : vector<6x16xf32>
    %44 = tpu.matmul %41, %43, %cst_27 {dimension_numbers = #tpu.dot_dimension_numbers<[1], [0], [0], [1], [0, 0, 1, 1], [], []>} : vector<6x8xf32>, vector<8x16xf32>, vector<6x16xf32> -> vector<6x16xf32>
    %45 = arith.addf %39, %44 : vector<6x16xf32>
    %46 = vector.extract_strided_slice %0 {offsets = [1, 1, 0], sizes = [1, 6, 8], strides = [1, 1, 1]} : vector<2x10x8xf32> to vector<1x6x8xf32>
    %47 = vector.shape_cast %46 : vector<1x6x8xf32> to vector<6x8xf32>
    %c1_28 = arith.constant 1 : index
    %c0_29 = arith.constant 0 : index
    %c0_30 = arith.constant 0 : index
    %48 = vector.load %arg2[%c1_28, %c0_29, %c0_30] : memref<5x8x16xf32, #tpu.memory_space<vmem>>, vector<1x8x16xf32>
    %49 = vector.shape_cast %48 : vector<1x8x16xf32> to vector<8x16xf32>
    %cst_31 = arith.constant dense<0.000000e+00> : vector<6x16xf32>
    %50 = tpu.matmul %47, %49, %cst_31 {dimension_numbers = #tpu.dot_dimension_numbers<[1], [0], [0], [1], [0, 0, 1, 1], [], []>} : vector<6x8xf32>, vector<8x16xf32>, vector<6x16xf32> -> vector<6x16xf32>
    %51 = arith.addf %45, %50 : vector<6x16xf32>
    %52 = vector.extract_strided_slice %0 {offsets = [1, 2, 0], sizes = [1, 6, 8], strides = [1, 1, 1]} : vector<2x10x8xf32> to vector<1x6x8xf32>
    %53 = vector.shape_cast %52 : vector<1x6x8xf32> to vector<6x8xf32>
    %c2_32 = arith.constant 2 : index
    %c0_33 = arith.constant 0 : index
    %c0_34 = arith.constant 0 : index
    %54 = vector.load %arg2[%c2_32, %c0_33, %c0_34] : memref<5x8x16xf32, #tpu.memory_space<vmem>>, vector<1x8x16xf32>
    %55 = vector.shape_cast %54 : vector<1x8x16xf32> to vector<8x16xf32>
    %cst_35 = arith.constant dense<0.000000e+00> : vector<6x16xf32>
    %56 = tpu.matmul %53, %55, %cst_35 {dimension_numbers = #tpu.dot_dimension_numbers<[1], [0], [0], [1], [0, 0, 1, 1], [], []>} : vector<6x8xf32>, vector<8x16xf32>, vector<6x16xf32> -> vector<6x16xf32>
    %57 = arith.addf %51, %56 : vector<6x16xf32>
    %58 = vector.extract_strided_slice %0 {offsets = [1, 3, 0], sizes = [1, 6, 8], strides = [1, 1, 1]} : vector<2x10x8xf32> to vector<1x6x8xf32>
    %59 = vector.shape_cast %58 : vector<1x6x8xf32> to vector<6x8xf32>
    %c3_36 = arith.constant 3 : index
    %c0_37 = arith.constant 0 : index
    %c0_38 = arith.constant 0 : index
    %60 = vector.load %arg2[%c3_36, %c0_37, %c0_38] : memref<5x8x16xf32, #tpu.memory_space<vmem>>, vector<1x8x16xf32>
    %61 = vector.shape_cast %60 : vector<1x8x16xf32> to vector<8x16xf32>
    %cst_39 = arith.constant dense<0.000000e+00> : vector<6x16xf32>
    %62 = tpu.matmul %59, %61, %cst_39 {dimension_numbers = #tpu.dot_dimension_numbers<[1], [0], [0], [1], [0, 0, 1, 1], [], []>} : vector<6x8xf32>, vector<8x16xf32>, vector<6x16xf32> -> vector<6x16xf32>
    %63 = arith.addf %57, %62 : vector<6x16xf32>
    %64 = vector.extract_strided_slice %0 {offsets = [1, 4, 0], sizes = [1, 6, 8], strides = [1, 1, 1]} : vector<2x10x8xf32> to vector<1x6x8xf32>
    %65 = vector.shape_cast %64 : vector<1x6x8xf32> to vector<6x8xf32>
    %c4_40 = arith.constant 4 : index
    %c0_41 = arith.constant 0 : index
    %c0_42 = arith.constant 0 : index
    %66 = vector.load %arg2[%c4_40, %c0_41, %c0_42] : memref<5x8x16xf32, #tpu.memory_space<vmem>>, vector<1x8x16xf32>
    %67 = vector.shape_cast %66 : vector<1x8x16xf32> to vector<8x16xf32>
    %cst_43 = arith.constant dense<0.000000e+00> : vector<6x16xf32>
    %68 = tpu.matmul %65, %67, %cst_43 {dimension_numbers = #tpu.dot_dimension_numbers<[1], [0], [0], [1], [0, 0, 1, 1], [], []>} : vector<6x8xf32>, vector<8x16xf32>, vector<6x16xf32> -> vector<6x16xf32>
    %69 = arith.addf %63, %68 : vector<6x16xf32>
    %70 = vector.broadcast %1 : vector<1x16xf32> to vector<6x16xf32>
    %71 = arith.addf %69, %70 : vector<6x16xf32>
    %72 = math.tanh %71 : vector<6x16xf32>
    %c1_44 = arith.constant 1 : index
    %c0_45 = arith.constant 0 : index
    %c0_46 = arith.constant 0 : index
    %73 = vector.load %arg4[%c1_44, %c0_45, %c0_46] : memref<2x6x16xf32, #tpu.memory_space<vmem>>, vector<1x6x16xf32>
    %74 = vector.shape_cast %73 : vector<1x6x16xf32> to vector<6x16xf32>
    %75 = vector.shape_cast %72 : vector<6x16xf32> to vector<1x6x16xf32>
    tpu.vector_store %arg4[%c1_44, %c0_45, %c0_46], %75 {strides = array<i32>} : memref<2x6x16xf32, #tpu.memory_space<vmem>>, vector<1x6x16xf32>,
    return
  }
  func.func @transform_0(%arg0: i32) -> (i32, i32, i32) {
    %c0_i32 = arith.constant 0 : i32
    %c0_i32_0 = arith.constant 0 : i32
    %c0_i32_1 = arith.constant 0 : i32
    %c0_i32_2 = arith.constant 0 : i32
    return %c0_i32, %c0_i32_0, %c0_i32_1 : i32, i32, i32
  }
  func.func @transform_1(%arg0: i32) -> (i32, i32, i32) {
    %c0_i32 = arith.constant 0 : i32
    %c0_i32_0 = arith.constant 0 : i32
    %c0_i32_1 = arith.constant 0 : i32
    %c0_i32_2 = arith.constant 0 : i32
    return %c0_i32, %c0_i32_0, %c0_i32_1 : i32, i32, i32
  }
  func.func @transform_2(%arg0: i32) -> (i32, i32) {
    %c0_i32 = arith.constant 0 : i32
    %c0_i32_0 = arith.constant 0 : i32
    %c0_i32_1 = arith.constant 0 : i32
    return %c0_i32, %c0_i32_0 : i32, i32
  }
  func.func @transform_3(%arg0: i32) -> (i32, i32, i32) {
    %c0_i32 = arith.constant 0 : i32
    %c0_i32_0 = arith.constant 0 : i32
    %c0_i32_1 = arith.constant 0 : i32
    %c0_i32_2 = arith.constant 0 : i32
    return %c0_i32, %c0_i32_0, %c0_i32_1 : i32, i32, i32
  }
}

module attributes {stable_mosaic.version = 11 : i64} {
  func.func @_conv1d_kernel(%arg0: i32, %arg1: memref<2x10x16xf32, #tpu.memory_space<vmem>>, %arg2: memref<5x16x16xf32, #tpu.memory_space<vmem>>, %arg3: memref<1x16xf32, #tpu.memory_space<vmem>>, %arg4: memref<2x6x16xf32, #tpu.memory_space<vmem>>) attributes {dimension_semantics = [#tpu.dimension_semantics<arbitrary>], iteration_bounds = array<i64: 1>, scalar_prefetch = 0 : i64, scratch_operands = 0 : i64, tpu.core_type = #tpu.core_type<tc>, window_params = [{pipeline_mode = #tpu.pipeline_mode<synchronous>, transform_indices = @transform_0, window_bounds = array<i64: 2, 10, 16>}, {pipeline_mode = #tpu.pipeline_mode<synchronous>, transform_indices = @transform_1, window_bounds = array<i64: 5, 16, 16>}, {pipeline_mode = #tpu.pipeline_mode<synchronous>, transform_indices = @transform_2, window_bounds = array<i64: 1, 16>}, {pipeline_mode = #tpu.pipeline_mode<synchronous>, transform_indices = @transform_3, window_bounds = array<i64: 2, 6, 16>}]} {
    %c0 = arith.constant 0 : index
    %c0_0 = arith.constant 0 : index
    %c0_1 = arith.constant 0 : index
    %0 = vector.load %arg1[%c0, %c0_0, %c0_1] : memref<2x10x16xf32, #tpu.memory_space<vmem>>, vector<2x10x16xf32>
    %c0_2 = arith.constant 0 : index
    %c0_3 = arith.constant 0 : index
    %1 = vector.load %arg3[%c0_2, %c0_3] : memref<1x16xf32, #tpu.memory_space<vmem>>, vector<1x16xf32>
    %cst = arith.constant 0.000000e+00 : f32
    %2 = vector.broadcast %cst : f32 to vector<6x16xf32>
    %3 = vector.extract_strided_slice %0 {offsets = [0, 0, 0], sizes = [1, 6, 16], strides = [1, 1, 1]} : vector<2x10x16xf32> to vector<1x6x16xf32>
    %4 = vector.shape_cast %3 : vector<1x6x16xf32> to vector<6x16xf32>
    %c0_4 = arith.constant 0 : index
    %c0_5 = arith.constant 0 : index
    %c0_6 = arith.constant 0 : index
    %5 = vector.load %arg2[%c0_4, %c0_5, %c0_6] : memref<5x16x16xf32, #tpu.memory_space<vmem>>, vector<1x16x16xf32>
    %6 = vector.shape_cast %5 : vector<1x16x16xf32> to vector<16x16xf32>
    %cst_7 = arith.constant dense<0.000000e+00> : vector<6x16xf32>
    %7 = tpu.matmul %4, %6, %cst_7 {dimension_numbers = #tpu.dot_dimension_numbers<[1], [0], [0], [1], [0, 0, 1, 1], [], []>} : vector<6x16xf32>, vector<16x16xf32>, vector<6x16xf32> -> vector<6x16xf32>
    %8 = arith.addf %2, %7 : vector<6x16xf32>
    %9 = vector.extract_strided_slice %0 {offsets = [0, 1, 0], sizes = [1, 6, 16], strides = [1, 1, 1]} : vector<2x10x16xf32> to vector<1x6x16xf32>
    %10 = vector.shape_cast %9 : vector<1x6x16xf32> to vector<6x16xf32>
    %c1 = arith.constant 1 : index
    %c0_8 = arith.constant 0 : index
    %c0_9 = arith.constant 0 : index
    %11 = vector.load %arg2[%c1, %c0_8, %c0_9] : memref<5x16x16xf32, #tpu.memory_space<vmem>>, vector<1x16x16xf32>
    %12 = vector.shape_cast %11 : vector<1x16x16xf32> to vector<16x16xf32>
    %cst_10 = arith.constant dense<0.000000e+00> : vector<6x16xf32>
    %13 = tpu.matmul %10, %12, %cst_10 {dimension_numbers = #tpu.dot_dimension_numbers<[1], [0], [0], [1], [0, 0, 1, 1], [], []>} : vector<6x16xf32>, vector<16x16xf32>, vector<6x16xf32> -> vector<6x16xf32>
    %14 = arith.addf %8, %13 : vector<6x16xf32>
    %15 = vector.extract_strided_slice %0 {offsets = [0, 2, 0], sizes = [1, 6, 16], strides = [1, 1, 1]} : vector<2x10x16xf32> to vector<1x6x16xf32>
    %16 = vector.shape_cast %15 : vector<1x6x16xf32> to vector<6x16xf32>
    %c2 = arith.constant 2 : index
    %c0_11 = arith.constant 0 : index
    %c0_12 = arith.constant 0 : index
    %17 = vector.load %arg2[%c2, %c0_11, %c0_12] : memref<5x16x16xf32, #tpu.memory_space<vmem>>, vector<1x16x16xf32>
    %18 = vector.shape_cast %17 : vector<1x16x16xf32> to vector<16x16xf32>
    %cst_13 = arith.constant dense<0.000000e+00> : vector<6x16xf32>
    %19 = tpu.matmul %16, %18, %cst_13 {dimension_numbers = #tpu.dot_dimension_numbers<[1], [0], [0], [1], [0, 0, 1, 1], [], []>} : vector<6x16xf32>, vector<16x16xf32>, vector<6x16xf32> -> vector<6x16xf32>
    %20 = arith.addf %14, %19 : vector<6x16xf32>
    %21 = vector.extract_strided_slice %0 {offsets = [0, 3, 0], sizes = [1, 6, 16], strides = [1, 1, 1]} : vector<2x10x16xf32> to vector<1x6x16xf32>
    %22 = vector.shape_cast %21 : vector<1x6x16xf32> to vector<6x16xf32>
    %c3 = arith.constant 3 : index
    %c0_14 = arith.constant 0 : index
    %c0_15 = arith.constant 0 : index
    %23 = vector.load %arg2[%c3, %c0_14, %c0_15] : memref<5x16x16xf32, #tpu.memory_space<vmem>>, vector<1x16x16xf32>
    %24 = vector.shape_cast %23 : vector<1x16x16xf32> to vector<16x16xf32>
    %cst_16 = arith.constant dense<0.000000e+00> : vector<6x16xf32>
    %25 = tpu.matmul %22, %24, %cst_16 {dimension_numbers = #tpu.dot_dimension_numbers<[1], [0], [0], [1], [0, 0, 1, 1], [], []>} : vector<6x16xf32>, vector<16x16xf32>, vector<6x16xf32> -> vector<6x16xf32>
    %26 = arith.addf %20, %25 : vector<6x16xf32>
    %27 = vector.extract_strided_slice %0 {offsets = [0, 4, 0], sizes = [1, 6, 16], strides = [1, 1, 1]} : vector<2x10x16xf32> to vector<1x6x16xf32>
    %28 = vector.shape_cast %27 : vector<1x6x16xf32> to vector<6x16xf32>
    %c4 = arith.constant 4 : index
    %c0_17 = arith.constant 0 : index
    %c0_18 = arith.constant 0 : index
    %29 = vector.load %arg2[%c4, %c0_17, %c0_18] : memref<5x16x16xf32, #tpu.memory_space<vmem>>, vector<1x16x16xf32>
    %30 = vector.shape_cast %29 : vector<1x16x16xf32> to vector<16x16xf32>
    %cst_19 = arith.constant dense<0.000000e+00> : vector<6x16xf32>
    %31 = tpu.matmul %28, %30, %cst_19 {dimension_numbers = #tpu.dot_dimension_numbers<[1], [0], [0], [1], [0, 0, 1, 1], [], []>} : vector<6x16xf32>, vector<16x16xf32>, vector<6x16xf32> -> vector<6x16xf32>
    %32 = arith.addf %26, %31 : vector<6x16xf32>
    %33 = vector.broadcast %1 : vector<1x16xf32> to vector<6x16xf32>
    %34 = arith.addf %32, %33 : vector<6x16xf32>
    %35 = math.tanh %34 : vector<6x16xf32>
    %c0_20 = arith.constant 0 : index
    %c0_21 = arith.constant 0 : index
    %c0_22 = arith.constant 0 : index
    %36 = vector.load %arg4[%c0_20, %c0_21, %c0_22] : memref<2x6x16xf32, #tpu.memory_space<vmem>>, vector<1x6x16xf32>
    %37 = vector.shape_cast %36 : vector<1x6x16xf32> to vector<6x16xf32>
    %38 = vector.shape_cast %35 : vector<6x16xf32> to vector<1x6x16xf32>
    tpu.vector_store %arg4[%c0_20, %c0_21, %c0_22], %38 {strides = array<i32>} : memref<2x6x16xf32, #tpu.memory_space<vmem>>, vector<1x6x16xf32>,
    %cst_23 = arith.constant 0.000000e+00 : f32
    %39 = vector.broadcast %cst_23 : f32 to vector<6x16xf32>
    %40 = vector.extract_strided_slice %0 {offsets = [1, 0, 0], sizes = [1, 6, 16], strides = [1, 1, 1]} : vector<2x10x16xf32> to vector<1x6x16xf32>
    %41 = vector.shape_cast %40 : vector<1x6x16xf32> to vector<6x16xf32>
    %c0_24 = arith.constant 0 : index
    %c0_25 = arith.constant 0 : index
    %c0_26 = arith.constant 0 : index
    %42 = vector.load %arg2[%c0_24, %c0_25, %c0_26] : memref<5x16x16xf32, #tpu.memory_space<vmem>>, vector<1x16x16xf32>
    %43 = vector.shape_cast %42 : vector<1x16x16xf32> to vector<16x16xf32>
    %cst_27 = arith.constant dense<0.000000e+00> : vector<6x16xf32>
    %44 = tpu.matmul %41, %43, %cst_27 {dimension_numbers = #tpu.dot_dimension_numbers<[1], [0], [0], [1], [0, 0, 1, 1], [], []>} : vector<6x16xf32>, vector<16x16xf32>, vector<6x16xf32> -> vector<6x16xf32>
    %45 = arith.addf %39, %44 : vector<6x16xf32>
    %46 = vector.extract_strided_slice %0 {offsets = [1, 1, 0], sizes = [1, 6, 16], strides = [1, 1, 1]} : vector<2x10x16xf32> to vector<1x6x16xf32>
    %47 = vector.shape_cast %46 : vector<1x6x16xf32> to vector<6x16xf32>
    %c1_28 = arith.constant 1 : index
    %c0_29 = arith.constant 0 : index
    %c0_30 = arith.constant 0 : index
    %48 = vector.load %arg2[%c1_28, %c0_29, %c0_30] : memref<5x16x16xf32, #tpu.memory_space<vmem>>, vector<1x16x16xf32>
    %49 = vector.shape_cast %48 : vector<1x16x16xf32> to vector<16x16xf32>
    %cst_31 = arith.constant dense<0.000000e+00> : vector<6x16xf32>
    %50 = tpu.matmul %47, %49, %cst_31 {dimension_numbers = #tpu.dot_dimension_numbers<[1], [0], [0], [1], [0, 0, 1, 1], [], []>} : vector<6x16xf32>, vector<16x16xf32>, vector<6x16xf32> -> vector<6x16xf32>
    %51 = arith.addf %45, %50 : vector<6x16xf32>
    %52 = vector.extract_strided_slice %0 {offsets = [1, 2, 0], sizes = [1, 6, 16], strides = [1, 1, 1]} : vector<2x10x16xf32> to vector<1x6x16xf32>
    %53 = vector.shape_cast %52 : vector<1x6x16xf32> to vector<6x16xf32>
    %c2_32 = arith.constant 2 : index
    %c0_33 = arith.constant 0 : index
    %c0_34 = arith.constant 0 : index
    %54 = vector.load %arg2[%c2_32, %c0_33, %c0_34] : memref<5x16x16xf32, #tpu.memory_space<vmem>>, vector<1x16x16xf32>
    %55 = vector.shape_cast %54 : vector<1x16x16xf32> to vector<16x16xf32>
    %cst_35 = arith.constant dense<0.000000e+00> : vector<6x16xf32>
    %56 = tpu.matmul %53, %55, %cst_35 {dimension_numbers = #tpu.dot_dimension_numbers<[1], [0], [0], [1], [0, 0, 1, 1], [], []>} : vector<6x16xf32>, vector<16x16xf32>, vector<6x16xf32> -> vector<6x16xf32>
    %57 = arith.addf %51, %56 : vector<6x16xf32>
    %58 = vector.extract_strided_slice %0 {offsets = [1, 3, 0], sizes = [1, 6, 16], strides = [1, 1, 1]} : vector<2x10x16xf32> to vector<1x6x16xf32>
    %59 = vector.shape_cast %58 : vector<1x6x16xf32> to vector<6x16xf32>
    %c3_36 = arith.constant 3 : index
    %c0_37 = arith.constant 0 : index
    %c0_38 = arith.constant 0 : index
    %60 = vector.load %arg2[%c3_36, %c0_37, %c0_38] : memref<5x16x16xf32, #tpu.memory_space<vmem>>, vector<1x16x16xf32>
    %61 = vector.shape_cast %60 : vector<1x16x16xf32> to vector<16x16xf32>
    %cst_39 = arith.constant dense<0.000000e+00> : vector<6x16xf32>
    %62 = tpu.matmul %59, %61, %cst_39 {dimension_numbers = #tpu.dot_dimension_numbers<[1], [0], [0], [1], [0, 0, 1, 1], [], []>} : vector<6x16xf32>, vector<16x16xf32>, vector<6x16xf32> -> vector<6x16xf32>
    %63 = arith.addf %57, %62 : vector<6x16xf32>
    %64 = vector.extract_strided_slice %0 {offsets = [1, 4, 0], sizes = [1, 6, 16], strides = [1, 1, 1]} : vector<2x10x16xf32> to vector<1x6x16xf32>
    %65 = vector.shape_cast %64 : vector<1x6x16xf32> to vector<6x16xf32>
    %c4_40 = arith.constant 4 : index
    %c0_41 = arith.constant 0 : index
    %c0_42 = arith.constant 0 : index
    %66 = vector.load %arg2[%c4_40, %c0_41, %c0_42] : memref<5x16x16xf32, #tpu.memory_space<vmem>>, vector<1x16x16xf32>
    %67 = vector.shape_cast %66 : vector<1x16x16xf32> to vector<16x16xf32>
    %cst_43 = arith.constant dense<0.000000e+00> : vector<6x16xf32>
    %68 = tpu.matmul %65, %67, %cst_43 {dimension_numbers = #tpu.dot_dimension_numbers<[1], [0], [0], [1], [0, 0, 1, 1], [], []>} : vector<6x16xf32>, vector<16x16xf32>, vector<6x16xf32> -> vector<6x16xf32>
    %69 = arith.addf %63, %68 : vector<6x16xf32>
    %70 = vector.broadcast %1 : vector<1x16xf32> to vector<6x16xf32>
    %71 = arith.addf %69, %70 : vector<6x16xf32>
    %72 = math.tanh %71 : vector<6x16xf32>
    %c1_44 = arith.constant 1 : index
    %c0_45 = arith.constant 0 : index
    %c0_46 = arith.constant 0 : index
    %73 = vector.load %arg4[%c1_44, %c0_45, %c0_46] : memref<2x6x16xf32, #tpu.memory_space<vmem>>, vector<1x6x16xf32>
    %74 = vector.shape_cast %73 : vector<1x6x16xf32> to vector<6x16xf32>
    %75 = vector.shape_cast %72 : vector<6x16xf32> to vector<1x6x16xf32>
    tpu.vector_store %arg4[%c1_44, %c0_45, %c0_46], %75 {strides = array<i32>} : memref<2x6x16xf32, #tpu.memory_space<vmem>>, vector<1x6x16xf32>,
    return
  }
  func.func @transform_0(%arg0: i32) -> (i32, i32, i32) {
    %c0_i32 = arith.constant 0 : i32
    %c0_i32_0 = arith.constant 0 : i32
    %c0_i32_1 = arith.constant 0 : i32
    %c0_i32_2 = arith.constant 0 : i32
    return %c0_i32, %c0_i32_0, %c0_i32_1 : i32, i32, i32
  }
  func.func @transform_1(%arg0: i32) -> (i32, i32, i32) {
    %c0_i32 = arith.constant 0 : i32
    %c0_i32_0 = arith.constant 0 : i32
    %c0_i32_1 = arith.constant 0 : i32
    %c0_i32_2 = arith.constant 0 : i32
    return %c0_i32, %c0_i32_0, %c0_i32_1 : i32, i32, i32
  }
  func.func @transform_2(%arg0: i32) -> (i32, i32) {
    %c0_i32 = arith.constant 0 : i32
    %c0_i32_0 = arith.constant 0 : i32
    %c0_i32_1 = arith.constant 0 : i32
    return %c0_i32, %c0_i32_0 : i32, i32
  }
  func.func @transform_3(%arg0: i32) -> (i32, i32, i32) {
    %c0_i32 = arith.constant 0 : i32
    %c0_i32_0 = arith.constant 0 : i32
    %c0_i32_1 = arith.constant 0 : i32
    %c0_i32_2 = arith.constant 0 : i32
    return %c0_i32, %c0_i32_0, %c0_i32_1 : i32, i32, i32
  }
}

module attributes {stable_mosaic.version = 11 : i64} {
  func.func @_conv1d_kernel(%arg0: i32, %arg1: memref<2x10x16xf32, #tpu.memory_space<vmem>>, %arg2: memref<5x16x8xf32, #tpu.memory_space<vmem>>, %arg3: memref<1x8xf32, #tpu.memory_space<vmem>>, %arg4: memref<2x6x8xf32, #tpu.memory_space<vmem>>) attributes {dimension_semantics = [#tpu.dimension_semantics<arbitrary>], iteration_bounds = array<i64: 1>, scalar_prefetch = 0 : i64, scratch_operands = 0 : i64, tpu.core_type = #tpu.core_type<tc>, window_params = [{pipeline_mode = #tpu.pipeline_mode<synchronous>, transform_indices = @transform_0, window_bounds = array<i64: 2, 10, 16>}, {pipeline_mode = #tpu.pipeline_mode<synchronous>, transform_indices = @transform_1, window_bounds = array<i64: 5, 16, 8>}, {pipeline_mode = #tpu.pipeline_mode<synchronous>, transform_indices = @transform_2, window_bounds = array<i64: 1, 8>}, {pipeline_mode = #tpu.pipeline_mode<synchronous>, transform_indices = @transform_3, window_bounds = array<i64: 2, 6, 8>}]} {
    %c0 = arith.constant 0 : index
    %c0_0 = arith.constant 0 : index
    %c0_1 = arith.constant 0 : index
    %0 = vector.load %arg1[%c0, %c0_0, %c0_1] : memref<2x10x16xf32, #tpu.memory_space<vmem>>, vector<2x10x16xf32>
    %c0_2 = arith.constant 0 : index
    %c0_3 = arith.constant 0 : index
    %1 = vector.load %arg3[%c0_2, %c0_3] : memref<1x8xf32, #tpu.memory_space<vmem>>, vector<1x8xf32>
    %cst = arith.constant 0.000000e+00 : f32
    %2 = vector.broadcast %cst : f32 to vector<6x8xf32>
    %3 = vector.extract_strided_slice %0 {offsets = [0, 0, 0], sizes = [1, 6, 16], strides = [1, 1, 1]} : vector<2x10x16xf32> to vector<1x6x16xf32>
    %4 = vector.shape_cast %3 : vector<1x6x16xf32> to vector<6x16xf32>
    %c0_4 = arith.constant 0 : index
    %c0_5 = arith.constant 0 : index
    %c0_6 = arith.constant 0 : index
    %5 = vector.load %arg2[%c0_4, %c0_5, %c0_6] : memref<5x16x8xf32, #tpu.memory_space<vmem>>, vector<1x16x8xf32>
    %6 = vector.shape_cast %5 : vector<1x16x8xf32> to vector<16x8xf32>
    %cst_7 = arith.constant dense<0.000000e+00> : vector<6x8xf32>
    %7 = tpu.matmul %4, %6, %cst_7 {dimension_numbers = #tpu.dot_dimension_numbers<[1], [0], [0], [1], [0, 0, 1, 1], [], []>} : vector<6x16xf32>, vector<16x8xf32>, vector<6x8xf32> -> vector<6x8xf32>
    %8 = arith.addf %2, %7 : vector<6x8xf32>
    %9 = vector.extract_strided_slice %0 {offsets = [0, 1, 0], sizes = [1, 6, 16], strides = [1, 1, 1]} : vector<2x10x16xf32> to vector<1x6x16xf32>
    %10 = vector.shape_cast %9 : vector<1x6x16xf32> to vector<6x16xf32>
    %c1 = arith.constant 1 : index
    %c0_8 = arith.constant 0 : index
    %c0_9 = arith.constant 0 : index
    %11 = vector.load %arg2[%c1, %c0_8, %c0_9] : memref<5x16x8xf32, #tpu.memory_space<vmem>>, vector<1x16x8xf32>
    %12 = vector.shape_cast %11 : vector<1x16x8xf32> to vector<16x8xf32>
    %cst_10 = arith.constant dense<0.000000e+00> : vector<6x8xf32>
    %13 = tpu.matmul %10, %12, %cst_10 {dimension_numbers = #tpu.dot_dimension_numbers<[1], [0], [0], [1], [0, 0, 1, 1], [], []>} : vector<6x16xf32>, vector<16x8xf32>, vector<6x8xf32> -> vector<6x8xf32>
    %14 = arith.addf %8, %13 : vector<6x8xf32>
    %15 = vector.extract_strided_slice %0 {offsets = [0, 2, 0], sizes = [1, 6, 16], strides = [1, 1, 1]} : vector<2x10x16xf32> to vector<1x6x16xf32>
    %16 = vector.shape_cast %15 : vector<1x6x16xf32> to vector<6x16xf32>
    %c2 = arith.constant 2 : index
    %c0_11 = arith.constant 0 : index
    %c0_12 = arith.constant 0 : index
    %17 = vector.load %arg2[%c2, %c0_11, %c0_12] : memref<5x16x8xf32, #tpu.memory_space<vmem>>, vector<1x16x8xf32>
    %18 = vector.shape_cast %17 : vector<1x16x8xf32> to vector<16x8xf32>
    %cst_13 = arith.constant dense<0.000000e+00> : vector<6x8xf32>
    %19 = tpu.matmul %16, %18, %cst_13 {dimension_numbers = #tpu.dot_dimension_numbers<[1], [0], [0], [1], [0, 0, 1, 1], [], []>} : vector<6x16xf32>, vector<16x8xf32>, vector<6x8xf32> -> vector<6x8xf32>
    %20 = arith.addf %14, %19 : vector<6x8xf32>
    %21 = vector.extract_strided_slice %0 {offsets = [0, 3, 0], sizes = [1, 6, 16], strides = [1, 1, 1]} : vector<2x10x16xf32> to vector<1x6x16xf32>
    %22 = vector.shape_cast %21 : vector<1x6x16xf32> to vector<6x16xf32>
    %c3 = arith.constant 3 : index
    %c0_14 = arith.constant 0 : index
    %c0_15 = arith.constant 0 : index
    %23 = vector.load %arg2[%c3, %c0_14, %c0_15] : memref<5x16x8xf32, #tpu.memory_space<vmem>>, vector<1x16x8xf32>
    %24 = vector.shape_cast %23 : vector<1x16x8xf32> to vector<16x8xf32>
    %cst_16 = arith.constant dense<0.000000e+00> : vector<6x8xf32>
    %25 = tpu.matmul %22, %24, %cst_16 {dimension_numbers = #tpu.dot_dimension_numbers<[1], [0], [0], [1], [0, 0, 1, 1], [], []>} : vector<6x16xf32>, vector<16x8xf32>, vector<6x8xf32> -> vector<6x8xf32>
    %26 = arith.addf %20, %25 : vector<6x8xf32>
    %27 = vector.extract_strided_slice %0 {offsets = [0, 4, 0], sizes = [1, 6, 16], strides = [1, 1, 1]} : vector<2x10x16xf32> to vector<1x6x16xf32>
    %28 = vector.shape_cast %27 : vector<1x6x16xf32> to vector<6x16xf32>
    %c4 = arith.constant 4 : index
    %c0_17 = arith.constant 0 : index
    %c0_18 = arith.constant 0 : index
    %29 = vector.load %arg2[%c4, %c0_17, %c0_18] : memref<5x16x8xf32, #tpu.memory_space<vmem>>, vector<1x16x8xf32>
    %30 = vector.shape_cast %29 : vector<1x16x8xf32> to vector<16x8xf32>
    %cst_19 = arith.constant dense<0.000000e+00> : vector<6x8xf32>
    %31 = tpu.matmul %28, %30, %cst_19 {dimension_numbers = #tpu.dot_dimension_numbers<[1], [0], [0], [1], [0, 0, 1, 1], [], []>} : vector<6x16xf32>, vector<16x8xf32>, vector<6x8xf32> -> vector<6x8xf32>
    %32 = arith.addf %26, %31 : vector<6x8xf32>
    %33 = vector.broadcast %1 : vector<1x8xf32> to vector<6x8xf32>
    %34 = arith.addf %32, %33 : vector<6x8xf32>
    %c0_20 = arith.constant 0 : index
    %c0_21 = arith.constant 0 : index
    %c0_22 = arith.constant 0 : index
    %35 = vector.load %arg4[%c0_20, %c0_21, %c0_22] : memref<2x6x8xf32, #tpu.memory_space<vmem>>, vector<1x6x8xf32>
    %36 = vector.shape_cast %35 : vector<1x6x8xf32> to vector<6x8xf32>
    %37 = vector.shape_cast %34 : vector<6x8xf32> to vector<1x6x8xf32>
    tpu.vector_store %arg4[%c0_20, %c0_21, %c0_22], %37 {strides = array<i32>} : memref<2x6x8xf32, #tpu.memory_space<vmem>>, vector<1x6x8xf32>,
    %cst_23 = arith.constant 0.000000e+00 : f32
    %38 = vector.broadcast %cst_23 : f32 to vector<6x8xf32>
    %39 = vector.extract_strided_slice %0 {offsets = [1, 0, 0], sizes = [1, 6, 16], strides = [1, 1, 1]} : vector<2x10x16xf32> to vector<1x6x16xf32>
    %40 = vector.shape_cast %39 : vector<1x6x16xf32> to vector<6x16xf32>
    %c0_24 = arith.constant 0 : index
    %c0_25 = arith.constant 0 : index
    %c0_26 = arith.constant 0 : index
    %41 = vector.load %arg2[%c0_24, %c0_25, %c0_26] : memref<5x16x8xf32, #tpu.memory_space<vmem>>, vector<1x16x8xf32>
    %42 = vector.shape_cast %41 : vector<1x16x8xf32> to vector<16x8xf32>
    %cst_27 = arith.constant dense<0.000000e+00> : vector<6x8xf32>
    %43 = tpu.matmul %40, %42, %cst_27 {dimension_numbers = #tpu.dot_dimension_numbers<[1], [0], [0], [1], [0, 0, 1, 1], [], []>} : vector<6x16xf32>, vector<16x8xf32>, vector<6x8xf32> -> vector<6x8xf32>
    %44 = arith.addf %38, %43 : vector<6x8xf32>
    %45 = vector.extract_strided_slice %0 {offsets = [1, 1, 0], sizes = [1, 6, 16], strides = [1, 1, 1]} : vector<2x10x16xf32> to vector<1x6x16xf32>
    %46 = vector.shape_cast %45 : vector<1x6x16xf32> to vector<6x16xf32>
    %c1_28 = arith.constant 1 : index
    %c0_29 = arith.constant 0 : index
    %c0_30 = arith.constant 0 : index
    %47 = vector.load %arg2[%c1_28, %c0_29, %c0_30] : memref<5x16x8xf32, #tpu.memory_space<vmem>>, vector<1x16x8xf32>
    %48 = vector.shape_cast %47 : vector<1x16x8xf32> to vector<16x8xf32>
    %cst_31 = arith.constant dense<0.000000e+00> : vector<6x8xf32>
    %49 = tpu.matmul %46, %48, %cst_31 {dimension_numbers = #tpu.dot_dimension_numbers<[1], [0], [0], [1], [0, 0, 1, 1], [], []>} : vector<6x16xf32>, vector<16x8xf32>, vector<6x8xf32> -> vector<6x8xf32>
    %50 = arith.addf %44, %49 : vector<6x8xf32>
    %51 = vector.extract_strided_slice %0 {offsets = [1, 2, 0], sizes = [1, 6, 16], strides = [1, 1, 1]} : vector<2x10x16xf32> to vector<1x6x16xf32>
    %52 = vector.shape_cast %51 : vector<1x6x16xf32> to vector<6x16xf32>
    %c2_32 = arith.constant 2 : index
    %c0_33 = arith.constant 0 : index
    %c0_34 = arith.constant 0 : index
    %53 = vector.load %arg2[%c2_32, %c0_33, %c0_34] : memref<5x16x8xf32, #tpu.memory_space<vmem>>, vector<1x16x8xf32>
    %54 = vector.shape_cast %53 : vector<1x16x8xf32> to vector<16x8xf32>
    %cst_35 = arith.constant dense<0.000000e+00> : vector<6x8xf32>
    %55 = tpu.matmul %52, %54, %cst_35 {dimension_numbers = #tpu.dot_dimension_numbers<[1], [0], [0], [1], [0, 0, 1, 1], [], []>} : vector<6x16xf32>, vector<16x8xf32>, vector<6x8xf32> -> vector<6x8xf32>
    %56 = arith.addf %50, %55 : vector<6x8xf32>
    %57 = vector.extract_strided_slice %0 {offsets = [1, 3, 0], sizes = [1, 6, 16], strides = [1, 1, 1]} : vector<2x10x16xf32> to vector<1x6x16xf32>
    %58 = vector.shape_cast %57 : vector<1x6x16xf32> to vector<6x16xf32>
    %c3_36 = arith.constant 3 : index
    %c0_37 = arith.constant 0 : index
    %c0_38 = arith.constant 0 : index
    %59 = vector.load %arg2[%c3_36, %c0_37, %c0_38] : memref<5x16x8xf32, #tpu.memory_space<vmem>>, vector<1x16x8xf32>
    %60 = vector.shape_cast %59 : vector<1x16x8xf32> to vector<16x8xf32>
    %cst_39 = arith.constant dense<0.000000e+00> : vector<6x8xf32>
    %61 = tpu.matmul %58, %60, %cst_39 {dimension_numbers = #tpu.dot_dimension_numbers<[1], [0], [0], [1], [0, 0, 1, 1], [], []>} : vector<6x16xf32>, vector<16x8xf32>, vector<6x8xf32> -> vector<6x8xf32>
    %62 = arith.addf %56, %61 : vector<6x8xf32>
    %63 = vector.extract_strided_slice %0 {offsets = [1, 4, 0], sizes = [1, 6, 16], strides = [1, 1, 1]} : vector<2x10x16xf32> to vector<1x6x16xf32>
    %64 = vector.shape_cast %63 : vector<1x6x16xf32> to vector<6x16xf32>
    %c4_40 = arith.constant 4 : index
    %c0_41 = arith.constant 0 : index
    %c0_42 = arith.constant 0 : index
    %65 = vector.load %arg2[%c4_40, %c0_41, %c0_42] : memref<5x16x8xf32, #tpu.memory_space<vmem>>, vector<1x16x8xf32>
    %66 = vector.shape_cast %65 : vector<1x16x8xf32> to vector<16x8xf32>
    %cst_43 = arith.constant dense<0.000000e+00> : vector<6x8xf32>
    %67 = tpu.matmul %64, %66, %cst_43 {dimension_numbers = #tpu.dot_dimension_numbers<[1], [0], [0], [1], [0, 0, 1, 1], [], []>} : vector<6x16xf32>, vector<16x8xf32>, vector<6x8xf32> -> vector<6x8xf32>
    %68 = arith.addf %62, %67 : vector<6x8xf32>
    %69 = vector.broadcast %1 : vector<1x8xf32> to vector<6x8xf32>
    %70 = arith.addf %68, %69 : vector<6x8xf32>
    %c1_44 = arith.constant 1 : index
    %c0_45 = arith.constant 0 : index
    %c0_46 = arith.constant 0 : index
    %71 = vector.load %arg4[%c1_44, %c0_45, %c0_46] : memref<2x6x8xf32, #tpu.memory_space<vmem>>, vector<1x6x8xf32>
    %72 = vector.shape_cast %71 : vector<1x6x8xf32> to vector<6x8xf32>
    %73 = vector.shape_cast %70 : vector<6x8xf32> to vector<1x6x8xf32>
    tpu.vector_store %arg4[%c1_44, %c0_45, %c0_46], %73 {strides = array<i32>} : memref<2x6x8xf32, #tpu.memory_space<vmem>>, vector<1x6x8xf32>,
    return
  }
  func.func @transform_0(%arg0: i32) -> (i32, i32, i32) {
    %c0_i32 = arith.constant 0 : i32
    %c0_i32_0 = arith.constant 0 : i32
    %c0_i32_1 = arith.constant 0 : i32
    %c0_i32_2 = arith.constant 0 : i32
    return %c0_i32, %c0_i32_0, %c0_i32_1 : i32, i32, i32
  }
  func.func @transform_1(%arg0: i32) -> (i32, i32, i32) {
    %c0_i32 = arith.constant 0 : i32
    %c0_i32_0 = arith.constant 0 : i32
    %c0_i32_1 = arith.constant 0 : i32
    %c0_i32_2 = arith.constant 0 : i32
    return %c0_i32, %c0_i32_0, %c0_i32_1 : i32, i32, i32
  }
  func.func @transform_2(%arg0: i32) -> (i32, i32) {
    %c0_i32 = arith.constant 0 : i32
    %c0_i32_0 = arith.constant 0 : i32
    %c0_i32_1 = arith.constant 0 : i32
    return %c0_i32, %c0_i32_0 : i32, i32
  }
  func.func @transform_3(%arg0: i32) -> (i32, i32, i32) {
    %c0_i32 = arith.constant 0 : i32
    %c0_i32_0 = arith.constant 0 : i32
    %c0_i32_1 = arith.constant 0 : i32
    %c0_i32_2 = arith.constant 0 : i32
    return %c0_i32, %c0_i32_0, %c0_i32_1 : i32, i32, i32
  }
}

</mosaic_0001>

<llo_original>
// kernel: tacotron2_forward.17
$region0: #{tacotron2_forward.17}
  #allocation0 [shape = 'u32[]', space=smem, size = 0x4, offset = 0x4, fixed_abs, tag = 'smem constant byte address 0x4 - core index']
  #allocation1 [shape = 'u32[144,128]{1,0:T(1,128)}', space=vmem, size = 0x12000, scoped, tag = 'internal scratch']
  %s0 = inlined_call_operand.vmem [shape: f32[16,32], index: 0, kind: input, shape index: {}]
  %s1 = inlined_call_operand.vmem [shape: f32[32,16], index: 1, kind: input, shape index: {}]
  %s2 = inlined_call_operand.vmem [shape: f32[1,16], index: 2, kind: input, shape index: {}]
  %s3 = inlined_call_operand.hbm [shape: f32[16,16], index: 3, kind: output, shape index: {}]
  %s4 = sld [smem:[#allocation0]]
  $region22: #{tacotron2_forward.17} parent=0
    _
  %s6 = ssub.s32 1, %s4
  %s7 = scalar_select 0, %s6, %s4
  $region1: #{tacotron2_forward.17} parent=0
    #allocation2 [shape = 'u8[8192]{0}', space=vmem, size = 0x2000, scoped, tag = 'output window, operand 0, single buffered']
    #allocation3 [shape = 's32[1]{0}', space=sflag, size = 0x4, scoped, tag = 'scoped memory for tacotron2_forward.17']
    %8 = vsyncpa [#allocation3], 0
    // Predicated region
    $region2: #{tacotron2_forward.17} parent=1 // pred_check
      _
    $region3: #{tacotron2_forward.17} parent=1 // pred_check_branch
      %10 = sbr.rel (0) target = $region5
    $region4: #{tacotron2_forward.17} parent=1 // pred_region
      _
    $region5: #{tacotron2_forward.17} parent=1 // pred_fallthru
      _
    // Predicated region
    $region6: #{tacotron2_forward.17} parent=1 // pred_check
      _
    $region7: #{tacotron2_forward.17} parent=1 // pred_check_branch
      %12 = sbr.rel (0) target = $region9
    $region8: #{tacotron2_forward.17} parent=1 // pred_region
      _
    $region9: #{tacotron2_forward.17} parent=1 // pred_fallthru
      _
    // Predicated region
    $region10: #{tacotron2_forward.17} parent=1 // pred_check
      _
    $region11: #{tacotron2_forward.17} parent=1 // pred_check_branch
      %14 = sbr.rel (0) target = $region13
    $region12: #{tacotron2_forward.17} parent=1 // pred_region
      _
    $region13: #{tacotron2_forward.17} parent=1 // pred_fallthru
      _
    %v15 = vld [vmem:[%s0] sm:$0xff]
    %v16 = vld [vmem:[%s0 + $0x8] sm:$0xff]
    %v17 = vld [vmem:[%s1] sm:$0xff]
    %v18 = vld [vmem:[%s1 + $0x8] sm:$0xff]
    %v19 = vld [vmem:[%s1 + $0x10] sm:$0xff]
    %v20 = vld [vmem:[%s1 + $0x18] sm:$0xff]
    %v21 = vld [vmem:[%s2] sm:$0x1]
    %v23 = vlaneseq
    %v24 = vshrl.u32 %v23, 7
    %v25 = vsub.s32 0, %v24
    %v26 = vrot.slane %v21, %v25
    %vm28 = vcmask 261120
    %v30 = vsel %vm28, %v15, 0
    %v33 = vsel %vm28, %v16, 0
    %35 = vmatprep.subr.mxu0 0.0
    %36 = vmatpush1.msra.mxu0 %v17
    %37 = vmatprep.subr.mxu0 0.0
    %38 = vmatpush1.msra.mxu0 %v18
    %39 = vmatprep.subr.mxu0 0.0
    %40 = vmatpush1.msra.mxu0 %v19
    %41 = vmatprep.subr.mxu0 0.0
    %42 = vmatpush1.msra.mxu0 %v20
    %43 = vmatprep.subr.mxu0 0.0
    %44 = vmatpush1.msra.mxu0 0.0
    %45 = vmatprep.subr.mxu0 0.0
    %46 = vmatpush1.msra.mxu0 0.0
    %47 = vmatprep.subr.mxu0 0.0
    %48 = vmatpush1.msra.mxu0 0.0
    %49 = vmatprep.subr.mxu0 0.0
    %50 = vmatpush1.msra.mxu0 0.0
    %51 = vmatprep.subr.mxu0 0.0
    %52 = vmatpush1.msra.mxu0 0.0
    %53 = vmatprep.subr.mxu0 0.0
    %54 = vmatpush1.msra.mxu0 0.0
    %55 = vmatprep.subr.mxu0 0.0
    %56 = vmatpush1.msra.mxu0 0.0
    %57 = vmatprep.subr.mxu0 0.0
    %58 = vmatpush1.msra.mxu0 0.0
    %59 = vmatprep.subr.mxu0 0.0
    %60 = vmatpush1.msra.mxu0 0.0
    %61 = vmatprep.subr.mxu0 0.0
    %62 = vmatpush1.msra.mxu0 0.0
    %63 = vmatprep.subr.mxu0 0.0
    %64 = vmatpush1.msra.mxu0 0.0
    %65 = vmatprep.subr.mxu0 0.0
    %66 = vmatpush1.msra.mxu0 0.0
    %67 = vmatprep.subr.mxu0 0.0
    %68 = vmatpush1.msra.mxu0 0.0
    %69 = vmatprep.subr.mxu0 0.0
    %70 = vmatpush1.msra.mxu0 0.0
    %71 = vmatprep.subr.mxu0 0.0
    %72 = vmatpush1.msra.mxu0 0.0
    %73 = vmatprep.subr.mxu0 0.0
    %74 = vmatpush1.msra.mxu0 0.0
    %75 = vmatprep.subr.mxu0 0.0
    %76 = vmatpush1.msra.mxu0 0.0
    %77 = vmatprep.subr.mxu0 0.0
    %78 = vmatpush1.msra.mxu0 0.0
    %79 = vmatprep.subr.mxu0 0.0
    %80 = vmatpush1.msra.mxu0 0.0
    %81 = vmatprep.subr.mxu0 0.0
    %82 = vmatpush1.msra.mxu0 0.0
    %83 = vmatprep.subr.mxu0 0.0
    %84 = vmatpush1.msra.mxu0 0.0
    %85 = vmatprep.subr.mxu0 0.0
    %86 = vmatpush1.msra.mxu0 0.0
    %87 = vmatprep.subr.mxu0 0.0
    %88 = vmatpush1.msra.mxu0 0.0
    %89 = vmatprep.subr.mxu0 0.0
    %90 = vmatpush1.msra.mxu0 0.0
    %91 = vmatprep.subr.mxu0 0.0
    %92 = vmatpush1.msra.mxu0 0.0
    %93 = vmatprep.subr.mxu0 0.0
    %94 = vmatpush1.msra.mxu0 0.0
    %95 = vmatprep.subr.mxu0 0.0
    %96 = vmatpush1.msra.mxu0 0.0
    %97 = vmatprep.subr.mxu0 0.0
    %98 = vmatpush1.msra.mxu0 0.0
    %99 = vmatprep.mubr.f32.mxu0 0.0
    %100 = vmatmul.mubr.f32.gmra.mrb[0].mxu0 %v30
    %v101 = vpop.f32.mrb[0].mxu0
    %v102 = vadd.f32 %v26, %v101
    %v103 = vpop.f32.mrb[0].mxu0
    %104 = vmatprep.mubr.f32.mxu0 0.0
    %105 = vmatmul.mubr.f32.gmra.mrb[0].mxu0 %v33
    %v106 = vpop.f32.mrb[0].mxu0
    %v107 = vadd.f32 %v26, %v106
    %v108 = vpop.f32.mrb[0].mxu0
    %109 = vdwg.mxu0
    %vm110 = vcmask 130048
    %111 = vst.msk [vmem:[#allocation2] sm:$0xff] %vm110, %v102
    %112 = vst.msk [vmem:[#allocation2 + $0x8] sm:$0xff] %vm110, %v107
    // Predicated region
    $region14: #{tacotron2_forward.17} parent=1 // pred_check
      _
    $region15: #{tacotron2_forward.17} parent=1 // pred_check_branch
      %114 = sbr.rel (0) target = $region17
    $region16: #{tacotron2_forward.17} parent=1 // pred_region
      %s116 = ssub.s32 256, 256
      %117 = vsyncadd [#allocation3], %s116
      %s118 = sshll.u32 [#allocation2], 4
      %s119 = int_to_ptr.vmem [resolvable:$true] %s118
      %124 = dma.vmem_to_hbm [thread:$0]  %s119, 256, %s3, [#allocation3], 128, 128, 8
    $region17: #{tacotron2_forward.17} parent=1 // pred_fallthru
      _
    // Predicated region
    $region18: #{tacotron2_forward.17} parent=1 // pred_check
      _
    $region19: #{tacotron2_forward.17} parent=1 // pred_check_branch
      %126 = sbr.rel (0) target = $region21
    $region20: #{tacotron2_forward.17} parent=1 // pred_region
      %127 = dma.done [#allocation3], 256
    $region21: #{tacotron2_forward.17} parent=1 // pred_fallthru
      _
    %128 = vsyncpa [#allocation3], 1

// kernel: tacotron2_forward.15
$region0: #{tacotron2_forward.15}
  #allocation0 [shape = 'u32[]', space=smem, size = 0x4, offset = 0x4, fixed_abs, tag = 'smem constant byte address 0x4 - core index']
  #allocation1 [shape = 'u32[144,128]{1,0:T(1,128)}', space=vmem, size = 0x12000, scoped, tag = 'internal scratch']
  #allocation2 [shape = 'f32[2,16]{1,0:T(2,128)}', space=vmem, size = 0x400, scoped, tag = 'scratch operand']
  #allocation3 [shape = 'f32[2,16]{1,0:T(2,128)}', space=vmem, size = 0x400, scoped, tag = 'scratch operand']
  #allocation4 [shape = 'f32[2,16]{1,0:T(2,128)}', space=vmem, size = 0x400, scoped, tag = 'scratch operand']
  #allocation5 [shape = 'f32[2,16]{1,0:T(2,128)}', space=vmem, size = 0x400, scoped, tag = 'scratch operand']
  %s0 = inlined_call_operand.vmem [shape: f32[8,2,32], index: 0, kind: input, shape index: {}]
  %s1 = inlined_call_operand.vmem [shape: f32[8,2,1], index: 1, kind: input, shape index: {}]
  %s2 = inlined_call_operand.vmem [shape: f32[48,64], index: 2, kind: input, shape index: {}]
  %s3 = inlined_call_operand.vmem [shape: f32[1,64], index: 3, kind: input, shape index: {}]
  %s4 = inlined_call_operand.vmem [shape: f32[48,64], index: 4, kind: input, shape index: {}]
  %s5 = inlined_call_operand.vmem [shape: f32[1,64], index: 5, kind: input, shape index: {}]
  %s6 = inlined_call_operand.vmem [shape: f32[8,2,32], index: 6, kind: output, shape index: {}]
  %s7 = sld [smem:[#allocation0]]
  $region41: #{tacotron2_forward.15} parent=0
    _
  %s9 = ssub.s32 1, %s7
  %s10 = scalar_select 0, %s9, %s7
  // Predicated region
  $region2: #{tacotron2_forward.15} parent=0 // pred_check
    _
  $region3: #{tacotron2_forward.15} parent=0 // pred_check_branch
    %12 = sbr.rel (0) target = $region5
  $region4: #{tacotron2_forward.15} parent=0 // pred_region
    _
  $region5: #{tacotron2_forward.15} parent=0 // pred_fallthru
    _
  // Predicated region
  $region6: #{tacotron2_forward.15} parent=0 // pred_check
    _
  $region7: #{tacotron2_forward.15} parent=0 // pred_check_branch
    %14 = sbr.rel (0) target = $region9
  $region8: #{tacotron2_forward.15} parent=0 // pred_region
    _
  $region9: #{tacotron2_forward.15} parent=0 // pred_fallthru
    _
  // Predicated region
  $region10: #{tacotron2_forward.15} parent=0 // pred_check
    _
  $region11: #{tacotron2_forward.15} parent=0 // pred_check_branch
    %16 = sbr.rel (0) target = $region13
  $region12: #{tacotron2_forward.15} parent=0 // pred_region
    _
  $region13: #{tacotron2_forward.15} parent=0 // pred_fallthru
    _
  // Predicated region
  $region14: #{tacotron2_forward.15} parent=0 // pred_check
    _
  $region15: #{tacotron2_forward.15} parent=0 // pred_check_branch
    %18 = sbr.rel (0) target = $region17
  $region16: #{tacotron2_forward.15} parent=0 // pred_region
    _
  $region17: #{tacotron2_forward.15} parent=0 // pred_fallthru
    _
  // Predicated region
  $region18: #{tacotron2_forward.15} parent=0 // pred_check
    _
  $region19: #{tacotron2_forward.15} parent=0 // pred_check_branch
    %20 = sbr.rel (0) target = $region21
  $region20: #{tacotron2_forward.15} parent=0 // pred_region
    _
  $region21: #{tacotron2_forward.15} parent=0 // pred_fallthru
    _
  // Predicated region
  $region22: #{tacotron2_forward.15} parent=0 // pred_check
    _
  $region23: #{tacotron2_forward.15} parent=0 // pred_check_branch
    %22 = sbr.rel (0) target = $region25
  $region24: #{tacotron2_forward.15} parent=0 // pred_region
    _
  $region25: #{tacotron2_forward.15} parent=0 // pred_fallthru
    _
  %v23 = vld [vmem:[%s2] sm:$0xff]
  %v24 = vld [vmem:[%s2 + $0x8] sm:$0xff]
  %v25 = vld [vmem:[%s2 + $0x10] sm:$0xff]
  %v26 = vld [vmem:[%s2 + $0x18] sm:$0xff]
  %v27 = vld [vmem:[%s2 + $0x20] sm:$0xff]
  %v28 = vld [vmem:[%s2 + $0x28] sm:$0xff]
  %v29 = vld [vmem:[%s3] sm:$0x1]
  %v30 = vld [vmem:[%s4] sm:$0xff]
  %v31 = vld [vmem:[%s4 + $0x8] sm:$0xff]
  %v32 = vld [vmem:[%s4 + $0x10] sm:$0xff]
  %v33 = vld [vmem:[%s4 + $0x18] sm:$0xff]
  %v34 = vld [vmem:[%s4 + $0x20] sm:$0xff]
  %v35 = vld [vmem:[%s4 + $0x28] sm:$0xff]
  %v36 = vld [vmem:[%s5] sm:$0x1]
  %vm37 = vcmask 123904
  %38 = vst.msk [vmem:[#allocation2] sm:$0x3] %vm37, 0.0
  %39 = vst.msk [vmem:[#allocation3] sm:$0x3] %vm37, 0.0
  %40 = vst.msk [vmem:[#allocation4] sm:$0x3] %vm37, 0.0
  %41 = vst.msk [vmem:[#allocation5] sm:$0x3] %vm37, 0.0
  loop: start=0, step=1, limit=8
  $region26: #{tacotron2_forward.15} parent=0 // loop_pre_header
    _
  $region27: #{tacotron2_forward.15} parent=0 // loop_header
    %s43 = sphi 0, %s47
    %p44 = scmp.ge.s32.totalorder %s43, 8
  $region28: #{tacotron2_forward.15} parent=0 // loop_header_branch
    %46 = sbr.rel (%p44) target = $region32
  $region29: #{tacotron2_forward.15} parent=0 // loop_body
    %s48 = ssub.s32 7, %s43
    %s49 = smul.u32 %s43, 2
    %s50 = scalar_lea.vmem %s1, %s49
    %v51 = vld [vmem:[%s50] sm:$0x3]
    %s52 = smul.u32 %s48, 2
    %s53 = scalar_lea.vmem %s1, %s52
    %v54 = vld [vmem:[%s53] sm:$0x3]
    %v55 = vld [vmem:[#allocation2] sm:$0x3]
    %v56 = vld [vmem:[#allocation3] sm:$0x3]
    %v57 = vld [vmem:[#allocation4] sm:$0x3]
    %v58 = vld [vmem:[#allocation5] sm:$0x3]
    %s59 = scalar_lea.vmem %s0, %s49
    %v60 = vld [vmem:[%s59] sm:$0x3]
    %62 = vrot.lane.b32.xlu0 %v55, 32
    %v63 = vpop.permute.xlu0 %62
    %vm65 = vcmask 261120
    %v66 = vsel %vm65, %v60, %v63
    %v68 = vlaneseq
    %v69 = vshrl.u32 %v68, 7
    %v70 = vsub.s32 0, %v69
    %v71 = vrot.slane %v29, %v70
    %vm73 = vcmask 392192
    %v75 = vsel %vm73, %v66, 0
    %77 = vmatprep.subr.mxu0 0.0
    %78 = vmatpush1.msra.mxu0 %v23
    %79 = vmatprep.subr.mxu0 0.0
    %80 = vmatpush1.msra.mxu0 %v24
    %81 = vmatprep.subr.mxu0 0.0
    %82 = vmatpush1.msra.mxu0 %v25
    %83 = vmatprep.subr.mxu0 0.0
    %84 = vmatpush1.msra.mxu0 %v26
    %85 = vmatprep.subr.mxu0 0.0
    %86 = vmatpush1.msra.mxu0 %v27
    %87 = vmatprep.subr.mxu0 0.0
    %88 = vmatpush1.msra.mxu0 %v28
    %89 = vmatprep.subr.mxu0 0.0
    %90 = vmatpush1.msra.mxu0 0.0
    %91 = vmatprep.subr.mxu0 0.0
    %92 = vmatpush1.msra.mxu0 0.0
    %93 = vmatprep.subr.mxu0 0.0
    %94 = vmatpush1.msra.mxu0 0.0
    %95 = vmatprep.subr.mxu0 0.0
    %96 = vmatpush1.msra.mxu0 0.0
    %97 = vmatprep.subr.mxu0 0.0
    %98 = vmatpush1.msra.mxu0 0.0
    %99 = vmatprep.subr.mxu0 0.0
    %100 = vmatpush1.msra.mxu0 0.0
    %101 = vmatprep.subr.mxu0 0.0
    %102 = vmatpush1.msra.mxu0 0.0
    %103 = vmatprep.subr.mxu0 0.0
    %104 = vmatpush1.msra.mxu0 0.0
    %105 = vmatprep.subr.mxu0 0.0
    %106 = vmatpush1.msra.mxu0 0.0
    %107 = vmatprep.subr.mxu0 0.0
    %108 = vmatpush1.msra.mxu0 0.0
    %109 = vmatprep.subr.mxu0 0.0
    %110 = vmatpush1.msra.mxu0 0.0
    %111 = vmatprep.subr.mxu0 0.0
    %112 = vmatpush1.msra.mxu0 0.0
    %113 = vmatprep.subr.mxu0 0.0
    %114 = vmatpush1.msra.mxu0 0.0
    %115 = vmatprep.subr.mxu0 0.0
    %116 = vmatpush1.msra.mxu0 0.0
    %117 = vmatprep.subr.mxu0 0.0
    %118 = vmatpush1.msra.mxu0 0.0
    %119 = vmatprep.subr.mxu0 0.0
    %120 = vmatpush1.msra.mxu0 0.0
    %121 = vmatprep.subr.mxu0 0.0
    %122 = vmatpush1.msra.mxu0 0.0
    %123 = vmatprep.subr.mxu0 0.0
    %124 = vmatpush1.msra.mxu0 0.0
    %125 = vmatprep.subr.mxu0 0.0
    %126 = vmatpush1.msra.mxu0 0.0
    %127 = vmatprep.subr.mxu0 0.0
    %128 = vmatpush1.msra.mxu0 0.0
    %129 = vmatprep.subr.mxu0 0.0
    %130 = vmatpush1.msra.mxu0 0.0
    %131 = vmatprep.subr.mxu0 0.0
    %132 = vmatpush1.msra.mxu0 0.0
    %133 = vmatprep.subr.mxu0 0.0
    %134 = vmatpush1.msra.mxu0 0.0
    %135 = vmatprep.subr.mxu0 0.0
    %136 = vmatpush1.msra.mxu0 0.0
    %137 = vmatprep.subr.mxu0 0.0
    %138 = vmatpush1.msra.mxu0 0.0
    %139 = vmatprep.subr.mxu0 0.0
    %140 = vmatpush1.msra.mxu0 0.0
    %141 = vmatprep.mubr.f32.mxu0 0.0
    %142 = vmatmul.mubr.f32.gmra.mrb[0].mxu0 %v75
    %v143 = vpop.f32.mrb[0].mxu0
    %v144 = vadd.f32 %v71, %v143
    %v145 = vpop.f32.mrb[0].mxu0
    %146 = vdwg.mxu0
    %s147 = scalar_lea.vmem %s0, %s52
    %v148 = vld [vmem:[%s147] sm:$0x3]
    %150 = vrot.lane.b32.xlu0 %v57, 32
    %v151 = vpop.permute.xlu0 %150
    %v153 = vsel %vm65, %v148, %v151
    %v155 = vlaneseq
    %v156 = vshrl.u32 %v155, 7
    %v157 = vsub.s32 0, %v156
    %v158 = vrot.slane %v36, %v157
    %v161 = vsel %vm73, %v153, 0
    %163 = vmatprep.subr.mxu0 0.0
    %164 = vmatpush1.msra.mxu0 %v30
    %165 = vmatprep.subr.mxu0 0.0
    %166 = vmatpush1.msra.mxu0 %v31
    %167 = vmatprep.subr.mxu0 0.0
    %168 = vmatpush1.msra.mxu0 %v32
    %169 = vmatprep.subr.mxu0 0.0
    %170 = vmatpush1.msra.mxu0 %v33
    %171 = vmatprep.subr.mxu0 0.0
    %172 = vmatpush1.msra.mxu0 %v34
    %173 = vmatprep.subr.mxu0 0.0
    %174 = vmatpush1.msra.mxu0 %v35
    %175 = vmatprep.subr.mxu0 0.0
    %176 = vmatpush1.msra.mxu0 0.0
    %177 = vmatprep.subr.mxu0 0.0
    %178 = vmatpush1.msra.mxu0 0.0
    %179 = vmatprep.subr.mxu0 0.0
    %180 = vmatpush1.msra.mxu0 0.0
    %181 = vmatprep.subr.mxu0 0.0
    %182 = vmatpush1.msra.mxu0 0.0
    %183 = vmatprep.subr.mxu0 0.0
    %184 = vmatpush1.msra.mxu0 0.0
    %185 = vmatprep.subr.mxu0 0.0
    %186 = vmatpush1.msra.mxu0 0.0
    %187 = vmatprep.subr.mxu0 0.0
    %188 = vmatpush1.msra.mxu0 0.0
    %189 = vmatprep.subr.mxu0 0.0
    %190 = vmatpush1.msra.mxu0 0.0
    %191 = vmatprep.subr.mxu0 0.0
    %192 = vmatpush1.msra.mxu0 0.0
    %193 = vmatprep.subr.mxu0 0.0
    %194 = vmatpush1.msra.mxu0 0.0
    %195 = vmatprep.subr.mxu0 0.0
    %196 = vmatpush1.msra.mxu0 0.0
    %197 = vmatprep.subr.mxu0 0.0
    %198 = vmatpush1.msra.mxu0 0.0
    %199 = vmatprep.subr.mxu0 0.0
    %200 = vmatpush1.msra.mxu0 0.0
    %201 = vmatprep.subr.mxu0 0.0
    %202 = vmatpush1.msra.mxu0 0.0
    %203 = vmatprep.subr.mxu0 0.0
    %204 = vmatpush1.msra.mxu0 0.0
    %205 = vmatprep.subr.mxu0 0.0
    %206 = vmatpush1.msra.mxu0 0.0
    %207 = vmatprep.subr.mxu0 0.0
    %208 = vmatpush1.msra.mxu0 0.0
    %209 = vmatprep.subr.mxu0 0.0
    %210 = vmatpush1.msra.mxu0 0.0
    %211 = vmatprep.subr.mxu0 0.0
    %212 = vmatpush1.msra.mxu0 0.0
    %213 = vmatprep.subr.mxu0 0.0
    %214 = vmatpush1.msra.mxu0 0.0
    %215 = vmatprep.subr.mxu0 0.0
    %216 = vmatpush1.msra.mxu0 0.0
    %217 = vmatprep.subr.mxu0 0.0
    %218 = vmatpush1.msra.mxu0 0.0
    %219 = vmatprep.subr.mxu0 0.0
    %220 = vmatpush1.msra.mxu0 0.0
    %221 = vmatprep.subr.mxu0 0.0
    %222 = vmatpush1.msra.mxu0 0.0
    %223 = vmatprep.subr.mxu0 0.0
    %224 = vmatpush1.msra.mxu0 0.0
    %225 = vmatprep.subr.mxu0 0.0
    %226 = vmatpush1.msra.mxu0 0.0
    %227 = vmatprep.mubr.f32.mxu0 0.0
    %228 = vmatmul.mubr.f32.gmra.mrb[0].mxu0 %v161
    %v229 = vpop.f32.mrb[0].mxu0
    %v230 = vadd.f32 %v158, %v229
    %v231 = vpop.f32.mrb[0].mxu0
    %232 = vdwg.mxu0
    %v233 = vxor.u32 %v144, 2147483648
    %v234 = vmul.f32 %v233, 1.442695
    %v235 = vpow.pop %v234
    %v236 = vadd.f32 %v235, 1.0
    %v237 = vrcp.pop %v236
    %v238 = vmul.f32 1.0, %v237
    %v239 = vtanh.pop %v144
    %241 = vrot.lane.b32.xlu0 %v56, 16
    %v242 = vpop.permute.xlu0 %241
    %v244 = vmul.f32 %v238, %v242
    %246 = vrot.lane.b32.xlu0 %v239, 96
    %v247 = vpop.permute.xlu0 %246
    %v249 = vmul.f32 %v238, %v247
    %251 = vrot.lane.b32.xlu0 %v249, 16
    %v252 = vpop.permute.xlu0 %251
    %v254 = vadd.f32 %v244, %v252
    %v255 = vtanh.pop %v254
    %257 = vrot.lane.b32.xlu0 %v255, 32
    %v258 = vpop.permute.xlu0 %257
    %v260 = vmul.f32 %v238, %v258
    %v261 = vxor.u32 %v230, 2147483648
    %v262 = vmul.f32 %v261, 1.442695
    %v263 = vpow.pop %v262
    %v264 = vadd.f32 %v263, 1.0
    %v265 = vrcp.pop %v264
    %v266 = vmul.f32 1.0, %v265
    %v267 = vtanh.pop %v230
    %269 = vrot.lane.b32.xlu0 %v58, 16
    %v270 = vpop.permute.xlu0 %269
    %v272 = vmul.f32 %v266, %v270
    %274 = vrot.lane.b32.xlu0 %v267, 96
    %v275 = vpop.permute.xlu0 %274
    %v277 = vmul.f32 %v266, %v275
    %279 = vrot.lane.b32.xlu0 %v277, 16
    %v280 = vpop.permute.xlu0 %279
    %v282 = vadd.f32 %v272, %v280
    %v283 = vtanh.pop %v282
    %285 = vrot.lane.b32.xlu0 %v283, 32
    %v286 = vpop.permute.xlu0 %285
    %v288 = vmul.f32 %v266, %v286
    %290 = vset.pattern.permute.xlu0 0
    %291 = vperm.xlu0 %290, %v51
    %v292 = vpop.permute.xlu0 %291
    %v294 = vmul.f32 %v292, %v260
    %v295 = vsub.f32 1.0, %v51
    %297 = vset.pattern.permute.xlu0 0
    %298 = vperm.xlu0 %297, %v295
    %v299 = vpop.permute.xlu0 %298
    %v301 = vmul.f32 %v299, %v55
    %303 = vrot.lane.b32.xlu0 %v301, 48
    %v304 = vpop.permute.xlu0 %303
    %v306 = vadd.f32 %v294, %v304
    %v307 = vmul.f32 %v292, %v254
    %v308 = vmul.f32 %v299, %v56
    %310 = vrot.lane.b32.xlu0 %v308, 16
    %v311 = vpop.permute.xlu0 %310
    %v313 = vadd.f32 %v307, %v311
    %315 = vset.pattern.permute.xlu0 0
    %316 = vperm.xlu0 %315, %v54
    %v317 = vpop.permute.xlu0 %316
    %v319 = vmul.f32 %v317, %v288
    %v320 = vsub.f32 1.0, %v54
    %322 = vset.pattern.permute.xlu0 0
    %323 = vperm.xlu0 %322, %v320
    %v324 = vpop.permute.xlu0 %323
    %v326 = vmul.f32 %v324, %v57
    %328 = vrot.lane.b32.xlu0 %v326, 48
    %v329 = vpop.permute.xlu0 %328
    %v331 = vadd.f32 %v319, %v329
    %v332 = vmul.f32 %v317, %v282
    %v333 = vmul.f32 %v324, %v58
    %335 = vrot.lane.b32.xlu0 %v333, 16
    %v336 = vpop.permute.xlu0 %335
    %v338 = vadd.f32 %v332, %v336
    %340 = vrot.lane.b32.xlu0 %v306, 80
    %v341 = vpop.permute.xlu0 %340
    %343 = vst.msk [vmem:[#allocation2] sm:$0x3] %vm37, %v341
    %345 = vrot.lane.b32.xlu0 %v313, 112
    %v346 = vpop.permute.xlu0 %345
    %348 = vst.msk [vmem:[#allocation3] sm:$0x3] %vm37, %v346
    %350 = vrot.lane.b32.xlu0 %v331, 80
    %v351 = vpop.permute.xlu0 %350
    %353 = vst.msk [vmem:[#allocation4] sm:$0x3] %vm37, %v351
    %355 = vrot.lane.b32.xlu0 %v338, 112
    %v356 = vpop.permute.xlu0 %355
    %358 = vst.msk [vmem:[#allocation5] sm:$0x3] %vm37, %v356
    %v359 = vmul.f32 %v292, %v306
    %361 = vrot.lane.b32.xlu0 %v359, 80
    %v362 = vpop.permute.xlu0 %361
    %s364 = scalar_lea.vmem %s6, %s49
    %365 = vst.msk [vmem:[%s364] sm:$0x3] %vm37, %v362
    %v366 = vmul.f32 %v317, %v331
    %368 = vrot.lane.b32.xlu0 %v366, 96
    %v369 = vpop.permute.xlu0 %368
    %s371 = scalar_lea.vmem %s6, %s52
    %vm372 = vcmask 255104
    %373 = vst.msk [vmem:[%s371] sm:$0x3] %vm372, %v369
  $region30: #{tacotron2_forward.15} parent=0 // loop_footer
    %s47 = sadd.s32 1, %s43
  $region31: #{tacotron2_forward.15} parent=0 // loop_footer_branch
    %42 = sbr.rel target = $region27
  $region32: #{tacotron2_forward.15} parent=0 // loop_exit
    _
  // Predicated region
  $region33: #{tacotron2_forward.15} parent=0 // pred_check
    _
  $region34: #{tacotron2_forward.15} parent=0 // pred_check_branch
    %375 = sbr.rel (0) target = $region36
  $region35: #{tacotron2_forward.15} parent=0 // pred_region
    _
  $region36: #{tacotron2_forward.15} parent=0 // pred_fallthru
    _
  // Predicated region
  $region37: #{tacotron2_forward.15} parent=0 // pred_check
    _
  $region38: #{tacotron2_forward.15} parent=0 // pred_check_branch
    %377 = sbr.rel (0) target = $region40
  $region39: #{tacotron2_forward.15} parent=0 // pred_region
    _
  $region40: #{tacotron2_forward.15} parent=0 // pred_fallthru
    _

// kernel: tacotron2_forward.12
$region0: #{tacotron2_forward.12}
  #allocation0 [shape = 'u32[]', space=smem, size = 0x4, offset = 0x4, fixed_abs, tag = 'smem constant byte address 0x4 - core index']
  #allocation1 [shape = 'u32[144,128]{1,0:T(1,128)}', space=vmem, size = 0x12000, scoped, tag = 'internal scratch']
  %s0 = inlined_call_operand.vmem [shape: f32[2,12,32], index: 0, kind: input, shape index: {}]
  %s1 = inlined_call_operand.vmem [shape: f32[5,32,32], index: 1, kind: input, shape index: {}]
  %s2 = inlined_call_operand.vmem [shape: f32[1,32], index: 2, kind: input, shape index: {}]
  %s3 = inlined_call_operand.vmem [shape: f32[2,8,32], index: 3, kind: output, shape index: {}]
  %s4 = sld [smem:[#allocation0]]
  $region22: #{tacotron2_forward.12} parent=0
    _
  %s6 = ssub.s32 1, %s4
  %s7 = scalar_select 0, %s6, %s4
  // Predicated region
  $region2: #{tacotron2_forward.12} parent=0 // pred_check
    _
  $region3: #{tacotron2_forward.12} parent=0 // pred_check_branch
    %9 = sbr.rel (0) target = $region5
  $region4: #{tacotron2_forward.12} parent=0 // pred_region
    _
  $region5: #{tacotron2_forward.12} parent=0 // pred_fallthru
    _
  // Predicated region
  $region6: #{tacotron2_forward.12} parent=0 // pred_check
    _
  $region7: #{tacotron2_forward.12} parent=0 // pred_check_branch
    %11 = sbr.rel (0) target = $region9
  $region8: #{tacotron2_forward.12} parent=0 // pred_region
    _
  $region9: #{tacotron2_forward.12} parent=0 // pred_fallthru
    _
  // Predicated region
  $region10: #{tacotron2_forward.12} parent=0 // pred_check
    _
  $region11: #{tacotron2_forward.12} parent=0 // pred_check_branch
    %13 = sbr.rel (0) target = $region13
  $region12: #{tacotron2_forward.12} parent=0 // pred_region
    _
  $region13: #{tacotron2_forward.12} parent=0 // pred_fallthru
    _
  %v14 = vld [vmem:[%s0] sm:$0xff]
  %v15 = vld [vmem:[%s0 + $0x8] sm:$0xf]
  %v16 = vld [vmem:[%s0 + $0x10] sm:$0xff]
  %v17 = vld [vmem:[%s0 + $0x18] sm:$0xf]
  %v18 = vld [vmem:[%s2] sm:$0x1]
  %v19 = vld [vmem:[%s1] sm:$0xff]
  %v20 = vld [vmem:[%s1 + $0x8] sm:$0xff]
  %v21 = vld [vmem:[%s1 + $0x10] sm:$0xff]
  %v22 = vld [vmem:[%s1 + $0x18] sm:$0xff]
  %s23 = scalar_lea.vmem %s1, 32
  %v24 = vld [vmem:[%s23] sm:$0xff]
  %v25 = vld [vmem:[%s23 + $0x8] sm:$0xff]
  %v26 = vld [vmem:[%s23 + $0x10] sm:$0xff]
  %v27 = vld [vmem:[%s23 + $0x18] sm:$0xff]
  %vm30 = vcmask 1046528
  %v31 = vrot.slane %v14, 1
  %v32 = vrot.slane %v15, 1
  %v33 = vsel %vm30, %v31, %v32
  %vm34 = vcmask 261120
  %v35 = vsel %vm34, %v33, 0
  %37 = vmatprep.subr.mxu0 0.0
  %38 = vmatpush1.msra.mxu0 %v24
  %39 = vmatprep.subr.mxu0 0.0
  %40 = vmatpush1.msra.mxu0 %v25
  %41 = vmatprep.subr.mxu0 0.0
  %42 = vmatpush1.msra.mxu0 %v26
  %43 = vmatprep.subr.mxu0 0.0
  %44 = vmatpush1.msra.mxu0 %v27
  %45 = vmatprep.subr.mxu0 0.0
  %46 = vmatpush1.msra.mxu0 0.0
  %47 = vmatprep.subr.mxu0 0.0
  %48 = vmatpush1.msra.mxu0 0.0
  %49 = vmatprep.subr.mxu0 0.0
  %50 = vmatpush1.msra.mxu0 0.0
  %51 = vmatprep.subr.mxu0 0.0
  %52 = vmatpush1.msra.mxu0 0.0
  %53 = vmatprep.subr.mxu0 0.0
  %54 = vmatpush1.msra.mxu0 0.0
  %55 = vmatprep.subr.mxu0 0.0
  %56 = vmatpush1.msra.mxu0 0.0
  %57 = vmatprep.subr.mxu0 0.0
  %58 = vmatpush1.msra.mxu0 0.0
  %59 = vmatprep.subr.mxu0 0.0
  %60 = vmatpush1.msra.mxu0 0.0
  %61 = vmatprep.subr.mxu0 0.0
  %62 = vmatpush1.msra.mxu0 0.0
  %63 = vmatprep.subr.mxu0 0.0
  %64 = vmatpush1.msra.mxu0 0.0
  %65 = vmatprep.subr.mxu0 0.0
  %66 = vmatpush1.msra.mxu0 0.0
  %67 = vmatprep.subr.mxu0 0.0
  %68 = vmatpush1.msra.mxu0 0.0
  %69 = vmatprep.subr.mxu0 0.0
  %70 = vmatpush1.msra.mxu0 0.0
  %71 = vmatprep.subr.mxu0 0.0
  %72 = vmatpush1.msra.mxu0 0.0
  %73 = vmatprep.subr.mxu0 0.0
  %74 = vmatpush1.msra.mxu0 0.0
  %75 = vmatprep.subr.mxu0 0.0
  %76 = vmatpush1.msra.mxu0 0.0
  %77 = vmatprep.subr.mxu0 0.0
  %78 = vmatpush1.msra.mxu0 0.0
  %79 = vmatprep.subr.mxu0 0.0
  %80 = vmatpush1.msra.mxu0 0.0
  %81 = vmatprep.subr.mxu0 0.0
  %82 = vmatpush1.msra.mxu0 0.0
  %83 = vmatprep.subr.mxu0 0.0
  %84 = vmatpush1.msra.mxu0 0.0
  %85 = vmatprep.subr.mxu0 0.0
  %86 = vmatpush1.msra.mxu0 0.0
  %87 = vmatprep.subr.mxu0 0.0
  %88 = vmatpush1.msra.mxu0 0.0
  %89 = vmatprep.subr.mxu0 0.0
  %90 = vmatpush1.msra.mxu0 0.0
  %91 = vmatprep.subr.mxu0 0.0
  %92 = vmatpush1.msra.mxu0 0.0
  %93 = vmatprep.subr.mxu0 0.0
  %94 = vmatpush1.msra.mxu0 0.0
  %95 = vmatprep.subr.mxu0 0.0
  %96 = vmatpush1.msra.mxu0 0.0
  %97 = vmatprep.subr.mxu0 0.0
  %98 = vmatpush1.msra.mxu0 0.0
  %99 = vmatprep.subr.mxu0 0.0
  %100 = vmatpush1.msra.mxu0 0.0
  %101 = vmatprep.mubr.f32.mxu0 0.0
  %102 = vmatmul.mubr.f32.gmra.mrb[0].mxu0 %v35
  %v103 = vpop.f32.mrb[0].mxu0
  %v104 = vadd.f32 0.0, %v103
  %v105 = vpop.f32.mrb[0].mxu0
  %106 = vdwg.mxu0
  %v107 = vsel %vm34, %v14, 0
  %109 = vmatprep.subr.mxu0 0.0
  %110 = vmatpush1.msra.mxu0 %v19
  %111 = vmatprep.subr.mxu0 0.0
  %112 = vmatpush1.msra.mxu0 %v20
  %113 = vmatprep.subr.mxu0 0.0
  %114 = vmatpush1.msra.mxu0 %v21
  %115 = vmatprep.subr.mxu0 0.0
  %116 = vmatpush1.msra.mxu0 %v22
  %117 = vmatprep.subr.mxu0 0.0
  %118 = vmatpush1.msra.mxu0 0.0
  %119 = vmatprep.subr.mxu0 0.0
  %120 = vmatpush1.msra.mxu0 0.0
  %121 = vmatprep.subr.mxu0 0.0
  %122 = vmatpush1.msra.mxu0 0.0
  %123 = vmatprep.subr.mxu0 0.0
  %124 = vmatpush1.msra.mxu0 0.0
  %125 = vmatprep.subr.mxu0 0.0
  %126 = vmatpush1.msra.mxu0 0.0
  %127 = vmatprep.subr.mxu0 0.0
  %128 = vmatpush1.msra.mxu0 0.0
  %129 = vmatprep.subr.mxu0 0.0
  %130 = vmatpush1.msra.mxu0 0.0
  %131 = vmatprep.subr.mxu0 0.0
  %132 = vmatpush1.msra.mxu0 0.0
  %133 = vmatprep.subr.mxu0 0.0
  %134 = vmatpush1.msra.mxu0 0.0
  %135 = vmatprep.subr.mxu0 0.0
  %136 = vmatpush1.msra.mxu0 0.0
  %137 = vmatprep.subr.mxu0 0.0
  %138 = vmatpush1.msra.mxu0 0.0
  %139 = vmatprep.subr.mxu0 0.0
  %140 = vmatpush1.msra.mxu0 0.0
  %141 = vmatprep.subr.mxu0 0.0
  %142 = vmatpush1.msra.mxu0 0.0
  %143 = vmatprep.subr.mxu0 0.0
  %144 = vmatpush1.msra.mxu0 0.0
  %145 = vmatprep.subr.mxu0 0.0
  %146 = vmatpush1.msra.mxu0 0.0
  %147 = vmatprep.subr.mxu0 0.0
  %148 = vmatpush1.msra.mxu0 0.0
  %149 = vmatprep.subr.mxu0 0.0
  %150 = vmatpush1.msra.mxu0 0.0
  %151 = vmatprep.subr.mxu0 0.0
  %152 = vmatpush1.msra.mxu0 0.0
  %153 = vmatprep.subr.mxu0 0.0
  %154 = vmatpush1.msra.mxu0 0.0
  %155 = vmatprep.subr.mxu0 0.0
  %156 = vmatpush1.msra.mxu0 0.0
  %157 = vmatprep.subr.mxu0 0.0
  %158 = vmatpush1.msra.mxu0 0.0
  %159 = vmatprep.subr.mxu0 0.0
  %160 = vmatpush1.msra.mxu0 0.0
  %161 = vmatprep.subr.mxu0 0.0
  %162 = vmatpush1.msra.mxu0 0.0
  %163 = vmatprep.subr.mxu0 0.0
  %164 = vmatpush1.msra.mxu0 0.0
  %165 = vmatprep.subr.mxu0 0.0
  %166 = vmatpush1.msra.mxu0 0.0
  %167 = vmatprep.subr.mxu0 0.0
  %168 = vmatpush1.msra.mxu0 0.0
  %169 = vmatprep.subr.mxu0 0.0
  %170 = vmatpush1.msra.mxu0 0.0
  %171 = vmatprep.subr.mxu0 0.0
  %172 = vmatpush1.msra.mxu0 0.0
  %173 = vmatprep.mubr.f32.mxu0 0.0
  %174 = vmatmul.mubr.f32.gmra.mrb[0].mxu0 %v107
  %v175 = vpop.f32.mrb[0].mxu0
  %v176 = vadd.f32 %v104, %v175
  %v177 = vpop.f32.mrb[0].mxu0
  %178 = vdwg.mxu0
  %s179 = scalar_lea.vmem %s1, 64
  %v180 = vld [vmem:[%s179] sm:$0xff]
  %v181 = vld [vmem:[%s179 + $0x8] sm:$0xff]
  %v182 = vld [vmem:[%s179 + $0x10] sm:$0xff]
  %v183 = vld [vmem:[%s179 + $0x18] sm:$0xff]
  %vm184 = vcmask 1045504
  %v185 = vrot.slane %v14, 2
  %v186 = vrot.slane %v15, 2
  %v187 = vsel %vm184, %v185, %v186
  %v188 = vsel %vm34, %v187, 0
  %190 = vmatprep.subr.mxu0 0.0
  %191 = vmatpush1.msra.mxu0 %v180
  %192 = vmatprep.subr.mxu0 0.0
  %193 = vmatpush1.msra.mxu0 %v181
  %194 = vmatprep.subr.mxu0 0.0
  %195 = vmatpush1.msra.mxu0 %v182
  %196 = vmatprep.subr.mxu0 0.0
  %197 = vmatpush1.msra.mxu0 %v183
  %198 = vmatprep.subr.mxu0 0.0
  %199 = vmatpush1.msra.mxu0 0.0
  %200 = vmatprep.subr.mxu0 0.0
  %201 = vmatpush1.msra.mxu0 0.0
  %202 = vmatprep.subr.mxu0 0.0
  %203 = vmatpush1.msra.mxu0 0.0
  %204 = vmatprep.subr.mxu0 0.0
  %205 = vmatpush1.msra.mxu0 0.0
  %206 = vmatprep.subr.mxu0 0.0
  %207 = vmatpush1.msra.mxu0 0.0
  %208 = vmatprep.subr.mxu0 0.0
  %209 = vmatpush1.msra.mxu0 0.0
  %210 = vmatprep.subr.mxu0 0.0
  %211 = vmatpush1.msra.mxu0 0.0
  %212 = vmatprep.subr.mxu0 0.0
  %213 = vmatpush1.msra.mxu0 0.0
  %214 = vmatprep.subr.mxu0 0.0
  %215 = vmatpush1.msra.mxu0 0.0
  %216 = vmatprep.subr.mxu0 0.0
  %217 = vmatpush1.msra.mxu0 0.0
  %218 = vmatprep.subr.mxu0 0.0
  %219 = vmatpush1.msra.mxu0 0.0
  %220 = vmatprep.subr.mxu0 0.0
  %221 = vmatpush1.msra.mxu0 0.0
  %222 = vmatprep.subr.mxu0 0.0
  %223 = vmatpush1.msra.mxu0 0.0
  %224 = vmatprep.subr.mxu0 0.0
  %225 = vmatpush1.msra.mxu0 0.0
  %226 = vmatprep.subr.mxu0 0.0
  %227 = vmatpush1.msra.mxu0 0.0
  %228 = vmatprep.subr.mxu0 0.0
  %229 = vmatpush1.msra.mxu0 0.0
  %230 = vmatprep.subr.mxu0 0.0
  %231 = vmatpush1.msra.mxu0 0.0
  %232 = vmatprep.subr.mxu0 0.0
  %233 = vmatpush1.msra.mxu0 0.0
  %234 = vmatprep.subr.mxu0 0.0
  %235 = vmatpush1.msra.mxu0 0.0
  %236 = vmatprep.subr.mxu0 0.0
  %237 = vmatpush1.msra.mxu0 0.0
  %238 = vmatprep.subr.mxu0 0.0
  %239 = vmatpush1.msra.mxu0 0.0
  %240 = vmatprep.subr.mxu0 0.0
  %241 = vmatpush1.msra.mxu0 0.0
  %242 = vmatprep.subr.mxu0 0.0
  %243 = vmatpush1.msra.mxu0 0.0
  %244 = vmatprep.subr.mxu0 0.0
  %245 = vmatpush1.msra.mxu0 0.0
  %246 = vmatprep.subr.mxu0 0.0
  %247 = vmatpush1.msra.mxu0 0.0
  %248 = vmatprep.subr.mxu0 0.0
  %249 = vmatpush1.msra.mxu0 0.0
  %250 = vmatprep.subr.mxu0 0.0
  %251 = vmatpush1.msra.mxu0 0.0
  %252 = vmatprep.subr.mxu0 0.0
  %253 = vmatpush1.msra.mxu0 0.0
  %254 = vmatprep.mubr.f32.mxu0 0.0
  %255 = vmatmul.mubr.f32.gmra.mrb[0].mxu0 %v188
  %v256 = vpop.f32.mrb[0].mxu0
  %v257 = vadd.f32 0.0, %v256
  %v258 = vpop.f32.mrb[0].mxu0
  %259 = vdwg.mxu0
  %v260 = vadd.f32 %v176, %v257
  %s261 = scalar_lea.vmem %s1, 96
  %v262 = vld [vmem:[%s261] sm:$0xff]
  %v263 = vld [vmem:[%s261 + $0x8] sm:$0xff]
  %v264 = vld [vmem:[%s261 + $0x10] sm:$0xff]
  %v265 = vld [vmem:[%s261 + $0x18] sm:$0xff]
  %vm266 = vcmask 1044480
  %v267 = vrot.slane %v14, 3
  %v268 = vrot.slane %v15, 3
  %v269 = vsel %vm266, %v267, %v268
  %v270 = vsel %vm34, %v269, 0
  %272 = vmatprep.subr.mxu0 0.0
  %273 = vmatpush1.msra.mxu0 %v262
  %274 = vmatprep.subr.mxu0 0.0
  %275 = vmatpush1.msra.mxu0 %v263
  %276 = vmatprep.subr.mxu0 0.0
  %277 = vmatpush1.msra.mxu0 %v264
  %278 = vmatprep.subr.mxu0 0.0
  %279 = vmatpush1.msra.mxu0 %v265
  %280 = vmatprep.subr.mxu0 0.0
  %281 = vmatpush1.msra.mxu0 0.0
  %282 = vmatprep.subr.mxu0 0.0
  %283 = vmatpush1.msra.mxu0 0.0
  %284 = vmatprep.subr.mxu0 0.0
  %285 = vmatpush1.msra.mxu0 0.0
  %286 = vmatprep.subr.mxu0 0.0
  %287 = vmatpush1.msra.mxu0 0.0
  %288 = vmatprep.subr.mxu0 0.0
  %289 = vmatpush1.msra.mxu0 0.0
  %290 = vmatprep.subr.mxu0 0.0
  %291 = vmatpush1.msra.mxu0 0.0
  %292 = vmatprep.subr.mxu0 0.0
  %293 = vmatpush1.msra.mxu0 0.0
  %294 = vmatprep.subr.mxu0 0.0
  %295 = vmatpush1.msra.mxu0 0.0
  %296 = vmatprep.subr.mxu0 0.0
  %297 = vmatpush1.msra.mxu0 0.0
  %298 = vmatprep.subr.mxu0 0.0
  %299 = vmatpush1.msra.mxu0 0.0
  %300 = vmatprep.subr.mxu0 0.0
  %301 = vmatpush1.msra.mxu0 0.0
  %302 = vmatprep.subr.mxu0 0.0
  %303 = vmatpush1.msra.mxu0 0.0
  %304 = vmatprep.subr.mxu0 0.0
  %305 = vmatpush1.msra.mxu0 0.0
  %306 = vmatprep.subr.mxu0 0.0
  %307 = vmatpush1.msra.mxu0 0.0
  %308 = vmatprep.subr.mxu0 0.0
  %309 = vmatpush1.msra.mxu0 0.0
  %310 = vmatprep.subr.mxu0 0.0
  %311 = vmatpush1.msra.mxu0 0.0
  %312 = vmatprep.subr.mxu0 0.0
  %313 = vmatpush1.msra.mxu0 0.0
  %314 = vmatprep.subr.mxu0 0.0
  %315 = vmatpush1.msra.mxu0 0.0
  %316 = vmatprep.subr.mxu0 0.0
  %317 = vmatpush1.msra.mxu0 0.0
  %318 = vmatprep.subr.mxu0 0.0
  %319 = vmatpush1.msra.mxu0 0.0
  %320 = vmatprep.subr.mxu0 0.0
  %321 = vmatpush1.msra.mxu0 0.0
  %322 = vmatprep.subr.mxu0 0.0
  %323 = vmatpush1.msra.mxu0 0.0
  %324 = vmatprep.subr.mxu0 0.0
  %325 = vmatpush1.msra.mxu0 0.0
  %326 = vmatprep.subr.mxu0 0.0
  %327 = vmatpush1.msra.mxu0 0.0
  %328 = vmatprep.subr.mxu0 0.0
  %329 = vmatpush1.msra.mxu0 0.0
  %330 = vmatprep.subr.mxu0 0.0
  %331 = vmatpush1.msra.mxu0 0.0
  %332 = vmatprep.subr.mxu0 0.0
  %333 = vmatpush1.msra.mxu0 0.0
  %334 = vmatprep.subr.mxu0 0.0
  %335 = vmatpush1.msra.mxu0 0.0
  %336 = vmatprep.mubr.f32.mxu0 0.0
  %337 = vmatmul.mubr.f32.gmra.mrb[0].mxu0 %v270
  %v338 = vpop.f32.mrb[0].mxu0
  %v339 = vadd.f32 0.0, %v338
  %v340 = vpop.f32.mrb[0].mxu0
  %341 = vdwg.mxu0
  %v342 = vadd.f32 %v260, %v339
  %s343 = scalar_lea.vmem %s1, 128
  %v344 = vld [vmem:[%s343] sm:$0xff]
  %v345 = vld [vmem:[%s343 + $0x8] sm:$0xff]
  %v346 = vld [vmem:[%s343 + $0x10] sm:$0xff]
  %v347 = vld [vmem:[%s343 + $0x18] sm:$0xff]
  %vm348 = vcmask 1043456
  %v349 = vrot.slane %v14, 4
  %v350 = vrot.slane %v15, 4
  %v351 = vsel %vm348, %v349, %v350
  %v352 = vsel %vm34, %v351, 0
  %354 = vmatprep.subr.mxu0 0.0
  %355 = vmatpush1.msra.mxu0 %v344
  %356 = vmatprep.subr.mxu0 0.0
  %357 = vmatpush1.msra.mxu0 %v345
  %358 = vmatprep.subr.mxu0 0.0
  %359 = vmatpush1.msra.mxu0 %v346
  %360 = vmatprep.subr.mxu0 0.0
  %361 = vmatpush1.msra.mxu0 %v347
  %362 = vmatprep.subr.mxu0 0.0
  %363 = vmatpush1.msra.mxu0 0.0
  %364 = vmatprep.subr.mxu0 0.0
  %365 = vmatpush1.msra.mxu0 0.0
  %366 = vmatprep.subr.mxu0 0.0
  %367 = vmatpush1.msra.mxu0 0.0
  %368 = vmatprep.subr.mxu0 0.0
  %369 = vmatpush1.msra.mxu0 0.0
  %370 = vmatprep.subr.mxu0 0.0
  %371 = vmatpush1.msra.mxu0 0.0
  %372 = vmatprep.subr.mxu0 0.0
  %373 = vmatpush1.msra.mxu0 0.0
  %374 = vmatprep.subr.mxu0 0.0
  %375 = vmatpush1.msra.mxu0 0.0
  %376 = vmatprep.subr.mxu0 0.0
  %377 = vmatpush1.msra.mxu0 0.0
  %378 = vmatprep.subr.mxu0 0.0
  %379 = vmatpush1.msra.mxu0 0.0
  %380 = vmatprep.subr.mxu0 0.0
  %381 = vmatpush1.msra.mxu0 0.0
  %382 = vmatprep.subr.mxu0 0.0
  %383 = vmatpush1.msra.mxu0 0.0
  %384 = vmatprep.subr.mxu0 0.0
  %385 = vmatpush1.msra.mxu0 0.0
  %386 = vmatprep.subr.mxu0 0.0
  %387 = vmatpush1.msra.mxu0 0.0
  %388 = vmatprep.subr.mxu0 0.0
  %389 = vmatpush1.msra.mxu0 0.0
  %390 = vmatprep.subr.mxu0 0.0
  %391 = vmatpush1.msra.mxu0 0.0
  %392 = vmatprep.subr.mxu0 0.0
  %393 = vmatpush1.msra.mxu0 0.0
  %394 = vmatprep.subr.mxu0 0.0
  %395 = vmatpush1.msra.mxu0 0.0
  %396 = vmatprep.subr.mxu0 0.0
  %397 = vmatpush1.msra.mxu0 0.0
  %398 = vmatprep.subr.mxu0 0.0
  %399 = vmatpush1.msra.mxu0 0.0
  %400 = vmatprep.subr.mxu0 0.0
  %401 = vmatpush1.msra.mxu0 0.0
  %402 = vmatprep.subr.mxu0 0.0
  %403 = vmatpush1.msra.mxu0 0.0
  %404 = vmatprep.subr.mxu0 0.0
  %405 = vmatpush1.msra.mxu0 0.0
  %406 = vmatprep.subr.mxu0 0.0
  %407 = vmatpush1.msra.mxu0 0.0
  %408 = vmatprep.subr.mxu0 0.0
  %409 = vmatpush1.msra.mxu0 0.0
  %410 = vmatprep.subr.mxu0 0.0
  %411 = vmatpush1.msra.mxu0 0.0
  %412 = vmatprep.subr.mxu0 0.0
  %413 = vmatpush1.msra.mxu0 0.0
  %414 = vmatprep.subr.mxu0 0.0
  %415 = vmatpush1.msra.mxu0 0.0
  %416 = vmatprep.subr.mxu0 0.0
  %417 = vmatpush1.msra.mxu0 0.0
  %418 = vmatprep.mubr.f32.mxu0 0.0
  %419 = vmatmul.mubr.f32.gmra.mrb[0].mxu0 %v352
  %v420 = vpop.f32.mrb[0].mxu0
  %v421 = vadd.f32 0.0, %v420
  %v422 = vpop.f32.mrb[0].mxu0
  %423 = vdwg.mxu0
  %v424 = vadd.f32 %v342, %v421
  %v426 = vlaneseq
  %v427 = vshrl.u32 %v426, 7
  %v428 = vsub.s32 0, %v427
  %v429 = vrot.slane %v18, %v428
  %v431 = vadd.f32 %v424, %v429
  %v432 = vmax.f32 %v431, 0.0
  %433 = vst.msk [vmem:[%s3] sm:$0xff] %vm34, %v432
  %v434 = vld [vmem:[%s1] sm:$0xff]
  %v435 = vld [vmem:[%s1 + $0x8] sm:$0xff]
  %v436 = vld [vmem:[%s1 + $0x10] sm:$0xff]
  %v437 = vld [vmem:[%s1 + $0x18] sm:$0xff]
  %v438 = vld [vmem:[%s23] sm:$0xff]
  %v439 = vld [vmem:[%s23 + $0x8] sm:$0xff]
  %v440 = vld [vmem:[%s23 + $0x10] sm:$0xff]
  %v441 = vld [vmem:[%s23 + $0x18] sm:$0xff]
  %v444 = vrot.slane %v16, 1
  %v445 = vrot.slane %v17, 1
  %v446 = vsel %vm30, %v444, %v445
  %v447 = vsel %vm34, %v446, 0
  %449 = vmatprep.subr.mxu0 0.0
  %450 = vmatpush1.msra.mxu0 %v438
  %451 = vmatprep.subr.mxu0 0.0
  %452 = vmatpush1.msra.mxu0 %v439
  %453 = vmatprep.subr.mxu0 0.0
  %454 = vmatpush1.msra.mxu0 %v440
  %455 = vmatprep.subr.mxu0 0.0
  %456 = vmatpush1.msra.mxu0 %v441
  %457 = vmatprep.subr.mxu0 0.0
  %458 = vmatpush1.msra.mxu0 0.0
  %459 = vmatprep.subr.mxu0 0.0
  %460 = vmatpush1.msra.mxu0 0.0
  %461 = vmatprep.subr.mxu0 0.0
  %462 = vmatpush1.msra.mxu0 0.0
  %463 = vmatprep.subr.mxu0 0.0
  %464 = vmatpush1.msra.mxu0 0.0
  %465 = vmatprep.subr.mxu0 0.0
  %466 = vmatpush1.msra.mxu0 0.0
  %467 = vmatprep.subr.mxu0 0.0
  %468 = vmatpush1.msra.mxu0 0.0
  %469 = vmatprep.subr.mxu0 0.0
  %470 = vmatpush1.msra.mxu0 0.0
  %471 = vmatprep.subr.mxu0 0.0
  %472 = vmatpush1.msra.mxu0 0.0
  %473 = vmatprep.subr.mxu0 0.0
  %474 = vmatpush1.msra.mxu0 0.0
  %475 = vmatprep.subr.mxu0 0.0
  %476 = vmatpush1.msra.mxu0 0.0
  %477 = vmatprep.subr.mxu0 0.0
  %478 = vmatpush1.msra.mxu0 0.0
  %479 = vmatprep.subr.mxu0 0.0
  %480 = vmatpush1.msra.mxu0 0.0
  %481 = vmatprep.subr.mxu0 0.0
  %482 = vmatpush1.msra.mxu0 0.0
  %483 = vmatprep.subr.mxu0 0.0
  %484 = vmatpush1.msra.mxu0 0.0
  %485 = vmatprep.subr.mxu0 0.0
  %486 = vmatpush1.msra.mxu0 0.0
  %487 = vmatprep.subr.mxu0 0.0
  %488 = vmatpush1.msra.mxu0 0.0
  %489 = vmatprep.subr.mxu0 0.0
  %490 = vmatpush1.msra.mxu0 0.0
  %491 = vmatprep.subr.mxu0 0.0
  %492 = vmatpush1.msra.mxu0 0.0
  %493 = vmatprep.subr.mxu0 0.0
  %494 = vmatpush1.msra.mxu0 0.0
  %495 = vmatprep.subr.mxu0 0.0
  %496 = vmatpush1.msra.mxu0 0.0
  %497 = vmatprep.subr.mxu0 0.0
  %498 = vmatpush1.msra.mxu0 0.0
  %499 = vmatprep.subr.mxu0 0.0
  %500 = vmatpush1.msra.mxu0 0.0
  %501 = vmatprep.subr.mxu0 0.0
  %502 = vmatpush1.msra.mxu0 0.0
  %503 = vmatprep.subr.mxu0 0.0
  %504 = vmatpush1.msra.mxu0 0.0
  %505 = vmatprep.subr.mxu0 0.0
  %506 = vmatpush1.msra.mxu0 0.0
  %507 = vmatprep.subr.mxu0 0.0
  %508 = vmatpush1.msra.mxu0 0.0
  %509 = vmatprep.subr.mxu0 0.0
  %510 = vmatpush1.msra.mxu0 0.0
  %511 = vmatprep.subr.mxu0 0.0
  %512 = vmatpush1.msra.mxu0 0.0
  %513 = vmatprep.mubr.f32.mxu0 0.0
  %514 = vmatmul.mubr.f32.gmra.mrb[0].mxu0 %v447
  %v515 = vpop.f32.mrb[0].mxu0
  %v516 = vadd.f32 0.0, %v515
  %v517 = vpop.f32.mrb[0].mxu0
  %518 = vdwg.mxu0
  %v519 = vsel %vm34, %v16, 0
  %521 = vmatprep.subr.mxu0 0.0
  %522 = vmatpush1.msra.mxu0 %v434
  %523 = vmatprep.subr.mxu0 0.0
  %524 = vmatpush1.msra.mxu0 %v435
  %525 = vmatprep.subr.mxu0 0.0
  %526 = vmatpush1.msra.mxu0 %v436
  %527 = vmatprep.subr.mxu0 0.0
  %528 = vmatpush1.msra.mxu0 %v437
  %529 = vmatprep.subr.mxu0 0.0
  %530 = vmatpush1.msra.mxu0 0.0
  %531 = vmatprep.subr.mxu0 0.0
  %532 = vmatpush1.msra.mxu0 0.0
  %533 = vmatprep.subr.mxu0 0.0
  %534 = vmatpush1.msra.mxu0 0.0
  %535 = vmatprep.subr.mxu0 0.0
  %536 = vmatpush1.msra.mxu0 0.0
  %537 = vmatprep.subr.mxu0 0.0
  %538 = vmatpush1.msra.mxu0 0.0
  %539 = vmatprep.subr.mxu0 0.0
  %540 = vmatpush1.msra.mxu0 0.0
  %541 = vmatprep.subr.mxu0 0.0
  %542 = vmatpush1.msra.mxu0 0.0
  %543 = vmatprep.subr.mxu0 0.0
  %544 = vmatpush1.msra.mxu0 0.0
  %545 = vmatprep.subr.mxu0 0.0
  %546 = vmatpush1.msra.mxu0 0.0
  %547 = vmatprep.subr.mxu0 0.0
  %548 = vmatpush1.msra.mxu0 0.0
  %549 = vmatprep.subr.mxu0 0.0
  %550 = vmatpush1.msra.mxu0 0.0
  %551 = vmatprep.subr.mxu0 0.0
  %552 = vmatpush1.msra.mxu0 0.0
  %553 = vmatprep.subr.mxu0 0.0
  %554 = vmatpush1.msra.mxu0 0.0
  %555 = vmatprep.subr.mxu0 0.0
  %556 = vmatpush1.msra.mxu0 0.0
  %557 = vmatprep.subr.mxu0 0.0
  %558 = vmatpush1.msra.mxu0 0.0
  %559 = vmatprep.subr.mxu0 0.0
  %560 = vmatpush1.msra.mxu0 0.0
  %561 = vmatprep.subr.mxu0 0.0
  %562 = vmatpush1.msra.mxu0 0.0
  %563 = vmatprep.subr.mxu0 0.0
  %564 = vmatpush1.msra.mxu0 0.0
  %565 = vmatprep.subr.mxu0 0.0
  %566 = vmatpush1.msra.mxu0 0.0
  %567 = vmatprep.subr.mxu0 0.0
  %568 = vmatpush1.msra.mxu0 0.0
  %569 = vmatprep.subr.mxu0 0.0
  %570 = vmatpush1.msra.mxu0 0.0
  %571 = vmatprep.subr.mxu0 0.0
  %572 = vmatpush1.msra.mxu0 0.0
  %573 = vmatprep.subr.mxu0 0.0
  %574 = vmatpush1.msra.mxu0 0.0
  %575 = vmatprep.subr.mxu0 0.0
  %576 = vmatpush1.msra.mxu0 0.0
  %577 = vmatprep.subr.mxu0 0.0
  %578 = vmatpush1.msra.mxu0 0.0
  %579 = vmatprep.subr.mxu0 0.0
  %580 = vmatpush1.msra.mxu0 0.0
  %581 = vmatprep.subr.mxu0 0.0
  %582 = vmatpush1.msra.mxu0 0.0
  %583 = vmatprep.subr.mxu0 0.0
  %584 = vmatpush1.msra.mxu0 0.0
  %585 = vmatprep.mubr.f32.mxu0 0.0
  %586 = vmatmul.mubr.f32.gmra.mrb[0].mxu0 %v519
  %v587 = vpop.f32.mrb[0].mxu0
  %v588 = vadd.f32 %v516, %v587
  %v589 = vpop.f32.mrb[0].mxu0
  %590 = vdwg.mxu0
  %v591 = vld [vmem:[%s179] sm:$0xff]
  %v592 = vld [vmem:[%s179 + $0x8] sm:$0xff]
  %v593 = vld [vmem:[%s179 + $0x10] sm:$0xff]
  %v594 = vld [vmem:[%s179 + $0x18] sm:$0xff]
  %v595 = vrot.slane %v16, 2
  %v596 = vrot.slane %v17, 2
  %v597 = vsel %vm184, %v595, %v596
  %v598 = vsel %vm34, %v597, 0
  %600 = vmatprep.subr.mxu0 0.0
  %601 = vmatpush1.msra.mxu0 %v591
  %602 = vmatprep.subr.mxu0 0.0
  %603 = vmatpush1.msra.mxu0 %v592
  %604 = vmatprep.subr.mxu0 0.0
  %605 = vmatpush1.msra.mxu0 %v593
  %606 = vmatprep.subr.mxu0 0.0
  %607 = vmatpush1.msra.mxu0 %v594
  %608 = vmatprep.subr.mxu0 0.0
  %609 = vmatpush1.msra.mxu0 0.0
  %610 = vmatprep.subr.mxu0 0.0
  %611 = vmatpush1.msra.mxu0 0.0
  %612 = vmatprep.subr.mxu0 0.0
  %613 = vmatpush1.msra.mxu0 0.0
  %614 = vmatprep.subr.mxu0 0.0
  %615 = vmatpush1.msra.mxu0 0.0
  %616 = vmatprep.subr.mxu0 0.0
  %617 = vmatpush1.msra.mxu0 0.0
  %618 = vmatprep.subr.mxu0 0.0
  %619 = vmatpush1.msra.mxu0 0.0
  %620 = vmatprep.subr.mxu0 0.0
  %621 = vmatpush1.msra.mxu0 0.0
  %622 = vmatprep.subr.mxu0 0.0
  %623 = vmatpush1.msra.mxu0 0.0
  %624 = vmatprep.subr.mxu0 0.0
  %625 = vmatpush1.msra.mxu0 0.0
  %626 = vmatprep.subr.mxu0 0.0
  %627 = vmatpush1.msra.mxu0 0.0
  %628 = vmatprep.subr.mxu0 0.0
  %629 = vmatpush1.msra.mxu0 0.0
  %630 = vmatprep.subr.mxu0 0.0
  %631 = vmatpush1.msra.mxu0 0.0
  %632 = vmatprep.subr.mxu0 0.0
  %633 = vmatpush1.msra.mxu0 0.0
  %634 = vmatprep.subr.mxu0 0.0
  %635 = vmatpush1.msra.mxu0 0.0
  %636 = vmatprep.subr.mxu0 0.0
  %637 = vmatpush1.msra.mxu0 0.0
  %638 = vmatprep.subr.mxu0 0.0
  %639 = vmatpush1.msra.mxu0 0.0
  %640 = vmatprep.subr.mxu0 0.0
  %641 = vmatpush1.msra.mxu0 0.0
  %642 = vmatprep.subr.mxu0 0.0
  %643 = vmatpush1.msra.mxu0 0.0
  %644 = vmatprep.subr.mxu0 0.0
  %645 = vmatpush1.msra.mxu0 0.0
  %646 = vmatprep.subr.mxu0 0.0
  %647 = vmatpush1.msra.mxu0 0.0
  %648 = vmatprep.subr.mxu0 0.0
  %649 = vmatpush1.msra.mxu0 0.0
  %650 = vmatprep.subr.mxu0 0.0
  %651 = vmatpush1.msra.mxu0 0.0
  %652 = vmatprep.subr.mxu0 0.0
  %653 = vmatpush1.msra.mxu0 0.0
  %654 = vmatprep.subr.mxu0 0.0
  %655 = vmatpush1.msra.mxu0 0.0
  %656 = vmatprep.subr.mxu0 0.0
  %657 = vmatpush1.msra.mxu0 0.0
  %658 = vmatprep.subr.mxu0 0.0
  %659 = vmatpush1.msra.mxu0 0.0
  %660 = vmatprep.subr.mxu0 0.0
  %661 = vmatpush1.msra.mxu0 0.0
  %662 = vmatprep.subr.mxu0 0.0
  %663 = vmatpush1.msra.mxu0 0.0
  %664 = vmatprep.mubr.f32.mxu0 0.0
  %665 = vmatmul.mubr.f32.gmra.mrb[0].mxu0 %v598
  %v666 = vpop.f32.mrb[0].mxu0
  %v667 = vadd.f32 0.0, %v666
  %v668 = vpop.f32.mrb[0].mxu0
  %669 = vdwg.mxu0
  %v670 = vadd.f32 %v588, %v667
  %v671 = vld [vmem:[%s261] sm:$0xff]
  %v672 = vld [vmem:[%s261 + $0x8] sm:$0xff]
  %v673 = vld [vmem:[%s261 + $0x10] sm:$0xff]
  %v674 = vld [vmem:[%s261 + $0x18] sm:$0xff]
  %v675 = vrot.slane %v16, 3
  %v676 = vrot.slane %v17, 3
  %v677 = vsel %vm266, %v675, %v676
  %v678 = vsel %vm34, %v677, 0
  %680 = vmatprep.subr.mxu0 0.0
  %681 = vmatpush1.msra.mxu0 %v671
  %682 = vmatprep.subr.mxu0 0.0
  %683 = vmatpush1.msra.mxu0 %v672
  %684 = vmatprep.subr.mxu0 0.0
  %685 = vmatpush1.msra.mxu0 %v673
  %686 = vmatprep.subr.mxu0 0.0
  %687 = vmatpush1.msra.mxu0 %v674
  %688 = vmatprep.subr.mxu0 0.0
  %689 = vmatpush1.msra.mxu0 0.0
  %690 = vmatprep.subr.mxu0 0.0
  %691 = vmatpush1.msra.mxu0 0.0
  %692 = vmatprep.subr.mxu0 0.0
  %693 = vmatpush1.msra.mxu0 0.0
  %694 = vmatprep.subr.mxu0 0.0
  %695 = vmatpush1.msra.mxu0 0.0
  %696 = vmatprep.subr.mxu0 0.0
  %697 = vmatpush1.msra.mxu0 0.0
  %698 = vmatprep.subr.mxu0 0.0
  %699 = vmatpush1.msra.mxu0 0.0
  %700 = vmatprep.subr.mxu0 0.0
  %701 = vmatpush1.msra.mxu0 0.0
  %702 = vmatprep.subr.mxu0 0.0
  %703 = vmatpush1.msra.mxu0 0.0
  %704 = vmatprep.subr.mxu0 0.0
  %705 = vmatpush1.msra.mxu0 0.0
  %706 = vmatprep.subr.mxu0 0.0
  %707 = vmatpush1.msra.mxu0 0.0
  %708 = vmatprep.subr.mxu0 0.0
  %709 = vmatpush1.msra.mxu0 0.0
  %710 = vmatprep.subr.mxu0 0.0
  %711 = vmatpush1.msra.mxu0 0.0
  %712 = vmatprep.subr.mxu0 0.0
  %713 = vmatpush1.msra.mxu0 0.0
  %714 = vmatprep.subr.mxu0 0.0
  %715 = vmatpush1.msra.mxu0 0.0
  %716 = vmatprep.subr.mxu0 0.0
  %717 = vmatpush1.msra.mxu0 0.0
  %718 = vmatprep.subr.mxu0 0.0
  %719 = vmatpush1.msra.mxu0 0.0
  %720 = vmatprep.subr.mxu0 0.0
  %721 = vmatpush1.msra.mxu0 0.0
  %722 = vmatprep.subr.mxu0 0.0
  %723 = vmatpush1.msra.mxu0 0.0
  %724 = vmatprep.subr.mxu0 0.0
  %725 = vmatpush1.msra.mxu0 0.0
  %726 = vmatprep.subr.mxu0 0.0
  %727 = vmatpush1.msra.mxu0 0.0
  %728 = vmatprep.subr.mxu0 0.0
  %729 = vmatpush1.msra.mxu0 0.0
  %730 = vmatprep.subr.mxu0 0.0
  %731 = vmatpush1.msra.mxu0 0.0
  %732 = vmatprep.subr.mxu0 0.0
  %733 = vmatpush1.msra.mxu0 0.0
  %734 = vmatprep.subr.mxu0 0.0
  %735 = vmatpush1.msra.mxu0 0.0
  %736 = vmatprep.subr.mxu0 0.0
  %737 = vmatpush1.msra.mxu0 0.0
  %738 = vmatprep.subr.mxu0 0.0
  %739 = vmatpush1.msra.mxu0 0.0
  %740 = vmatprep.subr.mxu0 0.0
  %741 = vmatpush1.msra.mxu0 0.0
  %742 = vmatprep.subr.mxu0 0.0
  %743 = vmatpush1.msra.mxu0 0.0
  %744 = vmatprep.mubr.f32.mxu0 0.0
  %745 = vmatmul.mubr.f32.gmra.mrb[0].mxu0 %v678
  %v746 = vpop.f32.mrb[0].mxu0
  %v747 = vadd.f32 0.0, %v746
  %v748 = vpop.f32.mrb[0].mxu0
  %749 = vdwg.mxu0
  %v750 = vadd.f32 %v670, %v747
  %v751 = vld [vmem:[%s343] sm:$0xff]
  %v752 = vld [vmem:[%s343 + $0x8] sm:$0xff]
  %v753 = vld [vmem:[%s343 + $0x10] sm:$0xff]
  %v754 = vld [vmem:[%s343 + $0x18] sm:$0xff]
  %v755 = vrot.slane %v16, 4
  %v756 = vrot.slane %v17, 4
  %v757 = vsel %vm348, %v755, %v756
  %v758 = vsel %vm34, %v757, 0
  %760 = vmatprep.subr.mxu0 0.0
  %761 = vmatpush1.msra.mxu0 %v751
  %762 = vmatprep.subr.mxu0 0.0
  %763 = vmatpush1.msra.mxu0 %v752
  %764 = vmatprep.subr.mxu0 0.0
  %765 = vmatpush1.msra.mxu0 %v753
  %766 = vmatprep.subr.mxu0 0.0
  %767 = vmatpush1.msra.mxu0 %v754
  %768 = vmatprep.subr.mxu0 0.0
  %769 = vmatpush1.msra.mxu0 0.0
  %770 = vmatprep.subr.mxu0 0.0
  %771 = vmatpush1.msra.mxu0 0.0
  %772 = vmatprep.subr.mxu0 0.0
  %773 = vmatpush1.msra.mxu0 0.0
  %774 = vmatprep.subr.mxu0 0.0
  %775 = vmatpush1.msra.mxu0 0.0
  %776 = vmatprep.subr.mxu0 0.0
  %777 = vmatpush1.msra.mxu0 0.0
  %778 = vmatprep.subr.mxu0 0.0
  %779 = vmatpush1.msra.mxu0 0.0
  %780 = vmatprep.subr.mxu0 0.0
  %781 = vmatpush1.msra.mxu0 0.0
  %782 = vmatprep.subr.mxu0 0.0
  %783 = vmatpush1.msra.mxu0 0.0
  %784 = vmatprep.subr.mxu0 0.0
  %785 = vmatpush1.msra.mxu0 0.0
  %786 = vmatprep.subr.mxu0 0.0
  %787 = vmatpush1.msra.mxu0 0.0
  %788 = vmatprep.subr.mxu0 0.0
  %789 = vmatpush1.msra.mxu0 0.0
  %790 = vmatprep.subr.mxu0 0.0
  %791 = vmatpush1.msra.mxu0 0.0
  %792 = vmatprep.subr.mxu0 0.0
  %793 = vmatpush1.msra.mxu0 0.0
  %794 = vmatprep.subr.mxu0 0.0
  %795 = vmatpush1.msra.mxu0 0.0
  %796 = vmatprep.subr.mxu0 0.0
  %797 = vmatpush1.msra.mxu0 0.0
  %798 = vmatprep.subr.mxu0 0.0
  %799 = vmatpush1.msra.mxu0 0.0
  %800 = vmatprep.subr.mxu0 0.0
  %801 = vmatpush1.msra.mxu0 0.0
  %802 = vmatprep.subr.mxu0 0.0
  %803 = vmatpush1.msra.mxu0 0.0
  %804 = vmatprep.subr.mxu0 0.0
  %805 = vmatpush1.msra.mxu0 0.0
  %806 = vmatprep.subr.mxu0 0.0
  %807 = vmatpush1.msra.mxu0 0.0
  %808 = vmatprep.subr.mxu0 0.0
  %809 = vmatpush1.msra.mxu0 0.0
  %810 = vmatprep.subr.mxu0 0.0
  %811 = vmatpush1.msra.mxu0 0.0
  %812 = vmatprep.subr.mxu0 0.0
  %813 = vmatpush1.msra.mxu0 0.0
  %814 = vmatprep.subr.mxu0 0.0
  %815 = vmatpush1.msra.mxu0 0.0
  %816 = vmatprep.subr.mxu0 0.0
  %817 = vmatpush1.msra.mxu0 0.0
  %818 = vmatprep.subr.mxu0 0.0
  %819 = vmatpush1.msra.mxu0 0.0
  %820 = vmatprep.subr.mxu0 0.0
  %821 = vmatpush1.msra.mxu0 0.0
  %822 = vmatprep.subr.mxu0 0.0
  %823 = vmatpush1.msra.mxu0 0.0
  %824 = vmatprep.mubr.f32.mxu0 0.0
  %825 = vmatmul.mubr.f32.gmra.mrb[0].mxu0 %v758
  %v826 = vpop.f32.mrb[0].mxu0
  %v827 = vadd.f32 0.0, %v826
  %v828 = vpop.f32.mrb[0].mxu0
  %829 = vdwg.mxu0
  %v830 = vadd.f32 %v750, %v827
  %v831 = vadd.f32 %v830, %v429
  %v832 = vmax.f32 %v831, 0.0
  %s833 = scalar_lea.vmem %s3, 8
  %834 = vst.msk [vmem:[%s833] sm:$0xff] %vm34, %v832
  // Predicated region
  $region14: #{tacotron2_forward.12} parent=0 // pred_check
    _
  $region15: #{tacotron2_forward.12} parent=0 // pred_check_branch
    %836 = sbr.rel (0) target = $region17
  $region16: #{tacotron2_forward.12} parent=0 // pred_region
    _
  $region17: #{tacotron2_forward.12} parent=0 // pred_fallthru
    _
  // Predicated region
  $region18: #{tacotron2_forward.12} parent=0 // pred_check
    _
  $region19: #{tacotron2_forward.12} parent=0 // pred_check_branch
    %838 = sbr.rel (0) target = $region21
  $region20: #{tacotron2_forward.12} parent=0 // pred_region
    _
  $region21: #{tacotron2_forward.12} parent=0 // pred_fallthru
    _

// kernel: tacotron2_forward.16
$region0: #{tacotron2_forward.16}
  #allocation0 [shape = 'u32[]', space=smem, size = 0x4, offset = 0x4, fixed_abs, tag = 'smem constant byte address 0x4 - core index']
  #allocation1 [shape = 'u32[144,128]{1,0:T(1,128)}', space=vmem, size = 0x12000, scoped, tag = 'internal scratch']
  %s0 = inlined_call_operand.vmem [shape: f32[16,8], index: 0, kind: input, shape index: {}]
  %s1 = inlined_call_operand.vmem [shape: f32[8,16], index: 1, kind: input, shape index: {}]
  %s2 = inlined_call_operand.vmem [shape: f32[16,16], index: 2, kind: input, shape index: {}]
  %s3 = inlined_call_operand.hbm [shape: f32[16,16], index: 3, kind: output, shape index: {}]
  %s4 = sld [smem:[#allocation0]]
  $region22: #{tacotron2_forward.16} parent=0
    _
  %s6 = ssub.s32 1, %s4
  %s7 = scalar_select 0, %s6, %s4
  $region1: #{tacotron2_forward.16} parent=0
    #allocation2 [shape = 'u8[8192]{0}', space=vmem, size = 0x2000, scoped, tag = 'output window, operand 0, single buffered']
    #allocation3 [shape = 's32[1]{0}', space=sflag, size = 0x4, scoped, tag = 'scoped memory for tacotron2_forward.16']
    %8 = vsyncpa [#allocation3], 0
    // Predicated region
    $region2: #{tacotron2_forward.16} parent=1 // pred_check
      _
    $region3: #{tacotron2_forward.16} parent=1 // pred_check_branch
      %10 = sbr.rel (0) target = $region5
    $region4: #{tacotron2_forward.16} parent=1 // pred_region
      _
    $region5: #{tacotron2_forward.16} parent=1 // pred_fallthru
      _
    // Predicated region
    $region6: #{tacotron2_forward.16} parent=1 // pred_check
      _
    $region7: #{tacotron2_forward.16} parent=1 // pred_check_branch
      %12 = sbr.rel (0) target = $region9
    $region8: #{tacotron2_forward.16} parent=1 // pred_region
      _
    $region9: #{tacotron2_forward.16} parent=1 // pred_fallthru
      _
    // Predicated region
    $region10: #{tacotron2_forward.16} parent=1 // pred_check
      _
    $region11: #{tacotron2_forward.16} parent=1 // pred_check_branch
      %14 = sbr.rel (0) target = $region13
    $region12: #{tacotron2_forward.16} parent=1 // pred_region
      _
    $region13: #{tacotron2_forward.16} parent=1 // pred_fallthru
      _
    %v15 = vld [vmem:[%s0] sm:$0xff]
    %v16 = vld [vmem:[%s0 + $0x8] sm:$0xff]
    %v17 = vld [vmem:[%s1] sm:$0xff]
    %vm18 = vcmask 64512
    %v20 = vsel %vm18, %v15, 0
    %v23 = vsel %vm18, %v16, 0
    %25 = vmatprep.subr.mxu0 0.0
    %26 = vmatpush1.msra.mxu0 %v17
    %27 = vmatprep.subr.mxu0 0.0
    %28 = vmatpush1.msra.mxu0 0.0
    %29 = vmatprep.subr.mxu0 0.0
    %30 = vmatpush1.msra.mxu0 0.0
    %31 = vmatprep.subr.mxu0 0.0
    %32 = vmatpush1.msra.mxu0 0.0
    %33 = vmatprep.subr.mxu0 0.0
    %34 = vmatpush1.msra.mxu0 0.0
    %35 = vmatprep.subr.mxu0 0.0
    %36 = vmatpush1.msra.mxu0 0.0
    %37 = vmatprep.subr.mxu0 0.0
    %38 = vmatpush1.msra.mxu0 0.0
    %39 = vmatprep.subr.mxu0 0.0
    %40 = vmatpush1.msra.mxu0 0.0
    %41 = vmatprep.subr.mxu0 0.0
    %42 = vmatpush1.msra.mxu0 0.0
    %43 = vmatprep.subr.mxu0 0.0
    %44 = vmatpush1.msra.mxu0 0.0
    %45 = vmatprep.subr.mxu0 0.0
    %46 = vmatpush1.msra.mxu0 0.0
    %47 = vmatprep.subr.mxu0 0.0
    %48 = vmatpush1.msra.mxu0 0.0
    %49 = vmatprep.subr.mxu0 0.0
    %50 = vmatpush1.msra.mxu0 0.0
    %51 = vmatprep.subr.mxu0 0.0
    %52 = vmatpush1.msra.mxu0 0.0
    %53 = vmatprep.subr.mxu0 0.0
    %54 = vmatpush1.msra.mxu0 0.0
    %55 = vmatprep.subr.mxu0 0.0
    %56 = vmatpush1.msra.mxu0 0.0
    %57 = vmatprep.subr.mxu0 0.0
    %58 = vmatpush1.msra.mxu0 0.0
    %59 = vmatprep.subr.mxu0 0.0
    %60 = vmatpush1.msra.mxu0 0.0
    %61 = vmatprep.subr.mxu0 0.0
    %62 = vmatpush1.msra.mxu0 0.0
    %63 = vmatprep.subr.mxu0 0.0
    %64 = vmatpush1.msra.mxu0 0.0
    %65 = vmatprep.subr.mxu0 0.0
    %66 = vmatpush1.msra.mxu0 0.0
    %67 = vmatprep.subr.mxu0 0.0
    %68 = vmatpush1.msra.mxu0 0.0
    %69 = vmatprep.subr.mxu0 0.0
    %70 = vmatpush1.msra.mxu0 0.0
    %71 = vmatprep.subr.mxu0 0.0
    %72 = vmatpush1.msra.mxu0 0.0
    %73 = vmatprep.subr.mxu0 0.0
    %74 = vmatpush1.msra.mxu0 0.0
    %75 = vmatprep.subr.mxu0 0.0
    %76 = vmatpush1.msra.mxu0 0.0
    %77 = vmatprep.subr.mxu0 0.0
    %78 = vmatpush1.msra.mxu0 0.0
    %79 = vmatprep.subr.mxu0 0.0
    %80 = vmatpush1.msra.mxu0 0.0
    %81 = vmatprep.subr.mxu0 0.0
    %82 = vmatpush1.msra.mxu0 0.0
    %83 = vmatprep.subr.mxu0 0.0
    %84 = vmatpush1.msra.mxu0 0.0
    %85 = vmatprep.subr.mxu0 0.0
    %86 = vmatpush1.msra.mxu0 0.0
    %87 = vmatprep.subr.mxu0 0.0
    %88 = vmatpush1.msra.mxu0 0.0
    %89 = vmatprep.mubr.f32.mxu0 0.0
    %90 = vmatmul.mubr.f32.gmra.mrb[0].mxu0 %v20
    %v91 = vpop.f32.mrb[0].mxu0
    %v92 = vadd.f32 0.0, %v91
    %v93 = vpop.f32.mrb[0].mxu0
    %94 = vmatprep.mubr.f32.mxu0 0.0
    %95 = vmatmul.mubr.f32.gmra.mrb[0].mxu0 %v23
    %v96 = vpop.f32.mrb[0].mxu0
    %v97 = vadd.f32 0.0, %v96
    %v98 = vpop.f32.mrb[0].mxu0
    %99 = vdwg.mxu0
    %v100 = vmax.f32 %v92, 0.0
    %v101 = vmax.f32 %v97, 0.0
    %v102 = vld [vmem:[%s2] sm:$0xff]
    %v103 = vld [vmem:[%s2 + $0x8] sm:$0xff]
    %vm104 = vcmask 130048
    %v106 = vsel %vm104, %v100, 0
    %v109 = vsel %vm104, %v101, 0
    %111 = vmatprep.subr.mxu0 0.0
    %112 = vmatpush1.msra.mxu0 %v102
    %113 = vmatprep.subr.mxu0 0.0
    %114 = vmatpush1.msra.mxu0 %v103
    %115 = vmatprep.subr.mxu0 0.0
    %116 = vmatpush1.msra.mxu0 0.0
    %117 = vmatprep.subr.mxu0 0.0
    %118 = vmatpush1.msra.mxu0 0.0
    %119 = vmatprep.subr.mxu0 0.0
    %120 = vmatpush1.msra.mxu0 0.0
    %121 = vmatprep.subr.mxu0 0.0
    %122 = vmatpush1.msra.mxu0 0.0
    %123 = vmatprep.subr.mxu0 0.0
    %124 = vmatpush1.msra.mxu0 0.0
    %125 = vmatprep.subr.mxu0 0.0
    %126 = vmatpush1.msra.mxu0 0.0
    %127 = vmatprep.subr.mxu0 0.0
    %128 = vmatpush1.msra.mxu0 0.0
    %129 = vmatprep.subr.mxu0 0.0
    %130 = vmatpush1.msra.mxu0 0.0
    %131 = vmatprep.subr.mxu0 0.0
    %132 = vmatpush1.msra.mxu0 0.0
    %133 = vmatprep.subr.mxu0 0.0
    %134 = vmatpush1.msra.mxu0 0.0
    %135 = vmatprep.subr.mxu0 0.0
    %136 = vmatpush1.msra.mxu0 0.0
    %137 = vmatprep.subr.mxu0 0.0
    %138 = vmatpush1.msra.mxu0 0.0
    %139 = vmatprep.subr.mxu0 0.0
    %140 = vmatpush1.msra.mxu0 0.0
    %141 = vmatprep.subr.mxu0 0.0
    %142 = vmatpush1.msra.mxu0 0.0
    %143 = vmatprep.subr.mxu0 0.0
    %144 = vmatpush1.msra.mxu0 0.0
    %145 = vmatprep.subr.mxu0 0.0
    %146 = vmatpush1.msra.mxu0 0.0
    %147 = vmatprep.subr.mxu0 0.0
    %148 = vmatpush1.msra.mxu0 0.0
    %149 = vmatprep.subr.mxu0 0.0
    %150 = vmatpush1.msra.mxu0 0.0
    %151 = vmatprep.subr.mxu0 0.0
    %152 = vmatpush1.msra.mxu0 0.0
    %153 = vmatprep.subr.mxu0 0.0
    %154 = vmatpush1.msra.mxu0 0.0
    %155 = vmatprep.subr.mxu0 0.0
    %156 = vmatpush1.msra.mxu0 0.0
    %157 = vmatprep.subr.mxu0 0.0
    %158 = vmatpush1.msra.mxu0 0.0
    %159 = vmatprep.subr.mxu0 0.0
    %160 = vmatpush1.msra.mxu0 0.0
    %161 = vmatprep.subr.mxu0 0.0
    %162 = vmatpush1.msra.mxu0 0.0
    %163 = vmatprep.subr.mxu0 0.0
    %164 = vmatpush1.msra.mxu0 0.0
    %165 = vmatprep.subr.mxu0 0.0
    %166 = vmatpush1.msra.mxu0 0.0
    %167 = vmatprep.subr.mxu0 0.0
    %168 = vmatpush1.msra.mxu0 0.0
    %169 = vmatprep.subr.mxu0 0.0
    %170 = vmatpush1.msra.mxu0 0.0
    %171 = vmatprep.subr.mxu0 0.0
    %172 = vmatpush1.msra.mxu0 0.0
    %173 = vmatprep.subr.mxu0 0.0
    %174 = vmatpush1.msra.mxu0 0.0
    %175 = vmatprep.mubr.f32.mxu0 0.0
    %176 = vmatmul.mubr.f32.gmra.mrb[0].mxu0 %v106
    %v177 = vpop.f32.mrb[0].mxu0
    %v178 = vadd.f32 0.0, %v177
    %v179 = vpop.f32.mrb[0].mxu0
    %180 = vmatprep.mubr.f32.mxu0 0.0
    %181 = vmatmul.mubr.f32.gmra.mrb[0].mxu0 %v109
    %v182 = vpop.f32.mrb[0].mxu0
    %v183 = vadd.f32 0.0, %v182
    %v184 = vpop.f32.mrb[0].mxu0
    %185 = vdwg.mxu0
    %v186 = vmax.f32 %v178, 0.0
    %v187 = vmax.f32 %v183, 0.0
    %188 = vst.msk [vmem:[#allocation2] sm:$0xff] %vm104, %v186
    %189 = vst.msk [vmem:[#allocation2 + $0x8] sm:$0xff] %vm104, %v187
    // Predicated region
    $region14: #{tacotron2_forward.16} parent=1 // pred_check
      _
    $region15: #{tacotron2_forward.16} parent=1 // pred_check_branch
      %191 = sbr.rel (0) target = $region17
    $region16: #{tacotron2_forward.16} parent=1 // pred_region
      %s193 = ssub.s32 256, 256
      %194 = vsyncadd [#allocation3], %s193
      %s195 = sshll.u32 [#allocation2], 4
      %s196 = int_to_ptr.vmem [resolvable:$true] %s195
      %201 = dma.vmem_to_hbm [thread:$0]  %s196, 256, %s3, [#allocation3], 128, 128, 8
    $region17: #{tacotron2_forward.16} parent=1 // pred_fallthru
      _
    // Predicated region
    $region18: #{tacotron2_forward.16} parent=1 // pred_check
      _
    $region19: #{tacotron2_forward.16} parent=1 // pred_check_branch
      %203 = sbr.rel (0) target = $region21
    $region20: #{tacotron2_forward.16} parent=1 // pred_region
      %204 = dma.done [#allocation3], 256
    $region21: #{tacotron2_forward.16} parent=1 // pred_fallthru
      _
    %205 = vsyncpa [#allocation3], 1

// kernel: tacotron2_forward.19
$region0: #{tacotron2_forward.19}
  #allocation0 [shape = 'u32[]', space=smem, size = 0x4, offset = 0x4, fixed_abs, tag = 'smem constant byte address 0x4 - core index']
  #allocation1 [shape = 'u32[144,128]{1,0:T(1,128)}', space=vmem, size = 0x12000, scoped, tag = 'internal scratch']
  %s0 = inlined_call_operand.vmem [shape: f32[2,10,8], index: 0, kind: input, shape index: {}]
  %s1 = inlined_call_operand.vmem [shape: f32[5,8,16], index: 1, kind: input, shape index: {}]
  %s2 = inlined_call_operand.vmem [shape: f32[1,16], index: 2, kind: input, shape index: {}]
  %s3 = inlined_call_operand.vmem [shape: f32[2,6,16], index: 3, kind: output, shape index: {}]
  %s4 = sld [smem:[#allocation0]]
  $region22: #{tacotron2_forward.19} parent=0
    _
  %s6 = ssub.s32 1, %s4
  %s7 = scalar_select 0, %s6, %s4
  // Predicated region
  $region2: #{tacotron2_forward.19} parent=0 // pred_check
    _
  $region3: #{tacotron2_forward.19} parent=0 // pred_check_branch
    %9 = sbr.rel (0) target = $region5
  $region4: #{tacotron2_forward.19} parent=0 // pred_region
    _
  $region5: #{tacotron2_forward.19} parent=0 // pred_fallthru
    _
  // Predicated region
  $region6: #{tacotron2_forward.19} parent=0 // pred_check
    _
  $region7: #{tacotron2_forward.19} parent=0 // pred_check_branch
    %11 = sbr.rel (0) target = $region9
  $region8: #{tacotron2_forward.19} parent=0 // pred_region
    _
  $region9: #{tacotron2_forward.19} parent=0 // pred_fallthru
    _
  // Predicated region
  $region10: #{tacotron2_forward.19} parent=0 // pred_check
    _
  $region11: #{tacotron2_forward.19} parent=0 // pred_check_branch
    %13 = sbr.rel (0) target = $region13
  $region12: #{tacotron2_forward.19} parent=0 // pred_region
    _
  $region13: #{tacotron2_forward.19} parent=0 // pred_fallthru
    _
  %v14 = vld [vmem:[%s0] sm:$0xff]
  %v15 = vld [vmem:[%s0 + $0x8] sm:$0x3]
  %v16 = vld [vmem:[%s0 + $0x10] sm:$0xff]
  %v17 = vld [vmem:[%s0 + $0x18] sm:$0x3]
  %v18 = vld [vmem:[%s2] sm:$0x1]
  %v19 = vld [vmem:[%s1] sm:$0xff]
  %s20 = scalar_lea.vmem %s1, 8
  %v21 = vld [vmem:[%s20] sm:$0xff]
  %v23 = vrot.slane %v14, 1
  %vm24 = vcmask 64512
  %v25 = vsel %vm24, %v23, 0
  %27 = vmatprep.subr.mxu0 0.0
  %28 = vmatpush1.msra.mxu0 %v21
  %29 = vmatprep.subr.mxu0 0.0
  %30 = vmatpush1.msra.mxu0 0.0
  %31 = vmatprep.subr.mxu0 0.0
  %32 = vmatpush1.msra.mxu0 0.0
  %33 = vmatprep.subr.mxu0 0.0
  %34 = vmatpush1.msra.mxu0 0.0
  %35 = vmatprep.subr.mxu0 0.0
  %36 = vmatpush1.msra.mxu0 0.0
  %37 = vmatprep.subr.mxu0 0.0
  %38 = vmatpush1.msra.mxu0 0.0
  %39 = vmatprep.subr.mxu0 0.0
  %40 = vmatpush1.msra.mxu0 0.0
  %41 = vmatprep.subr.mxu0 0.0
  %42 = vmatpush1.msra.mxu0 0.0
  %43 = vmatprep.subr.mxu0 0.0
  %44 = vmatpush1.msra.mxu0 0.0
  %45 = vmatprep.subr.mxu0 0.0
  %46 = vmatpush1.msra.mxu0 0.0
  %47 = vmatprep.subr.mxu0 0.0
  %48 = vmatpush1.msra.mxu0 0.0
  %49 = vmatprep.subr.mxu0 0.0
  %50 = vmatpush1.msra.mxu0 0.0
  %51 = vmatprep.subr.mxu0 0.0
  %52 = vmatpush1.msra.mxu0 0.0
  %53 = vmatprep.subr.mxu0 0.0
  %54 = vmatpush1.msra.mxu0 0.0
  %55 = vmatprep.subr.mxu0 0.0
  %56 = vmatpush1.msra.mxu0 0.0
  %57 = vmatprep.subr.mxu0 0.0
  %58 = vmatpush1.msra.mxu0 0.0
  %59 = vmatprep.subr.mxu0 0.0
  %60 = vmatpush1.msra.mxu0 0.0
  %61 = vmatprep.subr.mxu0 0.0
  %62 = vmatpush1.msra.mxu0 0.0
  %63 = vmatprep.subr.mxu0 0.0
  %64 = vmatpush1.msra.mxu0 0.0
  %65 = vmatprep.subr.mxu0 0.0
  %66 = vmatpush1.msra.mxu0 0.0
  %67 = vmatprep.subr.mxu0 0.0
  %68 = vmatpush1.msra.mxu0 0.0
  %69 = vmatprep.subr.mxu0 0.0
  %70 = vmatpush1.msra.mxu0 0.0
  %71 = vmatprep.subr.mxu0 0.0
  %72 = vmatpush1.msra.mxu0 0.0
  %73 = vmatprep.subr.mxu0 0.0
  %74 = vmatpush1.msra.mxu0 0.0
  %75 = vmatprep.subr.mxu0 0.0
  %76 = vmatpush1.msra.mxu0 0.0
  %77 = vmatprep.subr.mxu0 0.0
  %78 = vmatpush1.msra.mxu0 0.0
  %79 = vmatprep.subr.mxu0 0.0
  %80 = vmatpush1.msra.mxu0 0.0
  %81 = vmatprep.subr.mxu0 0.0
  %82 = vmatpush1.msra.mxu0 0.0
  %83 = vmatprep.subr.mxu0 0.0
  %84 = vmatpush1.msra.mxu0 0.0
  %85 = vmatprep.subr.mxu0 0.0
  %86 = vmatpush1.msra.mxu0 0.0
  %87 = vmatprep.subr.mxu0 0.0
  %88 = vmatpush1.msra.mxu0 0.0
  %89 = vmatprep.subr.mxu0 0.0
  %90 = vmatpush1.msra.mxu0 0.0
  %91 = vmatprep.mubr.f32.mxu0 0.0
  %92 = vmatmul.mubr.f32.gmra.mrb[0].mxu0 %v25
  %v93 = vpop.f32.mrb[0].mxu0
  %v94 = vadd.f32 0.0, %v93
  %v95 = vpop.f32.mrb[0].mxu0
  %96 = vdwg.mxu0
  %v97 = vsel %vm24, %v14, 0
  %99 = vmatprep.subr.mxu0 0.0
  %100 = vmatpush1.msra.mxu0 %v19
  %101 = vmatprep.subr.mxu0 0.0
  %102 = vmatpush1.msra.mxu0 0.0
  %103 = vmatprep.subr.mxu0 0.0
  %104 = vmatpush1.msra.mxu0 0.0
  %105 = vmatprep.subr.mxu0 0.0
  %106 = vmatpush1.msra.mxu0 0.0
  %107 = vmatprep.subr.mxu0 0.0
  %108 = vmatpush1.msra.mxu0 0.0
  %109 = vmatprep.subr.mxu0 0.0
  %110 = vmatpush1.msra.mxu0 0.0
  %111 = vmatprep.subr.mxu0 0.0
  %112 = vmatpush1.msra.mxu0 0.0
  %113 = vmatprep.subr.mxu0 0.0
  %114 = vmatpush1.msra.mxu0 0.0
  %115 = vmatprep.subr.mxu0 0.0
  %116 = vmatpush1.msra.mxu0 0.0
  %117 = vmatprep.subr.mxu0 0.0
  %118 = vmatpush1.msra.mxu0 0.0
  %119 = vmatprep.subr.mxu0 0.0
  %120 = vmatpush1.msra.mxu0 0.0
  %121 = vmatprep.subr.mxu0 0.0
  %122 = vmatpush1.msra.mxu0 0.0
  %123 = vmatprep.subr.mxu0 0.0
  %124 = vmatpush1.msra.mxu0 0.0
  %125 = vmatprep.subr.mxu0 0.0
  %126 = vmatpush1.msra.mxu0 0.0
  %127 = vmatprep.subr.mxu0 0.0
  %128 = vmatpush1.msra.mxu0 0.0
  %129 = vmatprep.subr.mxu0 0.0
  %130 = vmatpush1.msra.mxu0 0.0
  %131 = vmatprep.subr.mxu0 0.0
  %132 = vmatpush1.msra.mxu0 0.0
  %133 = vmatprep.subr.mxu0 0.0
  %134 = vmatpush1.msra.mxu0 0.0
  %135 = vmatprep.subr.mxu0 0.0
  %136 = vmatpush1.msra.mxu0 0.0
  %137 = vmatprep.subr.mxu0 0.0
  %138 = vmatpush1.msra.mxu0 0.0
  %139 = vmatprep.subr.mxu0 0.0
  %140 = vmatpush1.msra.mxu0 0.0
  %141 = vmatprep.subr.mxu0 0.0
  %142 = vmatpush1.msra.mxu0 0.0
  %143 = vmatprep.subr.mxu0 0.0
  %144 = vmatpush1.msra.mxu0 0.0
  %145 = vmatprep.subr.mxu0 0.0
  %146 = vmatpush1.msra.mxu0 0.0
  %147 = vmatprep.subr.mxu0 0.0
  %148 = vmatpush1.msra.mxu0 0.0
  %149 = vmatprep.subr.mxu0 0.0
  %150 = vmatpush1.msra.mxu0 0.0
  %151 = vmatprep.subr.mxu0 0.0
  %152 = vmatpush1.msra.mxu0 0.0
  %153 = vmatprep.subr.mxu0 0.0
  %154 = vmatpush1.msra.mxu0 0.0
  %155 = vmatprep.subr.mxu0 0.0
  %156 = vmatpush1.msra.mxu0 0.0
  %157 = vmatprep.subr.mxu0 0.0
  %158 = vmatpush1.msra.mxu0 0.0
  %159 = vmatprep.subr.mxu0 0.0
  %160 = vmatpush1.msra.mxu0 0.0
  %161 = vmatprep.subr.mxu0 0.0
  %162 = vmatpush1.msra.mxu0 0.0
  %163 = vmatprep.mubr.f32.mxu0 0.0
  %164 = vmatmul.mubr.f32.gmra.mrb[0].mxu0 %v97
  %v165 = vpop.f32.mrb[0].mxu0
  %v166 = vadd.f32 %v94, %v165
  %v167 = vpop.f32.mrb[0].mxu0
  %168 = vdwg.mxu0
  %s169 = scalar_lea.vmem %s1, 16
  %v170 = vld [vmem:[%s169] sm:$0xff]
  %v171 = vrot.slane %v14, 2
  %v172 = vsel %vm24, %v171, 0
  %174 = vmatprep.subr.mxu0 0.0
  %175 = vmatpush1.msra.mxu0 %v170
  %176 = vmatprep.subr.mxu0 0.0
  %177 = vmatpush1.msra.mxu0 0.0
  %178 = vmatprep.subr.mxu0 0.0
  %179 = vmatpush1.msra.mxu0 0.0
  %180 = vmatprep.subr.mxu0 0.0
  %181 = vmatpush1.msra.mxu0 0.0
  %182 = vmatprep.subr.mxu0 0.0
  %183 = vmatpush1.msra.mxu0 0.0
  %184 = vmatprep.subr.mxu0 0.0
  %185 = vmatpush1.msra.mxu0 0.0
  %186 = vmatprep.subr.mxu0 0.0
  %187 = vmatpush1.msra.mxu0 0.0
  %188 = vmatprep.subr.mxu0 0.0
  %189 = vmatpush1.msra.mxu0 0.0
  %190 = vmatprep.subr.mxu0 0.0
  %191 = vmatpush1.msra.mxu0 0.0
  %192 = vmatprep.subr.mxu0 0.0
  %193 = vmatpush1.msra.mxu0 0.0
  %194 = vmatprep.subr.mxu0 0.0
  %195 = vmatpush1.msra.mxu0 0.0
  %196 = vmatprep.subr.mxu0 0.0
  %197 = vmatpush1.msra.mxu0 0.0
  %198 = vmatprep.subr.mxu0 0.0
  %199 = vmatpush1.msra.mxu0 0.0
  %200 = vmatprep.subr.mxu0 0.0
  %201 = vmatpush1.msra.mxu0 0.0
  %202 = vmatprep.subr.mxu0 0.0
  %203 = vmatpush1.msra.mxu0 0.0
  %204 = vmatprep.subr.mxu0 0.0
  %205 = vmatpush1.msra.mxu0 0.0
  %206 = vmatprep.subr.mxu0 0.0
  %207 = vmatpush1.msra.mxu0 0.0
  %208 = vmatprep.subr.mxu0 0.0
  %209 = vmatpush1.msra.mxu0 0.0
  %210 = vmatprep.subr.mxu0 0.0
  %211 = vmatpush1.msra.mxu0 0.0
  %212 = vmatprep.subr.mxu0 0.0
  %213 = vmatpush1.msra.mxu0 0.0
  %214 = vmatprep.subr.mxu0 0.0
  %215 = vmatpush1.msra.mxu0 0.0
  %216 = vmatprep.subr.mxu0 0.0
  %217 = vmatpush1.msra.mxu0 0.0
  %218 = vmatprep.subr.mxu0 0.0
  %219 = vmatpush1.msra.mxu0 0.0
  %220 = vmatprep.subr.mxu0 0.0
  %221 = vmatpush1.msra.mxu0 0.0
  %222 = vmatprep.subr.mxu0 0.0
  %223 = vmatpush1.msra.mxu0 0.0
  %224 = vmatprep.subr.mxu0 0.0
  %225 = vmatpush1.msra.mxu0 0.0
  %226 = vmatprep.subr.mxu0 0.0
  %227 = vmatpush1.msra.mxu0 0.0
  %228 = vmatprep.subr.mxu0 0.0
  %229 = vmatpush1.msra.mxu0 0.0
  %230 = vmatprep.subr.mxu0 0.0
  %231 = vmatpush1.msra.mxu0 0.0
  %232 = vmatprep.subr.mxu0 0.0
  %233 = vmatpush1.msra.mxu0 0.0
  %234 = vmatprep.subr.mxu0 0.0
  %235 = vmatpush1.msra.mxu0 0.0
  %236 = vmatprep.subr.mxu0 0.0
  %237 = vmatpush1.msra.mxu0 0.0
  %238 = vmatprep.mubr.f32.mxu0 0.0
  %239 = vmatmul.mubr.f32.gmra.mrb[0].mxu0 %v172
  %v240 = vpop.f32.mrb[0].mxu0
  %v241 = vadd.f32 0.0, %v240
  %v242 = vpop.f32.mrb[0].mxu0
  %243 = vdwg.mxu0
  %v244 = vadd.f32 %v166, %v241
  %s245 = scalar_lea.vmem %s1, 24
  %v246 = vld [vmem:[%s245] sm:$0xff]
  %vm248 = vcmask 1044480
  %v249 = vrot.slane %v14, 3
  %v250 = vrot.slane %v15, 3
  %v251 = vsel %vm248, %v249, %v250
  %v252 = vsel %vm24, %v251, 0
  %254 = vmatprep.subr.mxu0 0.0
  %255 = vmatpush1.msra.mxu0 %v246
  %256 = vmatprep.subr.mxu0 0.0
  %257 = vmatpush1.msra.mxu0 0.0
  %258 = vmatprep.subr.mxu0 0.0
  %259 = vmatpush1.msra.mxu0 0.0
  %260 = vmatprep.subr.mxu0 0.0
  %261 = vmatpush1.msra.mxu0 0.0
  %262 = vmatprep.subr.mxu0 0.0
  %263 = vmatpush1.msra.mxu0 0.0
  %264 = vmatprep.subr.mxu0 0.0
  %265 = vmatpush1.msra.mxu0 0.0
  %266 = vmatprep.subr.mxu0 0.0
  %267 = vmatpush1.msra.mxu0 0.0
  %268 = vmatprep.subr.mxu0 0.0
  %269 = vmatpush1.msra.mxu0 0.0
  %270 = vmatprep.subr.mxu0 0.0
  %271 = vmatpush1.msra.mxu0 0.0
  %272 = vmatprep.subr.mxu0 0.0
  %273 = vmatpush1.msra.mxu0 0.0
  %274 = vmatprep.subr.mxu0 0.0
  %275 = vmatpush1.msra.mxu0 0.0
  %276 = vmatprep.subr.mxu0 0.0
  %277 = vmatpush1.msra.mxu0 0.0
  %278 = vmatprep.subr.mxu0 0.0
  %279 = vmatpush1.msra.mxu0 0.0
  %280 = vmatprep.subr.mxu0 0.0
  %281 = vmatpush1.msra.mxu0 0.0
  %282 = vmatprep.subr.mxu0 0.0
  %283 = vmatpush1.msra.mxu0 0.0
  %284 = vmatprep.subr.mxu0 0.0
  %285 = vmatpush1.msra.mxu0 0.0
  %286 = vmatprep.subr.mxu0 0.0
  %287 = vmatpush1.msra.mxu0 0.0
  %288 = vmatprep.subr.mxu0 0.0
  %289 = vmatpush1.msra.mxu0 0.0
  %290 = vmatprep.subr.mxu0 0.0
  %291 = vmatpush1.msra.mxu0 0.0
  %292 = vmatprep.subr.mxu0 0.0
  %293 = vmatpush1.msra.mxu0 0.0
  %294 = vmatprep.subr.mxu0 0.0
  %295 = vmatpush1.msra.mxu0 0.0
  %296 = vmatprep.subr.mxu0 0.0
  %297 = vmatpush1.msra.mxu0 0.0
  %298 = vmatprep.subr.mxu0 0.0
  %299 = vmatpush1.msra.mxu0 0.0
  %300 = vmatprep.subr.mxu0 0.0
  %301 = vmatpush1.msra.mxu0 0.0
  %302 = vmatprep.subr.mxu0 0.0
  %303 = vmatpush1.msra.mxu0 0.0
  %304 = vmatprep.subr.mxu0 0.0
  %305 = vmatpush1.msra.mxu0 0.0
  %306 = vmatprep.subr.mxu0 0.0
  %307 = vmatpush1.msra.mxu0 0.0
  %308 = vmatprep.subr.mxu0 0.0
  %309 = vmatpush1.msra.mxu0 0.0
  %310 = vmatprep.subr.mxu0 0.0
  %311 = vmatpush1.msra.mxu0 0.0
  %312 = vmatprep.subr.mxu0 0.0
  %313 = vmatpush1.msra.mxu0 0.0
  %314 = vmatprep.subr.mxu0 0.0
  %315 = vmatpush1.msra.mxu0 0.0
  %316 = vmatprep.subr.mxu0 0.0
  %317 = vmatpush1.msra.mxu0 0.0
  %318 = vmatprep.mubr.f32.mxu0 0.0
  %319 = vmatmul.mubr.f32.gmra.mrb[0].mxu0 %v252
  %v320 = vpop.f32.mrb[0].mxu0
  %v321 = vadd.f32 0.0, %v320
  %v322 = vpop.f32.mrb[0].mxu0
  %323 = vdwg.mxu0
  %v324 = vadd.f32 %v244, %v321
  %s325 = scalar_lea.vmem %s1, 32
  %v326 = vld [vmem:[%s325] sm:$0xff]
  %vm327 = vcmask 1043456
  %v328 = vrot.slane %v14, 4
  %v329 = vrot.slane %v15, 4
  %v330 = vsel %vm327, %v328, %v329
  %v331 = vsel %vm24, %v330, 0
  %333 = vmatprep.subr.mxu0 0.0
  %334 = vmatpush1.msra.mxu0 %v326
  %335 = vmatprep.subr.mxu0 0.0
  %336 = vmatpush1.msra.mxu0 0.0
  %337 = vmatprep.subr.mxu0 0.0
  %338 = vmatpush1.msra.mxu0 0.0
  %339 = vmatprep.subr.mxu0 0.0
  %340 = vmatpush1.msra.mxu0 0.0
  %341 = vmatprep.subr.mxu0 0.0
  %342 = vmatpush1.msra.mxu0 0.0
  %343 = vmatprep.subr.mxu0 0.0
  %344 = vmatpush1.msra.mxu0 0.0
  %345 = vmatprep.subr.mxu0 0.0
  %346 = vmatpush1.msra.mxu0 0.0
  %347 = vmatprep.subr.mxu0 0.0
  %348 = vmatpush1.msra.mxu0 0.0
  %349 = vmatprep.subr.mxu0 0.0
  %350 = vmatpush1.msra.mxu0 0.0
  %351 = vmatprep.subr.mxu0 0.0
  %352 = vmatpush1.msra.mxu0 0.0
  %353 = vmatprep.subr.mxu0 0.0
  %354 = vmatpush1.msra.mxu0 0.0
  %355 = vmatprep.subr.mxu0 0.0
  %356 = vmatpush1.msra.mxu0 0.0
  %357 = vmatprep.subr.mxu0 0.0
  %358 = vmatpush1.msra.mxu0 0.0
  %359 = vmatprep.subr.mxu0 0.0
  %360 = vmatpush1.msra.mxu0 0.0
  %361 = vmatprep.subr.mxu0 0.0
  %362 = vmatpush1.msra.mxu0 0.0
  %363 = vmatprep.subr.mxu0 0.0
  %364 = vmatpush1.msra.mxu0 0.0
  %365 = vmatprep.subr.mxu0 0.0
  %366 = vmatpush1.msra.mxu0 0.0
  %367 = vmatprep.subr.mxu0 0.0
  %368 = vmatpush1.msra.mxu0 0.0
  %369 = vmatprep.subr.mxu0 0.0
  %370 = vmatpush1.msra.mxu0 0.0
  %371 = vmatprep.subr.mxu0 0.0
  %372 = vmatpush1.msra.mxu0 0.0
  %373 = vmatprep.subr.mxu0 0.0
  %374 = vmatpush1.msra.mxu0 0.0
  %375 = vmatprep.subr.mxu0 0.0
  %376 = vmatpush1.msra.mxu0 0.0
  %377 = vmatprep.subr.mxu0 0.0
  %378 = vmatpush1.msra.mxu0 0.0
  %379 = vmatprep.subr.mxu0 0.0
  %380 = vmatpush1.msra.mxu0 0.0
  %381 = vmatprep.subr.mxu0 0.0
  %382 = vmatpush1.msra.mxu0 0.0
  %383 = vmatprep.subr.mxu0 0.0
  %384 = vmatpush1.msra.mxu0 0.0
  %385 = vmatprep.subr.mxu0 0.0
  %386 = vmatpush1.msra.mxu0 0.0
  %387 = vmatprep.subr.mxu0 0.0
  %388 = vmatpush1.msra.mxu0 0.0
  %389 = vmatprep.subr.mxu0 0.0
  %390 = vmatpush1.msra.mxu0 0.0
  %391 = vmatprep.subr.mxu0 0.0
  %392 = vmatpush1.msra.mxu0 0.0
  %393 = vmatprep.subr.mxu0 0.0
  %394 = vmatpush1.msra.mxu0 0.0
  %395 = vmatprep.subr.mxu0 0.0
  %396 = vmatpush1.msra.mxu0 0.0
  %397 = vmatprep.mubr.f32.mxu0 0.0
  %398 = vmatmul.mubr.f32.gmra.mrb[0].mxu0 %v331
  %v399 = vpop.f32.mrb[0].mxu0
  %v400 = vadd.f32 0.0, %v399
  %v401 = vpop.f32.mrb[0].mxu0
  %402 = vdwg.mxu0
  %v403 = vadd.f32 %v324, %v400
  %v405 = vlaneseq
  %v406 = vshrl.u32 %v405, 7
  %v407 = vsub.s32 0, %v406
  %v408 = vrot.slane %v18, %v407
  %v410 = vadd.f32 %v403, %v408
  %v411 = vtanh.pop %v410
  %vm412 = vcmask 128000
  %413 = vst.msk [vmem:[%s3] sm:$0x3f] %vm412, %v411
  %v414 = vld [vmem:[%s1] sm:$0xff]
  %v415 = vld [vmem:[%s20] sm:$0xff]
  %v417 = vrot.slane %v16, 1
  %v418 = vsel %vm24, %v417, 0
  %420 = vmatprep.subr.mxu0 0.0
  %421 = vmatpush1.msra.mxu0 %v415
  %422 = vmatprep.subr.mxu0 0.0
  %423 = vmatpush1.msra.mxu0 0.0
  %424 = vmatprep.subr.mxu0 0.0
  %425 = vmatpush1.msra.mxu0 0.0
  %426 = vmatprep.subr.mxu0 0.0
  %427 = vmatpush1.msra.mxu0 0.0
  %428 = vmatprep.subr.mxu0 0.0
  %429 = vmatpush1.msra.mxu0 0.0
  %430 = vmatprep.subr.mxu0 0.0
  %431 = vmatpush1.msra.mxu0 0.0
  %432 = vmatprep.subr.mxu0 0.0
  %433 = vmatpush1.msra.mxu0 0.0
  %434 = vmatprep.subr.mxu0 0.0
  %435 = vmatpush1.msra.mxu0 0.0
  %436 = vmatprep.subr.mxu0 0.0
  %437 = vmatpush1.msra.mxu0 0.0
  %438 = vmatprep.subr.mxu0 0.0
  %439 = vmatpush1.msra.mxu0 0.0
  %440 = vmatprep.subr.mxu0 0.0
  %441 = vmatpush1.msra.mxu0 0.0
  %442 = vmatprep.subr.mxu0 0.0
  %443 = vmatpush1.msra.mxu0 0.0
  %444 = vmatprep.subr.mxu0 0.0
  %445 = vmatpush1.msra.mxu0 0.0
  %446 = vmatprep.subr.mxu0 0.0
  %447 = vmatpush1.msra.mxu0 0.0
  %448 = vmatprep.subr.mxu0 0.0
  %449 = vmatpush1.msra.mxu0 0.0
  %450 = vmatprep.subr.mxu0 0.0
  %451 = vmatpush1.msra.mxu0 0.0
  %452 = vmatprep.subr.mxu0 0.0
  %453 = vmatpush1.msra.mxu0 0.0
  %454 = vmatprep.subr.mxu0 0.0
  %455 = vmatpush1.msra.mxu0 0.0
  %456 = vmatprep.subr.mxu0 0.0
  %457 = vmatpush1.msra.mxu0 0.0
  %458 = vmatprep.subr.mxu0 0.0
  %459 = vmatpush1.msra.mxu0 0.0
  %460 = vmatprep.subr.mxu0 0.0
  %461 = vmatpush1.msra.mxu0 0.0
  %462 = vmatprep.subr.mxu0 0.0
  %463 = vmatpush1.msra.mxu0 0.0
  %464 = vmatprep.subr.mxu0 0.0
  %465 = vmatpush1.msra.mxu0 0.0
  %466 = vmatprep.subr.mxu0 0.0
  %467 = vmatpush1.msra.mxu0 0.0
  %468 = vmatprep.subr.mxu0 0.0
  %469 = vmatpush1.msra.mxu0 0.0
  %470 = vmatprep.subr.mxu0 0.0
  %471 = vmatpush1.msra.mxu0 0.0
  %472 = vmatprep.subr.mxu0 0.0
  %473 = vmatpush1.msra.mxu0 0.0
  %474 = vmatprep.subr.mxu0 0.0
  %475 = vmatpush1.msra.mxu0 0.0
  %476 = vmatprep.subr.mxu0 0.0
  %477 = vmatpush1.msra.mxu0 0.0
  %478 = vmatprep.subr.mxu0 0.0
  %479 = vmatpush1.msra.mxu0 0.0
  %480 = vmatprep.subr.mxu0 0.0
  %481 = vmatpush1.msra.mxu0 0.0
  %482 = vmatprep.subr.mxu0 0.0
  %483 = vmatpush1.msra.mxu0 0.0
  %484 = vmatprep.mubr.f32.mxu0 0.0
  %485 = vmatmul.mubr.f32.gmra.mrb[0].mxu0 %v418
  %v486 = vpop.f32.mrb[0].mxu0
  %v487 = vadd.f32 0.0, %v486
  %v488 = vpop.f32.mrb[0].mxu0
  %489 = vdwg.mxu0
  %v490 = vsel %vm24, %v16, 0
  %492 = vmatprep.subr.mxu0 0.0
  %493 = vmatpush1.msra.mxu0 %v414
  %494 = vmatprep.subr.mxu0 0.0
  %495 = vmatpush1.msra.mxu0 0.0
  %496 = vmatprep.subr.mxu0 0.0
  %497 = vmatpush1.msra.mxu0 0.0
  %498 = vmatprep.subr.mxu0 0.0
  %499 = vmatpush1.msra.mxu0 0.0
  %500 = vmatprep.subr.mxu0 0.0
  %501 = vmatpush1.msra.mxu0 0.0
  %502 = vmatprep.subr.mxu0 0.0
  %503 = vmatpush1.msra.mxu0 0.0
  %504 = vmatprep.subr.mxu0 0.0
  %505 = vmatpush1.msra.mxu0 0.0
  %506 = vmatprep.subr.mxu0 0.0
  %507 = vmatpush1.msra.mxu0 0.0
  %508 = vmatprep.subr.mxu0 0.0
  %509 = vmatpush1.msra.mxu0 0.0
  %510 = vmatprep.subr.mxu0 0.0
  %511 = vmatpush1.msra.mxu0 0.0
  %512 = vmatprep.subr.mxu0 0.0
  %513 = vmatpush1.msra.mxu0 0.0
  %514 = vmatprep.subr.mxu0 0.0
  %515 = vmatpush1.msra.mxu0 0.0
  %516 = vmatprep.subr.mxu0 0.0
  %517 = vmatpush1.msra.mxu0 0.0
  %518 = vmatprep.subr.mxu0 0.0
  %519 = vmatpush1.msra.mxu0 0.0
  %520 = vmatprep.subr.mxu0 0.0
  %521 = vmatpush1.msra.mxu0 0.0
  %522 = vmatprep.subr.mxu0 0.0
  %523 = vmatpush1.msra.mxu0 0.0
  %524 = vmatprep.subr.mxu0 0.0
  %525 = vmatpush1.msra.mxu0 0.0
  %526 = vmatprep.subr.mxu0 0.0
  %527 = vmatpush1.msra.mxu0 0.0
  %528 = vmatprep.subr.mxu0 0.0
  %529 = vmatpush1.msra.mxu0 0.0
  %530 = vmatprep.subr.mxu0 0.0
  %531 = vmatpush1.msra.mxu0 0.0
  %532 = vmatprep.subr.mxu0 0.0
  %533 = vmatpush1.msra.mxu0 0.0
  %534 = vmatprep.subr.mxu0 0.0
  %535 = vmatpush1.msra.mxu0 0.0
  %536 = vmatprep.subr.mxu0 0.0
  %537 = vmatpush1.msra.mxu0 0.0
  %538 = vmatprep.subr.mxu0 0.0
  %539 = vmatpush1.msra.mxu0 0.0
  %540 = vmatprep.subr.mxu0 0.0
  %541 = vmatpush1.msra.mxu0 0.0
  %542 = vmatprep.subr.mxu0 0.0
  %543 = vmatpush1.msra.mxu0 0.0
  %544 = vmatprep.subr.mxu0 0.0
  %545 = vmatpush1.msra.mxu0 0.0
  %546 = vmatprep.subr.mxu0 0.0
  %547 = vmatpush1.msra.mxu0 0.0
  %548 = vmatprep.subr.mxu0 0.0
  %549 = vmatpush1.msra.mxu0 0.0
  %550 = vmatprep.subr.mxu0 0.0
  %551 = vmatpush1.msra.mxu0 0.0
  %552 = vmatprep.subr.mxu0 0.0
  %553 = vmatpush1.msra.mxu0 0.0
  %554 = vmatprep.subr.mxu0 0.0
  %555 = vmatpush1.msra.mxu0 0.0
  %556 = vmatprep.mubr.f32.mxu0 0.0
  %557 = vmatmul.mubr.f32.gmra.mrb[0].mxu0 %v490
  %v558 = vpop.f32.mrb[0].mxu0
  %v559 = vadd.f32 %v487, %v558
  %v560 = vpop.f32.mrb[0].mxu0
  %561 = vdwg.mxu0
  %v562 = vld [vmem:[%s169] sm:$0xff]
  %v563 = vrot.slane %v16, 2
  %v564 = vsel %vm24, %v563, 0
  %566 = vmatprep.subr.mxu0 0.0
  %567 = vmatpush1.msra.mxu0 %v562
  %568 = vmatprep.subr.mxu0 0.0
  %569 = vmatpush1.msra.mxu0 0.0
  %570 = vmatprep.subr.mxu0 0.0
  %571 = vmatpush1.msra.mxu0 0.0
  %572 = vmatprep.subr.mxu0 0.0
  %573 = vmatpush1.msra.mxu0 0.0
  %574 = vmatprep.subr.mxu0 0.0
  %575 = vmatpush1.msra.mxu0 0.0
  %576 = vmatprep.subr.mxu0 0.0
  %577 = vmatpush1.msra.mxu0 0.0
  %578 = vmatprep.subr.mxu0 0.0
  %579 = vmatpush1.msra.mxu0 0.0
  %580 = vmatprep.subr.mxu0 0.0
  %581 = vmatpush1.msra.mxu0 0.0
  %582 = vmatprep.subr.mxu0 0.0
  %583 = vmatpush1.msra.mxu0 0.0
  %584 = vmatprep.subr.mxu0 0.0
  %585 = vmatpush1.msra.mxu0 0.0
  %586 = vmatprep.subr.mxu0 0.0
  %587 = vmatpush1.msra.mxu0 0.0
  %588 = vmatprep.subr.mxu0 0.0
  %589 = vmatpush1.msra.mxu0 0.0
  %590 = vmatprep.subr.mxu0 0.0
  %591 = vmatpush1.msra.mxu0 0.0
  %592 = vmatprep.subr.mxu0 0.0
  %593 = vmatpush1.msra.mxu0 0.0
  %594 = vmatprep.subr.mxu0 0.0
  %595 = vmatpush1.msra.mxu0 0.0
  %596 = vmatprep.subr.mxu0 0.0
  %597 = vmatpush1.msra.mxu0 0.0
  %598 = vmatprep.subr.mxu0 0.0
  %599 = vmatpush1.msra.mxu0 0.0
  %600 = vmatprep.subr.mxu0 0.0
  %601 = vmatpush1.msra.mxu0 0.0
  %602 = vmatprep.subr.mxu0 0.0
  %603 = vmatpush1.msra.mxu0 0.0
  %604 = vmatprep.subr.mxu0 0.0
  %605 = vmatpush1.msra.mxu0 0.0
  %606 = vmatprep.subr.mxu0 0.0
  %607 = vmatpush1.msra.mxu0 0.0
  %608 = vmatprep.subr.mxu0 0.0
  %609 = vmatpush1.msra.mxu0 0.0
  %610 = vmatprep.subr.mxu0 0.0
  %611 = vmatpush1.msra.mxu0 0.0
  %612 = vmatprep.subr.mxu0 0.0
  %613 = vmatpush1.msra.mxu0 0.0
  %614 = vmatprep.subr.mxu0 0.0
  %615 = vmatpush1.msra.mxu0 0.0
  %616 = vmatprep.subr.mxu0 0.0
  %617 = vmatpush1.msra.mxu0 0.0
  %618 = vmatprep.subr.mxu0 0.0
  %619 = vmatpush1.msra.mxu0 0.0
  %620 = vmatprep.subr.mxu0 0.0
  %621 = vmatpush1.msra.mxu0 0.0
  %622 = vmatprep.subr.mxu0 0.0
  %623 = vmatpush1.msra.mxu0 0.0
  %624 = vmatprep.subr.mxu0 0.0
  %625 = vmatpush1.msra.mxu0 0.0
  %626 = vmatprep.subr.mxu0 0.0
  %627 = vmatpush1.msra.mxu0 0.0
  %628 = vmatprep.subr.mxu0 0.0
  %629 = vmatpush1.msra.mxu0 0.0
  %630 = vmatprep.mubr.f32.mxu0 0.0
  %631 = vmatmul.mubr.f32.gmra.mrb[0].mxu0 %v564
  %v632 = vpop.f32.mrb[0].mxu0
  %v633 = vadd.f32 0.0, %v632
  %v634 = vpop.f32.mrb[0].mxu0
  %635 = vdwg.mxu0
  %v636 = vadd.f32 %v559, %v633
  %v637 = vld [vmem:[%s245] sm:$0xff]
  %v639 = vrot.slane %v16, 3
  %v640 = vrot.slane %v17, 3
  %v641 = vsel %vm248, %v639, %v640
  %v642 = vsel %vm24, %v641, 0
  %644 = vmatprep.subr.mxu0 0.0
  %645 = vmatpush1.msra.mxu0 %v637
  %646 = vmatprep.subr.mxu0 0.0
  %647 = vmatpush1.msra.mxu0 0.0
  %648 = vmatprep.subr.mxu0 0.0
  %649 = vmatpush1.msra.mxu0 0.0
  %650 = vmatprep.subr.mxu0 0.0
  %651 = vmatpush1.msra.mxu0 0.0
  %652 = vmatprep.subr.mxu0 0.0
  %653 = vmatpush1.msra.mxu0 0.0
  %654 = vmatprep.subr.mxu0 0.0
  %655 = vmatpush1.msra.mxu0 0.0
  %656 = vmatprep.subr.mxu0 0.0
  %657 = vmatpush1.msra.mxu0 0.0
  %658 = vmatprep.subr.mxu0 0.0
  %659 = vmatpush1.msra.mxu0 0.0
  %660 = vmatprep.subr.mxu0 0.0
  %661 = vmatpush1.msra.mxu0 0.0
  %662 = vmatprep.subr.mxu0 0.0
  %663 = vmatpush1.msra.mxu0 0.0
  %664 = vmatprep.subr.mxu0 0.0
  %665 = vmatpush1.msra.mxu0 0.0
  %666 = vmatprep.subr.mxu0 0.0
  %667 = vmatpush1.msra.mxu0 0.0
  %668 = vmatprep.subr.mxu0 0.0
  %669 = vmatpush1.msra.mxu0 0.0
  %670 = vmatprep.subr.mxu0 0.0
  %671 = vmatpush1.msra.mxu0 0.0
  %672 = vmatprep.subr.mxu0 0.0
  %673 = vmatpush1.msra.mxu0 0.0
  %674 = vmatprep.subr.mxu0 0.0
  %675 = vmatpush1.msra.mxu0 0.0
  %676 = vmatprep.subr.mxu0 0.0
  %677 = vmatpush1.msra.mxu0 0.0
  %678 = vmatprep.subr.mxu0 0.0
  %679 = vmatpush1.msra.mxu0 0.0
  %680 = vmatprep.subr.mxu0 0.0
  %681 = vmatpush1.msra.mxu0 0.0
  %682 = vmatprep.subr.mxu0 0.0
  %683 = vmatpush1.msra.mxu0 0.0
  %684 = vmatprep.subr.mxu0 0.0
  %685 = vmatpush1.msra.mxu0 0.0
  %686 = vmatprep.subr.mxu0 0.0
  %687 = vmatpush1.msra.mxu0 0.0
  %688 = vmatprep.subr.mxu0 0.0
  %689 = vmatpush1.msra.mxu0 0.0
  %690 = vmatprep.subr.mxu0 0.0
  %691 = vmatpush1.msra.mxu0 0.0
  %692 = vmatprep.subr.mxu0 0.0
  %693 = vmatpush1.msra.mxu0 0.0
  %694 = vmatprep.subr.mxu0 0.0
  %695 = vmatpush1.msra.mxu0 0.0
  %696 = vmatprep.subr.mxu0 0.0
  %697 = vmatpush1.msra.mxu0 0.0
  %698 = vmatprep.subr.mxu0 0.0
  %699 = vmatpush1.msra.mxu0 0.0
  %700 = vmatprep.subr.mxu0 0.0
  %701 = vmatpush1.msra.mxu0 0.0
  %702 = vmatprep.subr.mxu0 0.0
  %703 = vmatpush1.msra.mxu0 0.0
  %704 = vmatprep.subr.mxu0 0.0
  %705 = vmatpush1.msra.mxu0 0.0
  %706 = vmatprep.subr.mxu0 0.0
  %707 = vmatpush1.msra.mxu0 0.0
  %708 = vmatprep.mubr.f32.mxu0 0.0
  %709 = vmatmul.mubr.f32.gmra.mrb[0].mxu0 %v642
  %v710 = vpop.f32.mrb[0].mxu0
  %v711 = vadd.f32 0.0, %v710
  %v712 = vpop.f32.mrb[0].mxu0
  %713 = vdwg.mxu0
  %v714 = vadd.f32 %v636, %v711
  %v715 = vld [vmem:[%s325] sm:$0xff]
  %v716 = vrot.slane %v16, 4
  %v717 = vrot.slane %v17, 4
  %v718 = vsel %vm327, %v716, %v717
  %v719 = vsel %vm24, %v718, 0
  %721 = vmatprep.subr.mxu0 0.0
  %722 = vmatpush1.msra.mxu0 %v715
  %723 = vmatprep.subr.mxu0 0.0
  %724 = vmatpush1.msra.mxu0 0.0
  %725 = vmatprep.subr.mxu0 0.0
  %726 = vmatpush1.msra.mxu0 0.0
  %727 = vmatprep.subr.mxu0 0.0
  %728 = vmatpush1.msra.mxu0 0.0
  %729 = vmatprep.subr.mxu0 0.0
  %730 = vmatpush1.msra.mxu0 0.0
  %731 = vmatprep.subr.mxu0 0.0
  %732 = vmatpush1.msra.mxu0 0.0
  %733 = vmatprep.subr.mxu0 0.0
  %734 = vmatpush1.msra.mxu0 0.0
  %735 = vmatprep.subr.mxu0 0.0
  %736 = vmatpush1.msra.mxu0 0.0
  %737 = vmatprep.subr.mxu0 0.0
  %738 = vmatpush1.msra.mxu0 0.0
  %739 = vmatprep.subr.mxu0 0.0
  %740 = vmatpush1.msra.mxu0 0.0
  %741 = vmatprep.subr.mxu0 0.0
  %742 = vmatpush1.msra.mxu0 0.0
  %743 = vmatprep.subr.mxu0 0.0
  %744 = vmatpush1.msra.mxu0 0.0
  %745 = vmatprep.subr.mxu0 0.0
  %746 = vmatpush1.msra.mxu0 0.0
  %747 = vmatprep.subr.mxu0 0.0
  %748 = vmatpush1.msra.mxu0 0.0
  %749 = vmatprep.subr.mxu0 0.0
  %750 = vmatpush1.msra.mxu0 0.0
  %751 = vmatprep.subr.mxu0 0.0
  %752 = vmatpush1.msra.mxu0 0.0
  %753 = vmatprep.subr.mxu0 0.0
  %754 = vmatpush1.msra.mxu0 0.0
  %755 = vmatprep.subr.mxu0 0.0
  %756 = vmatpush1.msra.mxu0 0.0
  %757 = vmatprep.subr.mxu0 0.0
  %758 = vmatpush1.msra.mxu0 0.0
  %759 = vmatprep.subr.mxu0 0.0
  %760 = vmatpush1.msra.mxu0 0.0
  %761 = vmatprep.subr.mxu0 0.0
  %762 = vmatpush1.msra.mxu0 0.0
  %763 = vmatprep.subr.mxu0 0.0
  %764 = vmatpush1.msra.mxu0 0.0
  %765 = vmatprep.subr.mxu0 0.0
  %766 = vmatpush1.msra.mxu0 0.0
  %767 = vmatprep.subr.mxu0 0.0
  %768 = vmatpush1.msra.mxu0 0.0
  %769 = vmatprep.subr.mxu0 0.0
  %770 = vmatpush1.msra.mxu0 0.0
  %771 = vmatprep.subr.mxu0 0.0
  %772 = vmatpush1.msra.mxu0 0.0
  %773 = vmatprep.subr.mxu0 0.0
  %774 = vmatpush1.msra.mxu0 0.0
  %775 = vmatprep.subr.mxu0 0.0
  %776 = vmatpush1.msra.mxu0 0.0
  %777 = vmatprep.subr.mxu0 0.0
  %778 = vmatpush1.msra.mxu0 0.0
  %779 = vmatprep.subr.mxu0 0.0
  %780 = vmatpush1.msra.mxu0 0.0
  %781 = vmatprep.subr.mxu0 0.0
  %782 = vmatpush1.msra.mxu0 0.0
  %783 = vmatprep.subr.mxu0 0.0
  %784 = vmatpush1.msra.mxu0 0.0
  %785 = vmatprep.mubr.f32.mxu0 0.0
  %786 = vmatmul.mubr.f32.gmra.mrb[0].mxu0 %v719
  %v787 = vpop.f32.mrb[0].mxu0
  %v788 = vadd.f32 0.0, %v787
  %v789 = vpop.f32.mrb[0].mxu0
  %790 = vdwg.mxu0
  %v791 = vadd.f32 %v714, %v788
  %v792 = vadd.f32 %v791, %v408
  %v793 = vtanh.pop %v792
  %s794 = scalar_lea.vmem %s3, 8
  %795 = vst.msk [vmem:[%s794] sm:$0x3f] %vm412, %v793
  // Predicated region
  $region14: #{tacotron2_forward.19} parent=0 // pred_check
    _
  $region15: #{tacotron2_forward.19} parent=0 // pred_check_branch
    %797 = sbr.rel (0) target = $region17
  $region16: #{tacotron2_forward.19} parent=0 // pred_region
    _
  $region17: #{tacotron2_forward.19} parent=0 // pred_fallthru
    _
  // Predicated region
  $region18: #{tacotron2_forward.19} parent=0 // pred_check
    _
  $region19: #{tacotron2_forward.19} parent=0 // pred_check_branch
    %799 = sbr.rel (0) target = $region21
  $region20: #{tacotron2_forward.19} parent=0 // pred_region
    _
  $region21: #{tacotron2_forward.19} parent=0 // pred_fallthru
    _

// kernel: tacotron2_forward.20
$region0: #{tacotron2_forward.20}
  #allocation0 [shape = 'u32[]', space=smem, size = 0x4, offset = 0x4, fixed_abs, tag = 'smem constant byte address 0x4 - core index']
  #allocation1 [shape = 'u32[144,128]{1,0:T(1,128)}', space=vmem, size = 0x12000, scoped, tag = 'internal scratch']
  %s0 = inlined_call_operand.vmem [shape: f32[2,10,16], index: 0, kind: input, shape index: {}]
  %s1 = inlined_call_operand.vmem [shape: f32[5,16,16], index: 1, kind: input, shape index: {}]
  %s2 = inlined_call_operand.vmem [shape: f32[1,16], index: 2, kind: input, shape index: {}]
  %s3 = inlined_call_operand.vmem [shape: f32[2,6,16], index: 3, kind: output, shape index: {}]
  %s4 = sld [smem:[#allocation0]]
  $region22: #{tacotron2_forward.20} parent=0
    _
  %s6 = ssub.s32 1, %s4
  %s7 = scalar_select 0, %s6, %s4
  // Predicated region
  $region2: #{tacotron2_forward.20} parent=0 // pred_check
    _
  $region3: #{tacotron2_forward.20} parent=0 // pred_check_branch
    %9 = sbr.rel (0) target = $region5
  $region4: #{tacotron2_forward.20} parent=0 // pred_region
    _
  $region5: #{tacotron2_forward.20} parent=0 // pred_fallthru
    _
  // Predicated region
  $region6: #{tacotron2_forward.20} parent=0 // pred_check
    _
  $region7: #{tacotron2_forward.20} parent=0 // pred_check_branch
    %11 = sbr.rel (0) target = $region9
  $region8: #{tacotron2_forward.20} parent=0 // pred_region
    _
  $region9: #{tacotron2_forward.20} parent=0 // pred_fallthru
    _
  // Predicated region
  $region10: #{tacotron2_forward.20} parent=0 // pred_check
    _
  $region11: #{tacotron2_forward.20} parent=0 // pred_check_branch
    %13 = sbr.rel (0) target = $region13
  $region12: #{tacotron2_forward.20} parent=0 // pred_region
    _
  $region13: #{tacotron2_forward.20} parent=0 // pred_fallthru
    _
  %v14 = vld [vmem:[%s0] sm:$0xff]
  %v15 = vld [vmem:[%s0 + $0x8] sm:$0x3]
  %v16 = vld [vmem:[%s0 + $0x10] sm:$0xff]
  %v17 = vld [vmem:[%s0 + $0x18] sm:$0x3]
  %v18 = vld [vmem:[%s2] sm:$0x1]
  %v19 = vld [vmem:[%s1] sm:$0xff]
  %v20 = vld [vmem:[%s1 + $0x8] sm:$0xff]
  %s21 = scalar_lea.vmem %s1, 16
  %v22 = vld [vmem:[%s21] sm:$0xff]
  %v23 = vld [vmem:[%s21 + $0x8] sm:$0xff]
  %v25 = vrot.slane %v14, 1
  %vm26 = vcmask 130048
  %v27 = vsel %vm26, %v25, 0
  %29 = vmatprep.subr.mxu0 0.0
  %30 = vmatpush1.msra.mxu0 %v22
  %31 = vmatprep.subr.mxu0 0.0
  %32 = vmatpush1.msra.mxu0 %v23
  %33 = vmatprep.subr.mxu0 0.0
  %34 = vmatpush1.msra.mxu0 0.0
  %35 = vmatprep.subr.mxu0 0.0
  %36 = vmatpush1.msra.mxu0 0.0
  %37 = vmatprep.subr.mxu0 0.0
  %38 = vmatpush1.msra.mxu0 0.0
  %39 = vmatprep.subr.mxu0 0.0
  %40 = vmatpush1.msra.mxu0 0.0
  %41 = vmatprep.subr.mxu0 0.0
  %42 = vmatpush1.msra.mxu0 0.0
  %43 = vmatprep.subr.mxu0 0.0
  %44 = vmatpush1.msra.mxu0 0.0
  %45 = vmatprep.subr.mxu0 0.0
  %46 = vmatpush1.msra.mxu0 0.0
  %47 = vmatprep.subr.mxu0 0.0
  %48 = vmatpush1.msra.mxu0 0.0
  %49 = vmatprep.subr.mxu0 0.0
  %50 = vmatpush1.msra.mxu0 0.0
  %51 = vmatprep.subr.mxu0 0.0
  %52 = vmatpush1.msra.mxu0 0.0
  %53 = vmatprep.subr.mxu0 0.0
  %54 = vmatpush1.msra.mxu0 0.0
  %55 = vmatprep.subr.mxu0 0.0
  %56 = vmatpush1.msra.mxu0 0.0
  %57 = vmatprep.subr.mxu0 0.0
  %58 = vmatpush1.msra.mxu0 0.0
  %59 = vmatprep.subr.mxu0 0.0
  %60 = vmatpush1.msra.mxu0 0.0
  %61 = vmatprep.subr.mxu0 0.0
  %62 = vmatpush1.msra.mxu0 0.0
  %63 = vmatprep.subr.mxu0 0.0
  %64 = vmatpush1.msra.mxu0 0.0
  %65 = vmatprep.subr.mxu0 0.0
  %66 = vmatpush1.msra.mxu0 0.0
  %67 = vmatprep.subr.mxu0 0.0
  %68 = vmatpush1.msra.mxu0 0.0
  %69 = vmatprep.subr.mxu0 0.0
  %70 = vmatpush1.msra.mxu0 0.0
  %71 = vmatprep.subr.mxu0 0.0
  %72 = vmatpush1.msra.mxu0 0.0
  %73 = vmatprep.subr.mxu0 0.0
  %74 = vmatpush1.msra.mxu0 0.0
  %75 = vmatprep.subr.mxu0 0.0
  %76 = vmatpush1.msra.mxu0 0.0
  %77 = vmatprep.subr.mxu0 0.0
  %78 = vmatpush1.msra.mxu0 0.0
  %79 = vmatprep.subr.mxu0 0.0
  %80 = vmatpush1.msra.mxu0 0.0
  %81 = vmatprep.subr.mxu0 0.0
  %82 = vmatpush1.msra.mxu0 0.0
  %83 = vmatprep.subr.mxu0 0.0
  %84 = vmatpush1.msra.mxu0 0.0
  %85 = vmatprep.subr.mxu0 0.0
  %86 = vmatpush1.msra.mxu0 0.0
  %87 = vmatprep.subr.mxu0 0.0
  %88 = vmatpush1.msra.mxu0 0.0
  %89 = vmatprep.subr.mxu0 0.0
  %90 = vmatpush1.msra.mxu0 0.0
  %91 = vmatprep.subr.mxu0 0.0
  %92 = vmatpush1.msra.mxu0 0.0
  %93 = vmatprep.mubr.f32.mxu0 0.0
  %94 = vmatmul.mubr.f32.gmra.mrb[0].mxu0 %v27
  %v95 = vpop.f32.mrb[0].mxu0
  %v96 = vadd.f32 0.0, %v95
  %v97 = vpop.f32.mrb[0].mxu0
  %98 = vdwg.mxu0
  %v99 = vsel %vm26, %v14, 0
  %101 = vmatprep.subr.mxu0 0.0
  %102 = vmatpush1.msra.mxu0 %v19
  %103 = vmatprep.subr.mxu0 0.0
  %104 = vmatpush1.msra.mxu0 %v20
  %105 = vmatprep.subr.mxu0 0.0
  %106 = vmatpush1.msra.mxu0 0.0
  %107 = vmatprep.subr.mxu0 0.0
  %108 = vmatpush1.msra.mxu0 0.0
  %109 = vmatprep.subr.mxu0 0.0
  %110 = vmatpush1.msra.mxu0 0.0
  %111 = vmatprep.subr.mxu0 0.0
  %112 = vmatpush1.msra.mxu0 0.0
  %113 = vmatprep.subr.mxu0 0.0
  %114 = vmatpush1.msra.mxu0 0.0
  %115 = vmatprep.subr.mxu0 0.0
  %116 = vmatpush1.msra.mxu0 0.0
  %117 = vmatprep.subr.mxu0 0.0
  %118 = vmatpush1.msra.mxu0 0.0
  %119 = vmatprep.subr.mxu0 0.0
  %120 = vmatpush1.msra.mxu0 0.0
  %121 = vmatprep.subr.mxu0 0.0
  %122 = vmatpush1.msra.mxu0 0.0
  %123 = vmatprep.subr.mxu0 0.0
  %124 = vmatpush1.msra.mxu0 0.0
  %125 = vmatprep.subr.mxu0 0.0
  %126 = vmatpush1.msra.mxu0 0.0
  %127 = vmatprep.subr.mxu0 0.0
  %128 = vmatpush1.msra.mxu0 0.0
  %129 = vmatprep.subr.mxu0 0.0
  %130 = vmatpush1.msra.mxu0 0.0
  %131 = vmatprep.subr.mxu0 0.0
  %132 = vmatpush1.msra.mxu0 0.0
  %133 = vmatprep.subr.mxu0 0.0
  %134 = vmatpush1.msra.mxu0 0.0
  %135 = vmatprep.subr.mxu0 0.0
  %136 = vmatpush1.msra.mxu0 0.0
  %137 = vmatprep.subr.mxu0 0.0
  %138 = vmatpush1.msra.mxu0 0.0
  %139 = vmatprep.subr.mxu0 0.0
  %140 = vmatpush1.msra.mxu0 0.0
  %141 = vmatprep.subr.mxu0 0.0
  %142 = vmatpush1.msra.mxu0 0.0
  %143 = vmatprep.subr.mxu0 0.0
  %144 = vmatpush1.msra.mxu0 0.0
  %145 = vmatprep.subr.mxu0 0.0
  %146 = vmatpush1.msra.mxu0 0.0
  %147 = vmatprep.subr.mxu0 0.0
  %148 = vmatpush1.msra.mxu0 0.0
  %149 = vmatprep.subr.mxu0 0.0
  %150 = vmatpush1.msra.mxu0 0.0
  %151 = vmatprep.subr.mxu0 0.0
  %152 = vmatpush1.msra.mxu0 0.0
  %153 = vmatprep.subr.mxu0 0.0
  %154 = vmatpush1.msra.mxu0 0.0
  %155 = vmatprep.subr.mxu0 0.0
  %156 = vmatpush1.msra.mxu0 0.0
  %157 = vmatprep.subr.mxu0 0.0
  %158 = vmatpush1.msra.mxu0 0.0
  %159 = vmatprep.subr.mxu0 0.0
  %160 = vmatpush1.msra.mxu0 0.0
  %161 = vmatprep.subr.mxu0 0.0
  %162 = vmatpush1.msra.mxu0 0.0
  %163 = vmatprep.subr.mxu0 0.0
  %164 = vmatpush1.msra.mxu0 0.0
  %165 = vmatprep.mubr.f32.mxu0 0.0
  %166 = vmatmul.mubr.f32.gmra.mrb[0].mxu0 %v99
  %v167 = vpop.f32.mrb[0].mxu0
  %v168 = vadd.f32 %v96, %v167
  %v169 = vpop.f32.mrb[0].mxu0
  %170 = vdwg.mxu0
  %s171 = scalar_lea.vmem %s1, 32
  %v172 = vld [vmem:[%s171] sm:$0xff]
  %v173 = vld [vmem:[%s171 + $0x8] sm:$0xff]
  %v174 = vrot.slane %v14, 2
  %v175 = vsel %vm26, %v174, 0
  %177 = vmatprep.subr.mxu0 0.0
  %178 = vmatpush1.msra.mxu0 %v172
  %179 = vmatprep.subr.mxu0 0.0
  %180 = vmatpush1.msra.mxu0 %v173
  %181 = vmatprep.subr.mxu0 0.0
  %182 = vmatpush1.msra.mxu0 0.0
  %183 = vmatprep.subr.mxu0 0.0
  %184 = vmatpush1.msra.mxu0 0.0
  %185 = vmatprep.subr.mxu0 0.0
  %186 = vmatpush1.msra.mxu0 0.0
  %187 = vmatprep.subr.mxu0 0.0
  %188 = vmatpush1.msra.mxu0 0.0
  %189 = vmatprep.subr.mxu0 0.0
  %190 = vmatpush1.msra.mxu0 0.0
  %191 = vmatprep.subr.mxu0 0.0
  %192 = vmatpush1.msra.mxu0 0.0
  %193 = vmatprep.subr.mxu0 0.0
  %194 = vmatpush1.msra.mxu0 0.0
  %195 = vmatprep.subr.mxu0 0.0
  %196 = vmatpush1.msra.mxu0 0.0
  %197 = vmatprep.subr.mxu0 0.0
  %198 = vmatpush1.msra.mxu0 0.0
  %199 = vmatprep.subr.mxu0 0.0
  %200 = vmatpush1.msra.mxu0 0.0
  %201 = vmatprep.subr.mxu0 0.0
  %202 = vmatpush1.msra.mxu0 0.0
  %203 = vmatprep.subr.mxu0 0.0
  %204 = vmatpush1.msra.mxu0 0.0
  %205 = vmatprep.subr.mxu0 0.0
  %206 = vmatpush1.msra.mxu0 0.0
  %207 = vmatprep.subr.mxu0 0.0
  %208 = vmatpush1.msra.mxu0 0.0
  %209 = vmatprep.subr.mxu0 0.0
  %210 = vmatpush1.msra.mxu0 0.0
  %211 = vmatprep.subr.mxu0 0.0
  %212 = vmatpush1.msra.mxu0 0.0
  %213 = vmatprep.subr.mxu0 0.0
  %214 = vmatpush1.msra.mxu0 0.0
  %215 = vmatprep.subr.mxu0 0.0
  %216 = vmatpush1.msra.mxu0 0.0
  %217 = vmatprep.subr.mxu0 0.0
  %218 = vmatpush1.msra.mxu0 0.0
  %219 = vmatprep.subr.mxu0 0.0
  %220 = vmatpush1.msra.mxu0 0.0
  %221 = vmatprep.subr.mxu0 0.0
  %222 = vmatpush1.msra.mxu0 0.0
  %223 = vmatprep.subr.mxu0 0.0
  %224 = vmatpush1.msra.mxu0 0.0
  %225 = vmatprep.subr.mxu0 0.0
  %226 = vmatpush1.msra.mxu0 0.0
  %227 = vmatprep.subr.mxu0 0.0
  %228 = vmatpush1.msra.mxu0 0.0
  %229 = vmatprep.subr.mxu0 0.0
  %230 = vmatpush1.msra.mxu0 0.0
  %231 = vmatprep.subr.mxu0 0.0
  %232 = vmatpush1.msra.mxu0 0.0
  %233 = vmatprep.subr.mxu0 0.0
  %234 = vmatpush1.msra.mxu0 0.0
  %235 = vmatprep.subr.mxu0 0.0
  %236 = vmatpush1.msra.mxu0 0.0
  %237 = vmatprep.subr.mxu0 0.0
  %238 = vmatpush1.msra.mxu0 0.0
  %239 = vmatprep.subr.mxu0 0.0
  %240 = vmatpush1.msra.mxu0 0.0
  %241 = vmatprep.mubr.f32.mxu0 0.0
  %242 = vmatmul.mubr.f32.gmra.mrb[0].mxu0 %v175
  %v243 = vpop.f32.mrb[0].mxu0
  %v244 = vadd.f32 0.0, %v243
  %v245 = vpop.f32.mrb[0].mxu0
  %246 = vdwg.mxu0
  %v247 = vadd.f32 %v168, %v244
  %s248 = scalar_lea.vmem %s1, 48
  %v249 = vld [vmem:[%s248] sm:$0xff]
  %v250 = vld [vmem:[%s248 + $0x8] sm:$0xff]
  %vm252 = vcmask 1044480
  %v253 = vrot.slane %v14, 3
  %v254 = vrot.slane %v15, 3
  %v255 = vsel %vm252, %v253, %v254
  %v256 = vsel %vm26, %v255, 0
  %258 = vmatprep.subr.mxu0 0.0
  %259 = vmatpush1.msra.mxu0 %v249
  %260 = vmatprep.subr.mxu0 0.0
  %261 = vmatpush1.msra.mxu0 %v250
  %262 = vmatprep.subr.mxu0 0.0
  %263 = vmatpush1.msra.mxu0 0.0
  %264 = vmatprep.subr.mxu0 0.0
  %265 = vmatpush1.msra.mxu0 0.0
  %266 = vmatprep.subr.mxu0 0.0
  %267 = vmatpush1.msra.mxu0 0.0
  %268 = vmatprep.subr.mxu0 0.0
  %269 = vmatpush1.msra.mxu0 0.0
  %270 = vmatprep.subr.mxu0 0.0
  %271 = vmatpush1.msra.mxu0 0.0
  %272 = vmatprep.subr.mxu0 0.0
  %273 = vmatpush1.msra.mxu0 0.0
  %274 = vmatprep.subr.mxu0 0.0
  %275 = vmatpush1.msra.mxu0 0.0
  %276 = vmatprep.subr.mxu0 0.0
  %277 = vmatpush1.msra.mxu0 0.0
  %278 = vmatprep.subr.mxu0 0.0
  %279 = vmatpush1.msra.mxu0 0.0
  %280 = vmatprep.subr.mxu0 0.0
  %281 = vmatpush1.msra.mxu0 0.0
  %282 = vmatprep.subr.mxu0 0.0
  %283 = vmatpush1.msra.mxu0 0.0
  %284 = vmatprep.subr.mxu0 0.0
  %285 = vmatpush1.msra.mxu0 0.0
  %286 = vmatprep.subr.mxu0 0.0
  %287 = vmatpush1.msra.mxu0 0.0
  %288 = vmatprep.subr.mxu0 0.0
  %289 = vmatpush1.msra.mxu0 0.0
  %290 = vmatprep.subr.mxu0 0.0
  %291 = vmatpush1.msra.mxu0 0.0
  %292 = vmatprep.subr.mxu0 0.0
  %293 = vmatpush1.msra.mxu0 0.0
  %294 = vmatprep.subr.mxu0 0.0
  %295 = vmatpush1.msra.mxu0 0.0
  %296 = vmatprep.subr.mxu0 0.0
  %297 = vmatpush1.msra.mxu0 0.0
  %298 = vmatprep.subr.mxu0 0.0
  %299 = vmatpush1.msra.mxu0 0.0
  %300 = vmatprep.subr.mxu0 0.0
  %301 = vmatpush1.msra.mxu0 0.0
  %302 = vmatprep.subr.mxu0 0.0
  %303 = vmatpush1.msra.mxu0 0.0
  %304 = vmatprep.subr.mxu0 0.0
  %305 = vmatpush1.msra.mxu0 0.0
  %306 = vmatprep.subr.mxu0 0.0
  %307 = vmatpush1.msra.mxu0 0.0
  %308 = vmatprep.subr.mxu0 0.0
  %309 = vmatpush1.msra.mxu0 0.0
  %310 = vmatprep.subr.mxu0 0.0
  %311 = vmatpush1.msra.mxu0 0.0
  %312 = vmatprep.subr.mxu0 0.0
  %313 = vmatpush1.msra.mxu0 0.0
  %314 = vmatprep.subr.mxu0 0.0
  %315 = vmatpush1.msra.mxu0 0.0
  %316 = vmatprep.subr.mxu0 0.0
  %317 = vmatpush1.msra.mxu0 0.0
  %318 = vmatprep.subr.mxu0 0.0
  %319 = vmatpush1.msra.mxu0 0.0
  %320 = vmatprep.subr.mxu0 0.0
  %321 = vmatpush1.msra.mxu0 0.0
  %322 = vmatprep.mubr.f32.mxu0 0.0
  %323 = vmatmul.mubr.f32.gmra.mrb[0].mxu0 %v256
  %v324 = vpop.f32.mrb[0].mxu0
  %v325 = vadd.f32 0.0, %v324
  %v326 = vpop.f32.mrb[0].mxu0
  %327 = vdwg.mxu0
  %v328 = vadd.f32 %v247, %v325
  %s329 = scalar_lea.vmem %s1, 64
  %v330 = vld [vmem:[%s329] sm:$0xff]
  %v331 = vld [vmem:[%s329 + $0x8] sm:$0xff]
  %vm332 = vcmask 1043456
  %v333 = vrot.slane %v14, 4
  %v334 = vrot.slane %v15, 4
  %v335 = vsel %vm332, %v333, %v334
  %v336 = vsel %vm26, %v335, 0
  %338 = vmatprep.subr.mxu0 0.0
  %339 = vmatpush1.msra.mxu0 %v330
  %340 = vmatprep.subr.mxu0 0.0
  %341 = vmatpush1.msra.mxu0 %v331
  %342 = vmatprep.subr.mxu0 0.0
  %343 = vmatpush1.msra.mxu0 0.0
  %344 = vmatprep.subr.mxu0 0.0
  %345 = vmatpush1.msra.mxu0 0.0
  %346 = vmatprep.subr.mxu0 0.0
  %347 = vmatpush1.msra.mxu0 0.0
  %348 = vmatprep.subr.mxu0 0.0
  %349 = vmatpush1.msra.mxu0 0.0
  %350 = vmatprep.subr.mxu0 0.0
  %351 = vmatpush1.msra.mxu0 0.0
  %352 = vmatprep.subr.mxu0 0.0
  %353 = vmatpush1.msra.mxu0 0.0
  %354 = vmatprep.subr.mxu0 0.0
  %355 = vmatpush1.msra.mxu0 0.0
  %356 = vmatprep.subr.mxu0 0.0
  %357 = vmatpush1.msra.mxu0 0.0
  %358 = vmatprep.subr.mxu0 0.0
  %359 = vmatpush1.msra.mxu0 0.0
  %360 = vmatprep.subr.mxu0 0.0
  %361 = vmatpush1.msra.mxu0 0.0
  %362 = vmatprep.subr.mxu0 0.0
  %363 = vmatpush1.msra.mxu0 0.0
  %364 = vmatprep.subr.mxu0 0.0
  %365 = vmatpush1.msra.mxu0 0.0
  %366 = vmatprep.subr.mxu0 0.0
  %367 = vmatpush1.msra.mxu0 0.0
  %368 = vmatprep.subr.mxu0 0.0
  %369 = vmatpush1.msra.mxu0 0.0
  %370 = vmatprep.subr.mxu0 0.0
  %371 = vmatpush1.msra.mxu0 0.0
  %372 = vmatprep.subr.mxu0 0.0
  %373 = vmatpush1.msra.mxu0 0.0
  %374 = vmatprep.subr.mxu0 0.0
  %375 = vmatpush1.msra.mxu0 0.0
  %376 = vmatprep.subr.mxu0 0.0
  %377 = vmatpush1.msra.mxu0 0.0
  %378 = vmatprep.subr.mxu0 0.0
  %379 = vmatpush1.msra.mxu0 0.0
  %380 = vmatprep.subr.mxu0 0.0
  %381 = vmatpush1.msra.mxu0 0.0
  %382 = vmatprep.subr.mxu0 0.0
  %383 = vmatpush1.msra.mxu0 0.0
  %384 = vmatprep.subr.mxu0 0.0
  %385 = vmatpush1.msra.mxu0 0.0
  %386 = vmatprep.subr.mxu0 0.0
  %387 = vmatpush1.msra.mxu0 0.0
  %388 = vmatprep.subr.mxu0 0.0
  %389 = vmatpush1.msra.mxu0 0.0
  %390 = vmatprep.subr.mxu0 0.0
  %391 = vmatpush1.msra.mxu0 0.0
  %392 = vmatprep.subr.mxu0 0.0
  %393 = vmatpush1.msra.mxu0 0.0
  %394 = vmatprep.subr.mxu0 0.0
  %395 = vmatpush1.msra.mxu0 0.0
  %396 = vmatprep.subr.mxu0 0.0
  %397 = vmatpush1.msra.mxu0 0.0
  %398 = vmatprep.subr.mxu0 0.0
  %399 = vmatpush1.msra.mxu0 0.0
  %400 = vmatprep.subr.mxu0 0.0
  %401 = vmatpush1.msra.mxu0 0.0
  %402 = vmatprep.mubr.f32.mxu0 0.0
  %403 = vmatmul.mubr.f32.gmra.mrb[0].mxu0 %v336
  %v404 = vpop.f32.mrb[0].mxu0
  %v405 = vadd.f32 0.0, %v404
  %v406 = vpop.f32.mrb[0].mxu0
  %407 = vdwg.mxu0
  %v408 = vadd.f32 %v328, %v405
  %v410 = vlaneseq
  %v411 = vshrl.u32 %v410, 7
  %v412 = vsub.s32 0, %v411
  %v413 = vrot.slane %v18, %v412
  %v415 = vadd.f32 %v408, %v413
  %v416 = vtanh.pop %v415
  %vm417 = vcmask 128000
  %418 = vst.msk [vmem:[%s3] sm:$0x3f] %vm417, %v416
  %v419 = vld [vmem:[%s1] sm:$0xff]
  %v420 = vld [vmem:[%s1 + $0x8] sm:$0xff]
  %v421 = vld [vmem:[%s21] sm:$0xff]
  %v422 = vld [vmem:[%s21 + $0x8] sm:$0xff]
  %v424 = vrot.slane %v16, 1
  %v425 = vsel %vm26, %v424, 0
  %427 = vmatprep.subr.mxu0 0.0
  %428 = vmatpush1.msra.mxu0 %v421
  %429 = vmatprep.subr.mxu0 0.0
  %430 = vmatpush1.msra.mxu0 %v422
  %431 = vmatprep.subr.mxu0 0.0
  %432 = vmatpush1.msra.mxu0 0.0
  %433 = vmatprep.subr.mxu0 0.0
  %434 = vmatpush1.msra.mxu0 0.0
  %435 = vmatprep.subr.mxu0 0.0
  %436 = vmatpush1.msra.mxu0 0.0
  %437 = vmatprep.subr.mxu0 0.0
  %438 = vmatpush1.msra.mxu0 0.0
  %439 = vmatprep.subr.mxu0 0.0
  %440 = vmatpush1.msra.mxu0 0.0
  %441 = vmatprep.subr.mxu0 0.0
  %442 = vmatpush1.msra.mxu0 0.0
  %443 = vmatprep.subr.mxu0 0.0
  %444 = vmatpush1.msra.mxu0 0.0
  %445 = vmatprep.subr.mxu0 0.0
  %446 = vmatpush1.msra.mxu0 0.0
  %447 = vmatprep.subr.mxu0 0.0
  %448 = vmatpush1.msra.mxu0 0.0
  %449 = vmatprep.subr.mxu0 0.0
  %450 = vmatpush1.msra.mxu0 0.0
  %451 = vmatprep.subr.mxu0 0.0
  %452 = vmatpush1.msra.mxu0 0.0
  %453 = vmatprep.subr.mxu0 0.0
  %454 = vmatpush1.msra.mxu0 0.0
  %455 = vmatprep.subr.mxu0 0.0
  %456 = vmatpush1.msra.mxu0 0.0
  %457 = vmatprep.subr.mxu0 0.0
  %458 = vmatpush1.msra.mxu0 0.0
  %459 = vmatprep.subr.mxu0 0.0
  %460 = vmatpush1.msra.mxu0 0.0
  %461 = vmatprep.subr.mxu0 0.0
  %462 = vmatpush1.msra.mxu0 0.0
  %463 = vmatprep.subr.mxu0 0.0
  %464 = vmatpush1.msra.mxu0 0.0
  %465 = vmatprep.subr.mxu0 0.0
  %466 = vmatpush1.msra.mxu0 0.0
  %467 = vmatprep.subr.mxu0 0.0
  %468 = vmatpush1.msra.mxu0 0.0
  %469 = vmatprep.subr.mxu0 0.0
  %470 = vmatpush1.msra.mxu0 0.0
  %471 = vmatprep.subr.mxu0 0.0
  %472 = vmatpush1.msra.mxu0 0.0
  %473 = vmatprep.subr.mxu0 0.0
  %474 = vmatpush1.msra.mxu0 0.0
  %475 = vmatprep.subr.mxu0 0.0
  %476 = vmatpush1.msra.mxu0 0.0
  %477 = vmatprep.subr.mxu0 0.0
  %478 = vmatpush1.msra.mxu0 0.0
  %479 = vmatprep.subr.mxu0 0.0
  %480 = vmatpush1.msra.mxu0 0.0
  %481 = vmatprep.subr.mxu0 0.0
  %482 = vmatpush1.msra.mxu0 0.0
  %483 = vmatprep.subr.mxu0 0.0
  %484 = vmatpush1.msra.mxu0 0.0
  %485 = vmatprep.subr.mxu0 0.0
  %486 = vmatpush1.msra.mxu0 0.0
  %487 = vmatprep.subr.mxu0 0.0
  %488 = vmatpush1.msra.mxu0 0.0
  %489 = vmatprep.subr.mxu0 0.0
  %490 = vmatpush1.msra.mxu0 0.0
  %491 = vmatprep.mubr.f32.mxu0 0.0
  %492 = vmatmul.mubr.f32.gmra.mrb[0].mxu0 %v425
  %v493 = vpop.f32.mrb[0].mxu0
  %v494 = vadd.f32 0.0, %v493
  %v495 = vpop.f32.mrb[0].mxu0
  %496 = vdwg.mxu0
  %v497 = vsel %vm26, %v16, 0
  %499 = vmatprep.subr.mxu0 0.0
  %500 = vmatpush1.msra.mxu0 %v419
  %501 = vmatprep.subr.mxu0 0.0
  %502 = vmatpush1.msra.mxu0 %v420
  %503 = vmatprep.subr.mxu0 0.0
  %504 = vmatpush1.msra.mxu0 0.0
  %505 = vmatprep.subr.mxu0 0.0
  %506 = vmatpush1.msra.mxu0 0.0
  %507 = vmatprep.subr.mxu0 0.0
  %508 = vmatpush1.msra.mxu0 0.0
  %509 = vmatprep.subr.mxu0 0.0
  %510 = vmatpush1.msra.mxu0 0.0
  %511 = vmatprep.subr.mxu0 0.0
  %512 = vmatpush1.msra.mxu0 0.0
  %513 = vmatprep.subr.mxu0 0.0
  %514 = vmatpush1.msra.mxu0 0.0
  %515 = vmatprep.subr.mxu0 0.0
  %516 = vmatpush1.msra.mxu0 0.0
  %517 = vmatprep.subr.mxu0 0.0
  %518 = vmatpush1.msra.mxu0 0.0
  %519 = vmatprep.subr.mxu0 0.0
  %520 = vmatpush1.msra.mxu0 0.0
  %521 = vmatprep.subr.mxu0 0.0
  %522 = vmatpush1.msra.mxu0 0.0
  %523 = vmatprep.subr.mxu0 0.0
  %524 = vmatpush1.msra.mxu0 0.0
  %525 = vmatprep.subr.mxu0 0.0
  %526 = vmatpush1.msra.mxu0 0.0
  %527 = vmatprep.subr.mxu0 0.0
  %528 = vmatpush1.msra.mxu0 0.0
  %529 = vmatprep.subr.mxu0 0.0
  %530 = vmatpush1.msra.mxu0 0.0
  %531 = vmatprep.subr.mxu0 0.0
  %532 = vmatpush1.msra.mxu0 0.0
  %533 = vmatprep.subr.mxu0 0.0
  %534 = vmatpush1.msra.mxu0 0.0
  %535 = vmatprep.subr.mxu0 0.0
  %536 = vmatpush1.msra.mxu0 0.0
  %537 = vmatprep.subr.mxu0 0.0
  %538 = vmatpush1.msra.mxu0 0.0
  %539 = vmatprep.subr.mxu0 0.0
  %540 = vmatpush1.msra.mxu0 0.0
  %541 = vmatprep.subr.mxu0 0.0
  %542 = vmatpush1.msra.mxu0 0.0
  %543 = vmatprep.subr.mxu0 0.0
  %544 = vmatpush1.msra.mxu0 0.0
  %545 = vmatprep.subr.mxu0 0.0
  %546 = vmatpush1.msra.mxu0 0.0
  %547 = vmatprep.subr.mxu0 0.0
  %548 = vmatpush1.msra.mxu0 0.0
  %549 = vmatprep.subr.mxu0 0.0
  %550 = vmatpush1.msra.mxu0 0.0
  %551 = vmatprep.subr.mxu0 0.0
  %552 = vmatpush1.msra.mxu0 0.0
  %553 = vmatprep.subr.mxu0 0.0
  %554 = vmatpush1.msra.mxu0 0.0
  %555 = vmatprep.subr.mxu0 0.0
  %556 = vmatpush1.msra.mxu0 0.0
  %557 = vmatprep.subr.mxu0 0.0
  %558 = vmatpush1.msra.mxu0 0.0
  %559 = vmatprep.subr.mxu0 0.0
  %560 = vmatpush1.msra.mxu0 0.0
  %561 = vmatprep.subr.mxu0 0.0
  %562 = vmatpush1.msra.mxu0 0.0
  %563 = vmatprep.mubr.f32.mxu0 0.0
  %564 = vmatmul.mubr.f32.gmra.mrb[0].mxu0 %v497
  %v565 = vpop.f32.mrb[0].mxu0
  %v566 = vadd.f32 %v494, %v565
  %v567 = vpop.f32.mrb[0].mxu0
  %568 = vdwg.mxu0
  %v569 = vld [vmem:[%s171] sm:$0xff]
  %v570 = vld [vmem:[%s171 + $0x8] sm:$0xff]
  %v571 = vrot.slane %v16, 2
  %v572 = vsel %vm26, %v571, 0
  %574 = vmatprep.subr.mxu0 0.0
  %575 = vmatpush1.msra.mxu0 %v569
  %576 = vmatprep.subr.mxu0 0.0
  %577 = vmatpush1.msra.mxu0 %v570
  %578 = vmatprep.subr.mxu0 0.0
  %579 = vmatpush1.msra.mxu0 0.0
  %580 = vmatprep.subr.mxu0 0.0
  %581 = vmatpush1.msra.mxu0 0.0
  %582 = vmatprep.subr.mxu0 0.0
  %583 = vmatpush1.msra.mxu0 0.0
  %584 = vmatprep.subr.mxu0 0.0
  %585 = vmatpush1.msra.mxu0 0.0
  %586 = vmatprep.subr.mxu0 0.0
  %587 = vmatpush1.msra.mxu0 0.0
  %588 = vmatprep.subr.mxu0 0.0
  %589 = vmatpush1.msra.mxu0 0.0
  %590 = vmatprep.subr.mxu0 0.0
  %591 = vmatpush1.msra.mxu0 0.0
  %592 = vmatprep.subr.mxu0 0.0
  %593 = vmatpush1.msra.mxu0 0.0
  %594 = vmatprep.subr.mxu0 0.0
  %595 = vmatpush1.msra.mxu0 0.0
  %596 = vmatprep.subr.mxu0 0.0
  %597 = vmatpush1.msra.mxu0 0.0
  %598 = vmatprep.subr.mxu0 0.0
  %599 = vmatpush1.msra.mxu0 0.0
  %600 = vmatprep.subr.mxu0 0.0
  %601 = vmatpush1.msra.mxu0 0.0
  %602 = vmatprep.subr.mxu0 0.0
  %603 = vmatpush1.msra.mxu0 0.0
  %604 = vmatprep.subr.mxu0 0.0
  %605 = vmatpush1.msra.mxu0 0.0
  %606 = vmatprep.subr.mxu0 0.0
  %607 = vmatpush1.msra.mxu0 0.0
  %608 = vmatprep.subr.mxu0 0.0
  %609 = vmatpush1.msra.mxu0 0.0
  %610 = vmatprep.subr.mxu0 0.0
  %611 = vmatpush1.msra.mxu0 0.0
  %612 = vmatprep.subr.mxu0 0.0
  %613 = vmatpush1.msra.mxu0 0.0
  %614 = vmatprep.subr.mxu0 0.0
  %615 = vmatpush1.msra.mxu0 0.0
  %616 = vmatprep.subr.mxu0 0.0
  %617 = vmatpush1.msra.mxu0 0.0
  %618 = vmatprep.subr.mxu0 0.0
  %619 = vmatpush1.msra.mxu0 0.0
  %620 = vmatprep.subr.mxu0 0.0
  %621 = vmatpush1.msra.mxu0 0.0
  %622 = vmatprep.subr.mxu0 0.0
  %623 = vmatpush1.msra.mxu0 0.0
  %624 = vmatprep.subr.mxu0 0.0
  %625 = vmatpush1.msra.mxu0 0.0
  %626 = vmatprep.subr.mxu0 0.0
  %627 = vmatpush1.msra.mxu0 0.0
  %628 = vmatprep.subr.mxu0 0.0
  %629 = vmatpush1.msra.mxu0 0.0
  %630 = vmatprep.subr.mxu0 0.0
  %631 = vmatpush1.msra.mxu0 0.0
  %632 = vmatprep.subr.mxu0 0.0
  %633 = vmatpush1.msra.mxu0 0.0
  %634 = vmatprep.subr.mxu0 0.0
  %635 = vmatpush1.msra.mxu0 0.0
  %636 = vmatprep.subr.mxu0 0.0
  %637 = vmatpush1.msra.mxu0 0.0
  %638 = vmatprep.mubr.f32.mxu0 0.0
  %639 = vmatmul.mubr.f32.gmra.mrb[0].mxu0 %v572
  %v640 = vpop.f32.mrb[0].mxu0
  %v641 = vadd.f32 0.0, %v640
  %v642 = vpop.f32.mrb[0].mxu0
  %643 = vdwg.mxu0
  %v644 = vadd.f32 %v566, %v641
  %v645 = vld [vmem:[%s248] sm:$0xff]
  %v646 = vld [vmem:[%s248 + $0x8] sm:$0xff]
  %v648 = vrot.slane %v16, 3
  %v649 = vrot.slane %v17, 3
  %v650 = vsel %vm252, %v648, %v649
  %v651 = vsel %vm26, %v650, 0
  %653 = vmatprep.subr.mxu0 0.0
  %654 = vmatpush1.msra.mxu0 %v645
  %655 = vmatprep.subr.mxu0 0.0
  %656 = vmatpush1.msra.mxu0 %v646
  %657 = vmatprep.subr.mxu0 0.0
  %658 = vmatpush1.msra.mxu0 0.0
  %659 = vmatprep.subr.mxu0 0.0
  %660 = vmatpush1.msra.mxu0 0.0
  %661 = vmatprep.subr.mxu0 0.0
  %662 = vmatpush1.msra.mxu0 0.0
  %663 = vmatprep.subr.mxu0 0.0
  %664 = vmatpush1.msra.mxu0 0.0
  %665 = vmatprep.subr.mxu0 0.0
  %666 = vmatpush1.msra.mxu0 0.0
  %667 = vmatprep.subr.mxu0 0.0
  %668 = vmatpush1.msra.mxu0 0.0
  %669 = vmatprep.subr.mxu0 0.0
  %670 = vmatpush1.msra.mxu0 0.0
  %671 = vmatprep.subr.mxu0 0.0
  %672 = vmatpush1.msra.mxu0 0.0
  %673 = vmatprep.subr.mxu0 0.0
  %674 = vmatpush1.msra.mxu0 0.0
  %675 = vmatprep.subr.mxu0 0.0
  %676 = vmatpush1.msra.mxu0 0.0
  %677 = vmatprep.subr.mxu0 0.0
  %678 = vmatpush1.msra.mxu0 0.0
  %679 = vmatprep.subr.mxu0 0.0
  %680 = vmatpush1.msra.mxu0 0.0
  %681 = vmatprep.subr.mxu0 0.0
  %682 = vmatpush1.msra.mxu0 0.0
  %683 = vmatprep.subr.mxu0 0.0
  %684 = vmatpush1.msra.mxu0 0.0
  %685 = vmatprep.subr.mxu0 0.0
  %686 = vmatpush1.msra.mxu0 0.0
  %687 = vmatprep.subr.mxu0 0.0
  %688 = vmatpush1.msra.mxu0 0.0
  %689 = vmatprep.subr.mxu0 0.0
  %690 = vmatpush1.msra.mxu0 0.0
  %691 = vmatprep.subr.mxu0 0.0
  %692 = vmatpush1.msra.mxu0 0.0
  %693 = vmatprep.subr.mxu0 0.0
  %694 = vmatpush1.msra.mxu0 0.0
  %695 = vmatprep.subr.mxu0 0.0
  %696 = vmatpush1.msra.mxu0 0.0
  %697 = vmatprep.subr.mxu0 0.0
  %698 = vmatpush1.msra.mxu0 0.0
  %699 = vmatprep.subr.mxu0 0.0
  %700 = vmatpush1.msra.mxu0 0.0
  %701 = vmatprep.subr.mxu0 0.0
  %702 = vmatpush1.msra.mxu0 0.0
  %703 = vmatprep.subr.mxu0 0.0
  %704 = vmatpush1.msra.mxu0 0.0
  %705 = vmatprep.subr.mxu0 0.0
  %706 = vmatpush1.msra.mxu0 0.0
  %707 = vmatprep.subr.mxu0 0.0
  %708 = vmatpush1.msra.mxu0 0.0
  %709 = vmatprep.subr.mxu0 0.0
  %710 = vmatpush1.msra.mxu0 0.0
  %711 = vmatprep.subr.mxu0 0.0
  %712 = vmatpush1.msra.mxu0 0.0
  %713 = vmatprep.subr.mxu0 0.0
  %714 = vmatpush1.msra.mxu0 0.0
  %715 = vmatprep.subr.mxu0 0.0
  %716 = vmatpush1.msra.mxu0 0.0
  %717 = vmatprep.mubr.f32.mxu0 0.0
  %718 = vmatmul.mubr.f32.gmra.mrb[0].mxu0 %v651
  %v719 = vpop.f32.mrb[0].mxu0
  %v720 = vadd.f32 0.0, %v719
  %v721 = vpop.f32.mrb[0].mxu0
  %722 = vdwg.mxu0
  %v723 = vadd.f32 %v644, %v720
  %v724 = vld [vmem:[%s329] sm:$0xff]
  %v725 = vld [vmem:[%s329 + $0x8] sm:$0xff]
  %v726 = vrot.slane %v16, 4
  %v727 = vrot.slane %v17, 4
  %v728 = vsel %vm332, %v726, %v727
  %v729 = vsel %vm26, %v728, 0
  %731 = vmatprep.subr.mxu0 0.0
  %732 = vmatpush1.msra.mxu0 %v724
  %733 = vmatprep.subr.mxu0 0.0
  %734 = vmatpush1.msra.mxu0 %v725
  %735 = vmatprep.subr.mxu0 0.0
  %736 = vmatpush1.msra.mxu0 0.0
  %737 = vmatprep.subr.mxu0 0.0
  %738 = vmatpush1.msra.mxu0 0.0
  %739 = vmatprep.subr.mxu0 0.0
  %740 = vmatpush1.msra.mxu0 0.0
  %741 = vmatprep.subr.mxu0 0.0
  %742 = vmatpush1.msra.mxu0 0.0
  %743 = vmatprep.subr.mxu0 0.0
  %744 = vmatpush1.msra.mxu0 0.0
  %745 = vmatprep.subr.mxu0 0.0
  %746 = vmatpush1.msra.mxu0 0.0
  %747 = vmatprep.subr.mxu0 0.0
  %748 = vmatpush1.msra.mxu0 0.0
  %749 = vmatprep.subr.mxu0 0.0
  %750 = vmatpush1.msra.mxu0 0.0
  %751 = vmatprep.subr.mxu0 0.0
  %752 = vmatpush1.msra.mxu0 0.0
  %753 = vmatprep.subr.mxu0 0.0
  %754 = vmatpush1.msra.mxu0 0.0
  %755 = vmatprep.subr.mxu0 0.0
  %756 = vmatpush1.msra.mxu0 0.0
  %757 = vmatprep.subr.mxu0 0.0
  %758 = vmatpush1.msra.mxu0 0.0
  %759 = vmatprep.subr.mxu0 0.0
  %760 = vmatpush1.msra.mxu0 0.0
  %761 = vmatprep.subr.mxu0 0.0
  %762 = vmatpush1.msra.mxu0 0.0
  %763 = vmatprep.subr.mxu0 0.0
  %764 = vmatpush1.msra.mxu0 0.0
  %765 = vmatprep.subr.mxu0 0.0
  %766 = vmatpush1.msra.mxu0 0.0
  %767 = vmatprep.subr.mxu0 0.0
  %768 = vmatpush1.msra.mxu0 0.0
  %769 = vmatprep.subr.mxu0 0.0
  %770 = vmatpush1.msra.mxu0 0.0
  %771 = vmatprep.subr.mxu0 0.0
  %772 = vmatpush1.msra.mxu0 0.0
  %773 = vmatprep.subr.mxu0 0.0
  %774 = vmatpush1.msra.mxu0 0.0
  %775 = vmatprep.subr.mxu0 0.0
  %776 = vmatpush1.msra.mxu0 0.0
  %777 = vmatprep.subr.mxu0 0.0
  %778 = vmatpush1.msra.mxu0 0.0
  %779 = vmatprep.subr.mxu0 0.0
  %780 = vmatpush1.msra.mxu0 0.0
  %781 = vmatprep.subr.mxu0 0.0
  %782 = vmatpush1.msra.mxu0 0.0
  %783 = vmatprep.subr.mxu0 0.0
  %784 = vmatpush1.msra.mxu0 0.0
  %785 = vmatprep.subr.mxu0 0.0
  %786 = vmatpush1.msra.mxu0 0.0
  %787 = vmatprep.subr.mxu0 0.0
  %788 = vmatpush1.msra.mxu0 0.0
  %789 = vmatprep.subr.mxu0 0.0
  %790 = vmatpush1.msra.mxu0 0.0
  %791 = vmatprep.subr.mxu0 0.0
  %792 = vmatpush1.msra.mxu0 0.0
  %793 = vmatprep.subr.mxu0 0.0
  %794 = vmatpush1.msra.mxu0 0.0
  %795 = vmatprep.mubr.f32.mxu0 0.0
  %796 = vmatmul.mubr.f32.gmra.mrb[0].mxu0 %v729
  %v797 = vpop.f32.mrb[0].mxu0
  %v798 = vadd.f32 0.0, %v797
  %v799 = vpop.f32.mrb[0].mxu0
  %800 = vdwg.mxu0
  %v801 = vadd.f32 %v723, %v798
  %v802 = vadd.f32 %v801, %v413
  %v803 = vtanh.pop %v802
  %s804 = scalar_lea.vmem %s3, 8
  %805 = vst.msk [vmem:[%s804] sm:$0x3f] %vm417, %v803
  // Predicated region
  $region14: #{tacotron2_forward.20} parent=0 // pred_check
    _
  $region15: #{tacotron2_forward.20} parent=0 // pred_check_branch
    %807 = sbr.rel (0) target = $region17
  $region16: #{tacotron2_forward.20} parent=0 // pred_region
    _
  $region17: #{tacotron2_forward.20} parent=0 // pred_fallthru
    _
  // Predicated region
  $region18: #{tacotron2_forward.20} parent=0 // pred_check
    _
  $region19: #{tacotron2_forward.20} parent=0 // pred_check_branch
    %809 = sbr.rel (0) target = $region21
  $region20: #{tacotron2_forward.20} parent=0 // pred_region
    _
  $region21: #{tacotron2_forward.20} parent=0 // pred_fallthru
    _

// kernel: tacotron2_forward.18
$region0: #{tacotron2_forward.18}
  #allocation0 [shape = 'u32[]', space=smem, size = 0x4, offset = 0x4, fixed_abs, tag = 'smem constant byte address 0x4 - core index']
  #allocation1 [shape = 'u32[144,128]{1,0:T(1,128)}', space=vmem, size = 0x12000, scoped, tag = 'internal scratch']
  #allocation2 [shape = 'f32[2,32]{1,0:T(2,128)}', space=vmem, size = 0x400, scoped, tag = 'scratch operand']
  #allocation3 [shape = 'f32[2,32]{1,0:T(2,128)}', space=vmem, size = 0x400, scoped, tag = 'scratch operand']
  #allocation4 [shape = 'f32[2,32]{1,0:T(2,128)}', space=vmem, size = 0x400, scoped, tag = 'scratch operand']
  #allocation5 [shape = 'f32[2,32]{1,0:T(2,128)}', space=vmem, size = 0x400, scoped, tag = 'scratch operand']
  #allocation6 [shape = 'f32[2,8]{1,0:T(2,128)}', space=vmem, size = 0x400, scoped, tag = 'scratch operand']
  #allocation7 [shape = 'f32[2,8]{1,0:T(2,128)}', space=vmem, size = 0x400, scoped, tag = 'scratch operand']
  #allocation8 [shape = 'f32[2,32]{1,0:T(2,128)}', space=vmem, size = 0x400, scoped, tag = 'scratch operand']
  %s0 = inlined_call_operand.hbm [shape: f32[8,2,16], index: 0, kind: input, shape index: {}]
  %s1 = inlined_call_operand.hbm [shape: f32[2,8,32], index: 1, kind: input, shape index: {}]
  %s2 = inlined_call_operand.hbm [shape: f32[2,8,16], index: 2, kind: input, shape index: {}]
  %s3 = inlined_call_operand.hbm [shape: f32[2,8], index: 3, kind: input, shape index: {}]
  %s4 = inlined_call_operand.hbm [shape: f32[80,128], index: 4, kind: input, shape index: {}]
  %s5 = inlined_call_operand.hbm [shape: f32[1,128], index: 5, kind: input, shape index: {}]
  %s6 = inlined_call_operand.hbm [shape: f32[32,16], index: 6, kind: input, shape index: {}]
  %s7 = inlined_call_operand.hbm [shape: f32[2,5,16], index: 7, kind: input, shape index: {}]
  %s8 = inlined_call_operand.hbm [shape: f32[1,16], index: 8, kind: input, shape index: {}]
  %s9 = inlined_call_operand.hbm [shape: f32[96,128], index: 9, kind: input, shape index: {}]
  %s10 = inlined_call_operand.hbm [shape: f32[1,128], index: 10, kind: input, shape index: {}]
  %s11 = inlined_call_operand.hbm [shape: f32[64,9], index: 11, kind: input, shape index: {}]
  %s12 = inlined_call_operand.hbm [shape: f32[1,9], index: 12, kind: input, shape index: {}]
  %s13 = inlined_call_operand.hbm [shape: f32[8,2,9], index: 13, kind: output, shape index: {0}]
  %s14 = inlined_call_operand.hbm [shape: f32[8,2,8], index: 14, kind: output, shape index: {1}]
  %15 = xla_tuple %s13, %s14
  %s16 = sld [smem:[#allocation0]]
  $region133: #{tacotron2_forward.18} parent=0
    _
  %s18 = ssub.s32 1, %s16
  %s19 = scalar_select 0, %s18, %s16
  $region1: #{tacotron2_forward.18} parent=0
    #allocation9 [shape = 'u8[8192]{0}', space=vmem, size = 0x2000, scoped, tag = 'input window, operand 0, single buffered']
    #allocation10 [shape = 's32[1]{0}', space=sflag, size = 0x4, scoped, tag = 'scoped memory for tacotron2_forward.18']
    #allocation11 [shape = 's32[1]{0}', space=sflag, size = 0x4, scoped, tag = 'scoped memory for tacotron2_forward.18']
    #allocation12 [shape = 'u8[8192]{0}', space=vmem, size = 0x2000, scoped, tag = 'input window, operand 1, single buffered']
    #allocation13 [shape = 's32[1]{0}', space=sflag, size = 0x4, scoped, tag = 'scoped memory for tacotron2_forward.18']
    #allocation14 [shape = 'u8[8192]{0}', space=vmem, size = 0x2000, scoped, tag = 'input window, operand 2, single buffered']
    #allocation15 [shape = 'u8[1024]{0}', space=vmem, size = 0x400, scoped, tag = 'input window, operand 3, single buffered']
    #allocation16 [shape = 's32[1]{0}', space=sflag, size = 0x4, scoped, tag = 'scoped memory for tacotron2_forward.18']
    #allocation17 [shape = 'u8[40960]{0}', space=vmem, size = 0xa000, scoped, tag = 'input window, operand 4, single buffered']
    #allocation18 [shape = 'u8[512]{0}', space=vmem, size = 0x400, scoped, tag = 'input window, operand 5, single buffered']
    #allocation19 [shape = 's32[1]{0}', space=sflag, size = 0x4, scoped, tag = 'scoped memory for tacotron2_forward.18']
    #allocation20 [shape = 'u8[16384]{0}', space=vmem, size = 0x4000, scoped, tag = 'input window, operand 6, single buffered']
    #allocation21 [shape = 'u8[8192]{0}', space=vmem, size = 0x2000, scoped, tag = 'input window, operand 7, single buffered']
    #allocation22 [shape = 's32[1]{0}', space=sflag, size = 0x4, scoped, tag = 'scoped memory for tacotron2_forward.18']
    #allocation23 [shape = 'u8[512]{0}', space=vmem, size = 0x400, scoped, tag = 'input window, operand 8, single buffered']
    #allocation24 [shape = 'u8[49152]{0}', space=vmem, size = 0xc000, scoped, tag = 'input window, operand 9, single buffered']
    #allocation25 [shape = 's32[1]{0}', space=sflag, size = 0x4, scoped, tag = 'scoped memory for tacotron2_forward.18']
    #allocation26 [shape = 'u8[512]{0}', space=vmem, size = 0x400, scoped, tag = 'input window, operand 10, single buffered']
    #allocation27 [shape = 'u8[32768]{0}', space=vmem, size = 0x8000, scoped, tag = 'input window, operand 11, single buffered']
    #allocation28 [shape = 's32[1]{0}', space=sflag, size = 0x4, scoped, tag = 'scoped memory for tacotron2_forward.18']
    #allocation29 [shape = 'u8[512]{0}', space=vmem, size = 0x400, scoped, tag = 'input window, operand 12, single buffered']
    #allocation30 [shape = 'u8[8192]{0}', space=vmem, size = 0x2000, scoped, tag = 'output window, operand 0, single buffered']
    #allocation31 [shape = 'u8[8192]{0}', space=vmem, size = 0x2000, scoped, tag = 'output window, operand 1, single buffered']
    #allocation32 [shape = 's32[1]{0}', space=sflag, size = 0x4, scoped, tag = 'scoped memory for tacotron2_forward.18']
    %20 = vsyncpa [#allocation10], 0
    %21 = vsyncpa [#allocation13], 0
    %22 = vsyncpa [#allocation16], 0
    %23 = vsyncpa [#allocation19], 0
    %24 = vsyncpa [#allocation22], 0
    %25 = vsyncpa [#allocation25], 0
    %26 = vsyncpa [#allocation28], 0
    %27 = vsyncpa [#allocation11], 0
    %28 = vsyncpa [#allocation32], 0
    // Predicated region
    $region2: #{tacotron2_forward.18} parent=1 // pred_check
      _
    $region3: #{tacotron2_forward.18} parent=1 // pred_check_branch
      %30 = sbr.rel (0) target = $region5
    $region4: #{tacotron2_forward.18} parent=1 // pred_region
      %s32 = ssub.s32 256, 256
      %33 = vsyncadd [#allocation10], %s32
      %s34 = sshll.u32 [#allocation9], 4
      %s35 = int_to_ptr.vmem [resolvable:$true] %s34
      %40 = dma.hbm_to_vmem [thread:$0]  %s0, 256, %s35, [#allocation10], 32, 32, 2
    $region5: #{tacotron2_forward.18} parent=1 // pred_fallthru
      _
    // Predicated region
    $region6: #{tacotron2_forward.18} parent=1 // pred_check
      _
    $region7: #{tacotron2_forward.18} parent=1 // pred_check_branch
      %42 = sbr.rel (0) target = $region9
    $region8: #{tacotron2_forward.18} parent=1 // pred_region
      %s44 = ssub.s32 256, 256
      %45 = vsyncadd [#allocation13], %s44
      %s46 = sshll.u32 [#allocation12], 4
      %s47 = int_to_ptr.vmem [resolvable:$true] %s46
      %52 = dma.hbm_to_vmem [thread:$0]  %s1, 256, %s47, [#allocation13], 128, 128, 8
    $region9: #{tacotron2_forward.18} parent=1 // pred_fallthru
      _
    // Predicated region
    $region10: #{tacotron2_forward.18} parent=1 // pred_check
      _
    $region11: #{tacotron2_forward.18} parent=1 // pred_check_branch
      %54 = sbr.rel (0) target = $region13
    $region12: #{tacotron2_forward.18} parent=1 // pred_region
      %s56 = ssub.s32 256, 256
      %57 = vsyncadd [#allocation13], %s56
      %s58 = sshll.u32 [#allocation14], 4
      %s59 = int_to_ptr.vmem [resolvable:$true] %s58
      %64 = dma.hbm_to_vmem [thread:$0]  %s2, 256, %s59, [#allocation13], 128, 128, 8
    $region13: #{tacotron2_forward.18} parent=1 // pred_fallthru
      _
    // Predicated region
    $region14: #{tacotron2_forward.18} parent=1 // pred_check
      _
    $region15: #{tacotron2_forward.18} parent=1 // pred_check_branch
      %66 = sbr.rel (0) target = $region17
    $region16: #{tacotron2_forward.18} parent=1 // pred_region
      %s68 = ssub.s32 32, 32
      %69 = vsyncadd [#allocation16], %s68
      %s71 = sshll.u32 [#allocation15], 4
      %s72 = int_to_ptr.vmem [resolvable:$true] %s71
      %74 = dma.hbm_to_vmem [thread:$0]  %s3, 32, %s72, [#allocation16]
    $region17: #{tacotron2_forward.18} parent=1 // pred_fallthru
      _
    // Predicated region
    $region18: #{tacotron2_forward.18} parent=1 // pred_check
      _
    $region19: #{tacotron2_forward.18} parent=1 // pred_check_branch
      %76 = sbr.rel (0) target = $region21
    $region20: #{tacotron2_forward.18} parent=1 // pred_region
      %s78 = ssub.s32 1280, 1280
      %79 = vsyncadd [#allocation16], %s78
      %s80 = sshll.u32 [#allocation17], 4
      %s81 = int_to_ptr.vmem [resolvable:$true] %s80
      %86 = dma.hbm_to_vmem [thread:$0]  %s4, 1280, %s81, [#allocation16], 128, 128, 8
    $region21: #{tacotron2_forward.18} parent=1 // pred_fallthru
      _
    // Predicated region
    $region22: #{tacotron2_forward.18} parent=1 // pred_check
      _
    $region23: #{tacotron2_forward.18} parent=1 // pred_check_branch
      %88 = sbr.rel (0) target = $region25
    $region24: #{tacotron2_forward.18} parent=1 // pred_region
      %s90 = ssub.s32 16, 16
      %91 = vsyncadd [#allocation19], %s90
      %s93 = sshll.u32 [#allocation18], 4
      %s94 = int_to_ptr.vmem [resolvable:$true] %s93
      %96 = dma.hbm_to_vmem [thread:$0]  %s5, 16, %s94, [#allocation19]
    $region25: #{tacotron2_forward.18} parent=1 // pred_fallthru
      _
    // Predicated region
    $region26: #{tacotron2_forward.18} parent=1 // pred_check
      _
    $region27: #{tacotron2_forward.18} parent=1 // pred_check_branch
      %98 = sbr.rel (0) target = $region29
    $region28: #{tacotron2_forward.18} parent=1 // pred_region
      %s100 = ssub.s32 512, 512
      %101 = vsyncadd [#allocation19], %s100
      %s102 = sshll.u32 [#allocation20], 4
      %s103 = int_to_ptr.vmem [resolvable:$true] %s102
      %108 = dma.hbm_to_vmem [thread:$0]  %s6, 512, %s103, [#allocation19], 128, 128, 8
    $region29: #{tacotron2_forward.18} parent=1 // pred_fallthru
      _
    // Predicated region
    $region30: #{tacotron2_forward.18} parent=1 // pred_check
      _
    $region31: #{tacotron2_forward.18} parent=1 // pred_check_branch
      %110 = sbr.rel (0) target = $region33
    $region32: #{tacotron2_forward.18} parent=1 // pred_region
      %s112 = ssub.s32 256, 256
      %113 = vsyncadd [#allocation22], %s112
      %s114 = sshll.u32 [#allocation21], 4
      %s115 = int_to_ptr.vmem [resolvable:$true] %s114
      %120 = dma.hbm_to_vmem [thread:$0]  %s7, 256, %s115, [#allocation22], 128, 128, 8
    $region33: #{tacotron2_forward.18} parent=1 // pred_fallthru
      _
    // Predicated region
    $region34: #{tacotron2_forward.18} parent=1 // pred_check
      _
    $region35: #{tacotron2_forward.18} parent=1 // pred_check_branch
      %122 = sbr.rel (0) target = $region37
    $region36: #{tacotron2_forward.18} parent=1 // pred_region
      %s124 = ssub.s32 16, 16
      %125 = vsyncadd [#allocation22], %s124
      %s127 = sshll.u32 [#allocation23], 4
      %s128 = int_to_ptr.vmem [resolvable:$true] %s127
      %130 = dma.hbm_to_vmem [thread:$0]  %s8, 16, %s128, [#allocation22]
    $region37: #{tacotron2_forward.18} parent=1 // pred_fallthru
      _
    // Predicated region
    $region38: #{tacotron2_forward.18} parent=1 // pred_check
      _
    $region39: #{tacotron2_forward.18} parent=1 // pred_check_branch
      %132 = sbr.rel (0) target = $region41
    $region40: #{tacotron2_forward.18} parent=1 // pred_region
      %s134 = ssub.s32 1536, 1536
      %135 = vsyncadd [#allocation25], %s134
      %s136 = sshll.u32 [#allocation24], 4
      %s137 = int_to_ptr.vmem [resolvable:$true] %s136
      %142 = dma.hbm_to_vmem [thread:$0]  %s9, 1536, %s137, [#allocation25], 128, 128, 8
    $region41: #{tacotron2_forward.18} parent=1 // pred_fallthru
      _
    // Predicated region
    $region42: #{tacotron2_forward.18} parent=1 // pred_check
      _
    $region43: #{tacotron2_forward.18} parent=1 // pred_check_branch
      %144 = sbr.rel (0) target = $region45
    $region44: #{tacotron2_forward.18} parent=1 // pred_region
      %s146 = ssub.s32 16, 16
      %147 = vsyncadd [#allocation25], %s146
      %s149 = sshll.u32 [#allocation26], 4
      %s150 = int_to_ptr.vmem [resolvable:$true] %s149
      %152 = dma.hbm_to_vmem [thread:$0]  %s10, 16, %s150, [#allocation25]
    $region45: #{tacotron2_forward.18} parent=1 // pred_fallthru
      _
    // Predicated region
    $region46: #{tacotron2_forward.18} parent=1 // pred_check
      _
    $region47: #{tacotron2_forward.18} parent=1 // pred_check_branch
      %154 = sbr.rel (0) target = $region49
    $region48: #{tacotron2_forward.18} parent=1 // pred_region
      %s156 = ssub.s32 1024, 1024
      %157 = vsyncadd [#allocation28], %s156
      %s158 = sshll.u32 [#allocation27], 4
      %s159 = int_to_ptr.vmem [resolvable:$true] %s158
      %164 = dma.hbm_to_vmem [thread:$0]  %s11, 1024, %s159, [#allocation28], 128, 128, 8
    $region49: #{tacotron2_forward.18} parent=1 // pred_fallthru
      _
    // Predicated region
    $region50: #{tacotron2_forward.18} parent=1 // pred_check
      _
    $region51: #{tacotron2_forward.18} parent=1 // pred_check_branch
      %166 = sbr.rel (0) target = $region53
    $region52: #{tacotron2_forward.18} parent=1 // pred_region
      %s168 = ssub.s32 16, 16
      %169 = vsyncadd [#allocation28], %s168
      %s171 = sshll.u32 [#allocation29], 4
      %s172 = int_to_ptr.vmem [resolvable:$true] %s171
      %174 = dma.hbm_to_vmem [thread:$0]  %s12, 16, %s172, [#allocation28]
    $region53: #{tacotron2_forward.18} parent=1 // pred_fallthru
      _
    // Predicated region
    $region54: #{tacotron2_forward.18} parent=1 // pred_check
      _
    $region55: #{tacotron2_forward.18} parent=1 // pred_check_branch
      %176 = sbr.rel (0) target = $region57
    $region56: #{tacotron2_forward.18} parent=1 // pred_region
      %177 = dma.done [#allocation10], 256
    $region57: #{tacotron2_forward.18} parent=1 // pred_fallthru
      _
    // Predicated region
    $region58: #{tacotron2_forward.18} parent=1 // pred_check
      _
    $region59: #{tacotron2_forward.18} parent=1 // pred_check_branch
      %179 = sbr.rel (0) target = $region61
    $region60: #{tacotron2_forward.18} parent=1 // pred_region
      %180 = dma.done [#allocation13], 256
    $region61: #{tacotron2_forward.18} parent=1 // pred_fallthru
      _
    // Predicated region
    $region62: #{tacotron2_forward.18} parent=1 // pred_check
      _
    $region63: #{tacotron2_forward.18} parent=1 // pred_check_branch
      %182 = sbr.rel (0) target = $region65
    $region64: #{tacotron2_forward.18} parent=1 // pred_region
      %183 = dma.done [#allocation13], 256
    $region65: #{tacotron2_forward.18} parent=1 // pred_fallthru
      _
    // Predicated region
    $region66: #{tacotron2_forward.18} parent=1 // pred_check
      _
    $region67: #{tacotron2_forward.18} parent=1 // pred_check_branch
      %185 = sbr.rel (0) target = $region69
    $region68: #{tacotron2_forward.18} parent=1 // pred_region
      %186 = dma.done [#allocation16], 32
    $region69: #{tacotron2_forward.18} parent=1 // pred_fallthru
      _
    // Predicated region
    $region70: #{tacotron2_forward.18} parent=1 // pred_check
      _
    $region71: #{tacotron2_forward.18} parent=1 // pred_check_branch
      %188 = sbr.rel (0) target = $region73
    $region72: #{tacotron2_forward.18} parent=1 // pred_region
      %189 = dma.done [#allocation16], 1280
    $region73: #{tacotron2_forward.18} parent=1 // pred_fallthru
      _
    // Predicated region
    $region74: #{tacotron2_forward.18} parent=1 // pred_check
      _
    $region75: #{tacotron2_forward.18} parent=1 // pred_check_branch
      %191 = sbr.rel (0) target = $region77
    $region76: #{tacotron2_forward.18} parent=1 // pred_region
      %192 = dma.done [#allocation19], 16
    $region77: #{tacotron2_forward.18} parent=1 // pred_fallthru
      _
    // Predicated region
    $region78: #{tacotron2_forward.18} parent=1 // pred_check
      _
    $region79: #{tacotron2_forward.18} parent=1 // pred_check_branch
      %194 = sbr.rel (0) target = $region81
    $region80: #{tacotron2_forward.18} parent=1 // pred_region
      %195 = dma.done [#allocation19], 512
    $region81: #{tacotron2_forward.18} parent=1 // pred_fallthru
      _
    // Predicated region
    $region82: #{tacotron2_forward.18} parent=1 // pred_check
      _
    $region83: #{tacotron2_forward.18} parent=1 // pred_check_branch
      %197 = sbr.rel (0) target = $region85
    $region84: #{tacotron2_forward.18} parent=1 // pred_region
      %198 = dma.done [#allocation22], 256
    $region85: #{tacotron2_forward.18} parent=1 // pred_fallthru
      _
    // Predicated region
    $region86: #{tacotron2_forward.18} parent=1 // pred_check
      _
    $region87: #{tacotron2_forward.18} parent=1 // pred_check_branch
      %200 = sbr.rel (0) target = $region89
    $region88: #{tacotron2_forward.18} parent=1 // pred_region
      %201 = dma.done [#allocation22], 16
    $region89: #{tacotron2_forward.18} parent=1 // pred_fallthru
      _
    // Predicated region
    $region90: #{tacotron2_forward.18} parent=1 // pred_check
      _
    $region91: #{tacotron2_forward.18} parent=1 // pred_check_branch
      %203 = sbr.rel (0) target = $region93
    $region92: #{tacotron2_forward.18} parent=1 // pred_region
      %204 = dma.done [#allocation25], 1536
    $region93: #{tacotron2_forward.18} parent=1 // pred_fallthru
      _
    // Predicated region
    $region94: #{tacotron2_forward.18} parent=1 // pred_check
      _
    $region95: #{tacotron2_forward.18} parent=1 // pred_check_branch
      %206 = sbr.rel (0) target = $region97
    $region96: #{tacotron2_forward.18} parent=1 // pred_region
      %207 = dma.done [#allocation25], 16
    $region97: #{tacotron2_forward.18} parent=1 // pred_fallthru
      _
    // Predicated region
    $region98: #{tacotron2_forward.18} parent=1 // pred_check
      _
    $region99: #{tacotron2_forward.18} parent=1 // pred_check_branch
      %209 = sbr.rel (0) target = $region101
    $region100: #{tacotron2_forward.18} parent=1 // pred_region
      %210 = dma.done [#allocation28], 1024
    $region101: #{tacotron2_forward.18} parent=1 // pred_fallthru
      _
    // Predicated region
    $region102: #{tacotron2_forward.18} parent=1 // pred_check
      _
    $region103: #{tacotron2_forward.18} parent=1 // pred_check_branch
      %212 = sbr.rel (0) target = $region105
    $region104: #{tacotron2_forward.18} parent=1 // pred_region
      %213 = dma.done [#allocation28], 16
    $region105: #{tacotron2_forward.18} parent=1 // pred_fallthru
      _
    %p214 = scmp.eq.s32.totalorder 0, 0
    // Predicated region
    $region106: #{tacotron2_forward.18} parent=1 // pred_check
      %p215 = pneg %p214
    $region107: #{tacotron2_forward.18} parent=1 // pred_check_branch
      %217 = sbr.rel (%p215) target = $region109
    $region108: #{tacotron2_forward.18} parent=1 // pred_region
      %vm218 = vcmask 254976
      %219 = vst.msk [vmem:[#allocation2] sm:$0x3] %vm218, 0.0
      %220 = vst.msk [vmem:[#allocation3] sm:$0x3] %vm218, 0.0
      %221 = vst.msk [vmem:[#allocation4] sm:$0x3] %vm218, 0.0
      %222 = vst.msk [vmem:[#allocation5] sm:$0x3] %vm218, 0.0
      %vm223 = vcmask 58368
      %224 = vst.msk [vmem:[#allocation6] sm:$0x3] %vm223, 0.0
      %225 = vst.msk [vmem:[#allocation7] sm:$0x3] %vm223, 0.0
      %226 = vst.msk [vmem:[#allocation8] sm:$0x3] %vm218, 0.0
    $region109: #{tacotron2_forward.18} parent=1 // pred_fallthru
      _
    %v227 = vld [vmem:[#allocation12] sm:$0xff]
    %v228 = vld [vmem:[#allocation12 + $0x8] sm:$0xff]
    %v229 = vld [vmem:[#allocation14] sm:$0xff]
    %v230 = vld [vmem:[#allocation14 + $0x8] sm:$0xff]
    %v231 = vld [vmem:[#allocation15] sm:$0x3]
    %v232 = vld [vmem:[#allocation17] sm:$0xff]
    %v233 = vld [vmem:[#allocation17 + $0x8] sm:$0xff]
    %v234 = vld [vmem:[#allocation17 + $0x10] sm:$0xff]
    %v235 = vld [vmem:[#allocation17 + $0x18] sm:$0xff]
    %v236 = vld [vmem:[#allocation17 + $0x20] sm:$0xff]
    %v237 = vld [vmem:[#allocation17 + $0x28] sm:$0xff]
    %v238 = vld [vmem:[#allocation17 + $0x30] sm:$0xff]
    %v239 = vld [vmem:[#allocation17 + $0x38] sm:$0xff]
    %v240 = vld [vmem:[#allocation17 + $0x40] sm:$0xff]
    %v241 = vld [vmem:[#allocation17 + $0x48] sm:$0xff]
    %v242 = vld [vmem:[#allocation18] sm:$0x1]
    %v243 = vld [vmem:[#allocation20] sm:$0xff]
    %v244 = vld [vmem:[#allocation20 + $0x8] sm:$0xff]
    %v245 = vld [vmem:[#allocation20 + $0x10] sm:$0xff]
    %v246 = vld [vmem:[#allocation20 + $0x18] sm:$0xff]
    %v247 = vld [vmem:[#allocation21] sm:$0x1f]
    %v248 = vld [vmem:[#allocation21 + $0x8] sm:$0x1f]
    %v249 = vld [vmem:[#allocation23] sm:$0x1]
    %v250 = vld [vmem:[#allocation24] sm:$0xff]
    %v251 = vld [vmem:[#allocation24 + $0x8] sm:$0xff]
    %v252 = vld [vmem:[#allocation24 + $0x10] sm:$0xff]
    %v253 = vld [vmem:[#allocation24 + $0x18] sm:$0xff]
    %v254 = vld [vmem:[#allocation24 + $0x20] sm:$0xff]
    %v255 = vld [vmem:[#allocation24 + $0x28] sm:$0xff]
    %v256 = vld [vmem:[#allocation24 + $0x30] sm:$0xff]
    %v257 = vld [vmem:[#allocation24 + $0x38] sm:$0xff]
    %v258 = vld [vmem:[#allocation24 + $0x40] sm:$0xff]
    %v259 = vld [vmem:[#allocation24 + $0x48] sm:$0xff]
    %v260 = vld [vmem:[#allocation24 + $0x50] sm:$0xff]
    %v261 = vld [vmem:[#allocation24 + $0x58] sm:$0xff]
    %v262 = vld [vmem:[#allocation26] sm:$0x1]
    %v263 = vld [vmem:[#allocation27] sm:$0xff]
    %v264 = vld [vmem:[#allocation27 + $0x8] sm:$0xff]
    %v265 = vld [vmem:[#allocation27 + $0x10] sm:$0xff]
    %v266 = vld [vmem:[#allocation27 + $0x18] sm:$0xff]
    %v267 = vld [vmem:[#allocation27 + $0x20] sm:$0xff]
    %v268 = vld [vmem:[#allocation27 + $0x28] sm:$0xff]
    %v269 = vld [vmem:[#allocation27 + $0x30] sm:$0xff]
    %v270 = vld [vmem:[#allocation27 + $0x38] sm:$0xff]
    %v271 = vld [vmem:[#allocation29] sm:$0x1]
    loop: start=0, step=1, limit=8
    $region110: #{tacotron2_forward.18} parent=1 // loop_pre_header
      _
    $region111: #{tacotron2_forward.18} parent=1 // loop_header
      %s273 = sphi 0, %s277
      %p274 = scmp.ge.s32.totalorder %s273, 8
    $region112: #{tacotron2_forward.18} parent=1 // loop_header_branch
      %276 = sbr.rel (%p274) target = $region116
    $region113: #{tacotron2_forward.18} parent=1 // loop_body
      %v278 = vld [vmem:[#allocation2] sm:$0x3]
      %v279 = vld [vmem:[#allocation3] sm:$0x3]
      %v280 = vld [vmem:[#allocation4] sm:$0x3]
      %v281 = vld [vmem:[#allocation5] sm:$0x3]
      %v282 = vld [vmem:[#allocation6] sm:$0x3]
      %v283 = vld [vmem:[#allocation7] sm:$0x3]
      %v284 = vld [vmem:[#allocation8] sm:$0x3]
      %s285 = smul.u32 %s273, 2
      %s286 = scalar_lea.vmem [#allocation9], %s285
      %v287 = vld [vmem:[%s286] sm:$0x3]
      %289 = vrot.lane.b32.xlu0 %v284, 16
      %v290 = vpop.permute.xlu0 %289
      %293 = vrot.lane.b32.xlu0 %v278, 48
      %v294 = vpop.permute.xlu0 %293
      %vm296 = vcmask 130048
      %v297 = vsel %vm296, %v287, %v290
      %vm298 = vcmask 392192
      %v299 = vsel %vm298, %v297, %v294
      %v301 = vlaneseq
      %v302 = vshrl.u32 %v301, 7
      %v303 = vsub.s32 0, %v302
      %v304 = vrot.slane %v242, %v303
      %vm306 = vcmask 654336
      %v308 = vsel %vm306, %v299, 0
      %310 = vmatprep.subr.mxu0 0.0
      %311 = vmatpush1.msra.mxu0 %v232
      %312 = vmatprep.subr.mxu0 0.0
      %313 = vmatpush1.msra.mxu0 %v233
      %314 = vmatprep.subr.mxu0 0.0
      %315 = vmatpush1.msra.mxu0 %v234
      %316 = vmatprep.subr.mxu0 0.0
      %317 = vmatpush1.msra.mxu0 %v235
      %318 = vmatprep.subr.mxu0 0.0
      %319 = vmatpush1.msra.mxu0 %v236
      %320 = vmatprep.subr.mxu0 0.0
      %321 = vmatpush1.msra.mxu0 %v237
      %322 = vmatprep.subr.mxu0 0.0
      %323 = vmatpush1.msra.mxu0 %v238
      %324 = vmatprep.subr.mxu0 0.0
      %325 = vmatpush1.msra.mxu0 %v239
      %326 = vmatprep.subr.mxu0 0.0
      %327 = vmatpush1.msra.mxu0 %v240
      %328 = vmatprep.subr.mxu0 0.0
      %329 = vmatpush1.msra.mxu0 %v241
      %330 = vmatprep.subr.mxu0 0.0
      %331 = vmatpush1.msra.mxu0 0.0
      %332 = vmatprep.subr.mxu0 0.0
      %333 = vmatpush1.msra.mxu0 0.0
      %334 = vmatprep.subr.mxu0 0.0
      %335 = vmatpush1.msra.mxu0 0.0
      %336 = vmatprep.subr.mxu0 0.0
      %337 = vmatpush1.msra.mxu0 0.0
      %338 = vmatprep.subr.mxu0 0.0
      %339 = vmatpush1.msra.mxu0 0.0
      %340 = vmatprep.subr.mxu0 0.0
      %341 = vmatpush1.msra.mxu0 0.0
      %342 = vmatprep.subr.mxu0 0.0
      %343 = vmatpush1.msra.mxu0 0.0
      %344 = vmatprep.subr.mxu0 0.0
      %345 = vmatpush1.msra.mxu0 0.0
      %346 = vmatprep.subr.mxu0 0.0
      %347 = vmatpush1.msra.mxu0 0.0
      %348 = vmatprep.subr.mxu0 0.0
      %349 = vmatpush1.msra.mxu0 0.0
      %350 = vmatprep.subr.mxu0 0.0
      %351 = vmatpush1.msra.mxu0 0.0
      %352 = vmatprep.subr.mxu0 0.0
      %353 = vmatpush1.msra.mxu0 0.0
      %354 = vmatprep.subr.mxu0 0.0
      %355 = vmatpush1.msra.mxu0 0.0
      %356 = vmatprep.subr.mxu0 0.0
      %357 = vmatpush1.msra.mxu0 0.0
      %358 = vmatprep.subr.mxu0 0.0
      %359 = vmatpush1.msra.mxu0 0.0
      %360 = vmatprep.subr.mxu0 0.0
      %361 = vmatpush1.msra.mxu0 0.0
      %362 = vmatprep.subr.mxu0 0.0
      %363 = vmatpush1.msra.mxu0 0.0
      %364 = vmatprep.subr.mxu0 0.0
      %365 = vmatpush1.msra.mxu0 0.0
      %366 = vmatprep.subr.mxu0 0.0
      %367 = vmatpush1.msra.mxu0 0.0
      %368 = vmatprep.subr.mxu0 0.0
      %369 = vmatpush1.msra.mxu0 0.0
      %370 = vmatprep.subr.mxu0 0.0
      %371 = vmatpush1.msra.mxu0 0.0
      %372 = vmatprep.subr.mxu0 0.0
      %373 = vmatpush1.msra.mxu0 0.0
      %374 = vmatprep.mubr.f32.mxu0 0.0
      %375 = vmatmul.mubr.f32.gmra.mrb[0].mxu0 %v308
      %v376 = vpop.f32.mrb[0].mxu0
      %v377 = vadd.f32 %v304, %v376
      %v378 = vpop.f32.mrb[0].mxu0
      %379 = vdwg.mxu0
      %v380 = vxor.u32 %v377, 2147483648
      %v381 = vmul.f32 %v380, 1.442695
      %v382 = vpow.pop %v381
      %v383 = vadd.f32 %v382, 1.0
      %v384 = vrcp.pop %v383
      %v385 = vmul.f32 1.0, %v384
      %v386 = vtanh.pop %v377
      %388 = vrot.lane.b32.xlu0 %v279, 32
      %v389 = vpop.permute.xlu0 %388
      %v391 = vmul.f32 %v385, %v389
      %393 = vrot.lane.b32.xlu0 %v386, 64
      %v394 = vpop.permute.xlu0 %393
      %v396 = vmul.f32 %v385, %v394
      %398 = vrot.lane.b32.xlu0 %v396, 32
      %v399 = vpop.permute.xlu0 %398
      %v401 = vadd.f32 %v391, %v399
      %v402 = vtanh.pop %v401
      %404 = vrot.lane.b32.xlu0 %v402, 64
      %v405 = vpop.permute.xlu0 %404
      %v407 = vmul.f32 %v385, %v405
      %409 = vrot.lane.b32.xlu0 %v407, 32
      %v410 = vpop.permute.xlu0 %409
      %vm411 = vcmask 261120
      %v412 = vsel %vm411, %v410, 0
      %414 = vmatprep.subr.mxu0 0.0
      %415 = vmatpush1.msra.mxu0 %v243
      %416 = vmatprep.subr.mxu0 0.0
      %417 = vmatpush1.msra.mxu0 %v244
      %418 = vmatprep.subr.mxu0 0.0
      %419 = vmatpush1.msra.mxu0 %v245
      %420 = vmatprep.subr.mxu0 0.0
      %421 = vmatpush1.msra.mxu0 %v246
      %422 = vmatprep.subr.mxu0 0.0
      %423 = vmatpush1.msra.mxu0 0.0
      %424 = vmatprep.subr.mxu0 0.0
      %425 = vmatpush1.msra.mxu0 0.0
      %426 = vmatprep.subr.mxu0 0.0
      %427 = vmatpush1.msra.mxu0 0.0
      %428 = vmatprep.subr.mxu0 0.0
      %429 = vmatpush1.msra.mxu0 0.0
      %430 = vmatprep.subr.mxu0 0.0
      %431 = vmatpush1.msra.mxu0 0.0
      %432 = vmatprep.subr.mxu0 0.0
      %433 = vmatpush1.msra.mxu0 0.0
      %434 = vmatprep.subr.mxu0 0.0
      %435 = vmatpush1.msra.mxu0 0.0
      %436 = vmatprep.subr.mxu0 0.0
      %437 = vmatpush1.msra.mxu0 0.0
      %438 = vmatprep.subr.mxu0 0.0
      %439 = vmatpush1.msra.mxu0 0.0
      %440 = vmatprep.subr.mxu0 0.0
      %441 = vmatpush1.msra.mxu0 0.0
      %442 = vmatprep.subr.mxu0 0.0
      %443 = vmatpush1.msra.mxu0 0.0
      %444 = vmatprep.subr.mxu0 0.0
      %445 = vmatpush1.msra.mxu0 0.0
      %446 = vmatprep.subr.mxu0 0.0
      %447 = vmatpush1.msra.mxu0 0.0
      %448 = vmatprep.subr.mxu0 0.0
      %449 = vmatpush1.msra.mxu0 0.0
      %450 = vmatprep.subr.mxu0 0.0
      %451 = vmatpush1.msra.mxu0 0.0
      %452 = vmatprep.subr.mxu0 0.0
      %453 = vmatpush1.msra.mxu0 0.0
      %454 = vmatprep.subr.mxu0 0.0
      %455 = vmatpush1.msra.mxu0 0.0
      %456 = vmatprep.subr.mxu0 0.0
      %457 = vmatpush1.msra.mxu0 0.0
      %458 = vmatprep.subr.mxu0 0.0
      %459 = vmatpush1.msra.mxu0 0.0
      %460 = vmatprep.subr.mxu0 0.0
      %461 = vmatpush1.msra.mxu0 0.0
      %462 = vmatprep.subr.mxu0 0.0
      %463 = vmatpush1.msra.mxu0 0.0
      %464 = vmatprep.subr.mxu0 0.0
      %465 = vmatpush1.msra.mxu0 0.0
      %466 = vmatprep.subr.mxu0 0.0
      %467 = vmatpush1.msra.mxu0 0.0
      %468 = vmatprep.subr.mxu0 0.0
      %469 = vmatpush1.msra.mxu0 0.0
      %470 = vmatprep.subr.mxu0 0.0
      %471 = vmatpush1.msra.mxu0 0.0
      %472 = vmatprep.subr.mxu0 0.0
      %473 = vmatpush1.msra.mxu0 0.0
      %474 = vmatprep.subr.mxu0 0.0
      %475 = vmatpush1.msra.mxu0 0.0
      %476 = vmatprep.subr.mxu0 0.0
      %477 = vmatpush1.msra.mxu0 0.0
      %478 = vmatprep.mubr.f32.mxu0 0.0
      %479 = vmatmul.mubr.f32.gmra.mrb[0].mxu0 %v412
      %v480 = vpop.f32.mrb[0].mxu0
      %v481 = vadd.f32 0.0, %v480
      %v482 = vpop.f32.mrb[0].mxu0
      %483 = vdwg.mxu0
      %485 = vrot.lane.b32.xlu0 %v282, 2
      %v486 = vpop.permute.xlu0 %485
      %vm488 = vcmask 15360
      %v489 = vsel %vm488, 0.0, %v486
      %vm490 = vcmask 80896
      %v491 = vsel %vm490, %v489, 0.0
      %493 = vrot.lane.b32.xlu0 %v283, 2
      %v494 = vpop.permute.xlu0 %493
      %v496 = vsel %vm488, 0.0, %v494
      %v497 = vsel %vm490, %v496, 0.0
      %v498 = vlaneseq
      %v499 = vshrl.u32 %v498, 7
      %v500 = vsub.s32 0, %v499
      %v501 = vrot.slane %v491, %v500
      %503 = vbcast.lane.b32.xlu0 %v501, 256
      %v504 = vpop.permute.xlu0 %503
      %v505 = vlaneseq
      %v506 = vshrl.u32 %v505, 7
      %v507 = vsub.s32 1, %v506
      %v508 = vrot.slane %v491, %v507
      %510 = vbcast.lane.b32.xlu0 %v508, 256
      %v511 = vpop.permute.xlu0 %510
      %v512 = vlaneseq
      %v513 = vshrl.u32 %v512, 7
      %v514 = vsub.s32 0, %v513
      %v515 = vrot.slane %v247, %v514
      %v516 = vmul.f32 %v504, %v515
      %v517 = vmul.f32 %v511, %v515
      %v518 = vlaneseq
      %v519 = vshrl.u32 %v518, 7
      %v520 = vsub.s32 0, %v519
      %v521 = vrot.slane %v497, %v520
      %523 = vbcast.lane.b32.xlu0 %v521, 256
      %v524 = vpop.permute.xlu0 %523
      %v525 = vlaneseq
      %v526 = vshrl.u32 %v525, 7
      %v527 = vsub.s32 1, %v526
      %v528 = vrot.slane %v497, %v527
      %530 = vbcast.lane.b32.xlu0 %v528, 256
      %v531 = vpop.permute.xlu0 %530
      %v532 = vlaneseq
      %v533 = vshrl.u32 %v532, 7
      %v534 = vsub.s32 0, %v533
      %v535 = vrot.slane %v248, %v534
      %v536 = vmul.f32 %v524, %v535
      %v537 = vmul.f32 %v531, %v535
      %v538 = vadd.f32 %v516, %v536
      %v539 = vadd.f32 %v517, %v537
      %v540 = vadd.f32 %v538, 0.0
      %v541 = vadd.f32 %v539, 0.0
      %s543 = sor.u32 256, 1
      %544 = vbcast.lane.b32.xlu0 %v501, %s543
      %v545 = vpop.permute.xlu0 %544
      %s547 = sor.u32 256, 1
      %548 = vbcast.lane.b32.xlu0 %v508, %s547
      %v549 = vpop.permute.xlu0 %548
      %v550 = vlaneseq
      %v551 = vshrl.u32 %v550, 7
      %v552 = vsub.s32 1, %v551
      %v553 = vrot.slane %v247, %v552
      %v554 = vmul.f32 %v545, %v553
      %v555 = vmul.f32 %v549, %v553
      %s557 = sor.u32 256, 1
      %558 = vbcast.lane.b32.xlu0 %v521, %s557
      %v559 = vpop.permute.xlu0 %558
      %s561 = sor.u32 256, 1
      %562 = vbcast.lane.b32.xlu0 %v528, %s561
      %v563 = vpop.permute.xlu0 %562
      %v564 = vlaneseq
      %v565 = vshrl.u32 %v564, 7
      %v566 = vsub.s32 1, %v565
      %v567 = vrot.slane %v248, %v566
      %v568 = vmul.f32 %v559, %v567
      %v569 = vmul.f32 %v563, %v567
      %v570 = vadd.f32 %v554, %v568
      %v571 = vadd.f32 %v555, %v569
      %v572 = vadd.f32 %v540, %v570
      %v573 = vadd.f32 %v541, %v571
      %s575 = sor.u32 256, 2
      %576 = vbcast.lane.b32.xlu0 %v501, %s575
      %v577 = vpop.permute.xlu0 %576
      %s579 = sor.u32 256, 2
      %580 = vbcast.lane.b32.xlu0 %v508, %s579
      %v581 = vpop.permute.xlu0 %580
      %v582 = vlaneseq
      %v583 = vshrl.u32 %v582, 7
      %v584 = vsub.s32 2, %v583
      %v585 = vrot.slane %v247, %v584
      %v586 = vmul.f32 %v577, %v585
      %v587 = vmul.f32 %v581, %v585
      %s589 = sor.u32 256, 2
      %590 = vbcast.lane.b32.xlu0 %v521, %s589
      %v591 = vpop.permute.xlu0 %590
      %s593 = sor.u32 256, 2
      %594 = vbcast.lane.b32.xlu0 %v528, %s593
      %v595 = vpop.permute.xlu0 %594
      %v596 = vlaneseq
      %v597 = vshrl.u32 %v596, 7
      %v598 = vsub.s32 2, %v597
      %v599 = vrot.slane %v248, %v598
      %v600 = vmul.f32 %v591, %v599
      %v601 = vmul.f32 %v595, %v599
      %v602 = vadd.f32 %v586, %v600
      %v603 = vadd.f32 %v587, %v601
      %v604 = vadd.f32 %v572, %v602
      %v605 = vadd.f32 %v573, %v603
      %s607 = sor.u32 256, 3
      %608 = vbcast.lane.b32.xlu0 %v501, %s607
      %v609 = vpop.permute.xlu0 %608
      %s611 = sor.u32 256, 3
      %612 = vbcast.lane.b32.xlu0 %v508, %s611
      %v613 = vpop.permute.xlu0 %612
      %v614 = vlaneseq
      %v615 = vshrl.u32 %v614, 7
      %v616 = vsub.s32 3, %v615
      %v617 = vrot.slane %v247, %v616
      %v618 = vmul.f32 %v609, %v617
      %v619 = vmul.f32 %v613, %v617
      %s621 = sor.u32 256, 3
      %622 = vbcast.lane.b32.xlu0 %v521, %s621
      %v623 = vpop.permute.xlu0 %622
      %s625 = sor.u32 256, 3
      %626 = vbcast.lane.b32.xlu0 %v528, %s625
      %v627 = vpop.permute.xlu0 %626
      %v628 = vlaneseq
      %v629 = vshrl.u32 %v628, 7
      %v630 = vsub.s32 3, %v629
      %v631 = vrot.slane %v248, %v630
      %v632 = vmul.f32 %v623, %v631
      %v633 = vmul.f32 %v627, %v631
      %v634 = vadd.f32 %v618, %v632
      %v635 = vadd.f32 %v619, %v633
      %v636 = vadd.f32 %v604, %v634
      %v637 = vadd.f32 %v605, %v635
      %s639 = sor.u32 256, 4
      %640 = vbcast.lane.b32.xlu0 %v501, %s639
      %v641 = vpop.permute.xlu0 %640
      %s643 = sor.u32 256, 4
      %644 = vbcast.lane.b32.xlu0 %v508, %s643
      %v645 = vpop.permute.xlu0 %644
      %v646 = vlaneseq
      %v647 = vshrl.u32 %v646, 7
      %v648 = vsub.s32 4, %v647
      %v649 = vrot.slane %v247, %v648
      %v650 = vmul.f32 %v641, %v649
      %v651 = vmul.f32 %v645, %v649
      %s653 = sor.u32 256, 4
      %654 = vbcast.lane.b32.xlu0 %v521, %s653
      %v655 = vpop.permute.xlu0 %654
      %s657 = sor.u32 256, 4
      %658 = vbcast.lane.b32.xlu0 %v528, %s657
      %v659 = vpop.permute.xlu0 %658
      %v660 = vlaneseq
      %v661 = vshrl.u32 %v660, 7
      %v662 = vsub.s32 4, %v661
      %v663 = vrot.slane %v248, %v662
      %v664 = vmul.f32 %v655, %v663
      %v665 = vmul.f32 %v659, %v663
      %v666 = vadd.f32 %v650, %v664
      %v667 = vadd.f32 %v651, %v665
      %v668 = vadd.f32 %v636, %v666
      %v669 = vadd.f32 %v637, %v667
      %v672 = vunpack.c.l.s4 1966171168
      %v673 = vunpack.c.0.s8 %v672
      %v674 = vlaneseq
      %v675 = vshrl.u32 %v674, 7
      %v676 = vsub.s32 %v673, %v675
      %v677 = vrot.slane %v481, %v676
      %v678 = vcombine.high %v677, %v677
      %v680 = vunpack.c.l.s4 1966171168
      %v681 = vunpack.c.0.s8 %v680
      %v682 = vlaneseq
      %v683 = vshrl.u32 %v682, 7
      %v684 = vsub.s32 %v681, %v683
      %v685 = vrot.slane %v677, %v684
      %v687 = vunpack.c.l.s4 1966171168
      %v688 = vunpack.c.0.s8 %v687
      %v689 = vlaneseq
      %v690 = vshrl.u32 %v689, 7
      %v691 = vsub.s32 %v688, %v690
      %v692 = vrot.slane %v678, %v691
      %v693 = vlaneseq
      %v694 = vshrl.u32 %v693, 7
      %v695 = vsub.s32 0, %v694
      %v696 = vrot.slane %v685, %v695
      %v697 = vlaneseq
      %v698 = vshrl.u32 %v697, 7
      %v699 = vsub.s32 0, %v698
      %v700 = vrot.slane %v692, %v699
      %v703 = vadd.f32 %v696, %v668
      %v704 = vadd.f32 %v700, %v669
      %v705 = vadd.f32 %v703, %v229
      %v706 = vadd.f32 %v704, %v230
      %v707 = vtanh.pop %v705
      %v708 = vtanh.pop %v706
      %v710 = vlaneseq
      %v711 = vshrl.u32 %v710, 7
      %v712 = vsub.s32 0, %v711
      %v713 = vrot.slane %v249, %v712
      %v715 = vmul.f32 %v707, %v713
      %v716 = vmul.f32 %v708, %v713
      %v717 = vsel %vm296, %v715, 0.0
      %718 = vadd.xlane.f32.xlu0 %v717
      %v719 = vpop.xlane.xlu0 %718
      %v720 = vsel %vm296, %v716, 0.0
      %721 = vadd.xlane.f32.xlu0 %v720
      %v722 = vpop.xlane.xlu0 %721
      %v724 = vlaneseq
      %v725 = vshrl.u32 %v724, 7
      %v726 = vsub.s32 0, %v725
      %v727 = vrot.slane %v231, %v726
      %729 = vbcast.lane.b32.xlu0 %v727, 256
      %v730 = vpop.permute.xlu0 %729
      %v731 = vlaneseq
      %v732 = vshrl.u32 %v731, 7
      %v733 = vsub.s32 1, %v732
      %v734 = vrot.slane %v231, %v733
      %736 = vbcast.lane.b32.xlu0 %v734, 256
      %v737 = vpop.permute.xlu0 %736
      %v740 = vadd.f32 %v719, %v730
      %v741 = vadd.f32 %v722, %v737
      %744 = vset.pattern.permute.xlu0 0
      %745 = vperm.xlu0 %744, %v740
      %v746 = vpop.permute.xlu0 %745
      %747 = vset.pattern.permute.xlu0 0
      %748 = vperm.xlu0 %747, %v741
      %v749 = vpop.permute.xlu0 %748
      %v750 = vlaneseq
      %v751 = vand.u32 %v750, 127
      %v752 = vlaneseq
      %v753 = vshrl.u32 %v752, 7
      %v754 = vsub.s32 %v751, %v753
      %v755 = vrot.slane %v746, %v754
      %v756 = vlaneseq
      %v757 = vshrl.u32 %v756, 7
      %v758 = vsub.s32 %v751, %v757
      %v759 = vrot.slane %v749, %v758
      %vm760 = vcmask 1041409
      %v761 = vsel %vm760, %v759, %v755
      %vm763 = vcmask 58368
      %v764 = vsel %vm763, %v761, -inf
      %765 = vmax.xlane.f32.xlu0 %v764
      %v766 = vpop.xlane.xlu0 %765
      %v768 = vlaneseq
      %v769 = vshrl.u32 %v768, 7
      %v770 = vsub.s32 0, %v769
      %v771 = vrot.slane %v766, %v770
      %v772 = vlaneseq
      %v773 = vshrl.u32 %v772, 7
      %v774 = vsub.s32 1, %v773
      %v775 = vrot.slane %v766, %v774
      %v778 = vsub.f32 %v740, %v771
      %v779 = vsub.f32 %v741, %v775
      %v780 = vmul.f32 %v778, 1.442695
      %v781 = vpow.pop %v780
      %v782 = vmul.f32 %v779, 1.442695
      %v783 = vpow.pop %v782
      %786 = vset.pattern.permute.xlu0 0
      %787 = vperm.xlu0 %786, %v781
      %v788 = vpop.permute.xlu0 %787
      %789 = vset.pattern.permute.xlu0 0
      %790 = vperm.xlu0 %789, %v783
      %v791 = vpop.permute.xlu0 %790
      %v792 = vlaneseq
      %v793 = vshrl.u32 %v792, 7
      %v794 = vsub.s32 %v751, %v793
      %v795 = vrot.slane %v788, %v794
      %v796 = vlaneseq
      %v797 = vshrl.u32 %v796, 7
      %v798 = vsub.s32 %v751, %v797
      %v799 = vrot.slane %v791, %v798
      %v800 = vsel %vm760, %v799, %v795
      %v802 = vsel %vm763, %v800, 0.0
      %803 = vadd.xlane.f32.xlu0 %v802
      %v804 = vpop.xlane.xlu0 %803
      %v806 = vlaneseq
      %v807 = vshrl.u32 %v806, 7
      %v808 = vsub.s32 0, %v807
      %v809 = vrot.slane %v804, %v808
      %v810 = vlaneseq
      %v811 = vshrl.u32 %v810, 7
      %v812 = vsub.s32 1, %v811
      %v813 = vrot.slane %v804, %v812
      %v816 = vrcp.pop %v809
      %v817 = vmul.f32 %v781, %v816
      %v818 = vrcp.pop %v813
      %v819 = vmul.f32 %v783, %v818
      %822 = vset.pattern.permute.xlu0 0
      %823 = vperm.xlu0 %822, %v817
      %v824 = vpop.permute.xlu0 %823
      %825 = vset.pattern.permute.xlu0 0
      %826 = vperm.xlu0 %825, %v819
      %v827 = vpop.permute.xlu0 %826
      %v828 = vlaneseq
      %v829 = vshrl.u32 %v828, 7
      %v830 = vsub.s32 %v751, %v829
      %v831 = vrot.slane %v824, %v830
      %v832 = vlaneseq
      %v833 = vshrl.u32 %v832, 7
      %v834 = vsub.s32 %v751, %v833
      %v835 = vrot.slane %v827, %v834
      %v836 = vsel %vm760, %v835, %v831
      %v838 = vadd.f32 %v283, %v836
      %vm839 = vcmask 64512
      %v840 = vsel %vm839, %v831, 0
      %842 = vmatprep.subr.mxu0 0.0
      %843 = vmatpush1.msra.mxu0 %v227
      %844 = vmatprep.subr.mxu0 0.0
      %845 = vmatpush1.msra.mxu0 0.0
      %846 = vmatprep.subr.mxu0 0.0
      %847 = vmatpush1.msra.mxu0 0.0
      %848 = vmatprep.subr.mxu0 0.0
      %849 = vmatpush1.msra.mxu0 0.0
      %850 = vmatprep.subr.mxu0 0.0
      %851 = vmatpush1.msra.mxu0 0.0
      %852 = vmatprep.subr.mxu0 0.0
      %853 = vmatpush1.msra.mxu0 0.0
      %854 = vmatprep.subr.mxu0 0.0
      %855 = vmatpush1.msra.mxu0 0.0
      %856 = vmatprep.subr.mxu0 0.0
      %857 = vmatpush1.msra.mxu0 0.0
      %858 = vmatprep.subr.mxu0 0.0
      %859 = vmatpush1.msra.mxu0 0.0
      %860 = vmatprep.subr.mxu0 0.0
      %861 = vmatpush1.msra.mxu0 0.0
      %862 = vmatprep.subr.mxu0 0.0
      %863 = vmatpush1.msra.mxu0 0.0
      %864 = vmatprep.subr.mxu0 0.0
      %865 = vmatpush1.msra.mxu0 0.0
      %866 = vmatprep.subr.mxu0 0.0
      %867 = vmatpush1.msra.mxu0 0.0
      %868 = vmatprep.subr.mxu0 0.0
      %869 = vmatpush1.msra.mxu0 0.0
      %870 = vmatprep.subr.mxu0 0.0
      %871 = vmatpush1.msra.mxu0 0.0
      %872 = vmatprep.subr.mxu0 0.0
      %873 = vmatpush1.msra.mxu0 0.0
      %874 = vmatprep.subr.mxu0 0.0
      %875 = vmatpush1.msra.mxu0 0.0
      %876 = vmatprep.subr.mxu0 0.0
      %877 = vmatpush1.msra.mxu0 0.0
      %878 = vmatprep.subr.mxu0 0.0
      %879 = vmatpush1.msra.mxu0 0.0
      %880 = vmatprep.subr.mxu0 0.0
      %881 = vmatpush1.msra.mxu0 0.0
      %882 = vmatprep.subr.mxu0 0.0
      %883 = vmatpush1.msra.mxu0 0.0
      %884 = vmatprep.subr.mxu0 0.0
      %885 = vmatpush1.msra.mxu0 0.0
      %886 = vmatprep.subr.mxu0 0.0
      %887 = vmatpush1.msra.mxu0 0.0
      %888 = vmatprep.subr.mxu0 0.0
      %889 = vmatpush1.msra.mxu0 0.0
      %890 = vmatprep.subr.mxu0 0.0
      %891 = vmatpush1.msra.mxu0 0.0
      %892 = vmatprep.subr.mxu0 0.0
      %893 = vmatpush1.msra.mxu0 0.0
      %894 = vmatprep.subr.mxu0 0.0
      %895 = vmatpush1.msra.mxu0 0.0
      %896 = vmatprep.subr.mxu0 0.0
      %897 = vmatpush1.msra.mxu0 0.0
      %898 = vmatprep.subr.mxu0 0.0
      %899 = vmatpush1.msra.mxu0 0.0
      %900 = vmatprep.subr.mxu0 0.0
      %901 = vmatpush1.msra.mxu0 0.0
      %902 = vmatprep.subr.mxu0 0.0
      %903 = vmatpush1.msra.mxu0 0.0
      %904 = vmatprep.subr.mxu0 0.0
      %905 = vmatpush1.msra.mxu0 0.0
      %906 = vmatprep.mubr.f32.mxu0 0.0
      %907 = vmatmul.mubr.f32.gmra.mrb[0].mxu0 %v840
      %v908 = vpop.f32.mrb[0].mxu0
      %v909 = vadd.f32 0.0, %v908
      %v910 = vpop.f32.mrb[0].mxu0
      %911 = vdwg.mxu0
      %v912 = vsel %vm839, %v835, 0
      %914 = vmatprep.subr.mxu0 0.0
      %915 = vmatpush1.msra.mxu0 %v228
      %916 = vmatprep.subr.mxu0 0.0
      %917 = vmatpush1.msra.mxu0 0.0
      %918 = vmatprep.subr.mxu0 0.0
      %919 = vmatpush1.msra.mxu0 0.0
      %920 = vmatprep.subr.mxu0 0.0
      %921 = vmatpush1.msra.mxu0 0.0
      %922 = vmatprep.subr.mxu0 0.0
      %923 = vmatpush1.msra.mxu0 0.0
      %924 = vmatprep.subr.mxu0 0.0
      %925 = vmatpush1.msra.mxu0 0.0
      %926 = vmatprep.subr.mxu0 0.0
      %927 = vmatpush1.msra.mxu0 0.0
      %928 = vmatprep.subr.mxu0 0.0
      %929 = vmatpush1.msra.mxu0 0.0
      %930 = vmatprep.subr.mxu0 0.0
      %931 = vmatpush1.msra.mxu0 0.0
      %932 = vmatprep.subr.mxu0 0.0
      %933 = vmatpush1.msra.mxu0 0.0
      %934 = vmatprep.subr.mxu0 0.0
      %935 = vmatpush1.msra.mxu0 0.0
      %936 = vmatprep.subr.mxu0 0.0
      %937 = vmatpush1.msra.mxu0 0.0
      %938 = vmatprep.subr.mxu0 0.0
      %939 = vmatpush1.msra.mxu0 0.0
      %940 = vmatprep.subr.mxu0 0.0
      %941 = vmatpush1.msra.mxu0 0.0
      %942 = vmatprep.subr.mxu0 0.0
      %943 = vmatpush1.msra.mxu0 0.0
      %944 = vmatprep.subr.mxu0 0.0
      %945 = vmatpush1.msra.mxu0 0.0
      %946 = vmatprep.subr.mxu0 0.0
      %947 = vmatpush1.msra.mxu0 0.0
      %948 = vmatprep.subr.mxu0 0.0
      %949 = vmatpush1.msra.mxu0 0.0
      %950 = vmatprep.subr.mxu0 0.0
      %951 = vmatpush1.msra.mxu0 0.0
      %952 = vmatprep.subr.mxu0 0.0
      %953 = vmatpush1.msra.mxu0 0.0
      %954 = vmatprep.subr.mxu0 0.0
      %955 = vmatpush1.msra.mxu0 0.0
      %956 = vmatprep.subr.mxu0 0.0
      %957 = vmatpush1.msra.mxu0 0.0
      %958 = vmatprep.subr.mxu0 0.0
      %959 = vmatpush1.msra.mxu0 0.0
      %960 = vmatprep.subr.mxu0 0.0
      %961 = vmatpush1.msra.mxu0 0.0
      %962 = vmatprep.subr.mxu0 0.0
      %963 = vmatpush1.msra.mxu0 0.0
      %964 = vmatprep.subr.mxu0 0.0
      %965 = vmatpush1.msra.mxu0 0.0
      %966 = vmatprep.subr.mxu0 0.0
      %967 = vmatpush1.msra.mxu0 0.0
      %968 = vmatprep.subr.mxu0 0.0
      %969 = vmatpush1.msra.mxu0 0.0
      %970 = vmatprep.subr.mxu0 0.0
      %971 = vmatpush1.msra.mxu0 0.0
      %972 = vmatprep.subr.mxu0 0.0
      %973 = vmatpush1.msra.mxu0 0.0
      %974 = vmatprep.subr.mxu0 0.0
      %975 = vmatpush1.msra.mxu0 0.0
      %976 = vmatprep.subr.mxu0 0.0
      %977 = vmatpush1.msra.mxu0 0.0
      %978 = vmatprep.mubr.f32.mxu0 0.0
      %979 = vmatmul.mubr.f32.gmra.mrb[0].mxu0 %v912
      %v980 = vpop.f32.mrb[0].mxu0
      %v981 = vadd.f32 0.0, %v980
      %v982 = vpop.f32.mrb[0].mxu0
      %983 = vdwg.mxu0
      %v987 = vrot.slane %v981, 7
      %v988 = vsel %vm760, %v987, %v909
      %989 = vrot.lane.b32.xlu0 %v988, 32
      %v990 = vpop.permute.xlu0 %989
      %993 = vrot.lane.b32.xlu0 %v280, 64
      %v994 = vpop.permute.xlu0 %993
      %v996 = vsel %vm411, %v410, %v990
      %vm997 = vcmask 523264
      %v998 = vsel %vm997, %v996, %v994
      %v1000 = vlaneseq
      %v1001 = vshrl.u32 %v1000, 7
      %v1002 = vsub.s32 0, %v1001
      %v1003 = vrot.slane %v262, %v1002
      %vm1005 = vcmask 785408
      %v1007 = vsel %vm1005, %v998, 0
      %1009 = vmatprep.subr.mxu0 0.0
      %1010 = vmatpush1.msra.mxu0 %v250
      %1011 = vmatprep.subr.mxu0 0.0
      %1012 = vmatpush1.msra.mxu0 %v251
      %1013 = vmatprep.subr.mxu0 0.0
      %1014 = vmatpush1.msra.mxu0 %v252
      %1015 = vmatprep.subr.mxu0 0.0
      %1016 = vmatpush1.msra.mxu0 %v253
      %1017 = vmatprep.subr.mxu0 0.0
      %1018 = vmatpush1.msra.mxu0 %v254
      %1019 = vmatprep.subr.mxu0 0.0
      %1020 = vmatpush1.msra.mxu0 %v255
      %1021 = vmatprep.subr.mxu0 0.0
      %1022 = vmatpush1.msra.mxu0 %v256
      %1023 = vmatprep.subr.mxu0 0.0
      %1024 = vmatpush1.msra.mxu0 %v257
      %1025 = vmatprep.subr.mxu0 0.0
      %1026 = vmatpush1.msra.mxu0 %v258
      %1027 = vmatprep.subr.mxu0 0.0
      %1028 = vmatpush1.msra.mxu0 %v259
      %1029 = vmatprep.subr.mxu0 0.0
      %1030 = vmatpush1.msra.mxu0 %v260
      %1031 = vmatprep.subr.mxu0 0.0
      %1032 = vmatpush1.msra.mxu0 %v261
      %1033 = vmatprep.subr.mxu0 0.0
      %1034 = vmatpush1.msra.mxu0 0.0
      %1035 = vmatprep.subr.mxu0 0.0
      %1036 = vmatpush1.msra.mxu0 0.0
      %1037 = vmatprep.subr.mxu0 0.0
      %1038 = vmatpush1.msra.mxu0 0.0
      %1039 = vmatprep.subr.mxu0 0.0
      %1040 = vmatpush1.msra.mxu0 0.0
      %1041 = vmatprep.subr.mxu0 0.0
      %1042 = vmatpush1.msra.mxu0 0.0
      %1043 = vmatprep.subr.mxu0 0.0
      %1044 = vmatpush1.msra.mxu0 0.0
      %1045 = vmatprep.subr.mxu0 0.0
      %1046 = vmatpush1.msra.mxu0 0.0
      %1047 = vmatprep.subr.mxu0 0.0
      %1048 = vmatpush1.msra.mxu0 0.0
      %1049 = vmatprep.subr.mxu0 0.0
      %1050 = vmatpush1.msra.mxu0 0.0
      %1051 = vmatprep.subr.mxu0 0.0
      %1052 = vmatpush1.msra.mxu0 0.0
      %1053 = vmatprep.subr.mxu0 0.0
      %1054 = vmatpush1.msra.mxu0 0.0
      %1055 = vmatprep.subr.mxu0 0.0
      %1056 = vmatpush1.msra.mxu0 0.0
      %1057 = vmatprep.subr.mxu0 0.0
      %1058 = vmatpush1.msra.mxu0 0.0
      %1059 = vmatprep.subr.mxu0 0.0
      %1060 = vmatpush1.msra.mxu0 0.0
      %1061 = vmatprep.subr.mxu0 0.0
      %1062 = vmatpush1.msra.mxu0 0.0
      %1063 = vmatprep.subr.mxu0 0.0
      %1064 = vmatpush1.msra.mxu0 0.0
      %1065 = vmatprep.subr.mxu0 0.0
      %1066 = vmatpush1.msra.mxu0 0.0
      %1067 = vmatprep.subr.mxu0 0.0
      %1068 = vmatpush1.msra.mxu0 0.0
      %1069 = vmatprep.subr.mxu0 0.0
      %1070 = vmatpush1.msra.mxu0 0.0
      %1071 = vmatprep.subr.mxu0 0.0
      %1072 = vmatpush1.msra.mxu0 0.0
      %1073 = vmatprep.mubr.f32.mxu0 0.0
      %1074 = vmatmul.mubr.f32.gmra.mrb[0].mxu0 %v1007
      %v1075 = vpop.f32.mrb[0].mxu0
      %v1076 = vadd.f32 %v1003, %v1075
      %v1077 = vpop.f32.mrb[0].mxu0
      %1078 = vdwg.mxu0
      %v1079 = vxor.u32 %v1076, 2147483648
      %v1080 = vmul.f32 %v1079, 1.442695
      %v1081 = vpow.pop %v1080
      %v1082 = vadd.f32 %v1081, 1.0
      %v1083 = vrcp.pop %v1082
      %v1084 = vmul.f32 1.0, %v1083
      %v1085 = vtanh.pop %v1076
      %1087 = vrot.lane.b32.xlu0 %v281, 32
      %v1088 = vpop.permute.xlu0 %1087
      %v1090 = vmul.f32 %v1084, %v1088
      %1092 = vrot.lane.b32.xlu0 %v1085, 64
      %v1093 = vpop.permute.xlu0 %1092
      %v1095 = vmul.f32 %v1084, %v1093
      %1097 = vrot.lane.b32.xlu0 %v1095, 32
      %v1098 = vpop.permute.xlu0 %1097
      %v1100 = vadd.f32 %v1090, %v1098
      %v1101 = vtanh.pop %v1100
      %1103 = vrot.lane.b32.xlu0 %v1101, 64
      %v1104 = vpop.permute.xlu0 %1103
      %v1106 = vmul.f32 %v1084, %v1104
      %1108 = vrot.lane.b32.xlu0 %v1106, 32
      %v1109 = vpop.permute.xlu0 %1108
      %v1111 = vsel %vm411, %v1109, %v990
      %v1113 = vlaneseq
      %v1114 = vshrl.u32 %v1113, 7
      %v1115 = vsub.s32 0, %v1114
      %v1116 = vrot.slane %v271, %v1115
      %v1119 = vsel %vm997, %v1111, 0
      %1121 = vmatprep.subr.mxu0 0.0
      %1122 = vmatpush1.msra.mxu0 %v263
      %1123 = vmatprep.subr.mxu0 0.0
      %1124 = vmatpush1.msra.mxu0 %v264
      %1125 = vmatprep.subr.mxu0 0.0
      %1126 = vmatpush1.msra.mxu0 %v265
      %1127 = vmatprep.subr.mxu0 0.0
      %1128 = vmatpush1.msra.mxu0 %v266
      %1129 = vmatprep.subr.mxu0 0.0
      %1130 = vmatpush1.msra.mxu0 %v267
      %1131 = vmatprep.subr.mxu0 0.0
      %1132 = vmatpush1.msra.mxu0 %v268
      %1133 = vmatprep.subr.mxu0 0.0
      %1134 = vmatpush1.msra.mxu0 %v269
      %1135 = vmatprep.subr.mxu0 0.0
      %1136 = vmatpush1.msra.mxu0 %v270
      %1137 = vmatprep.subr.mxu0 0.0
      %1138 = vmatpush1.msra.mxu0 0.0
      %1139 = vmatprep.subr.mxu0 0.0
      %1140 = vmatpush1.msra.mxu0 0.0
      %1141 = vmatprep.subr.mxu0 0.0
      %1142 = vmatpush1.msra.mxu0 0.0
      %1143 = vmatprep.subr.mxu0 0.0
      %1144 = vmatpush1.msra.mxu0 0.0
      %1145 = vmatprep.subr.mxu0 0.0
      %1146 = vmatpush1.msra.mxu0 0.0
      %1147 = vmatprep.subr.mxu0 0.0
      %1148 = vmatpush1.msra.mxu0 0.0
      %1149 = vmatprep.subr.mxu0 0.0
      %1150 = vmatpush1.msra.mxu0 0.0
      %1151 = vmatprep.subr.mxu0 0.0
      %1152 = vmatpush1.msra.mxu0 0.0
      %1153 = vmatprep.subr.mxu0 0.0
      %1154 = vmatpush1.msra.mxu0 0.0
      %1155 = vmatprep.subr.mxu0 0.0
      %1156 = vmatpush1.msra.mxu0 0.0
      %1157 = vmatprep.subr.mxu0 0.0
      %1158 = vmatpush1.msra.mxu0 0.0
      %1159 = vmatprep.subr.mxu0 0.0
      %1160 = vmatpush1.msra.mxu0 0.0
      %1161 = vmatprep.subr.mxu0 0.0
      %1162 = vmatpush1.msra.mxu0 0.0
      %1163 = vmatprep.subr.mxu0 0.0
      %1164 = vmatpush1.msra.mxu0 0.0
      %1165 = vmatprep.subr.mxu0 0.0
      %1166 = vmatpush1.msra.mxu0 0.0
      %1167 = vmatprep.subr.mxu0 0.0
      %1168 = vmatpush1.msra.mxu0 0.0
      %1169 = vmatprep.subr.mxu0 0.0
      %1170 = vmatpush1.msra.mxu0 0.0
      %1171 = vmatprep.subr.mxu0 0.0
      %1172 = vmatpush1.msra.mxu0 0.0
      %1173 = vmatprep.subr.mxu0 0.0
      %1174 = vmatpush1.msra.mxu0 0.0
      %1175 = vmatprep.subr.mxu0 0.0
      %1176 = vmatpush1.msra.mxu0 0.0
      %1177 = vmatprep.subr.mxu0 0.0
      %1178 = vmatpush1.msra.mxu0 0.0
      %1179 = vmatprep.subr.mxu0 0.0
      %1180 = vmatpush1.msra.mxu0 0.0
      %1181 = vmatprep.subr.mxu0 0.0
      %1182 = vmatpush1.msra.mxu0 0.0
      %1183 = vmatprep.subr.mxu0 0.0
      %1184 = vmatpush1.msra.mxu0 0.0
      %1185 = vmatprep.mubr.f32.mxu0 0.0
      %1186 = vmatmul.mubr.f32.gmra.mrb[0].mxu0 %v1119
      %v1187 = vpop.f32.mrb[0].mxu0
      %v1188 = vadd.f32 %v1116, %v1187
      %v1189 = vpop.f32.mrb[0].mxu0
      %1190 = vdwg.mxu0
      %vm1191 = vcmask 254976
      %1192 = vst.msk [vmem:[#allocation2] sm:$0x3] %vm1191, %v410
      %1194 = vrot.lane.b32.xlu0 %v401, 96
      %v1195 = vpop.permute.xlu0 %1194
      %1197 = vst.msk [vmem:[#allocation3] sm:$0x3] %vm1191, %v1195
      %1198 = vst.msk [vmem:[#allocation4] sm:$0x3] %vm1191, %v1109
      %1200 = vrot.lane.b32.xlu0 %v1100, 96
      %v1201 = vpop.permute.xlu0 %1200
      %1203 = vst.msk [vmem:[#allocation5] sm:$0x3] %vm1191, %v1201
      %1204 = vst.msk [vmem:[#allocation6] sm:$0x3] %vm763, %v836
      %1205 = vst.msk [vmem:[#allocation7] sm:$0x3] %vm763, %v838
      %1207 = vst.msk [vmem:[#allocation8] sm:$0x3] %vm1191, %v988
      %s1208 = scalar_lea.vmem [#allocation30], %s285
      %vm1209 = vcmask 66560
      %1210 = vst.msk [vmem:[%s1208] sm:$0x3] %vm1209, %v1188
      %s1211 = scalar_lea.vmem [#allocation31], %s285
      %1212 = vst.msk [vmem:[%s1211] sm:$0x3] %vm763, %v836
    $region114: #{tacotron2_forward.18} parent=1 // loop_footer
      %s277 = sadd.s32 1, %s273
    $region115: #{tacotron2_forward.18} parent=1 // loop_footer_branch
      %272 = sbr.rel target = $region111
    $region116: #{tacotron2_forward.18} parent=1 // loop_exit
      _
    // Predicated region
    $region117: #{tacotron2_forward.18} parent=1 // pred_check
      _
    $region118: #{tacotron2_forward.18} parent=1 // pred_check_branch
      %1214 = sbr.rel (0) target = $region120
    $region119: #{tacotron2_forward.18} parent=1 // pred_region
      %s1216 = ssub.s32 256, 256
      %1217 = vsyncadd [#allocation11], %s1216
      %s1218 = sshll.u32 [#allocation30], 4
      %s1219 = int_to_ptr.vmem [resolvable:$true] %s1218
      %1224 = dma.vmem_to_hbm [thread:$0]  %s1219, 256, %s13, [#allocation11], 32, 32, 2
    $region120: #{tacotron2_forward.18} parent=1 // pred_fallthru
      _
    // Predicated region
    $region121: #{tacotron2_forward.18} parent=1 // pred_check
      _
    $region122: #{tacotron2_forward.18} parent=1 // pred_check_branch
      %1226 = sbr.rel (0) target = $region124
    $region123: #{tacotron2_forward.18} parent=1 // pred_region
      %s1228 = ssub.s32 256, 256
      %1229 = vsyncadd [#allocation32], %s1228
      %s1230 = sshll.u32 [#allocation31], 4
      %s1231 = int_to_ptr.vmem [resolvable:$true] %s1230
      %1236 = dma.vmem_to_hbm [thread:$0]  %s1231, 256, %s14, [#allocation32], 32, 32, 2
    $region124: #{tacotron2_forward.18} parent=1 // pred_fallthru
      _
    // Predicated region
    $region125: #{tacotron2_forward.18} parent=1 // pred_check
      _
    $region126: #{tacotron2_forward.18} parent=1 // pred_check_branch
      %1238 = sbr.rel (0) target = $region128
    $region127: #{tacotron2_forward.18} parent=1 // pred_region
      %1239 = dma.done [#allocation11], 256
    $region128: #{tacotron2_forward.18} parent=1 // pred_fallthru
      _
    // Predicated region
    $region129: #{tacotron2_forward.18} parent=1 // pred_check
      _
    $region130: #{tacotron2_forward.18} parent=1 // pred_check_branch
      %1241 = sbr.rel (0) target = $region132
    $region131: #{tacotron2_forward.18} parent=1 // pred_region
      %1242 = dma.done [#allocation32], 256
    $region132: #{tacotron2_forward.18} parent=1 // pred_fallthru
      _
    %1243 = vsyncpa [#allocation10], 1
    %1244 = vsyncpa [#allocation13], 1
    %1245 = vsyncpa [#allocation16], 1
    %1246 = vsyncpa [#allocation19], 1
    %1247 = vsyncpa [#allocation22], 1
    %1248 = vsyncpa [#allocation25], 1
    %1249 = vsyncpa [#allocation28], 1
    %1250 = vsyncpa [#allocation11], 1
    %1251 = vsyncpa [#allocation32], 1

// kernel: tacotron2_forward.23
$region0: #{tacotron2_forward.23}
  #allocation0 [shape = 'u32[]', space=smem, size = 0x4, offset = 0x4, fixed_abs, tag = 'smem constant byte address 0x4 - core index']
  #allocation1 [shape = 'u32[144,128]{1,0:T(1,128)}', space=vmem, size = 0x12000, scoped, tag = 'internal scratch']
  %s0 = inlined_call_operand.vmem [shape: f32[2,10,16], index: 0, kind: input, shape index: {}]
  %s1 = inlined_call_operand.vmem [shape: f32[5,16,8], index: 1, kind: input, shape index: {}]
  %s2 = inlined_call_operand.vmem [shape: f32[1,8], index: 2, kind: input, shape index: {}]
  %s3 = inlined_call_operand.vmem [shape: f32[2,6,8], index: 3, kind: output, shape index: {}]
  %s4 = sld [smem:[#allocation0]]
  $region22: #{tacotron2_forward.23} parent=0
    _
  %s6 = ssub.s32 1, %s4
  %s7 = scalar_select 0, %s6, %s4
  // Predicated region
  $region2: #{tacotron2_forward.23} parent=0 // pred_check
    _
  $region3: #{tacotron2_forward.23} parent=0 // pred_check_branch
    %9 = sbr.rel (0) target = $region5
  $region4: #{tacotron2_forward.23} parent=0 // pred_region
    _
  $region5: #{tacotron2_forward.23} parent=0 // pred_fallthru
    _
  // Predicated region
  $region6: #{tacotron2_forward.23} parent=0 // pred_check
    _
  $region7: #{tacotron2_forward.23} parent=0 // pred_check_branch
    %11 = sbr.rel (0) target = $region9
  $region8: #{tacotron2_forward.23} parent=0 // pred_region
    _
  $region9: #{tacotron2_forward.23} parent=0 // pred_fallthru
    _
  // Predicated region
  $region10: #{tacotron2_forward.23} parent=0 // pred_check
    _
  $region11: #{tacotron2_forward.23} parent=0 // pred_check_branch
    %13 = sbr.rel (0) target = $region13
  $region12: #{tacotron2_forward.23} parent=0 // pred_region
    _
  $region13: #{tacotron2_forward.23} parent=0 // pred_fallthru
    _
  %v14 = vld [vmem:[%s0] sm:$0xff]
  %v15 = vld [vmem:[%s0 + $0x8] sm:$0x3]
  %v16 = vld [vmem:[%s0 + $0x10] sm:$0xff]
  %v17 = vld [vmem:[%s0 + $0x18] sm:$0x3]
  %v18 = vld [vmem:[%s2] sm:$0x1]
  %v19 = vld [vmem:[%s1] sm:$0xff]
  %v20 = vld [vmem:[%s1 + $0x8] sm:$0xff]
  %s21 = scalar_lea.vmem %s1, 16
  %v22 = vld [vmem:[%s21] sm:$0xff]
  %v23 = vld [vmem:[%s21 + $0x8] sm:$0xff]
  %v25 = vrot.slane %v14, 1
  %vm26 = vcmask 130048
  %v27 = vsel %vm26, %v25, 0
  %29 = vmatprep.subr.mxu0 0.0
  %30 = vmatpush1.msra.mxu0 %v22
  %31 = vmatprep.subr.mxu0 0.0
  %32 = vmatpush1.msra.mxu0 %v23
  %33 = vmatprep.subr.mxu0 0.0
  %34 = vmatpush1.msra.mxu0 0.0
  %35 = vmatprep.subr.mxu0 0.0
  %36 = vmatpush1.msra.mxu0 0.0
  %37 = vmatprep.subr.mxu0 0.0
  %38 = vmatpush1.msra.mxu0 0.0
  %39 = vmatprep.subr.mxu0 0.0
  %40 = vmatpush1.msra.mxu0 0.0
  %41 = vmatprep.subr.mxu0 0.0
  %42 = vmatpush1.msra.mxu0 0.0
  %43 = vmatprep.subr.mxu0 0.0
  %44 = vmatpush1.msra.mxu0 0.0
  %45 = vmatprep.subr.mxu0 0.0
  %46 = vmatpush1.msra.mxu0 0.0
  %47 = vmatprep.subr.mxu0 0.0
  %48 = vmatpush1.msra.mxu0 0.0
  %49 = vmatprep.subr.mxu0 0.0
  %50 = vmatpush1.msra.mxu0 0.0
  %51 = vmatprep.subr.mxu0 0.0
  %52 = vmatpush1.msra.mxu0 0.0
  %53 = vmatprep.subr.mxu0 0.0
  %54 = vmatpush1.msra.mxu0 0.0
  %55 = vmatprep.subr.mxu0 0.0
  %56 = vmatpush1.msra.mxu0 0.0
  %57 = vmatprep.subr.mxu0 0.0
  %58 = vmatpush1.msra.mxu0 0.0
  %59 = vmatprep.subr.mxu0 0.0
  %60 = vmatpush1.msra.mxu0 0.0
  %61 = vmatprep.subr.mxu0 0.0
  %62 = vmatpush1.msra.mxu0 0.0
  %63 = vmatprep.subr.mxu0 0.0
  %64 = vmatpush1.msra.mxu0 0.0
  %65 = vmatprep.subr.mxu0 0.0
  %66 = vmatpush1.msra.mxu0 0.0
  %67 = vmatprep.subr.mxu0 0.0
  %68 = vmatpush1.msra.mxu0 0.0
  %69 = vmatprep.subr.mxu0 0.0
  %70 = vmatpush1.msra.mxu0 0.0
  %71 = vmatprep.subr.mxu0 0.0
  %72 = vmatpush1.msra.mxu0 0.0
  %73 = vmatprep.subr.mxu0 0.0
  %74 = vmatpush1.msra.mxu0 0.0
  %75 = vmatprep.subr.mxu0 0.0
  %76 = vmatpush1.msra.mxu0 0.0
  %77 = vmatprep.subr.mxu0 0.0
  %78 = vmatpush1.msra.mxu0 0.0
  %79 = vmatprep.subr.mxu0 0.0
  %80 = vmatpush1.msra.mxu0 0.0
  %81 = vmatprep.subr.mxu0 0.0
  %82 = vmatpush1.msra.mxu0 0.0
  %83 = vmatprep.subr.mxu0 0.0
  %84 = vmatpush1.msra.mxu0 0.0
  %85 = vmatprep.subr.mxu0 0.0
  %86 = vmatpush1.msra.mxu0 0.0
  %87 = vmatprep.subr.mxu0 0.0
  %88 = vmatpush1.msra.mxu0 0.0
  %89 = vmatprep.subr.mxu0 0.0
  %90 = vmatpush1.msra.mxu0 0.0
  %91 = vmatprep.subr.mxu0 0.0
  %92 = vmatpush1.msra.mxu0 0.0
  %93 = vmatprep.mubr.f32.mxu0 0.0
  %94 = vmatmul.mubr.f32.gmra.mrb[0].mxu0 %v27
  %v95 = vpop.f32.mrb[0].mxu0
  %v96 = vadd.f32 0.0, %v95
  %v97 = vpop.f32.mrb[0].mxu0
  %98 = vdwg.mxu0
  %v99 = vsel %vm26, %v14, 0
  %101 = vmatprep.subr.mxu0 0.0
  %102 = vmatpush1.msra.mxu0 %v19
  %103 = vmatprep.subr.mxu0 0.0
  %104 = vmatpush1.msra.mxu0 %v20
  %105 = vmatprep.subr.mxu0 0.0
  %106 = vmatpush1.msra.mxu0 0.0
  %107 = vmatprep.subr.mxu0 0.0
  %108 = vmatpush1.msra.mxu0 0.0
  %109 = vmatprep.subr.mxu0 0.0
  %110 = vmatpush1.msra.mxu0 0.0
  %111 = vmatprep.subr.mxu0 0.0
  %112 = vmatpush1.msra.mxu0 0.0
  %113 = vmatprep.subr.mxu0 0.0
  %114 = vmatpush1.msra.mxu0 0.0
  %115 = vmatprep.subr.mxu0 0.0
  %116 = vmatpush1.msra.mxu0 0.0
  %117 = vmatprep.subr.mxu0 0.0
  %118 = vmatpush1.msra.mxu0 0.0
  %119 = vmatprep.subr.mxu0 0.0
  %120 = vmatpush1.msra.mxu0 0.0
  %121 = vmatprep.subr.mxu0 0.0
  %122 = vmatpush1.msra.mxu0 0.0
  %123 = vmatprep.subr.mxu0 0.0
  %124 = vmatpush1.msra.mxu0 0.0
  %125 = vmatprep.subr.mxu0 0.0
  %126 = vmatpush1.msra.mxu0 0.0
  %127 = vmatprep.subr.mxu0 0.0
  %128 = vmatpush1.msra.mxu0 0.0
  %129 = vmatprep.subr.mxu0 0.0
  %130 = vmatpush1.msra.mxu0 0.0
  %131 = vmatprep.subr.mxu0 0.0
  %132 = vmatpush1.msra.mxu0 0.0
  %133 = vmatprep.subr.mxu0 0.0
  %134 = vmatpush1.msra.mxu0 0.0
  %135 = vmatprep.subr.mxu0 0.0
  %136 = vmatpush1.msra.mxu0 0.0
  %137 = vmatprep.subr.mxu0 0.0
  %138 = vmatpush1.msra.mxu0 0.0
  %139 = vmatprep.subr.mxu0 0.0
  %140 = vmatpush1.msra.mxu0 0.0
  %141 = vmatprep.subr.mxu0 0.0
  %142 = vmatpush1.msra.mxu0 0.0
  %143 = vmatprep.subr.mxu0 0.0
  %144 = vmatpush1.msra.mxu0 0.0
  %145 = vmatprep.subr.mxu0 0.0
  %146 = vmatpush1.msra.mxu0 0.0
  %147 = vmatprep.subr.mxu0 0.0
  %148 = vmatpush1.msra.mxu0 0.0
  %149 = vmatprep.subr.mxu0 0.0
  %150 = vmatpush1.msra.mxu0 0.0
  %151 = vmatprep.subr.mxu0 0.0
  %152 = vmatpush1.msra.mxu0 0.0
  %153 = vmatprep.subr.mxu0 0.0
  %154 = vmatpush1.msra.mxu0 0.0
  %155 = vmatprep.subr.mxu0 0.0
  %156 = vmatpush1.msra.mxu0 0.0
  %157 = vmatprep.subr.mxu0 0.0
  %158 = vmatpush1.msra.mxu0 0.0
  %159 = vmatprep.subr.mxu0 0.0
  %160 = vmatpush1.msra.mxu0 0.0
  %161 = vmatprep.subr.mxu0 0.0
  %162 = vmatpush1.msra.mxu0 0.0
  %163 = vmatprep.subr.mxu0 0.0
  %164 = vmatpush1.msra.mxu0 0.0
  %165 = vmatprep.mubr.f32.mxu0 0.0
  %166 = vmatmul.mubr.f32.gmra.mrb[0].mxu0 %v99
  %v167 = vpop.f32.mrb[0].mxu0
  %v168 = vadd.f32 %v96, %v167
  %v169 = vpop.f32.mrb[0].mxu0
  %170 = vdwg.mxu0
  %s171 = scalar_lea.vmem %s1, 32
  %v172 = vld [vmem:[%s171] sm:$0xff]
  %v173 = vld [vmem:[%s171 + $0x8] sm:$0xff]
  %v174 = vrot.slane %v14, 2
  %v175 = vsel %vm26, %v174, 0
  %177 = vmatprep.subr.mxu0 0.0
  %178 = vmatpush1.msra.mxu0 %v172
  %179 = vmatprep.subr.mxu0 0.0
  %180 = vmatpush1.msra.mxu0 %v173
  %181 = vmatprep.subr.mxu0 0.0
  %182 = vmatpush1.msra.mxu0 0.0
  %183 = vmatprep.subr.mxu0 0.0
  %184 = vmatpush1.msra.mxu0 0.0
  %185 = vmatprep.subr.mxu0 0.0
  %186 = vmatpush1.msra.mxu0 0.0
  %187 = vmatprep.subr.mxu0 0.0
  %188 = vmatpush1.msra.mxu0 0.0
  %189 = vmatprep.subr.mxu0 0.0
  %190 = vmatpush1.msra.mxu0 0.0
  %191 = vmatprep.subr.mxu0 0.0
  %192 = vmatpush1.msra.mxu0 0.0
  %193 = vmatprep.subr.mxu0 0.0
  %194 = vmatpush1.msra.mxu0 0.0
  %195 = vmatprep.subr.mxu0 0.0
  %196 = vmatpush1.msra.mxu0 0.0
  %197 = vmatprep.subr.mxu0 0.0
  %198 = vmatpush1.msra.mxu0 0.0
  %199 = vmatprep.subr.mxu0 0.0
  %200 = vmatpush1.msra.mxu0 0.0
  %201 = vmatprep.subr.mxu0 0.0
  %202 = vmatpush1.msra.mxu0 0.0
  %203 = vmatprep.subr.mxu0 0.0
  %204 = vmatpush1.msra.mxu0 0.0
  %205 = vmatprep.subr.mxu0 0.0
  %206 = vmatpush1.msra.mxu0 0.0
  %207 = vmatprep.subr.mxu0 0.0
  %208 = vmatpush1.msra.mxu0 0.0
  %209 = vmatprep.subr.mxu0 0.0
  %210 = vmatpush1.msra.mxu0 0.0
  %211 = vmatprep.subr.mxu0 0.0
  %212 = vmatpush1.msra.mxu0 0.0
  %213 = vmatprep.subr.mxu0 0.0
  %214 = vmatpush1.msra.mxu0 0.0
  %215 = vmatprep.subr.mxu0 0.0
  %216 = vmatpush1.msra.mxu0 0.0
  %217 = vmatprep.subr.mxu0 0.0
  %218 = vmatpush1.msra.mxu0 0.0
  %219 = vmatprep.subr.mxu0 0.0
  %220 = vmatpush1.msra.mxu0 0.0
  %221 = vmatprep.subr.mxu0 0.0
  %222 = vmatpush1.msra.mxu0 0.0
  %223 = vmatprep.subr.mxu0 0.0
  %224 = vmatpush1.msra.mxu0 0.0
  %225 = vmatprep.subr.mxu0 0.0
  %226 = vmatpush1.msra.mxu0 0.0
  %227 = vmatprep.subr.mxu0 0.0
  %228 = vmatpush1.msra.mxu0 0.0
  %229 = vmatprep.subr.mxu0 0.0
  %230 = vmatpush1.msra.mxu0 0.0
  %231 = vmatprep.subr.mxu0 0.0
  %232 = vmatpush1.msra.mxu0 0.0
  %233 = vmatprep.subr.mxu0 0.0
  %234 = vmatpush1.msra.mxu0 0.0
  %235 = vmatprep.subr.mxu0 0.0
  %236 = vmatpush1.msra.mxu0 0.0
  %237 = vmatprep.subr.mxu0 0.0
  %238 = vmatpush1.msra.mxu0 0.0
  %239 = vmatprep.subr.mxu0 0.0
  %240 = vmatpush1.msra.mxu0 0.0
  %241 = vmatprep.mubr.f32.mxu0 0.0
  %242 = vmatmul.mubr.f32.gmra.mrb[0].mxu0 %v175
  %v243 = vpop.f32.mrb[0].mxu0
  %v244 = vadd.f32 0.0, %v243
  %v245 = vpop.f32.mrb[0].mxu0
  %246 = vdwg.mxu0
  %v247 = vadd.f32 %v168, %v244
  %s248 = scalar_lea.vmem %s1, 48
  %v249 = vld [vmem:[%s248] sm:$0xff]
  %v250 = vld [vmem:[%s248 + $0x8] sm:$0xff]
  %vm252 = vcmask 1044480
  %v253 = vrot.slane %v14, 3
  %v254 = vrot.slane %v15, 3
  %v255 = vsel %vm252, %v253, %v254
  %v256 = vsel %vm26, %v255, 0
  %258 = vmatprep.subr.mxu0 0.0
  %259 = vmatpush1.msra.mxu0 %v249
  %260 = vmatprep.subr.mxu0 0.0
  %261 = vmatpush1.msra.mxu0 %v250
  %262 = vmatprep.subr.mxu0 0.0
  %263 = vmatpush1.msra.mxu0 0.0
  %264 = vmatprep.subr.mxu0 0.0
  %265 = vmatpush1.msra.mxu0 0.0
  %266 = vmatprep.subr.mxu0 0.0
  %267 = vmatpush1.msra.mxu0 0.0
  %268 = vmatprep.subr.mxu0 0.0
  %269 = vmatpush1.msra.mxu0 0.0
  %270 = vmatprep.subr.mxu0 0.0
  %271 = vmatpush1.msra.mxu0 0.0
  %272 = vmatprep.subr.mxu0 0.0
  %273 = vmatpush1.msra.mxu0 0.0
  %274 = vmatprep.subr.mxu0 0.0
  %275 = vmatpush1.msra.mxu0 0.0
  %276 = vmatprep.subr.mxu0 0.0
  %277 = vmatpush1.msra.mxu0 0.0
  %278 = vmatprep.subr.mxu0 0.0
  %279 = vmatpush1.msra.mxu0 0.0
  %280 = vmatprep.subr.mxu0 0.0
  %281 = vmatpush1.msra.mxu0 0.0
  %282 = vmatprep.subr.mxu0 0.0
  %283 = vmatpush1.msra.mxu0 0.0
  %284 = vmatprep.subr.mxu0 0.0
  %285 = vmatpush1.msra.mxu0 0.0
  %286 = vmatprep.subr.mxu0 0.0
  %287 = vmatpush1.msra.mxu0 0.0
  %288 = vmatprep.subr.mxu0 0.0
  %289 = vmatpush1.msra.mxu0 0.0
  %290 = vmatprep.subr.mxu0 0.0
  %291 = vmatpush1.msra.mxu0 0.0
  %292 = vmatprep.subr.mxu0 0.0
  %293 = vmatpush1.msra.mxu0 0.0
  %294 = vmatprep.subr.mxu0 0.0
  %295 = vmatpush1.msra.mxu0 0.0
  %296 = vmatprep.subr.mxu0 0.0
  %297 = vmatpush1.msra.mxu0 0.0
  %298 = vmatprep.subr.mxu0 0.0
  %299 = vmatpush1.msra.mxu0 0.0
  %300 = vmatprep.subr.mxu0 0.0
  %301 = vmatpush1.msra.mxu0 0.0
  %302 = vmatprep.subr.mxu0 0.0
  %303 = vmatpush1.msra.mxu0 0.0
  %304 = vmatprep.subr.mxu0 0.0
  %305 = vmatpush1.msra.mxu0 0.0
  %306 = vmatprep.subr.mxu0 0.0
  %307 = vmatpush1.msra.mxu0 0.0
  %308 = vmatprep.subr.mxu0 0.0
  %309 = vmatpush1.msra.mxu0 0.0
  %310 = vmatprep.subr.mxu0 0.0
  %311 = vmatpush1.msra.mxu0 0.0
  %312 = vmatprep.subr.mxu0 0.0
  %313 = vmatpush1.msra.mxu0 0.0
  %314 = vmatprep.subr.mxu0 0.0
  %315 = vmatpush1.msra.mxu0 0.0
  %316 = vmatprep.subr.mxu0 0.0
  %317 = vmatpush1.msra.mxu0 0.0
  %318 = vmatprep.subr.mxu0 0.0
  %319 = vmatpush1.msra.mxu0 0.0
  %320 = vmatprep.subr.mxu0 0.0
  %321 = vmatpush1.msra.mxu0 0.0
  %322 = vmatprep.mubr.f32.mxu0 0.0
  %323 = vmatmul.mubr.f32.gmra.mrb[0].mxu0 %v256
  %v324 = vpop.f32.mrb[0].mxu0
  %v325 = vadd.f32 0.0, %v324
  %v326 = vpop.f32.mrb[0].mxu0
  %327 = vdwg.mxu0
  %v328 = vadd.f32 %v247, %v325
  %s329 = scalar_lea.vmem %s1, 64
  %v330 = vld [vmem:[%s329] sm:$0xff]
  %v331 = vld [vmem:[%s329 + $0x8] sm:$0xff]
  %vm332 = vcmask 1043456
  %v333 = vrot.slane %v14, 4
  %v334 = vrot.slane %v15, 4
  %v335 = vsel %vm332, %v333, %v334
  %v336 = vsel %vm26, %v335, 0
  %338 = vmatprep.subr.mxu0 0.0
  %339 = vmatpush1.msra.mxu0 %v330
  %340 = vmatprep.subr.mxu0 0.0
  %341 = vmatpush1.msra.mxu0 %v331
  %342 = vmatprep.subr.mxu0 0.0
  %343 = vmatpush1.msra.mxu0 0.0
  %344 = vmatprep.subr.mxu0 0.0
  %345 = vmatpush1.msra.mxu0 0.0
  %346 = vmatprep.subr.mxu0 0.0
  %347 = vmatpush1.msra.mxu0 0.0
  %348 = vmatprep.subr.mxu0 0.0
  %349 = vmatpush1.msra.mxu0 0.0
  %350 = vmatprep.subr.mxu0 0.0
  %351 = vmatpush1.msra.mxu0 0.0
  %352 = vmatprep.subr.mxu0 0.0
  %353 = vmatpush1.msra.mxu0 0.0
  %354 = vmatprep.subr.mxu0 0.0
  %355 = vmatpush1.msra.mxu0 0.0
  %356 = vmatprep.subr.mxu0 0.0
  %357 = vmatpush1.msra.mxu0 0.0
  %358 = vmatprep.subr.mxu0 0.0
  %359 = vmatpush1.msra.mxu0 0.0
  %360 = vmatprep.subr.mxu0 0.0
  %361 = vmatpush1.msra.mxu0 0.0
  %362 = vmatprep.subr.mxu0 0.0
  %363 = vmatpush1.msra.mxu0 0.0
  %364 = vmatprep.subr.mxu0 0.0
  %365 = vmatpush1.msra.mxu0 0.0
  %366 = vmatprep.subr.mxu0 0.0
  %367 = vmatpush1.msra.mxu0 0.0
  %368 = vmatprep.subr.mxu0 0.0
  %369 = vmatpush1.msra.mxu0 0.0
  %370 = vmatprep.subr.mxu0 0.0
  %371 = vmatpush1.msra.mxu0 0.0
  %372 = vmatprep.subr.mxu0 0.0
  %373 = vmatpush1.msra.mxu0 0.0
  %374 = vmatprep.subr.mxu0 0.0
  %375 = vmatpush1.msra.mxu0 0.0
  %376 = vmatprep.subr.mxu0 0.0
  %377 = vmatpush1.msra.mxu0 0.0
  %378 = vmatprep.subr.mxu0 0.0
  %379 = vmatpush1.msra.mxu0 0.0
  %380 = vmatprep.subr.mxu0 0.0
  %381 = vmatpush1.msra.mxu0 0.0
  %382 = vmatprep.subr.mxu0 0.0
  %383 = vmatpush1.msra.mxu0 0.0
  %384 = vmatprep.subr.mxu0 0.0
  %385 = vmatpush1.msra.mxu0 0.0
  %386 = vmatprep.subr.mxu0 0.0
  %387 = vmatpush1.msra.mxu0 0.0
  %388 = vmatprep.subr.mxu0 0.0
  %389 = vmatpush1.msra.mxu0 0.0
  %390 = vmatprep.subr.mxu0 0.0
  %391 = vmatpush1.msra.mxu0 0.0
  %392 = vmatprep.subr.mxu0 0.0
  %393 = vmatpush1.msra.mxu0 0.0
  %394 = vmatprep.subr.mxu0 0.0
  %395 = vmatpush1.msra.mxu0 0.0
  %396 = vmatprep.subr.mxu0 0.0
  %397 = vmatpush1.msra.mxu0 0.0
  %398 = vmatprep.subr.mxu0 0.0
  %399 = vmatpush1.msra.mxu0 0.0
  %400 = vmatprep.subr.mxu0 0.0
  %401 = vmatpush1.msra.mxu0 0.0
  %402 = vmatprep.mubr.f32.mxu0 0.0
  %403 = vmatmul.mubr.f32.gmra.mrb[0].mxu0 %v336
  %v404 = vpop.f32.mrb[0].mxu0
  %v405 = vadd.f32 0.0, %v404
  %v406 = vpop.f32.mrb[0].mxu0
  %407 = vdwg.mxu0
  %v408 = vadd.f32 %v328, %v405
  %v410 = vlaneseq
  %v411 = vshrl.u32 %v410, 7
  %v412 = vsub.s32 0, %v411
  %v413 = vrot.slane %v18, %v412
  %v415 = vadd.f32 %v408, %v413
  %vm416 = vcmask 62464
  %417 = vst.msk [vmem:[%s3] sm:$0x3f] %vm416, %v415
  %v418 = vld [vmem:[%s1] sm:$0xff]
  %v419 = vld [vmem:[%s1 + $0x8] sm:$0xff]
  %v420 = vld [vmem:[%s21] sm:$0xff]
  %v421 = vld [vmem:[%s21 + $0x8] sm:$0xff]
  %v423 = vrot.slane %v16, 1
  %v424 = vsel %vm26, %v423, 0
  %426 = vmatprep.subr.mxu0 0.0
  %427 = vmatpush1.msra.mxu0 %v420
  %428 = vmatprep.subr.mxu0 0.0
  %429 = vmatpush1.msra.mxu0 %v421
  %430 = vmatprep.subr.mxu0 0.0
  %431 = vmatpush1.msra.mxu0 0.0
  %432 = vmatprep.subr.mxu0 0.0
  %433 = vmatpush1.msra.mxu0 0.0
  %434 = vmatprep.subr.mxu0 0.0
  %435 = vmatpush1.msra.mxu0 0.0
  %436 = vmatprep.subr.mxu0 0.0
  %437 = vmatpush1.msra.mxu0 0.0
  %438 = vmatprep.subr.mxu0 0.0
  %439 = vmatpush1.msra.mxu0 0.0
  %440 = vmatprep.subr.mxu0 0.0
  %441 = vmatpush1.msra.mxu0 0.0
  %442 = vmatprep.subr.mxu0 0.0
  %443 = vmatpush1.msra.mxu0 0.0
  %444 = vmatprep.subr.mxu0 0.0
  %445 = vmatpush1.msra.mxu0 0.0
  %446 = vmatprep.subr.mxu0 0.0
  %447 = vmatpush1.msra.mxu0 0.0
  %448 = vmatprep.subr.mxu0 0.0
  %449 = vmatpush1.msra.mxu0 0.0
  %450 = vmatprep.subr.mxu0 0.0
  %451 = vmatpush1.msra.mxu0 0.0
  %452 = vmatprep.subr.mxu0 0.0
  %453 = vmatpush1.msra.mxu0 0.0
  %454 = vmatprep.subr.mxu0 0.0
  %455 = vmatpush1.msra.mxu0 0.0
  %456 = vmatprep.subr.mxu0 0.0
  %457 = vmatpush1.msra.mxu0 0.0
  %458 = vmatprep.subr.mxu0 0.0
  %459 = vmatpush1.msra.mxu0 0.0
  %460 = vmatprep.subr.mxu0 0.0
  %461 = vmatpush1.msra.mxu0 0.0
  %462 = vmatprep.subr.mxu0 0.0
  %463 = vmatpush1.msra.mxu0 0.0
  %464 = vmatprep.subr.mxu0 0.0
  %465 = vmatpush1.msra.mxu0 0.0
  %466 = vmatprep.subr.mxu0 0.0
  %467 = vmatpush1.msra.mxu0 0.0
  %468 = vmatprep.subr.mxu0 0.0
  %469 = vmatpush1.msra.mxu0 0.0
  %470 = vmatprep.subr.mxu0 0.0
  %471 = vmatpush1.msra.mxu0 0.0
  %472 = vmatprep.subr.mxu0 0.0
  %473 = vmatpush1.msra.mxu0 0.0
  %474 = vmatprep.subr.mxu0 0.0
  %475 = vmatpush1.msra.mxu0 0.0
  %476 = vmatprep.subr.mxu0 0.0
  %477 = vmatpush1.msra.mxu0 0.0
  %478 = vmatprep.subr.mxu0 0.0
  %479 = vmatpush1.msra.mxu0 0.0
  %480 = vmatprep.subr.mxu0 0.0
  %481 = vmatpush1.msra.mxu0 0.0
  %482 = vmatprep.subr.mxu0 0.0
  %483 = vmatpush1.msra.mxu0 0.0
  %484 = vmatprep.subr.mxu0 0.0
  %485 = vmatpush1.msra.mxu0 0.0
  %486 = vmatprep.subr.mxu0 0.0
  %487 = vmatpush1.msra.mxu0 0.0
  %488 = vmatprep.subr.mxu0 0.0
  %489 = vmatpush1.msra.mxu0 0.0
  %490 = vmatprep.mubr.f32.mxu0 0.0
  %491 = vmatmul.mubr.f32.gmra.mrb[0].mxu0 %v424
  %v492 = vpop.f32.mrb[0].mxu0
  %v493 = vadd.f32 0.0, %v492
  %v494 = vpop.f32.mrb[0].mxu0
  %495 = vdwg.mxu0
  %v496 = vsel %vm26, %v16, 0
  %498 = vmatprep.subr.mxu0 0.0
  %499 = vmatpush1.msra.mxu0 %v418
  %500 = vmatprep.subr.mxu0 0.0
  %501 = vmatpush1.msra.mxu0 %v419
  %502 = vmatprep.subr.mxu0 0.0
  %503 = vmatpush1.msra.mxu0 0.0
  %504 = vmatprep.subr.mxu0 0.0
  %505 = vmatpush1.msra.mxu0 0.0
  %506 = vmatprep.subr.mxu0 0.0
  %507 = vmatpush1.msra.mxu0 0.0
  %508 = vmatprep.subr.mxu0 0.0
  %509 = vmatpush1.msra.mxu0 0.0
  %510 = vmatprep.subr.mxu0 0.0
  %511 = vmatpush1.msra.mxu0 0.0
  %512 = vmatprep.subr.mxu0 0.0
  %513 = vmatpush1.msra.mxu0 0.0
  %514 = vmatprep.subr.mxu0 0.0
  %515 = vmatpush1.msra.mxu0 0.0
  %516 = vmatprep.subr.mxu0 0.0
  %517 = vmatpush1.msra.mxu0 0.0
  %518 = vmatprep.subr.mxu0 0.0
  %519 = vmatpush1.msra.mxu0 0.0
  %520 = vmatprep.subr.mxu0 0.0
  %521 = vmatpush1.msra.mxu0 0.0
  %522 = vmatprep.subr.mxu0 0.0
  %523 = vmatpush1.msra.mxu0 0.0
  %524 = vmatprep.subr.mxu0 0.0
  %525 = vmatpush1.msra.mxu0 0.0
  %526 = vmatprep.subr.mxu0 0.0
  %527 = vmatpush1.msra.mxu0 0.0
  %528 = vmatprep.subr.mxu0 0.0
  %529 = vmatpush1.msra.mxu0 0.0
  %530 = vmatprep.subr.mxu0 0.0
  %531 = vmatpush1.msra.mxu0 0.0
  %532 = vmatprep.subr.mxu0 0.0
  %533 = vmatpush1.msra.mxu0 0.0
  %534 = vmatprep.subr.mxu0 0.0
  %535 = vmatpush1.msra.mxu0 0.0
  %536 = vmatprep.subr.mxu0 0.0
  %537 = vmatpush1.msra.mxu0 0.0
  %538 = vmatprep.subr.mxu0 0.0
  %539 = vmatpush1.msra.mxu0 0.0
  %540 = vmatprep.subr.mxu0 0.0
  %541 = vmatpush1.msra.mxu0 0.0
  %542 = vmatprep.subr.mxu0 0.0
  %543 = vmatpush1.msra.mxu0 0.0
  %544 = vmatprep.subr.mxu0 0.0
  %545 = vmatpush1.msra.mxu0 0.0
  %546 = vmatprep.subr.mxu0 0.0
  %547 = vmatpush1.msra.mxu0 0.0
  %548 = vmatprep.subr.mxu0 0.0
  %549 = vmatpush1.msra.mxu0 0.0
  %550 = vmatprep.subr.mxu0 0.0
  %551 = vmatpush1.msra.mxu0 0.0
  %552 = vmatprep.subr.mxu0 0.0
  %553 = vmatpush1.msra.mxu0 0.0
  %554 = vmatprep.subr.mxu0 0.0
  %555 = vmatpush1.msra.mxu0 0.0
  %556 = vmatprep.subr.mxu0 0.0
  %557 = vmatpush1.msra.mxu0 0.0
  %558 = vmatprep.subr.mxu0 0.0
  %559 = vmatpush1.msra.mxu0 0.0
  %560 = vmatprep.subr.mxu0 0.0
  %561 = vmatpush1.msra.mxu0 0.0
  %562 = vmatprep.mubr.f32.mxu0 0.0
  %563 = vmatmul.mubr.f32.gmra.mrb[0].mxu0 %v496
  %v564 = vpop.f32.mrb[0].mxu0
  %v565 = vadd.f32 %v493, %v564
  %v566 = vpop.f32.mrb[0].mxu0
  %567 = vdwg.mxu0
  %v568 = vld [vmem:[%s171] sm:$0xff]
  %v569 = vld [vmem:[%s171 + $0x8] sm:$0xff]
  %v570 = vrot.slane %v16, 2
  %v571 = vsel %vm26, %v570, 0
  %573 = vmatprep.subr.mxu0 0.0
  %574 = vmatpush1.msra.mxu0 %v568
  %575 = vmatprep.subr.mxu0 0.0
  %576 = vmatpush1.msra.mxu0 %v569
  %577 = vmatprep.subr.mxu0 0.0
  %578 = vmatpush1.msra.mxu0 0.0
  %579 = vmatprep.subr.mxu0 0.0
  %580 = vmatpush1.msra.mxu0 0.0
  %581 = vmatprep.subr.mxu0 0.0
  %582 = vmatpush1.msra.mxu0 0.0
  %583 = vmatprep.subr.mxu0 0.0
  %584 = vmatpush1.msra.mxu0 0.0
  %585 = vmatprep.subr.mxu0 0.0
  %586 = vmatpush1.msra.mxu0 0.0
  %587 = vmatprep.subr.mxu0 0.0
  %588 = vmatpush1.msra.mxu0 0.0
  %589 = vmatprep.subr.mxu0 0.0
  %590 = vmatpush1.msra.mxu0 0.0
  %591 = vmatprep.subr.mxu0 0.0
  %592 = vmatpush1.msra.mxu0 0.0
  %593 = vmatprep.subr.mxu0 0.0
  %594 = vmatpush1.msra.mxu0 0.0
  %595 = vmatprep.subr.mxu0 0.0
  %596 = vmatpush1.msra.mxu0 0.0
  %597 = vmatprep.subr.mxu0 0.0
  %598 = vmatpush1.msra.mxu0 0.0
  %599 = vmatprep.subr.mxu0 0.0
  %600 = vmatpush1.msra.mxu0 0.0
  %601 = vmatprep.subr.mxu0 0.0
  %602 = vmatpush1.msra.mxu0 0.0
  %603 = vmatprep.subr.mxu0 0.0
  %604 = vmatpush1.msra.mxu0 0.0
  %605 = vmatprep.subr.mxu0 0.0
  %606 = vmatpush1.msra.mxu0 0.0
  %607 = vmatprep.subr.mxu0 0.0
  %608 = vmatpush1.msra.mxu0 0.0
  %609 = vmatprep.subr.mxu0 0.0
  %610 = vmatpush1.msra.mxu0 0.0
  %611 = vmatprep.subr.mxu0 0.0
  %612 = vmatpush1.msra.mxu0 0.0
  %613 = vmatprep.subr.mxu0 0.0
  %614 = vmatpush1.msra.mxu0 0.0
  %615 = vmatprep.subr.mxu0 0.0
  %616 = vmatpush1.msra.mxu0 0.0
  %617 = vmatprep.subr.mxu0 0.0
  %618 = vmatpush1.msra.mxu0 0.0
  %619 = vmatprep.subr.mxu0 0.0
  %620 = vmatpush1.msra.mxu0 0.0
  %621 = vmatprep.subr.mxu0 0.0
  %622 = vmatpush1.msra.mxu0 0.0
  %623 = vmatprep.subr.mxu0 0.0
  %624 = vmatpush1.msra.mxu0 0.0
  %625 = vmatprep.subr.mxu0 0.0
  %626 = vmatpush1.msra.mxu0 0.0
  %627 = vmatprep.subr.mxu0 0.0
  %628 = vmatpush1.msra.mxu0 0.0
  %629 = vmatprep.subr.mxu0 0.0
  %630 = vmatpush1.msra.mxu0 0.0
  %631 = vmatprep.subr.mxu0 0.0
  %632 = vmatpush1.msra.mxu0 0.0
  %633 = vmatprep.subr.mxu0 0.0
  %634 = vmatpush1.msra.mxu0 0.0
  %635 = vmatprep.subr.mxu0 0.0
  %636 = vmatpush1.msra.mxu0 0.0
  %637 = vmatprep.mubr.f32.mxu0 0.0
  %638 = vmatmul.mubr.f32.gmra.mrb[0].mxu0 %v571
  %v639 = vpop.f32.mrb[0].mxu0
  %v640 = vadd.f32 0.0, %v639
  %v641 = vpop.f32.mrb[0].mxu0
  %642 = vdwg.mxu0
  %v643 = vadd.f32 %v565, %v640
  %v644 = vld [vmem:[%s248] sm:$0xff]
  %v645 = vld [vmem:[%s248 + $0x8] sm:$0xff]
  %v647 = vrot.slane %v16, 3
  %v648 = vrot.slane %v17, 3
  %v649 = vsel %vm252, %v647, %v648
  %v650 = vsel %vm26, %v649, 0
  %652 = vmatprep.subr.mxu0 0.0
  %653 = vmatpush1.msra.mxu0 %v644
  %654 = vmatprep.subr.mxu0 0.0
  %655 = vmatpush1.msra.mxu0 %v645
  %656 = vmatprep.subr.mxu0 0.0
  %657 = vmatpush1.msra.mxu0 0.0
  %658 = vmatprep.subr.mxu0 0.0
  %659 = vmatpush1.msra.mxu0 0.0
  %660 = vmatprep.subr.mxu0 0.0
  %661 = vmatpush1.msra.mxu0 0.0
  %662 = vmatprep.subr.mxu0 0.0
  %663 = vmatpush1.msra.mxu0 0.0
  %664 = vmatprep.subr.mxu0 0.0
  %665 = vmatpush1.msra.mxu0 0.0
  %666 = vmatprep.subr.mxu0 0.0
  %667 = vmatpush1.msra.mxu0 0.0
  %668 = vmatprep.subr.mxu0 0.0
  %669 = vmatpush1.msra.mxu0 0.0
  %670 = vmatprep.subr.mxu0 0.0
  %671 = vmatpush1.msra.mxu0 0.0
  %672 = vmatprep.subr.mxu0 0.0
  %673 = vmatpush1.msra.mxu0 0.0
  %674 = vmatprep.subr.mxu0 0.0
  %675 = vmatpush1.msra.mxu0 0.0
  %676 = vmatprep.subr.mxu0 0.0
  %677 = vmatpush1.msra.mxu0 0.0
  %678 = vmatprep.subr.mxu0 0.0
  %679 = vmatpush1.msra.mxu0 0.0
  %680 = vmatprep.subr.mxu0 0.0
  %681 = vmatpush1.msra.mxu0 0.0
  %682 = vmatprep.subr.mxu0 0.0
  %683 = vmatpush1.msra.mxu0 0.0
  %684 = vmatprep.subr.mxu0 0.0
  %685 = vmatpush1.msra.mxu0 0.0
  %686 = vmatprep.subr.mxu0 0.0
  %687 = vmatpush1.msra.mxu0 0.0
  %688 = vmatprep.subr.mxu0 0.0
  %689 = vmatpush1.msra.mxu0 0.0
  %690 = vmatprep.subr.mxu0 0.0
  %691 = vmatpush1.msra.mxu0 0.0
  %692 = vmatprep.subr.mxu0 0.0
  %693 = vmatpush1.msra.mxu0 0.0
  %694 = vmatprep.subr.mxu0 0.0
  %695 = vmatpush1.msra.mxu0 0.0
  %696 = vmatprep.subr.mxu0 0.0
  %697 = vmatpush1.msra.mxu0 0.0
  %698 = vmatprep.subr.mxu0 0.0
  %699 = vmatpush1.msra.mxu0 0.0
  %700 = vmatprep.subr.mxu0 0.0
  %701 = vmatpush1.msra.mxu0 0.0
  %702 = vmatprep.subr.mxu0 0.0
  %703 = vmatpush1.msra.mxu0 0.0
  %704 = vmatprep.subr.mxu0 0.0
  %705 = vmatpush1.msra.mxu0 0.0
  %706 = vmatprep.subr.mxu0 0.0
  %707 = vmatpush1.msra.mxu0 0.0
  %708 = vmatprep.subr.mxu0 0.0
  %709 = vmatpush1.msra.mxu0 0.0
  %710 = vmatprep.subr.mxu0 0.0
  %711 = vmatpush1.msra.mxu0 0.0
  %712 = vmatprep.subr.mxu0 0.0
  %713 = vmatpush1.msra.mxu0 0.0
  %714 = vmatprep.subr.mxu0 0.0
  %715 = vmatpush1.msra.mxu0 0.0
  %716 = vmatprep.mubr.f32.mxu0 0.0
  %717 = vmatmul.mubr.f32.gmra.mrb[0].mxu0 %v650
  %v718 = vpop.f32.mrb[0].mxu0
  %v719 = vadd.f32 0.0, %v718
  %v720 = vpop.f32.mrb[0].mxu0
  %721 = vdwg.mxu0
  %v722 = vadd.f32 %v643, %v719
  %v723 = vld [vmem:[%s329] sm:$0xff]
  %v724 = vld [vmem:[%s329 + $0x8] sm:$0xff]
  %v725 = vrot.slane %v16, 4
  %v726 = vrot.slane %v17, 4
  %v727 = vsel %vm332, %v725, %v726
  %v728 = vsel %vm26, %v727, 0
  %730 = vmatprep.subr.mxu0 0.0
  %731 = vmatpush1.msra.mxu0 %v723
  %732 = vmatprep.subr.mxu0 0.0
  %733 = vmatpush1.msra.mxu0 %v724
  %734 = vmatprep.subr.mxu0 0.0
  %735 = vmatpush1.msra.mxu0 0.0
  %736 = vmatprep.subr.mxu0 0.0
  %737 = vmatpush1.msra.mxu0 0.0
  %738 = vmatprep.subr.mxu0 0.0
  %739 = vmatpush1.msra.mxu0 0.0
  %740 = vmatprep.subr.mxu0 0.0
  %741 = vmatpush1.msra.mxu0 0.0
  %742 = vmatprep.subr.mxu0 0.0
  %743 = vmatpush1.msra.mxu0 0.0
  %744 = vmatprep.subr.mxu0 0.0
  %745 = vmatpush1.msra.mxu0 0.0
  %746 = vmatprep.subr.mxu0 0.0
  %747 = vmatpush1.msra.mxu0 0.0
  %748 = vmatprep.subr.mxu0 0.0
  %749 = vmatpush1.msra.mxu0 0.0
  %750 = vmatprep.subr.mxu0 0.0
  %751 = vmatpush1.msra.mxu0 0.0
  %752 = vmatprep.subr.mxu0 0.0
  %753 = vmatpush1.msra.mxu0 0.0
  %754 = vmatprep.subr.mxu0 0.0
  %755 = vmatpush1.msra.mxu0 0.0
  %756 = vmatprep.subr.mxu0 0.0
  %757 = vmatpush1.msra.mxu0 0.0
  %758 = vmatprep.subr.mxu0 0.0
  %759 = vmatpush1.msra.mxu0 0.0
  %760 = vmatprep.subr.mxu0 0.0
  %761 = vmatpush1.msra.mxu0 0.0
  %762 = vmatprep.subr.mxu0 0.0
  %763 = vmatpush1.msra.mxu0 0.0
  %764 = vmatprep.subr.mxu0 0.0
  %765 = vmatpush1.msra.mxu0 0.0
  %766 = vmatprep.subr.mxu0 0.0
  %767 = vmatpush1.msra.mxu0 0.0
  %768 = vmatprep.subr.mxu0 0.0
  %769 = vmatpush1.msra.mxu0 0.0
  %770 = vmatprep.subr.mxu0 0.0
  %771 = vmatpush1.msra.mxu0 0.0
  %772 = vmatprep.subr.mxu0 0.0
  %773 = vmatpush1.msra.mxu0 0.0
  %774 = vmatprep.subr.mxu0 0.0
  %775 = vmatpush1.msra.mxu0 0.0
  %776 = vmatprep.subr.mxu0 0.0
  %777 = vmatpush1.msra.mxu0 0.0
  %778 = vmatprep.subr.mxu0 0.0
  %779 = vmatpush1.msra.mxu0 0.0
  %780 = vmatprep.subr.mxu0 0.0
  %781 = vmatpush1.msra.mxu0 0.0
  %782 = vmatprep.subr.mxu0 0.0
  %783 = vmatpush1.msra.mxu0 0.0
  %784 = vmatprep.subr.mxu0 0.0
  %785 = vmatpush1.msra.mxu0 0.0
  %786 = vmatprep.subr.mxu0 0.0
  %787 = vmatpush1.msra.mxu0 0.0
  %788 = vmatprep.subr.mxu0 0.0
  %789 = vmatpush1.msra.mxu0 0.0
  %790 = vmatprep.subr.mxu0 0.0
  %791 = vmatpush1.msra.mxu0 0.0
  %792 = vmatprep.subr.mxu0 0.0
  %793 = vmatpush1.msra.mxu0 0.0
  %794 = vmatprep.mubr.f32.mxu0 0.0
  %795 = vmatmul.mubr.f32.gmra.mrb[0].mxu0 %v728
  %v796 = vpop.f32.mrb[0].mxu0
  %v797 = vadd.f32 0.0, %v796
  %v798 = vpop.f32.mrb[0].mxu0
  %799 = vdwg.mxu0
  %v800 = vadd.f32 %v722, %v797
  %v801 = vadd.f32 %v800, %v413
  %s802 = scalar_lea.vmem %s3, 8
  %803 = vst.msk [vmem:[%s802] sm:$0x3f] %vm416, %v801
  // Predicated region
  $region14: #{tacotron2_forward.23} parent=0 // pred_check
    _
  $region15: #{tacotron2_forward.23} parent=0 // pred_check_branch
    %805 = sbr.rel (0) target = $region17
  $region16: #{tacotron2_forward.23} parent=0 // pred_region
    _
  $region17: #{tacotron2_forward.23} parent=0 // pred_fallthru
    _
  // Predicated region
  $region18: #{tacotron2_forward.23} parent=0 // pred_check
    _
  $region19: #{tacotron2_forward.23} parent=0 // pred_check_branch
    %807 = sbr.rel (0) target = $region21
  $region20: #{tacotron2_forward.23} parent=0 // pred_region
    _
  $region21: #{tacotron2_forward.23} parent=0 // pred_fallthru
    _

</llo_original>
